<compile_context>
chip_gen: v7x
topology: tpu7x:2x2x1
jax: 0.10.0
libtpu: 0.0.40
codegen_flags: <defaults>
</compile_context>

<pallas_src>
import functools

import numpy as np
import jax
import jax.numpy as jnp
from jax.experimental import pallas as pl
from jax.experimental.pallas import tpu as pltpu

NEG_SLOPE = 0.01  # nn.LeakyReLU default
VMEM = pltpu.MemorySpace.VMEM


def _lrelu(x):
    return jnp.where(x > 0, x, NEG_SLOPE * x)


def _mxu(a, b):
    """Matmul with operands in b's dtype (bf16 for real weights), f32 accumulate."""
    return jnp.dot(a.astype(b.dtype), b, preferred_element_type=jnp.float32)


# --------------------------------------------------------------------------
# Packed-matrix constructors (run once at parameter-prep time, host/XLA glue)
# --------------------------------------------------------------------------
def _interp_matrix_align_corners(n_out, n_in):
    a = np.zeros((n_out, n_in), np.float32)
    if n_in == 1 or n_out == 1:
        a[:, 0] = 1.0
        return a
    scale = (n_in - 1) / (n_out - 1)
    for o in range(n_out):
        c = o * scale
        i0 = min(int(np.floor(c)), n_in - 1)
        i1 = min(i0 + 1, n_in - 1)
        frac = c - i0
        a[o, i0] += 1.0 - frac
        a[o, i1] += frac
    return a


def _reflect_pad_matrix(n):
    """(n+2, n) left-multiply matrix implementing reflect padding of size 1."""
    p = np.zeros((n + 2, n), np.float32)
    p[0, 1] = 1.0
    p[np.arange(1, n + 1), np.arange(n)] = 1.0
    p[n + 1, n - 2] = 1.0
    return p


def _edge_shift(n, d):
    """(n, n) left-multiply matrix: (M @ x)[i] = x[clip(i + d, 0, n-1)]."""
    m = np.zeros((n, n), np.float32)
    m[np.arange(n), np.clip(np.arange(n) + d, 0, n - 1)] = 1.0
    return m


def _pack_conv3x3(w, wp, dtype=jnp.bfloat16):
    """3x3 conv weight (3,3,cin,cout) -> per-kh packed GEMM (3, wp*cin, (wp-2)*cout).

    Acts on the (H, W*C)-packed layout: out[h, wdst*cout+co] accumulates over kh of
    x_padded[h+kh, :] @ packed[kh]."""
    wo = wp - 2
    mats = []
    for kh in range(3):
        m = jnp.zeros((wp * w.shape[2], wo * w.shape[3]), jnp.float32)
        for kw in range(3):
            m = m + jnp.kron(jnp.asarray(np.eye(wp, wo, -kw), jnp.float32), w[kh, kw])
        mats.append(m)
    return jnp.stack(mats).astype(dtype)


def _tile_bias(b, w):
    return jnp.tile(b, (w,)).reshape(1, -1).astype(jnp.float32)


# --------------------------------------------------------------------------
# Kernel 1: summarizer front-end + LSTM + all dense heads (single pallas_call)
# --------------------------------------------------------------------------
def _encoder_kernel(
    # ---- inputs ----
    x_ref, speed_ref, pa_ref, act_ref, h0_ref, c0_ref,
    wc0_ref, b0_ref, shup_ref, shdn_ref, swl_ref, swr_ref, k2_ref, b2i_ref,
    wsp_ref, bsp_ref, wpa_ref, bpa_ref, wact_ref, bact_ref,
    wih_img_ref, wih_spd_ref, wih_pa_ref, whh_ref, blstm_ref,
    we1_ref, be1_ref, we2_ref, be2_ref,
    wbe_ref, wba_ref, bb_ref, wa_ref, ba_ref, wn1b_ref, bn1b_ref, wns_ref,
    # ---- outputs ----
    ni_out_ref, h1_out_ref, c1_out_ref, ns_out_ref,
    # ---- scratch ----
    img_scr,
    *, lstm_size, min_speed, max_speed,
):
    batch = x_ref.shape[0]
    h_img = x_ref.shape[1] - 2          # image height (== width)
    h_pool = h_img // 2

    b0 = b0_ref[...]
    shup = shup_ref[...]
    shdn = shdn_ref[...]
    swl = swl_ref[...]
    swr = swr_ref[...]

    # --- conv1(3x3 reflect) + LeakyReLU + MaxPool(3,2,1) + image_in_2, per batch ---
    for b in range(batch):
        conv = b0
        for kh in range(3):
            conv = conv + _mxu(x_ref[b, kh:kh + h_img, :], wc0_ref[kh])
        conv = _lrelu(conv)                                      # (H, W*16)
        # 3-tap sliding max along H (edge-replicated taps == implicit -inf pad)
        slid = jnp.maximum(conv, jnp.maximum(_mxu(shup, conv), _mxu(shdn, conv)))
        # 3-tap sliding max along W (W,C packed in lanes, channel stride 16)
        slid = jnp.maximum(slid, jnp.maximum(_mxu(slid, swl), _mxu(slid, swr)))
        # stride-2 subsample (even rows / even w) folded into the image_in_2 GEMM
        feat = b2i_ref[...]                                      # (1, Hd)
        for ho in range(h_pool):
            feat = feat + _mxu(slid[2 * ho:2 * ho + 1, :], k2_ref[ho])
        img_scr[b:b + 1, :] = _lrelu(feat)

    img_feat = img_scr[...]                                      # (B, Hd)

    # --- speed_in (Linear(1, Hd) as broadcast), prev_action_in, actions_in ---
    spd = (speed_ref[...] - min_speed) / (max_speed - min_speed) * 2.0 - 1.0
    spd_feat = _lrelu(spd * wsp_ref[...] + bsp_ref[...])
    pa_feat = _lrelu(_mxu(pa_ref[...], wpa_ref[...]) + bpa_ref[...])
    act_feat = _lrelu(_mxu(act_ref[...], wact_ref[...]) + bact_ref[...])

    # --- LSTM cell (gate order [i, f, g, o]); input-concat folded into row-split W_ih ---
    lsz = lstm_size
    gates = (_mxu(img_feat, wih_img_ref[...]) + _mxu(spd_feat, wih_spd_ref[...])
             + _mxu(pa_feat, wih_pa_ref[...]) + _mxu(h0_ref[...], whh_ref[...])
             + blstm_ref[...])
    i_g = jax.nn.sigmoid(gates[:, 0 * lsz:1 * lsz])
    f_g = jax.nn.sigmoid(gates[:, 1 * lsz:2 * lsz])
    g_g = jnp.tanh(gates[:, 2 * lsz:3 * lsz])
    o_g = jax.nn.sigmoid(gates[:, 3 * lsz:4 * lsz])
    c1 = f_g * c0_ref[...] + i_g * g_g
    h1 = o_g * jnp.tanh(c1)

    # --- encode MLP, BayesianLinear (pre-sampled weight), next_image_1, next_speed ---
    e = _lrelu(_mxu(_lrelu(h1), we1_ref[...]) + be1_ref[...])
    enc = _lrelu(_mxu(e, we2_ref[...]) + be2_ref[...])
    x = _mxu(enc, wbe_ref[...]) + _mxu(act_feat, wba_ref[...]) + bb_ref[...]
    ni_a = _lrelu(_mxu(x, wa_ref[...]) + ba_ref[...])
    ni = _lrelu(_mxu(ni_a, wn1b_ref[...]) + bn1b_ref[...])       # (B, 32*(S/4)^2), lane-dense

    ni_out_ref[...] = ni
    h1_out_ref[...] = h1
    c1_out_ref[...] = c1
    ns_out_ref[...] = _mxu(x, wns_ref[...])


# --------------------------------------------------------------------------
# Kernel 2: decoder convs + bilinear upsamples (single pallas_call)
# --------------------------------------------------------------------------
def _decoder_kernel(ni_ref, wc1_ref, b1_ref, l1_ref, r1_ref,
                    wc2_ref, b2_ref, l2_ref, r2_ref, wc3_ref, b3_ref,
                    out_ref):
    batch = ni_ref.shape[0]
    hq = ni_ref.shape[1] - 2            # S // 4
    hh = 2 * hq                         # S // 2

    b1 = b1_ref[...]
    b2 = b2_ref[...]
    b3 = b3_ref[...]
    l1 = l1_ref[...]
    r1 = r1_ref[...]
    l2 = l2_ref[...]
    r2 = r2_ref[...]
    wc3 = wc3_ref[...]

    for b in range(batch):
        # conv3x3 (32->32, reflect-padded input) + LeakyReLU
        y = b1
        for kh in range(3):
            y = y + _mxu(ni_ref[b, kh:kh + hq, :], wc1_ref[kh])
        y = _lrelu(y)                                            # (S/4, S/4*32)
        # bilinear x2 (align_corners) + reflect pad, as row/col GEMMs
        y = _mxu(_mxu(l1, y), r1)                                # (S/2+2, (S/2+2)*32)
        # conv3x3 (32->16) + LeakyReLU
        z = b2
        for kh in range(3):
            z = z + _mxu(y[kh:kh + hh, :], wc2_ref[kh])
        z = _lrelu(z)                                            # (S/2, S/2*16)
        # bilinear x2 (align_corners)
        z = _mxu(_mxu(l2, z), r2)                                # (S, S*16)
        # conv1x1 (16->4) + clamp
        img = jnp.clip(_mxu(z, wc3) + b3, -1.0, 1.0)             # (S, S*4)
        out_ref[b, :, :] = img


# --------------------------------------------------------------------------
# Parameter init (deterministic, synthetic — no checkpoint load)
# --------------------------------------------------------------------------
def init_params(key, args):
    ks = iter(jax.random.split(key, 64))

    def dense(n_in, n_out, bias=True, scale=0.1):
        w = jax.random.normal(next(ks), (n_in, n_out), jnp.float32) * scale
        b = jax.random.normal(next(ks), (n_out,), jnp.float32) * scale if bias else None
        return {"w": w, "b": b}

    def conv(kh, kw, cin, cout, scale=0.1):
        # TODO(synk): ConstrainedConv2d source not provided; assumed = Conv2d with
        # weights clamped to [-1, 1].
        w = jax.random.normal(next(ks), (kh, kw, cin, cout), jnp.float32) * scale
        b = jax.random.normal(next(ks), (cout,), jnp.float32) * scale
        return {"w": jnp.clip(w, -1.0, 1.0), "b": b}

    s, hd, lsz, enc = args["image_size"], args["hidden_size"], args["lstm_size"], args["encode_size"]
    p = {}
    # Summarizer
    p["conv1"] = conv(3, 3, 4, 16)
    p["image_in_2"] = dense(16 * (s // 2) * (s // 2), hd)      # rows in torch (c,h,w) order
    p["speed_in"] = dense(1, hd)
    p["prev_action_in"] = dense(2, hd)
    p["lstm"] = {
        "w_ih": jax.random.normal(next(ks), (3 * hd, 4 * lsz), jnp.float32) * 0.1,
        "w_hh": jax.random.normal(next(ks), (lsz, 4 * lsz), jnp.float32) * 0.1,
        "b_ih": jax.random.normal(next(ks), (4 * lsz,), jnp.float32) * 0.1,
        "b_hh": jax.random.normal(next(ks), (4 * lsz,), jnp.float32) * 0.1,
    }
    p["encode1"] = dense(lsz, hd)
    p["encode2"] = dense(hd, enc)
    # Transitioner
    p["actions_in"] = dense(2 * args["lookahead"], hd)
    # TODO(synk): BayesianLinear eps is sampled once at init (frozen), not per forward.
    mu_w = jax.random.normal(next(ks), (enc + hd, hd), jnp.float32) * 0.1
    mu_b = jax.random.normal(next(ks), (hd,), jnp.float32) * 0.1
    rho_w = jnp.full((enc + hd, hd), -3.0, jnp.float32)
    rho_b = jnp.full((hd,), -3.0, jnp.float32)
    eps_w = jax.random.normal(next(ks), (enc + hd, hd), jnp.float32)
    eps_b = jax.random.normal(next(ks), (hd,), jnp.float32)
    p["bayes"] = {"w": mu_w + jnp.log1p(jnp.exp(rho_w)) * eps_w,
                  "b": mu_b + jnp.log1p(jnp.exp(rho_b)) * eps_b}
    p["ni1_a"] = dense(hd, hd)
    p["ni1_b"] = dense(hd, 32 * (s // 4) * (s // 4))           # cols in torch (c,h,w) order
    p["ni2_conv1"] = conv(3, 3, 32, 32)
    p["ni2_conv2"] = conv(3, 3, 32, 16)
    p["ni2_conv3"] = conv(1, 1, 16, 4)
    p["next_speed"] = dense(hd, 1, bias=False)
    return p


def pack_params(p, args):
    """Build all packed GEMM matrices once (glue, runs outside the kernels)."""
    s, hd, lsz, enc = args["image_size"], args["hidden_size"], args["lstm_size"], args["encode_size"]
    assert s % 4 == 0, "image_size must be divisible by 4"
    sh, sq = s // 2, s // 4
    f32, bf16 = jnp.float32, jnp.bfloat16
    pk = {}

    # ---- summarizer front-end ----
    pk["wc0"] = _pack_conv3x3(p["conv1"]["w"], s + 2)                         # (3,(S+2)*4,S*16)
    pk["b0"] = _tile_bias(p["conv1"]["b"], s)
    pk["shup"] = jnp.asarray(_edge_shift(s, +1), f32)
    pk["shdn"] = jnp.asarray(_edge_shift(s, -1), f32)
    pk["swl"] = jnp.asarray(np.kron(_edge_shift(s, +1).T, np.eye(16, dtype=np.float32)), f32)
    pk["swr"] = jnp.asarray(np.kron(_edge_shift(s, -1).T, np.eye(16, dtype=np.float32)), f32)
    # image_in_2: torch flattens NCHW (c,h,w); reorder rows to (h,w,c), fold the
    # even-column pool subsample, and split per pooled output row.
    w2 = p["image_in_2"]["w"].reshape(16, sh, sh, hd).transpose(1, 2, 0, 3).reshape(sh * sh * 16, hd)
    esub = np.zeros((s, sh), np.float32)
    esub[np.arange(sh) * 2, np.arange(sh)] = 1.0
    colsel = jnp.asarray(np.kron(esub, np.eye(16, dtype=np.float32)), f32)     # (S*16, Sh*16)
    pk["k2"] = jnp.einsum("ab,hbd->had", colsel, w2.reshape(sh, sh * 16, hd)).astype(bf16)
    pk["b2i"] = p["image_in_2"]["b"].reshape(1, hd)
    pk["wsp"] = p["speed_in"]["w"].reshape(1, hd)
    pk["bsp"] = p["speed_in"]["b"].reshape(1, hd)
    pk["wpa"] = p["prev_action_in"]["w"].astype(bf16)
    pk["bpa"] = p["prev_action_in"]["b"].reshape(1, hd)
    pk["wact"] = p["actions_in"]["w"].astype(bf16)
    pk["bact"] = p["actions_in"]["b"].reshape(1, hd)
    wih = p["lstm"]["w_ih"]
    pk["wih_img"] = wih[0:hd].astype(bf16)
    pk["wih_spd"] = wih[hd:2 * hd].astype(bf16)
    pk["wih_pa"] = wih[2 * hd:3 * hd].astype(bf16)
    pk["whh"] = p["lstm"]["w_hh"].astype(bf16)
    pk["blstm"] = (p["lstm"]["b_ih"] + p["lstm"]["b_hh"]).reshape(1, 4 * lsz)
    pk["we1"] = p["encode1"]["w"].astype(bf16)
    pk["be1"] = p["encode1"]["b"].reshape(1, hd)
    pk["we2"] = p["encode2"]["w"].astype(bf16)
    pk["be2"] = p["encode2"]["b"].reshape(1, enc)
    wb = p["bayes"]["w"]
    pk["wbe"] = wb[:enc].astype(bf16)
    pk["wba"] = wb[enc:].astype(bf16)
    pk["bb"] = p["bayes"]["b"].reshape(1, hd)
    pk["wa"] = p["ni1_a"]["w"].astype(bf16)
    pk["ba"] = p["ni1_a"]["b"].reshape(1, hd)
    # ni1_b: torch reshapes its output to NCHW (c,h,w); reorder columns to (h,w,c)
    wn = p["ni1_b"]["w"].reshape(hd, 32, sq, sq).transpose(0, 2, 3, 1).reshape(hd, sq * sq * 32)
    bn = p["ni1_b"]["b"].reshape(32, sq, sq).transpose(1, 2, 0).reshape(1, sq * sq * 32)
    pk["wn1b"] = wn.astype(bf16)
    pk["bn1b"] = bn
    pk["wns"] = p["next_speed"]["w"].astype(f32)

    # ---- decoder ----
    pk["wc1"] = _pack_conv3x3(p["ni2_conv1"]["w"], sq + 2)                     # (3, (Sq+2)*32, Sq*32)
    pk["b1r"] = _tile_bias(p["ni2_conv1"]["b"], sq)
    ah1 = _interp_matrix_align_corners(sh, sq)
    pr1 = _reflect_pad_matrix(sh)
    pk["l1"] = jnp.asarray(pr1 @ ah1, f32)                                     # (Sh+2, Sq)
    pk["r1"] = jnp.asarray(np.kron((pr1 @ ah1).T, np.eye(32, dtype=np.float32)), f32)
    pk["wc2"] = _pack_conv3x3(p["ni2_conv2"]["w"], sh + 2)                     # (3, (Sh+2)*32, Sh*16)
    pk["b2r"] = _tile_bias(p["ni2_conv2"]["b"], sh)
    ah2 = _interp_matrix_align_corners(s, sh)
    pk["l2"] = jnp.asarray(ah2, f32)                                           # (S, Sh)
    pk["r2"] = jnp.asarray(np.kron(ah2.T, np.eye(16, dtype=np.float32)), f32)  # (Sh*16, S*16)
    pk["wc3"] = jnp.kron(jnp.eye(s, dtype=f32), p["ni2_conv3"]["w"][0, 0]).astype(bf16)
    pk["b3r"] = _tile_bias(p["ni2_conv3"]["b"], s)
    return pk


# --------------------------------------------------------------------------
# Forward pass (non-sequence path: image is 4-D, hidden=None -> zeros)
# --------------------------------------------------------------------------
def transitioner_forward(pk, args, image, speed, prev_action, action, hidden=None):
    batch = image.shape[0]
    s = args["image_size"]
    hd, lsz = args["hidden_size"], args["lstm_size"]
    sq = s // 4

    # glue: reflect-pad the NHWC image and pack (W, C) into the lane dimension
    xpad = jnp.pad(image, ((0, 0), (1, 1), (1, 1), (0, 0)), mode="reflect")
    xpad = xpad.reshape(batch, s + 2, (s + 2) * 4)
    if hidden is None:
        h0 = jnp.zeros((batch, lsz), jnp.float32)
        c0 = jnp.zeros((batch, lsz), jnp.float32)
    else:
        h0, c0 = hidden[0][0], hidden[1][0]

    enc_in = [
        xpad, speed.astype(jnp.float32), prev_action, action, h0, c0,
        pk["wc0"], pk["b0"], pk["shup"], pk["shdn"], pk["swl"], pk["swr"], pk["k2"], pk["b2i"],
        pk["wsp"], pk["bsp"], pk["wpa"], pk["bpa"], pk["wact"], pk["bact"],
        pk["wih_img"], pk["wih_spd"], pk["wih_pa"], pk["whh"], pk["blstm"],
        pk["we1"], pk["be1"], pk["we2"], pk["be2"],
        pk["wbe"], pk["wba"], pk["bb"], pk["wa"], pk["ba"], pk["wn1b"], pk["bn1b"], pk["wns"],
    ]
    kern1 = functools.partial(_encoder_kernel, lstm_size=lsz,
                              min_speed=float(args["min_speed"]),
                              max_speed=float(args["max_speed"]))
    ni_flat, h1, c1, next_speed = pl.pallas_call(
        kern1,
        out_shape=(
            jax.ShapeDtypeStruct((batch, sq * sq * 32), jnp.float32),
            jax.ShapeDtypeStruct((batch, lsz), jnp.float32),
            jax.ShapeDtypeStruct((batch, lsz), jnp.float32),
            jax.ShapeDtypeStruct((batch, 1), jnp.float32),
        ),
        in_specs=[pl.BlockSpec(memory_space=VMEM)] * len(enc_in),
        out_specs=(pl.BlockSpec(memory_space=VMEM),) * 4,
        scratch_shapes=[pltpu.VMEM((batch, hd), jnp.float32)],
    )(*enc_in)

    # glue: (B, Sq*Sq*32) [(h,w,c)-ordered] -> reflect-padded packed decoder input
    ni = ni_flat.reshape(batch, sq, sq, 32)
    ni = jnp.pad(ni, ((0, 0), (1, 1), (1, 1), (0, 0)), mode="reflect")
    ni = ni.reshape(batch, sq + 2, (sq + 2) * 32)

    dec_in = [ni, pk["wc1"], pk["b1r"], pk["l1"], pk["r1"],
              pk["wc2"], pk["b2r"], pk["l2"], pk["r2"], pk["wc3"], pk["b3r"]]
    out = pl.pallas_call(
        _decoder_kernel,
        out_shape=jax.ShapeDtypeStruct((batch, s, s * 4), jnp.float32),
        in_specs=[pl.BlockSpec(memory_space=VMEM)] * len(dec_in),
        out_specs=pl.BlockSpec(memory_space=VMEM),
    )(*dec_in)

    next_image = out.reshape(batch, s, s, 4)   # == torch output after permute(0,2,3,1)+clamp
    return next_image, next_speed, (h1[None], c1[None])


# --------------------------------------------------------------------------
if __name__ == "__main__":
    args = dict(image_size=16, hidden_size=32, lstm_size=32, encode_size=32,
                lookahead=1, min_speed=0.0, max_speed=10.0)
    key = jax.random.PRNGKey(0)
    kp, ki, ksp, kpa, ka = jax.random.split(key, 5)
    params = init_params(kp, args)
    packed = pack_params(params, args)

    B = 2
    image = jax.random.uniform(ki, (B, args["image_size"], args["image_size"], 4),
                               jnp.float32, -1.0, 1.0)
    speed = jax.random.uniform(ksp, (B, 1), jnp.float32, args["min_speed"], args["max_speed"])
    prev_action = jax.random.uniform(kpa, (B, 2), jnp.float32, -1.0, 1.0)
    action = jax.random.uniform(ka, (B, 2 * args["lookahead"]), jnp.float32, -1.0, 1.0)

    fwd = jax.jit(functools.partial(transitioner_forward, packed, args))
    next_image, next_speed, hidden = fwd(image, speed, prev_action, action)
    jax.block_until_ready((next_image, next_speed, hidden))

    assert next_image.shape == (B, args["image_size"], args["image_size"], 4)
    assert next_speed.shape == (B, 1)
    assert hidden[0].shape == (1, B, args["lstm_size"])
    assert hidden[1].shape == (1, B, args["lstm_size"])
    assert bool(jnp.all(jnp.isfinite(next_image)))
    assert float(jnp.abs(next_image).max()) <= 1.0 + 1e-6
    print("KERNEL_OK")
</pallas_src>

<mosaic_0001>
module attributes {stable_mosaic.version = 11 : i64} {
  func.func @_encoder_kernel(%arg0: memref<2x18x72xf32, #tpu.memory_space<vmem>>, %arg1: memref<2x1xf32, #tpu.memory_space<vmem>>, %arg2: memref<2x2xf32, #tpu.memory_space<vmem>>, %arg3: memref<2x2xf32, #tpu.memory_space<vmem>>, %arg4: memref<2x32xf32, #tpu.memory_space<vmem>>, %arg5: memref<2x32xf32, #tpu.memory_space<vmem>>, %arg6: memref<3x72x256xbf16, #tpu.memory_space<vmem>>, %arg7: memref<1x256xf32, #tpu.memory_space<vmem>>, %arg8: memref<16x16xf32, #tpu.memory_space<vmem>>, %arg9: memref<16x16xf32, #tpu.memory_space<vmem>>, %arg10: memref<256x256xf32, #tpu.memory_space<vmem>>, %arg11: memref<256x256xf32, #tpu.memory_space<vmem>>, %arg12: memref<8x256x32xbf16, #tpu.memory_space<vmem>>, %arg13: memref<1x32xf32, #tpu.memory_space<vmem>>, %arg14: memref<1x32xf32, #tpu.memory_space<vmem>>, %arg15: memref<1x32xf32, #tpu.memory_space<vmem>>, %arg16: memref<2x32xbf16, #tpu.memory_space<vmem>>, %arg17: memref<1x32xf32, #tpu.memory_space<vmem>>, %arg18: memref<2x32xbf16, #tpu.memory_space<vmem>>, %arg19: memref<1x32xf32, #tpu.memory_space<vmem>>, %arg20: memref<32x128xbf16, #tpu.memory_space<vmem>>, %arg21: memref<32x128xbf16, #tpu.memory_space<vmem>>, %arg22: memref<32x128xbf16, #tpu.memory_space<vmem>>, %arg23: memref<32x128xbf16, #tpu.memory_space<vmem>>, %arg24: memref<1x128xf32, #tpu.memory_space<vmem>>, %arg25: memref<32x32xbf16, #tpu.memory_space<vmem>>, %arg26: memref<1x32xf32, #tpu.memory_space<vmem>>, %arg27: memref<32x32xbf16, #tpu.memory_space<vmem>>, %arg28: memref<1x32xf32, #tpu.memory_space<vmem>>, %arg29: memref<32x32xbf16, #tpu.memory_space<vmem>>, %arg30: memref<32x32xbf16, #tpu.memory_space<vmem>>, %arg31: memref<1x32xf32, #tpu.memory_space<vmem>>, %arg32: memref<32x32xbf16, #tpu.memory_space<vmem>>, %arg33: memref<1x32xf32, #tpu.memory_space<vmem>>, %arg34: memref<32x512xbf16, #tpu.memory_space<vmem>>, %arg35: memref<1x512xf32, #tpu.memory_space<vmem>>, %arg36: memref<32x1xf32, #tpu.memory_space<vmem>>, %arg37: memref<2x512xf32, #tpu.memory_space<vmem>>, %arg38: memref<2x32xf32, #tpu.memory_space<vmem>>, %arg39: memref<2x32xf32, #tpu.memory_space<vmem>>, %arg40: memref<2x1xf32, #tpu.memory_space<vmem>>, %arg41: memref<2x32xf32, #tpu.memory_space<vmem>>) attributes {dimension_semantics = [], scalar_prefetch = 0 : i64, scratch_operands = 1 : i64, tpu.core_type = #tpu.core_type<tc>} {
    %c0 = arith.constant 0 : index
    %c0_0 = arith.constant 0 : index
    %0 = vector.load %arg7[%c0, %c0_0] : memref<1x256xf32, #tpu.memory_space<vmem>>, vector<1x256xf32>
    %c0_1 = arith.constant 0 : index
    %c0_2 = arith.constant 0 : index
    %1 = vector.load %arg8[%c0_1, %c0_2] : memref<16x16xf32, #tpu.memory_space<vmem>>, vector<16x16xf32>
    %c0_3 = arith.constant 0 : index
    %c0_4 = arith.constant 0 : index
    %2 = vector.load %arg9[%c0_3, %c0_4] : memref<16x16xf32, #tpu.memory_space<vmem>>, vector<16x16xf32>
    %c0_5 = arith.constant 0 : index
    %c0_6 = arith.constant 0 : index
    %3 = vector.load %arg10[%c0_5, %c0_6] : memref<256x256xf32, #tpu.memory_space<vmem>>, vector<256x256xf32>
    %c0_7 = arith.constant 0 : index
    %c0_8 = arith.constant 0 : index
    %4 = vector.load %arg11[%c0_7, %c0_8] : memref<256x256xf32, #tpu.memory_space<vmem>>, vector<256x256xf32>
    %c0_9 = arith.constant 0 : index
    %c0_10 = arith.constant 0 : index
    %c0_11 = arith.constant 0 : index
    %5 = vector.load %arg0[%c0_9, %c0_10, %c0_11] : memref<2x18x72xf32, #tpu.memory_space<vmem>>, vector<1x16x72xf32>
    %6 = vector.shape_cast %5 : vector<1x16x72xf32> to vector<16x72xf32>
    %c0_12 = arith.constant 0 : index
    %c0_13 = arith.constant 0 : index
    %c0_14 = arith.constant 0 : index
    %7 = vector.load %arg6[%c0_12, %c0_13, %c0_14] : memref<3x72x256xbf16, #tpu.memory_space<vmem>>, vector<1x72x256xbf16>
    %8 = vector.shape_cast %7 : vector<1x72x256xbf16> to vector<72x256xbf16>
    %9 = arith.truncf %6 : vector<16x72xf32> to vector<16x72xbf16>
    %cst = arith.constant dense<0.000000e+00> : vector<16x256xf32>
    %10 = tpu.matmul %9, %8, %cst {dimension_numbers = #tpu.dot_dimension_numbers<[1], [0], [0], [1], [0, 0, 1, 1], [], []>} : vector<16x72xbf16>, vector<72x256xbf16>, vector<16x256xf32> -> vector<16x256xf32>
    %11 = vector.broadcast %0 : vector<1x256xf32> to vector<16x256xf32>
    %12 = arith.addf %11, %10 : vector<16x256xf32>
    %c0_15 = arith.constant 0 : index
    %c1 = arith.constant 1 : index
    %c0_16 = arith.constant 0 : index
    %13 = vector.load %arg0[%c0_15, %c1, %c0_16] : memref<2x18x72xf32, #tpu.memory_space<vmem>>, vector<1x16x72xf32>
    %14 = vector.shape_cast %13 : vector<1x16x72xf32> to vector<16x72xf32>
    %c1_17 = arith.constant 1 : index
    %c0_18 = arith.constant 0 : index
    %c0_19 = arith.constant 0 : index
    %15 = vector.load %arg6[%c1_17, %c0_18, %c0_19] : memref<3x72x256xbf16, #tpu.memory_space<vmem>>, vector<1x72x256xbf16>
    %16 = vector.shape_cast %15 : vector<1x72x256xbf16> to vector<72x256xbf16>
    %17 = arith.truncf %14 : vector<16x72xf32> to vector<16x72xbf16>
    %cst_20 = arith.constant dense<0.000000e+00> : vector<16x256xf32>
    %18 = tpu.matmul %17, %16, %cst_20 {dimension_numbers = #tpu.dot_dimension_numbers<[1], [0], [0], [1], [0, 0, 1, 1], [], []>} : vector<16x72xbf16>, vector<72x256xbf16>, vector<16x256xf32> -> vector<16x256xf32>
    %19 = arith.addf %12, %18 : vector<16x256xf32>
    %c0_21 = arith.constant 0 : index
    %c2 = arith.constant 2 : index
    %c0_22 = arith.constant 0 : index
    %20 = vector.load %arg0[%c0_21, %c2, %c0_22] : memref<2x18x72xf32, #tpu.memory_space<vmem>>, vector<1x16x72xf32>
    %21 = vector.shape_cast %20 : vector<1x16x72xf32> to vector<16x72xf32>
    %c2_23 = arith.constant 2 : index
    %c0_24 = arith.constant 0 : index
    %c0_25 = arith.constant 0 : index
    %22 = vector.load %arg6[%c2_23, %c0_24, %c0_25] : memref<3x72x256xbf16, #tpu.memory_space<vmem>>, vector<1x72x256xbf16>
    %23 = vector.shape_cast %22 : vector<1x72x256xbf16> to vector<72x256xbf16>
    %24 = arith.truncf %21 : vector<16x72xf32> to vector<16x72xbf16>
    %cst_26 = arith.constant dense<0.000000e+00> : vector<16x256xf32>
    %25 = tpu.matmul %24, %23, %cst_26 {dimension_numbers = #tpu.dot_dimension_numbers<[1], [0], [0], [1], [0, 0, 1, 1], [], []>} : vector<16x72xbf16>, vector<72x256xbf16>, vector<16x256xf32> -> vector<16x256xf32>
    %26 = arith.addf %19, %25 : vector<16x256xf32>
    %cst_27 = arith.constant 0.000000e+00 : f32
    %27 = vector.broadcast %cst_27 : f32 to vector<16x256xf32>
    %28 = arith.cmpf ogt, %26, %27 : vector<16x256xf32>
    %cst_28 = arith.constant 0.00999999977 : f32
    %29 = vector.broadcast %cst_28 : f32 to vector<16x256xf32>
    %30 = arith.mulf %29, %26 : vector<16x256xf32>
    %31 = arith.select %28, %26, %30 : vector<16x256xi1>, vector<16x256xf32>
    %cst_29 = arith.constant dense<0.000000e+00> : vector<16x256xf32>
    %32 = tpu.matmul %1, %31, %cst_29 {dimension_numbers = #tpu.dot_dimension_numbers<[1], [0], [0], [1], [0, 0, 1, 1], [], []>} : vector<16x16xf32>, vector<16x256xf32>, vector<16x256xf32> -> vector<16x256xf32>
    %cst_30 = arith.constant dense<0.000000e+00> : vector<16x256xf32>
    %33 = tpu.matmul %2, %31, %cst_30 {dimension_numbers = #tpu.dot_dimension_numbers<[1], [0], [0], [1], [0, 0, 1, 1], [], []>} : vector<16x16xf32>, vector<16x256xf32>, vector<16x256xf32> -> vector<16x256xf32>
    %34 = arith.maximumf %32, %33 : vector<16x256xf32>
    %35 = arith.maximumf %31, %34 : vector<16x256xf32>
    %cst_31 = arith.constant dense<0.000000e+00> : vector<16x256xf32>
    %36 = tpu.matmul %35, %3, %cst_31 {dimension_numbers = #tpu.dot_dimension_numbers<[1], [0], [0], [1], [0, 0, 1, 1], [], []>} : vector<16x256xf32>, vector<256x256xf32>, vector<16x256xf32> -> vector<16x256xf32>
    %cst_32 = arith.constant dense<0.000000e+00> : vector<16x256xf32>
    %37 = tpu.matmul %35, %4, %cst_32 {dimension_numbers = #tpu.dot_dimension_numbers<[1], [0], [0], [1], [0, 0, 1, 1], [], []>} : vector<16x256xf32>, vector<256x256xf32>, vector<16x256xf32> -> vector<16x256xf32>
    %38 = arith.maximumf %36, %37 : vector<16x256xf32>
    %39 = arith.maximumf %35, %38 : vector<16x256xf32>
    %c0_33 = arith.constant 0 : index
    %c0_34 = arith.constant 0 : index
    %40 = vector.load %arg13[%c0_33, %c0_34] : memref<1x32xf32, #tpu.memory_space<vmem>>, vector<1x32xf32>
    %41 = vector.extract_strided_slice %39 {offsets = [0, 0], sizes = [1, 256], strides = [1, 1]} : vector<16x256xf32> to vector<1x256xf32>
    %c0_35 = arith.constant 0 : index
    %c0_36 = arith.constant 0 : index
    %c0_37 = arith.constant 0 : index
    %42 = vector.load %arg12[%c0_35, %c0_36, %c0_37] : memref<8x256x32xbf16, #tpu.memory_space<vmem>>, vector<1x256x32xbf16>
    %43 = vector.shape_cast %42 : vector<1x256x32xbf16> to vector<256x32xbf16>
    %44 = arith.truncf %41 : vector<1x256xf32> to vector<1x256xbf16>
    %cst_38 = arith.constant dense<0.000000e+00> : vector<1x32xf32>
    %45 = tpu.matmul %44, %43, %cst_38 {dimension_numbers = #tpu.dot_dimension_numbers<[1], [0], [0], [1], [0, 0, 1, 1], [], []>} : vector<1x256xbf16>, vector<256x32xbf16>, vector<1x32xf32> -> vector<1x32xf32>
    %46 = arith.addf %40, %45 : vector<1x32xf32>
    %47 = vector.extract_strided_slice %39 {offsets = [2, 0], sizes = [1, 256], strides = [1, 1]} : vector<16x256xf32> to vector<1x256xf32>
    %c1_39 = arith.constant 1 : index
    %c0_40 = arith.constant 0 : index
    %c0_41 = arith.constant 0 : index
    %48 = vector.load %arg12[%c1_39, %c0_40, %c0_41] : memref<8x256x32xbf16, #tpu.memory_space<vmem>>, vector<1x256x32xbf16>
    %49 = vector.shape_cast %48 : vector<1x256x32xbf16> to vector<256x32xbf16>
    %50 = arith.truncf %47 : vector<1x256xf32> to vector<1x256xbf16>
    %cst_42 = arith.constant dense<0.000000e+00> : vector<1x32xf32>
    %51 = tpu.matmul %50, %49, %cst_42 {dimension_numbers = #tpu.dot_dimension_numbers<[1], [0], [0], [1], [0, 0, 1, 1], [], []>} : vector<1x256xbf16>, vector<256x32xbf16>, vector<1x32xf32> -> vector<1x32xf32>
    %52 = arith.addf %46, %51 : vector<1x32xf32>
    %53 = vector.extract_strided_slice %39 {offsets = [4, 0], sizes = [1, 256], strides = [1, 1]} : vector<16x256xf32> to vector<1x256xf32>
    %c2_43 = arith.constant 2 : index
    %c0_44 = arith.constant 0 : index
    %c0_45 = arith.constant 0 : index
    %54 = vector.load %arg12[%c2_43, %c0_44, %c0_45] : memref<8x256x32xbf16, #tpu.memory_space<vmem>>, vector<1x256x32xbf16>
    %55 = vector.shape_cast %54 : vector<1x256x32xbf16> to vector<256x32xbf16>
    %56 = arith.truncf %53 : vector<1x256xf32> to vector<1x256xbf16>
    %cst_46 = arith.constant dense<0.000000e+00> : vector<1x32xf32>
    %57 = tpu.matmul %56, %55, %cst_46 {dimension_numbers = #tpu.dot_dimension_numbers<[1], [0], [0], [1], [0, 0, 1, 1], [], []>} : vector<1x256xbf16>, vector<256x32xbf16>, vector<1x32xf32> -> vector<1x32xf32>
    %58 = arith.addf %52, %57 : vector<1x32xf32>
    %59 = vector.extract_strided_slice %39 {offsets = [6, 0], sizes = [1, 256], strides = [1, 1]} : vector<16x256xf32> to vector<1x256xf32>
    %c3 = arith.constant 3 : index
    %c0_47 = arith.constant 0 : index
    %c0_48 = arith.constant 0 : index
    %60 = vector.load %arg12[%c3, %c0_47, %c0_48] : memref<8x256x32xbf16, #tpu.memory_space<vmem>>, vector<1x256x32xbf16>
    %61 = vector.shape_cast %60 : vector<1x256x32xbf16> to vector<256x32xbf16>
    %62 = arith.truncf %59 : vector<1x256xf32> to vector<1x256xbf16>
    %cst_49 = arith.constant dense<0.000000e+00> : vector<1x32xf32>
    %63 = tpu.matmul %62, %61, %cst_49 {dimension_numbers = #tpu.dot_dimension_numbers<[1], [0], [0], [1], [0, 0, 1, 1], [], []>} : vector<1x256xbf16>, vector<256x32xbf16>, vector<1x32xf32> -> vector<1x32xf32>
    %64 = arith.addf %58, %63 : vector<1x32xf32>
    %65 = vector.extract_strided_slice %39 {offsets = [8, 0], sizes = [1, 256], strides = [1, 1]} : vector<16x256xf32> to vector<1x256xf32>
    %c4 = arith.constant 4 : index
    %c0_50 = arith.constant 0 : index
    %c0_51 = arith.constant 0 : index
    %66 = vector.load %arg12[%c4, %c0_50, %c0_51] : memref<8x256x32xbf16, #tpu.memory_space<vmem>>, vector<1x256x32xbf16>
    %67 = vector.shape_cast %66 : vector<1x256x32xbf16> to vector<256x32xbf16>
    %68 = arith.truncf %65 : vector<1x256xf32> to vector<1x256xbf16>
    %cst_52 = arith.constant dense<0.000000e+00> : vector<1x32xf32>
    %69 = tpu.matmul %68, %67, %cst_52 {dimension_numbers = #tpu.dot_dimension_numbers<[1], [0], [0], [1], [0, 0, 1, 1], [], []>} : vector<1x256xbf16>, vector<256x32xbf16>, vector<1x32xf32> -> vector<1x32xf32>
    %70 = arith.addf %64, %69 : vector<1x32xf32>
    %71 = vector.extract_strided_slice %39 {offsets = [10, 0], sizes = [1, 256], strides = [1, 1]} : vector<16x256xf32> to vector<1x256xf32>
    %c5 = arith.constant 5 : index
    %c0_53 = arith.constant 0 : index
    %c0_54 = arith.constant 0 : index
    %72 = vector.load %arg12[%c5, %c0_53, %c0_54] : memref<8x256x32xbf16, #tpu.memory_space<vmem>>, vector<1x256x32xbf16>
    %73 = vector.shape_cast %72 : vector<1x256x32xbf16> to vector<256x32xbf16>
    %74 = arith.truncf %71 : vector<1x256xf32> to vector<1x256xbf16>
    %cst_55 = arith.constant dense<0.000000e+00> : vector<1x32xf32>
    %75 = tpu.matmul %74, %73, %cst_55 {dimension_numbers = #tpu.dot_dimension_numbers<[1], [0], [0], [1], [0, 0, 1, 1], [], []>} : vector<1x256xbf16>, vector<256x32xbf16>, vector<1x32xf32> -> vector<1x32xf32>
    %76 = arith.addf %70, %75 : vector<1x32xf32>
    %77 = vector.extract_strided_slice %39 {offsets = [12, 0], sizes = [1, 256], strides = [1, 1]} : vector<16x256xf32> to vector<1x256xf32>
    %c6 = arith.constant 6 : index
    %c0_56 = arith.constant 0 : index
    %c0_57 = arith.constant 0 : index
    %78 = vector.load %arg12[%c6, %c0_56, %c0_57] : memref<8x256x32xbf16, #tpu.memory_space<vmem>>, vector<1x256x32xbf16>
    %79 = vector.shape_cast %78 : vector<1x256x32xbf16> to vector<256x32xbf16>
    %80 = arith.truncf %77 : vector<1x256xf32> to vector<1x256xbf16>
    %cst_58 = arith.constant dense<0.000000e+00> : vector<1x32xf32>
    %81 = tpu.matmul %80, %79, %cst_58 {dimension_numbers = #tpu.dot_dimension_numbers<[1], [0], [0], [1], [0, 0, 1, 1], [], []>} : vector<1x256xbf16>, vector<256x32xbf16>, vector<1x32xf32> -> vector<1x32xf32>
    %82 = arith.addf %76, %81 : vector<1x32xf32>
    %83 = vector.extract_strided_slice %39 {offsets = [14, 0], sizes = [1, 256], strides = [1, 1]} : vector<16x256xf32> to vector<1x256xf32>
    %c7 = arith.constant 7 : index
    %c0_59 = arith.constant 0 : index
    %c0_60 = arith.constant 0 : index
    %84 = vector.load %arg12[%c7, %c0_59, %c0_60] : memref<8x256x32xbf16, #tpu.memory_space<vmem>>, vector<1x256x32xbf16>
    %85 = vector.shape_cast %84 : vector<1x256x32xbf16> to vector<256x32xbf16>
    %86 = arith.truncf %83 : vector<1x256xf32> to vector<1x256xbf16>
    %cst_61 = arith.constant dense<0.000000e+00> : vector<1x32xf32>
    %87 = tpu.matmul %86, %85, %cst_61 {dimension_numbers = #tpu.dot_dimension_numbers<[1], [0], [0], [1], [0, 0, 1, 1], [], []>} : vector<1x256xbf16>, vector<256x32xbf16>, vector<1x32xf32> -> vector<1x32xf32>
    %88 = arith.addf %82, %87 : vector<1x32xf32>
    %cst_62 = arith.constant 0.000000e+00 : f32
    %89 = vector.broadcast %cst_62 : f32 to vector<1x32xf32>
    %90 = arith.cmpf ogt, %88, %89 : vector<1x32xf32>
    %cst_63 = arith.constant 0.00999999977 : f32
    %91 = vector.broadcast %cst_63 : f32 to vector<1x32xf32>
    %92 = arith.mulf %91, %88 : vector<1x32xf32>
    %93 = arith.select %90, %88, %92 : vector<1x32xi1>, vector<1x32xf32>
    %c0_64 = arith.constant 0 : index
    %c0_65 = arith.constant 0 : index
    %94 = vector.load %arg41[%c0_64, %c0_65] : memref<2x32xf32, #tpu.memory_space<vmem>>, vector<1x32xf32>
    tpu.vector_store %arg41[%c0_64, %c0_65], %93 {strides = array<i32>} : memref<2x32xf32, #tpu.memory_space<vmem>>, vector<1x32xf32>,
    %c1_66 = arith.constant 1 : index
    %c0_67 = arith.constant 0 : index
    %c0_68 = arith.constant 0 : index
    %95 = vector.load %arg0[%c1_66, %c0_67, %c0_68] : memref<2x18x72xf32, #tpu.memory_space<vmem>>, vector<1x16x72xf32>
    %96 = vector.shape_cast %95 : vector<1x16x72xf32> to vector<16x72xf32>
    %c0_69 = arith.constant 0 : index
    %c0_70 = arith.constant 0 : index
    %c0_71 = arith.constant 0 : index
    %97 = vector.load %arg6[%c0_69, %c0_70, %c0_71] : memref<3x72x256xbf16, #tpu.memory_space<vmem>>, vector<1x72x256xbf16>
    %98 = vector.shape_cast %97 : vector<1x72x256xbf16> to vector<72x256xbf16>
    %99 = arith.truncf %96 : vector<16x72xf32> to vector<16x72xbf16>
    %cst_72 = arith.constant dense<0.000000e+00> : vector<16x256xf32>
    %100 = tpu.matmul %99, %98, %cst_72 {dimension_numbers = #tpu.dot_dimension_numbers<[1], [0], [0], [1], [0, 0, 1, 1], [], []>} : vector<16x72xbf16>, vector<72x256xbf16>, vector<16x256xf32> -> vector<16x256xf32>
    %101 = vector.broadcast %0 : vector<1x256xf32> to vector<16x256xf32>
    %102 = arith.addf %101, %100 : vector<16x256xf32>
    %c1_73 = arith.constant 1 : index
    %c1_74 = arith.constant 1 : index
    %c0_75 = arith.constant 0 : index
    %103 = vector.load %arg0[%c1_73, %c1_74, %c0_75] : memref<2x18x72xf32, #tpu.memory_space<vmem>>, vector<1x16x72xf32>
    %104 = vector.shape_cast %103 : vector<1x16x72xf32> to vector<16x72xf32>
    %c1_76 = arith.constant 1 : index
    %c0_77 = arith.constant 0 : index
    %c0_78 = arith.constant 0 : index
    %105 = vector.load %arg6[%c1_76, %c0_77, %c0_78] : memref<3x72x256xbf16, #tpu.memory_space<vmem>>, vector<1x72x256xbf16>
    %106 = vector.shape_cast %105 : vector<1x72x256xbf16> to vector<72x256xbf16>
    %107 = arith.truncf %104 : vector<16x72xf32> to vector<16x72xbf16>
    %cst_79 = arith.constant dense<0.000000e+00> : vector<16x256xf32>
    %108 = tpu.matmul %107, %106, %cst_79 {dimension_numbers = #tpu.dot_dimension_numbers<[1], [0], [0], [1], [0, 0, 1, 1], [], []>} : vector<16x72xbf16>, vector<72x256xbf16>, vector<16x256xf32> -> vector<16x256xf32>
    %109 = arith.addf %102, %108 : vector<16x256xf32>
    %c1_80 = arith.constant 1 : index
    %c2_81 = arith.constant 2 : index
    %c0_82 = arith.constant 0 : index
    %110 = vector.load %arg0[%c1_80, %c2_81, %c0_82] : memref<2x18x72xf32, #tpu.memory_space<vmem>>, vector<1x16x72xf32>
    %111 = vector.shape_cast %110 : vector<1x16x72xf32> to vector<16x72xf32>
    %c2_83 = arith.constant 2 : index
    %c0_84 = arith.constant 0 : index
    %c0_85 = arith.constant 0 : index
    %112 = vector.load %arg6[%c2_83, %c0_84, %c0_85] : memref<3x72x256xbf16, #tpu.memory_space<vmem>>, vector<1x72x256xbf16>
    %113 = vector.shape_cast %112 : vector<1x72x256xbf16> to vector<72x256xbf16>
    %114 = arith.truncf %111 : vector<16x72xf32> to vector<16x72xbf16>
    %cst_86 = arith.constant dense<0.000000e+00> : vector<16x256xf32>
    %115 = tpu.matmul %114, %113, %cst_86 {dimension_numbers = #tpu.dot_dimension_numbers<[1], [0], [0], [1], [0, 0, 1, 1], [], []>} : vector<16x72xbf16>, vector<72x256xbf16>, vector<16x256xf32> -> vector<16x256xf32>
    %116 = arith.addf %109, %115 : vector<16x256xf32>
    %cst_87 = arith.constant 0.000000e+00 : f32
    %117 = vector.broadcast %cst_87 : f32 to vector<16x256xf32>
    %118 = arith.cmpf ogt, %116, %117 : vector<16x256xf32>
    %cst_88 = arith.constant 0.00999999977 : f32
    %119 = vector.broadcast %cst_88 : f32 to vector<16x256xf32>
    %120 = arith.mulf %119, %116 : vector<16x256xf32>
    %121 = arith.select %118, %116, %120 : vector<16x256xi1>, vector<16x256xf32>
    %cst_89 = arith.constant dense<0.000000e+00> : vector<16x256xf32>
    %122 = tpu.matmul %1, %121, %cst_89 {dimension_numbers = #tpu.dot_dimension_numbers<[1], [0], [0], [1], [0, 0, 1, 1], [], []>} : vector<16x16xf32>, vector<16x256xf32>, vector<16x256xf32> -> vector<16x256xf32>
    %cst_90 = arith.constant dense<0.000000e+00> : vector<16x256xf32>
    %123 = tpu.matmul %2, %121, %cst_90 {dimension_numbers = #tpu.dot_dimension_numbers<[1], [0], [0], [1], [0, 0, 1, 1], [], []>} : vector<16x16xf32>, vector<16x256xf32>, vector<16x256xf32> -> vector<16x256xf32>
    %124 = arith.maximumf %122, %123 : vector<16x256xf32>
    %125 = arith.maximumf %121, %124 : vector<16x256xf32>
    %cst_91 = arith.constant dense<0.000000e+00> : vector<16x256xf32>
    %126 = tpu.matmul %125, %3, %cst_91 {dimension_numbers = #tpu.dot_dimension_numbers<[1], [0], [0], [1], [0, 0, 1, 1], [], []>} : vector<16x256xf32>, vector<256x256xf32>, vector<16x256xf32> -> vector<16x256xf32>
    %cst_92 = arith.constant dense<0.000000e+00> : vector<16x256xf32>
    %127 = tpu.matmul %125, %4, %cst_92 {dimension_numbers = #tpu.dot_dimension_numbers<[1], [0], [0], [1], [0, 0, 1, 1], [], []>} : vector<16x256xf32>, vector<256x256xf32>, vector<16x256xf32> -> vector<16x256xf32>
    %128 = arith.maximumf %126, %127 : vector<16x256xf32>
    %129 = arith.maximumf %125, %128 : vector<16x256xf32>
    %c0_93 = arith.constant 0 : index
    %c0_94 = arith.constant 0 : index
    %130 = vector.load %arg13[%c0_93, %c0_94] : memref<1x32xf32, #tpu.memory_space<vmem>>, vector<1x32xf32>
    %131 = vector.extract_strided_slice %129 {offsets = [0, 0], sizes = [1, 256], strides = [1, 1]} : vector<16x256xf32> to vector<1x256xf32>
    %c0_95 = arith.constant 0 : index
    %c0_96 = arith.constant 0 : index
    %c0_97 = arith.constant 0 : index
    %132 = vector.load %arg12[%c0_95, %c0_96, %c0_97] : memref<8x256x32xbf16, #tpu.memory_space<vmem>>, vector<1x256x32xbf16>
    %133 = vector.shape_cast %132 : vector<1x256x32xbf16> to vector<256x32xbf16>
    %134 = arith.truncf %131 : vector<1x256xf32> to vector<1x256xbf16>
    %cst_98 = arith.constant dense<0.000000e+00> : vector<1x32xf32>
    %135 = tpu.matmul %134, %133, %cst_98 {dimension_numbers = #tpu.dot_dimension_numbers<[1], [0], [0], [1], [0, 0, 1, 1], [], []>} : vector<1x256xbf16>, vector<256x32xbf16>, vector<1x32xf32> -> vector<1x32xf32>
    %136 = arith.addf %130, %135 : vector<1x32xf32>
    %137 = vector.extract_strided_slice %129 {offsets = [2, 0], sizes = [1, 256], strides = [1, 1]} : vector<16x256xf32> to vector<1x256xf32>
    %c1_99 = arith.constant 1 : index
    %c0_100 = arith.constant 0 : index
    %c0_101 = arith.constant 0 : index
    %138 = vector.load %arg12[%c1_99, %c0_100, %c0_101] : memref<8x256x32xbf16, #tpu.memory_space<vmem>>, vector<1x256x32xbf16>
    %139 = vector.shape_cast %138 : vector<1x256x32xbf16> to vector<256x32xbf16>
    %140 = arith.truncf %137 : vector<1x256xf32> to vector<1x256xbf16>
    %cst_102 = arith.constant dense<0.000000e+00> : vector<1x32xf32>
    %141 = tpu.matmul %140, %139, %cst_102 {dimension_numbers = #tpu.dot_dimension_numbers<[1], [0], [0], [1], [0, 0, 1, 1], [], []>} : vector<1x256xbf16>, vector<256x32xbf16>, vector<1x32xf32> -> vector<1x32xf32>
    %142 = arith.addf %136, %141 : vector<1x32xf32>
    %143 = vector.extract_strided_slice %129 {offsets = [4, 0], sizes = [1, 256], strides = [1, 1]} : vector<16x256xf32> to vector<1x256xf32>
    %c2_103 = arith.constant 2 : index
    %c0_104 = arith.constant 0 : index
    %c0_105 = arith.constant 0 : index
    %144 = vector.load %arg12[%c2_103, %c0_104, %c0_105] : memref<8x256x32xbf16, #tpu.memory_space<vmem>>, vector<1x256x32xbf16>
    %145 = vector.shape_cast %144 : vector<1x256x32xbf16> to vector<256x32xbf16>
    %146 = arith.truncf %143 : vector<1x256xf32> to vector<1x256xbf16>
    %cst_106 = arith.constant dense<0.000000e+00> : vector<1x32xf32>
    %147 = tpu.matmul %146, %145, %cst_106 {dimension_numbers = #tpu.dot_dimension_numbers<[1], [0], [0], [1], [0, 0, 1, 1], [], []>} : vector<1x256xbf16>, vector<256x32xbf16>, vector<1x32xf32> -> vector<1x32xf32>
    %148 = arith.addf %142, %147 : vector<1x32xf32>
    %149 = vector.extract_strided_slice %129 {offsets = [6, 0], sizes = [1, 256], strides = [1, 1]} : vector<16x256xf32> to vector<1x256xf32>
    %c3_107 = arith.constant 3 : index
    %c0_108 = arith.constant 0 : index
    %c0_109 = arith.constant 0 : index
    %150 = vector.load %arg12[%c3_107, %c0_108, %c0_109] : memref<8x256x32xbf16, #tpu.memory_space<vmem>>, vector<1x256x32xbf16>
    %151 = vector.shape_cast %150 : vector<1x256x32xbf16> to vector<256x32xbf16>
    %152 = arith.truncf %149 : vector<1x256xf32> to vector<1x256xbf16>
    %cst_110 = arith.constant dense<0.000000e+00> : vector<1x32xf32>
    %153 = tpu.matmul %152, %151, %cst_110 {dimension_numbers = #tpu.dot_dimension_numbers<[1], [0], [0], [1], [0, 0, 1, 1], [], []>} : vector<1x256xbf16>, vector<256x32xbf16>, vector<1x32xf32> -> vector<1x32xf32>
    %154 = arith.addf %148, %153 : vector<1x32xf32>
    %155 = vector.extract_strided_slice %129 {offsets = [8, 0], sizes = [1, 256], strides = [1, 1]} : vector<16x256xf32> to vector<1x256xf32>
    %c4_111 = arith.constant 4 : index
    %c0_112 = arith.constant 0 : index
    %c0_113 = arith.constant 0 : index
    %156 = vector.load %arg12[%c4_111, %c0_112, %c0_113] : memref<8x256x32xbf16, #tpu.memory_space<vmem>>, vector<1x256x32xbf16>
    %157 = vector.shape_cast %156 : vector<1x256x32xbf16> to vector<256x32xbf16>
    %158 = arith.truncf %155 : vector<1x256xf32> to vector<1x256xbf16>
    %cst_114 = arith.constant dense<0.000000e+00> : vector<1x32xf32>
    %159 = tpu.matmul %158, %157, %cst_114 {dimension_numbers = #tpu.dot_dimension_numbers<[1], [0], [0], [1], [0, 0, 1, 1], [], []>} : vector<1x256xbf16>, vector<256x32xbf16>, vector<1x32xf32> -> vector<1x32xf32>
    %160 = arith.addf %154, %159 : vector<1x32xf32>
    %161 = vector.extract_strided_slice %129 {offsets = [10, 0], sizes = [1, 256], strides = [1, 1]} : vector<16x256xf32> to vector<1x256xf32>
    %c5_115 = arith.constant 5 : index
    %c0_116 = arith.constant 0 : index
    %c0_117 = arith.constant 0 : index
    %162 = vector.load %arg12[%c5_115, %c0_116, %c0_117] : memref<8x256x32xbf16, #tpu.memory_space<vmem>>, vector<1x256x32xbf16>
    %163 = vector.shape_cast %162 : vector<1x256x32xbf16> to vector<256x32xbf16>
    %164 = arith.truncf %161 : vector<1x256xf32> to vector<1x256xbf16>
    %cst_118 = arith.constant dense<0.000000e+00> : vector<1x32xf32>
    %165 = tpu.matmul %164, %163, %cst_118 {dimension_numbers = #tpu.dot_dimension_numbers<[1], [0], [0], [1], [0, 0, 1, 1], [], []>} : vector<1x256xbf16>, vector<256x32xbf16>, vector<1x32xf32> -> vector<1x32xf32>
    %166 = arith.addf %160, %165 : vector<1x32xf32>
    %167 = vector.extract_strided_slice %129 {offsets = [12, 0], sizes = [1, 256], strides = [1, 1]} : vector<16x256xf32> to vector<1x256xf32>
    %c6_119 = arith.constant 6 : index
    %c0_120 = arith.constant 0 : index
    %c0_121 = arith.constant 0 : index
    %168 = vector.load %arg12[%c6_119, %c0_120, %c0_121] : memref<8x256x32xbf16, #tpu.memory_space<vmem>>, vector<1x256x32xbf16>
    %169 = vector.shape_cast %168 : vector<1x256x32xbf16> to vector<256x32xbf16>
    %170 = arith.truncf %167 : vector<1x256xf32> to vector<1x256xbf16>
    %cst_122 = arith.constant dense<0.000000e+00> : vector<1x32xf32>
    %171 = tpu.matmul %170, %169, %cst_122 {dimension_numbers = #tpu.dot_dimension_numbers<[1], [0], [0], [1], [0, 0, 1, 1], [], []>} : vector<1x256xbf16>, vector<256x32xbf16>, vector<1x32xf32> -> vector<1x32xf32>
    %172 = arith.addf %166, %171 : vector<1x32xf32>
    %173 = vector.extract_strided_slice %129 {offsets = [14, 0], sizes = [1, 256], strides = [1, 1]} : vector<16x256xf32> to vector<1x256xf32>
    %c7_123 = arith.constant 7 : index
    %c0_124 = arith.constant 0 : index
    %c0_125 = arith.constant 0 : index
    %174 = vector.load %arg12[%c7_123, %c0_124, %c0_125] : memref<8x256x32xbf16, #tpu.memory_space<vmem>>, vector<1x256x32xbf16>
    %175 = vector.shape_cast %174 : vector<1x256x32xbf16> to vector<256x32xbf16>
    %176 = arith.truncf %173 : vector<1x256xf32> to vector<1x256xbf16>
    %cst_126 = arith.constant dense<0.000000e+00> : vector<1x32xf32>
    %177 = tpu.matmul %176, %175, %cst_126 {dimension_numbers = #tpu.dot_dimension_numbers<[1], [0], [0], [1], [0, 0, 1, 1], [], []>} : vector<1x256xbf16>, vector<256x32xbf16>, vector<1x32xf32> -> vector<1x32xf32>
    %178 = arith.addf %172, %177 : vector<1x32xf32>
    %cst_127 = arith.constant 0.000000e+00 : f32
    %179 = vector.broadcast %cst_127 : f32 to vector<1x32xf32>
    %180 = arith.cmpf ogt, %178, %179 : vector<1x32xf32>
    %cst_128 = arith.constant 0.00999999977 : f32
    %181 = vector.broadcast %cst_128 : f32 to vector<1x32xf32>
    %182 = arith.mulf %181, %178 : vector<1x32xf32>
    %183 = arith.select %180, %178, %182 : vector<1x32xi1>, vector<1x32xf32>
    %c1_129 = arith.constant 1 : index
    %c0_130 = arith.constant 0 : index
    %184 = vector.load %arg41[%c1_129, %c0_130] : memref<2x32xf32, #tpu.memory_space<vmem>>, vector<1x32xf32>
    tpu.vector_store %arg41[%c1_129, %c0_130], %183 {strides = array<i32>} : memref<2x32xf32, #tpu.memory_space<vmem>>, vector<1x32xf32>,
    %c0_131 = arith.constant 0 : index
    %c0_132 = arith.constant 0 : index
    %185 = vector.load %arg41[%c0_131, %c0_132] : memref<2x32xf32, #tpu.memory_space<vmem>>, vector<2x32xf32>
    %c0_133 = arith.constant 0 : index
    %c0_134 = arith.constant 0 : index
    %186 = vector.load %arg1[%c0_133, %c0_134] : memref<2x1xf32, #tpu.memory_space<vmem>>, vector<2x1xf32>
    %cst_135 = arith.constant 0.000000e+00 : f32
    %187 = vector.broadcast %cst_135 : f32 to vector<2x1xf32>
    %188 = arith.subf %186, %187 : vector<2x1xf32>
    %cst_136 = arith.constant 1.000000e+01 : f32
    %189 = vector.broadcast %cst_136 : f32 to vector<2x1xf32>
    %190 = arith.divf %188, %189 : vector<2x1xf32>
    %cst_137 = arith.constant 2.000000e+00 : f32
    %191 = vector.broadcast %cst_137 : f32 to vector<2x1xf32>
    %192 = arith.mulf %190, %191 : vector<2x1xf32>
    %cst_138 = arith.constant 1.000000e+00 : f32
    %193 = vector.broadcast %cst_138 : f32 to vector<2x1xf32>
    %194 = arith.subf %192, %193 : vector<2x1xf32>
    %c0_139 = arith.constant 0 : index
    %c0_140 = arith.constant 0 : index
    %195 = vector.load %arg14[%c0_139, %c0_140] : memref<1x32xf32, #tpu.memory_space<vmem>>, vector<1x32xf32>
    %196 = vector.broadcast %194 : vector<2x1xf32> to vector<2x32xf32>
    %197 = vector.broadcast %195 : vector<1x32xf32> to vector<2x32xf32>
    %198 = arith.mulf %196, %197 : vector<2x32xf32>
    %c0_141 = arith.constant 0 : index
    %c0_142 = arith.constant 0 : index
    %199 = vector.load %arg15[%c0_141, %c0_142] : memref<1x32xf32, #tpu.memory_space<vmem>>, vector<1x32xf32>
    %200 = vector.broadcast %199 : vector<1x32xf32> to vector<2x32xf32>
    %201 = arith.addf %198, %200 : vector<2x32xf32>
    %cst_143 = arith.constant 0.000000e+00 : f32
    %202 = vector.broadcast %cst_143 : f32 to vector<2x32xf32>
    %203 = arith.cmpf ogt, %201, %202 : vector<2x32xf32>
    %cst_144 = arith.constant 0.00999999977 : f32
    %204 = vector.broadcast %cst_144 : f32 to vector<2x32xf32>
    %205 = arith.mulf %204, %201 : vector<2x32xf32>
    %206 = arith.select %203, %201, %205 : vector<2x32xi1>, vector<2x32xf32>
    %c0_145 = arith.constant 0 : index
    %c0_146 = arith.constant 0 : index
    %207 = vector.load %arg2[%c0_145, %c0_146] : memref<2x2xf32, #tpu.memory_space<vmem>>, vector<2x2xf32>
    %c0_147 = arith.constant 0 : index
    %c0_148 = arith.constant 0 : index
    %208 = vector.load %arg16[%c0_147, %c0_148] : memref<2x32xbf16, #tpu.memory_space<vmem>>, vector<2x32xbf16>
    %209 = arith.truncf %207 : vector<2x2xf32> to vector<2x2xbf16>
    %cst_149 = arith.constant dense<0.000000e+00> : vector<2x32xf32>
    %210 = tpu.matmul %209, %208, %cst_149 {dimension_numbers = #tpu.dot_dimension_numbers<[1], [0], [0], [1], [0, 0, 1, 1], [], []>} : vector<2x2xbf16>, vector<2x32xbf16>, vector<2x32xf32> -> vector<2x32xf32>
    %c0_150 = arith.constant 0 : index
    %c0_151 = arith.constant 0 : index
    %211 = vector.load %arg17[%c0_150, %c0_151] : memref<1x32xf32, #tpu.memory_space<vmem>>, vector<1x32xf32>
    %212 = vector.broadcast %211 : vector<1x32xf32> to vector<2x32xf32>
    %213 = arith.addf %210, %212 : vector<2x32xf32>
    %cst_152 = arith.constant 0.000000e+00 : f32
    %214 = vector.broadcast %cst_152 : f32 to vector<2x32xf32>
    %215 = arith.cmpf ogt, %213, %214 : vector<2x32xf32>
    %cst_153 = arith.constant 0.00999999977 : f32
    %216 = vector.broadcast %cst_153 : f32 to vector<2x32xf32>
    %217 = arith.mulf %216, %213 : vector<2x32xf32>
    %218 = arith.select %215, %213, %217 : vector<2x32xi1>, vector<2x32xf32>
    %c0_154 = arith.constant 0 : index
    %c0_155 = arith.constant 0 : index
    %219 = vector.load %arg3[%c0_154, %c0_155] : memref<2x2xf32, #tpu.memory_space<vmem>>, vector<2x2xf32>
    %c0_156 = arith.constant 0 : index
    %c0_157 = arith.constant 0 : index
    %220 = vector.load %arg18[%c0_156, %c0_157] : memref<2x32xbf16, #tpu.memory_space<vmem>>, vector<2x32xbf16>
    %221 = arith.truncf %219 : vector<2x2xf32> to vector<2x2xbf16>
    %cst_158 = arith.constant dense<0.000000e+00> : vector<2x32xf32>
    %222 = tpu.matmul %221, %220, %cst_158 {dimension_numbers = #tpu.dot_dimension_numbers<[1], [0], [0], [1], [0, 0, 1, 1], [], []>} : vector<2x2xbf16>, vector<2x32xbf16>, vector<2x32xf32> -> vector<2x32xf32>
    %c0_159 = arith.constant 0 : index
    %c0_160 = arith.constant 0 : index
    %223 = vector.load %arg19[%c0_159, %c0_160] : memref<1x32xf32, #tpu.memory_space<vmem>>, vector<1x32xf32>
    %224 = vector.broadcast %223 : vector<1x32xf32> to vector<2x32xf32>
    %225 = arith.addf %222, %224 : vector<2x32xf32>
    %cst_161 = arith.constant 0.000000e+00 : f32
    %226 = vector.broadcast %cst_161 : f32 to vector<2x32xf32>
    %227 = arith.cmpf ogt, %225, %226 : vector<2x32xf32>
    %cst_162 = arith.constant 0.00999999977 : f32
    %228 = vector.broadcast %cst_162 : f32 to vector<2x32xf32>
    %229 = arith.mulf %228, %225 : vector<2x32xf32>
    %230 = arith.select %227, %225, %229 : vector<2x32xi1>, vector<2x32xf32>
    %c0_163 = arith.constant 0 : index
    %c0_164 = arith.constant 0 : index
    %231 = vector.load %arg20[%c0_163, %c0_164] : memref<32x128xbf16, #tpu.memory_space<vmem>>, vector<32x128xbf16>
    %232 = arith.truncf %185 : vector<2x32xf32> to vector<2x32xbf16>
    %cst_165 = arith.constant dense<0.000000e+00> : vector<2x128xf32>
    %233 = tpu.matmul %232, %231, %cst_165 {dimension_numbers = #tpu.dot_dimension_numbers<[1], [0], [0], [1], [0, 0, 1, 1], [], []>} : vector<2x32xbf16>, vector<32x128xbf16>, vector<2x128xf32> -> vector<2x128xf32>
    %c0_166 = arith.constant 0 : index
    %c0_167 = arith.constant 0 : index
    %234 = vector.load %arg21[%c0_166, %c0_167] : memref<32x128xbf16, #tpu.memory_space<vmem>>, vector<32x128xbf16>
    %235 = arith.truncf %206 : vector<2x32xf32> to vector<2x32xbf16>
    %cst_168 = arith.constant dense<0.000000e+00> : vector<2x128xf32>
    %236 = tpu.matmul %235, %234, %cst_168 {dimension_numbers = #tpu.dot_dimension_numbers<[1], [0], [0], [1], [0, 0, 1, 1], [], []>} : vector<2x32xbf16>, vector<32x128xbf16>, vector<2x128xf32> -> vector<2x128xf32>
    %237 = arith.addf %233, %236 : vector<2x128xf32>
    %c0_169 = arith.constant 0 : index
    %c0_170 = arith.constant 0 : index
    %238 = vector.load %arg22[%c0_169, %c0_170] : memref<32x128xbf16, #tpu.memory_space<vmem>>, vector<32x128xbf16>
    %239 = arith.truncf %218 : vector<2x32xf32> to vector<2x32xbf16>
    %cst_171 = arith.constant dense<0.000000e+00> : vector<2x128xf32>
    %240 = tpu.matmul %239, %238, %cst_171 {dimension_numbers = #tpu.dot_dimension_numbers<[1], [0], [0], [1], [0, 0, 1, 1], [], []>} : vector<2x32xbf16>, vector<32x128xbf16>, vector<2x128xf32> -> vector<2x128xf32>
    %241 = arith.addf %237, %240 : vector<2x128xf32>
    %c0_172 = arith.constant 0 : index
    %c0_173 = arith.constant 0 : index
    %242 = vector.load %arg4[%c0_172, %c0_173] : memref<2x32xf32, #tpu.memory_space<vmem>>, vector<2x32xf32>
    %c0_174 = arith.constant 0 : index
    %c0_175 = arith.constant 0 : index
    %243 = vector.load %arg23[%c0_174, %c0_175] : memref<32x128xbf16, #tpu.memory_space<vmem>>, vector<32x128xbf16>
    %244 = arith.truncf %242 : vector<2x32xf32> to vector<2x32xbf16>
    %cst_176 = arith.constant dense<0.000000e+00> : vector<2x128xf32>
    %245 = tpu.matmul %244, %243, %cst_176 {dimension_numbers = #tpu.dot_dimension_numbers<[1], [0], [0], [1], [0, 0, 1, 1], [], []>} : vector<2x32xbf16>, vector<32x128xbf16>, vector<2x128xf32> -> vector<2x128xf32>
    %246 = arith.addf %241, %245 : vector<2x128xf32>
    %c0_177 = arith.constant 0 : index
    %c0_178 = arith.constant 0 : index
    %247 = vector.load %arg24[%c0_177, %c0_178] : memref<1x128xf32, #tpu.memory_space<vmem>>, vector<1x128xf32>
    %248 = vector.broadcast %247 : vector<1x128xf32> to vector<2x128xf32>
    %249 = arith.addf %246, %248 : vector<2x128xf32>
    %250 = vector.extract_strided_slice %249 {offsets = [0, 0], sizes = [2, 32], strides = [1, 1]} : vector<2x128xf32> to vector<2x32xf32>
    %251 = arith.negf %250 : vector<2x32xf32>
    %252 = math.exp %251 : vector<2x32xf32>
    %cst_179 = arith.constant 1.000000e+00 : f32
    %253 = vector.broadcast %cst_179 : f32 to vector<2x32xf32>
    %254 = arith.addf %253, %252 : vector<2x32xf32>
    %255 = arith.divf %253, %254 : vector<2x32xf32>
    %256 = vector.extract_strided_slice %249 {offsets = [0, 32], sizes = [2, 32], strides = [1, 1]} : vector<2x128xf32> to vector<2x32xf32>
    %257 = arith.negf %256 : vector<2x32xf32>
    %258 = math.exp %257 : vector<2x32xf32>
    %cst_180 = arith.constant 1.000000e+00 : f32
    %259 = vector.broadcast %cst_180 : f32 to vector<2x32xf32>
    %260 = arith.addf %259, %258 : vector<2x32xf32>
    %261 = arith.divf %259, %260 : vector<2x32xf32>
    %262 = vector.extract_strided_slice %249 {offsets = [0, 64], sizes = [2, 32], strides = [1, 1]} : vector<2x128xf32> to vector<2x32xf32>
    %263 = math.tanh %262 : vector<2x32xf32>
    %264 = vector.extract_strided_slice %249 {offsets = [0, 96], sizes = [2, 32], strides = [1, 1]} : vector<2x128xf32> to vector<2x32xf32>
    %265 = arith.negf %264 : vector<2x32xf32>
    %266 = math.exp %265 : vector<2x32xf32>
    %cst_181 = arith.constant 1.000000e+00 : f32
    %267 = vector.broadcast %cst_181 : f32 to vector<2x32xf32>
    %268 = arith.addf %267, %266 : vector<2x32xf32>
    %269 = arith.divf %267, %268 : vector<2x32xf32>
    %c0_182 = arith.constant 0 : index
    %c0_183 = arith.constant 0 : index
    %270 = vector.load %arg5[%c0_182, %c0_183] : memref<2x32xf32, #tpu.memory_space<vmem>>, vector<2x32xf32>
    %271 = arith.mulf %261, %270 : vector<2x32xf32>
    %272 = arith.mulf %255, %263 : vector<2x32xf32>
    %273 = arith.addf %271, %272 : vector<2x32xf32>
    %274 = math.tanh %273 : vector<2x32xf32>
    %275 = arith.mulf %269, %274 : vector<2x32xf32>
    %cst_184 = arith.constant 0.000000e+00 : f32
    %276 = vector.broadcast %cst_184 : f32 to vector<2x32xf32>
    %277 = arith.cmpf ogt, %275, %276 : vector<2x32xf32>
    %cst_185 = arith.constant 0.00999999977 : f32
    %278 = vector.broadcast %cst_185 : f32 to vector<2x32xf32>
    %279 = arith.mulf %278, %275 : vector<2x32xf32>
    %280 = arith.select %277, %275, %279 : vector<2x32xi1>, vector<2x32xf32>
    %c0_186 = arith.constant 0 : index
    %c0_187 = arith.constant 0 : index
    %281 = vector.load %arg25[%c0_186, %c0_187] : memref<32x32xbf16, #tpu.memory_space<vmem>>, vector<32x32xbf16>
    %282 = arith.truncf %280 : vector<2x32xf32> to vector<2x32xbf16>
    %cst_188 = arith.constant dense<0.000000e+00> : vector<2x32xf32>
    %283 = tpu.matmul %282, %281, %cst_188 {dimension_numbers = #tpu.dot_dimension_numbers<[1], [0], [0], [1], [0, 0, 1, 1], [], []>} : vector<2x32xbf16>, vector<32x32xbf16>, vector<2x32xf32> -> vector<2x32xf32>
    %c0_189 = arith.constant 0 : index
    %c0_190 = arith.constant 0 : index
    %284 = vector.load %arg26[%c0_189, %c0_190] : memref<1x32xf32, #tpu.memory_space<vmem>>, vector<1x32xf32>
    %285 = vector.broadcast %284 : vector<1x32xf32> to vector<2x32xf32>
    %286 = arith.addf %283, %285 : vector<2x32xf32>
    %cst_191 = arith.constant 0.000000e+00 : f32
    %287 = vector.broadcast %cst_191 : f32 to vector<2x32xf32>
    %288 = arith.cmpf ogt, %286, %287 : vector<2x32xf32>
    %cst_192 = arith.constant 0.00999999977 : f32
    %289 = vector.broadcast %cst_192 : f32 to vector<2x32xf32>
    %290 = arith.mulf %289, %286 : vector<2x32xf32>
    %291 = arith.select %288, %286, %290 : vector<2x32xi1>, vector<2x32xf32>
    %c0_193 = arith.constant 0 : index
    %c0_194 = arith.constant 0 : index
    %292 = vector.load %arg27[%c0_193, %c0_194] : memref<32x32xbf16, #tpu.memory_space<vmem>>, vector<32x32xbf16>
    %293 = arith.truncf %291 : vector<2x32xf32> to vector<2x32xbf16>
    %cst_195 = arith.constant dense<0.000000e+00> : vector<2x32xf32>
    %294 = tpu.matmul %293, %292, %cst_195 {dimension_numbers = #tpu.dot_dimension_numbers<[1], [0], [0], [1], [0, 0, 1, 1], [], []>} : vector<2x32xbf16>, vector<32x32xbf16>, vector<2x32xf32> -> vector<2x32xf32>
    %c0_196 = arith.constant 0 : index
    %c0_197 = arith.constant 0 : index
    %295 = vector.load %arg28[%c0_196, %c0_197] : memref<1x32xf32, #tpu.memory_space<vmem>>, vector<1x32xf32>
    %296 = vector.broadcast %295 : vector<1x32xf32> to vector<2x32xf32>
    %297 = arith.addf %294, %296 : vector<2x32xf32>
    %cst_198 = arith.constant 0.000000e+00 : f32
    %298 = vector.broadcast %cst_198 : f32 to vector<2x32xf32>
    %299 = arith.cmpf ogt, %297, %298 : vector<2x32xf32>
    %cst_199 = arith.constant 0.00999999977 : f32
    %300 = vector.broadcast %cst_199 : f32 to vector<2x32xf32>
    %301 = arith.mulf %300, %297 : vector<2x32xf32>
    %302 = arith.select %299, %297, %301 : vector<2x32xi1>, vector<2x32xf32>
    %c0_200 = arith.constant 0 : index
    %c0_201 = arith.constant 0 : index
    %303 = vector.load %arg29[%c0_200, %c0_201] : memref<32x32xbf16, #tpu.memory_space<vmem>>, vector<32x32xbf16>
    %304 = arith.truncf %302 : vector<2x32xf32> to vector<2x32xbf16>
    %cst_202 = arith.constant dense<0.000000e+00> : vector<2x32xf32>
    %305 = tpu.matmul %304, %303, %cst_202 {dimension_numbers = #tpu.dot_dimension_numbers<[1], [0], [0], [1], [0, 0, 1, 1], [], []>} : vector<2x32xbf16>, vector<32x32xbf16>, vector<2x32xf32> -> vector<2x32xf32>
    %c0_203 = arith.constant 0 : index
    %c0_204 = arith.constant 0 : index
    %306 = vector.load %arg30[%c0_203, %c0_204] : memref<32x32xbf16, #tpu.memory_space<vmem>>, vector<32x32xbf16>
    %307 = arith.truncf %230 : vector<2x32xf32> to vector<2x32xbf16>
    %cst_205 = arith.constant dense<0.000000e+00> : vector<2x32xf32>
    %308 = tpu.matmul %307, %306, %cst_205 {dimension_numbers = #tpu.dot_dimension_numbers<[1], [0], [0], [1], [0, 0, 1, 1], [], []>} : vector<2x32xbf16>, vector<32x32xbf16>, vector<2x32xf32> -> vector<2x32xf32>
    %309 = arith.addf %305, %308 : vector<2x32xf32>
    %c0_206 = arith.constant 0 : index
    %c0_207 = arith.constant 0 : index
    %310 = vector.load %arg31[%c0_206, %c0_207] : memref<1x32xf32, #tpu.memory_space<vmem>>, vector<1x32xf32>
    %311 = vector.broadcast %310 : vector<1x32xf32> to vector<2x32xf32>
    %312 = arith.addf %309, %311 : vector<2x32xf32>
    %c0_208 = arith.constant 0 : index
    %c0_209 = arith.constant 0 : index
    %313 = vector.load %arg32[%c0_208, %c0_209] : memref<32x32xbf16, #tpu.memory_space<vmem>>, vector<32x32xbf16>
    %314 = arith.truncf %312 : vector<2x32xf32> to vector<2x32xbf16>
    %cst_210 = arith.constant dense<0.000000e+00> : vector<2x32xf32>
    %315 = tpu.matmul %314, %313, %cst_210 {dimension_numbers = #tpu.dot_dimension_numbers<[1], [0], [0], [1], [0, 0, 1, 1], [], []>} : vector<2x32xbf16>, vector<32x32xbf16>, vector<2x32xf32> -> vector<2x32xf32>
    %c0_211 = arith.constant 0 : index
    %c0_212 = arith.constant 0 : index
    %316 = vector.load %arg33[%c0_211, %c0_212] : memref<1x32xf32, #tpu.memory_space<vmem>>, vector<1x32xf32>
    %317 = vector.broadcast %316 : vector<1x32xf32> to vector<2x32xf32>
    %318 = arith.addf %315, %317 : vector<2x32xf32>
    %cst_213 = arith.constant 0.000000e+00 : f32
    %319 = vector.broadcast %cst_213 : f32 to vector<2x32xf32>
    %320 = arith.cmpf ogt, %318, %319 : vector<2x32xf32>
    %cst_214 = arith.constant 0.00999999977 : f32
    %321 = vector.broadcast %cst_214 : f32 to vector<2x32xf32>
    %322 = arith.mulf %321, %318 : vector<2x32xf32>
    %323 = arith.select %320, %318, %322 : vector<2x32xi1>, vector<2x32xf32>
    %c0_215 = arith.constant 0 : index
    %c0_216 = arith.constant 0 : index
    %324 = vector.load %arg34[%c0_215, %c0_216] : memref<32x512xbf16, #tpu.memory_space<vmem>>, vector<32x512xbf16>
    %325 = arith.truncf %323 : vector<2x32xf32> to vector<2x32xbf16>
    %cst_217 = arith.constant dense<0.000000e+00> : vector<2x512xf32>
    %326 = tpu.matmul %325, %324, %cst_217 {dimension_numbers = #tpu.dot_dimension_numbers<[1], [0], [0], [1], [0, 0, 1, 1], [], []>} : vector<2x32xbf16>, vector<32x512xbf16>, vector<2x512xf32> -> vector<2x512xf32>
    %c0_218 = arith.constant 0 : index
    %c0_219 = arith.constant 0 : index
    %327 = vector.load %arg35[%c0_218, %c0_219] : memref<1x512xf32, #tpu.memory_space<vmem>>, vector<1x512xf32>
    %328 = vector.broadcast %327 : vector<1x512xf32> to vector<2x512xf32>
    %329 = arith.addf %326, %328 : vector<2x512xf32>
    %cst_220 = arith.constant 0.000000e+00 : f32
    %330 = vector.broadcast %cst_220 : f32 to vector<2x512xf32>
    %331 = arith.cmpf ogt, %329, %330 : vector<2x512xf32>
    %cst_221 = arith.constant 0.00999999977 : f32
    %332 = vector.broadcast %cst_221 : f32 to vector<2x512xf32>
    %333 = arith.mulf %332, %329 : vector<2x512xf32>
    %334 = arith.select %331, %329, %333 : vector<2x512xi1>, vector<2x512xf32>
    %c0_222 = arith.constant 0 : index
    %c0_223 = arith.constant 0 : index
    %335 = vector.load %arg37[%c0_222, %c0_223] : memref<2x512xf32, #tpu.memory_space<vmem>>, vector<2x512xf32>
    tpu.vector_store %arg37[%c0_222, %c0_223], %334 {strides = array<i32>} : memref<2x512xf32, #tpu.memory_space<vmem>>, vector<2x512xf32>,
    %c0_224 = arith.constant 0 : index
    %c0_225 = arith.constant 0 : index
    %336 = vector.load %arg38[%c0_224, %c0_225] : memref<2x32xf32, #tpu.memory_space<vmem>>, vector<2x32xf32>
    tpu.vector_store %arg38[%c0_224, %c0_225], %275 {strides = array<i32>} : memref<2x32xf32, #tpu.memory_space<vmem>>, vector<2x32xf32>,
    %c0_226 = arith.constant 0 : index
    %c0_227 = arith.constant 0 : index
    %337 = vector.load %arg39[%c0_226, %c0_227] : memref<2x32xf32, #tpu.memory_space<vmem>>, vector<2x32xf32>
    tpu.vector_store %arg39[%c0_226, %c0_227], %273 {strides = array<i32>} : memref<2x32xf32, #tpu.memory_space<vmem>>, vector<2x32xf32>,
    %c0_228 = arith.constant 0 : index
    %c0_229 = arith.constant 0 : index
    %338 = vector.load %arg36[%c0_228, %c0_229] : memref<32x1xf32, #tpu.memory_space<vmem>>, vector<32x1xf32>
    %cst_230 = arith.constant dense<0.000000e+00> : vector<2x1xf32>
    %339 = tpu.matmul %312, %338, %cst_230 {dimension_numbers = #tpu.dot_dimension_numbers<[1], [0], [0], [1], [0, 0, 1, 1], [], []>} : vector<2x32xf32>, vector<32x1xf32>, vector<2x1xf32> -> vector<2x1xf32>
    %c0_231 = arith.constant 0 : index
    %c0_232 = arith.constant 0 : index
    %340 = vector.load %arg40[%c0_231, %c0_232] : memref<2x1xf32, #tpu.memory_space<vmem>>, vector<2x1xf32>
    tpu.vector_store %arg40[%c0_231, %c0_232], %339 {strides = array<i32>} : memref<2x1xf32, #tpu.memory_space<vmem>>, vector<2x1xf32>,
    return
  }
}

module attributes {stable_mosaic.version = 11 : i64} {
  func.func @_decoder_kernel(%arg0: memref<2x6x192xf32, #tpu.memory_space<vmem>>, %arg1: memref<3x192x128xbf16, #tpu.memory_space<vmem>>, %arg2: memref<1x128xf32, #tpu.memory_space<vmem>>, %arg3: memref<10x4xf32, #tpu.memory_space<vmem>>, %arg4: memref<128x320xf32, #tpu.memory_space<vmem>>, %arg5: memref<3x320x128xbf16, #tpu.memory_space<vmem>>, %arg6: memref<1x128xf32, #tpu.memory_space<vmem>>, %arg7: memref<16x8xf32, #tpu.memory_space<vmem>>, %arg8: memref<128x256xf32, #tpu.memory_space<vmem>>, %arg9: memref<256x64xbf16, #tpu.memory_space<vmem>>, %arg10: memref<1x64xf32, #tpu.memory_space<vmem>>, %arg11: memref<2x16x64xf32, #tpu.memory_space<vmem>>) attributes {dimension_semantics = [], scalar_prefetch = 0 : i64, scratch_operands = 0 : i64, tpu.core_type = #tpu.core_type<tc>} {
    %c0 = arith.constant 0 : index
    %c0_0 = arith.constant 0 : index
    %0 = vector.load %arg2[%c0, %c0_0] : memref<1x128xf32, #tpu.memory_space<vmem>>, vector<1x128xf32>
    %c0_1 = arith.constant 0 : index
    %c0_2 = arith.constant 0 : index
    %1 = vector.load %arg6[%c0_1, %c0_2] : memref<1x128xf32, #tpu.memory_space<vmem>>, vector<1x128xf32>
    %c0_3 = arith.constant 0 : index
    %c0_4 = arith.constant 0 : index
    %2 = vector.load %arg10[%c0_3, %c0_4] : memref<1x64xf32, #tpu.memory_space<vmem>>, vector<1x64xf32>
    %c0_5 = arith.constant 0 : index
    %c0_6 = arith.constant 0 : index
    %3 = vector.load %arg3[%c0_5, %c0_6] : memref<10x4xf32, #tpu.memory_space<vmem>>, vector<10x4xf32>
    %c0_7 = arith.constant 0 : index
    %c0_8 = arith.constant 0 : index
    %4 = vector.load %arg4[%c0_7, %c0_8] : memref<128x320xf32, #tpu.memory_space<vmem>>, vector<128x320xf32>
    %c0_9 = arith.constant 0 : index
    %c0_10 = arith.constant 0 : index
    %5 = vector.load %arg7[%c0_9, %c0_10] : memref<16x8xf32, #tpu.memory_space<vmem>>, vector<16x8xf32>
    %c0_11 = arith.constant 0 : index
    %c0_12 = arith.constant 0 : index
    %6 = vector.load %arg8[%c0_11, %c0_12] : memref<128x256xf32, #tpu.memory_space<vmem>>, vector<128x256xf32>
    %c0_13 = arith.constant 0 : index
    %c0_14 = arith.constant 0 : index
    %7 = vector.load %arg9[%c0_13, %c0_14] : memref<256x64xbf16, #tpu.memory_space<vmem>>, vector<256x64xbf16>
    %c0_15 = arith.constant 0 : index
    %c0_16 = arith.constant 0 : index
    %c0_17 = arith.constant 0 : index
    %8 = vector.load %arg0[%c0_15, %c0_16, %c0_17] : memref<2x6x192xf32, #tpu.memory_space<vmem>>, vector<1x4x192xf32>
    %9 = vector.shape_cast %8 : vector<1x4x192xf32> to vector<4x192xf32>
    %c0_18 = arith.constant 0 : index
    %c0_19 = arith.constant 0 : index
    %c0_20 = arith.constant 0 : index
    %10 = vector.load %arg1[%c0_18, %c0_19, %c0_20] : memref<3x192x128xbf16, #tpu.memory_space<vmem>>, vector<1x192x128xbf16>
    %11 = vector.shape_cast %10 : vector<1x192x128xbf16> to vector<192x128xbf16>
    %12 = arith.truncf %9 : vector<4x192xf32> to vector<4x192xbf16>
    %cst = arith.constant dense<0.000000e+00> : vector<4x128xf32>
    %13 = tpu.matmul %12, %11, %cst {dimension_numbers = #tpu.dot_dimension_numbers<[1], [0], [0], [1], [0, 0, 1, 1], [], []>} : vector<4x192xbf16>, vector<192x128xbf16>, vector<4x128xf32> -> vector<4x128xf32>
    %14 = vector.broadcast %0 : vector<1x128xf32> to vector<4x128xf32>
    %15 = arith.addf %14, %13 : vector<4x128xf32>
    %c0_21 = arith.constant 0 : index
    %c1 = arith.constant 1 : index
    %c0_22 = arith.constant 0 : index
    %16 = vector.load %arg0[%c0_21, %c1, %c0_22] : memref<2x6x192xf32, #tpu.memory_space<vmem>>, vector<1x4x192xf32>
    %17 = vector.shape_cast %16 : vector<1x4x192xf32> to vector<4x192xf32>
    %c1_23 = arith.constant 1 : index
    %c0_24 = arith.constant 0 : index
    %c0_25 = arith.constant 0 : index
    %18 = vector.load %arg1[%c1_23, %c0_24, %c0_25] : memref<3x192x128xbf16, #tpu.memory_space<vmem>>, vector<1x192x128xbf16>
    %19 = vector.shape_cast %18 : vector<1x192x128xbf16> to vector<192x128xbf16>
    %20 = arith.truncf %17 : vector<4x192xf32> to vector<4x192xbf16>
    %cst_26 = arith.constant dense<0.000000e+00> : vector<4x128xf32>
    %21 = tpu.matmul %20, %19, %cst_26 {dimension_numbers = #tpu.dot_dimension_numbers<[1], [0], [0], [1], [0, 0, 1, 1], [], []>} : vector<4x192xbf16>, vector<192x128xbf16>, vector<4x128xf32> -> vector<4x128xf32>
    %22 = arith.addf %15, %21 : vector<4x128xf32>
    %c0_27 = arith.constant 0 : index
    %c2 = arith.constant 2 : index
    %c0_28 = arith.constant 0 : index
    %23 = vector.load %arg0[%c0_27, %c2, %c0_28] : memref<2x6x192xf32, #tpu.memory_space<vmem>>, vector<1x4x192xf32>
    %24 = vector.shape_cast %23 : vector<1x4x192xf32> to vector<4x192xf32>
    %c2_29 = arith.constant 2 : index
    %c0_30 = arith.constant 0 : index
    %c0_31 = arith.constant 0 : index
    %25 = vector.load %arg1[%c2_29, %c0_30, %c0_31] : memref<3x192x128xbf16, #tpu.memory_space<vmem>>, vector<1x192x128xbf16>
    %26 = vector.shape_cast %25 : vector<1x192x128xbf16> to vector<192x128xbf16>
    %27 = arith.truncf %24 : vector<4x192xf32> to vector<4x192xbf16>
    %cst_32 = arith.constant dense<0.000000e+00> : vector<4x128xf32>
    %28 = tpu.matmul %27, %26, %cst_32 {dimension_numbers = #tpu.dot_dimension_numbers<[1], [0], [0], [1], [0, 0, 1, 1], [], []>} : vector<4x192xbf16>, vector<192x128xbf16>, vector<4x128xf32> -> vector<4x128xf32>
    %29 = arith.addf %22, %28 : vector<4x128xf32>
    %cst_33 = arith.constant 0.000000e+00 : f32
    %30 = vector.broadcast %cst_33 : f32 to vector<4x128xf32>
    %31 = arith.cmpf ogt, %29, %30 : vector<4x128xf32>
    %cst_34 = arith.constant 0.00999999977 : f32
    %32 = vector.broadcast %cst_34 : f32 to vector<4x128xf32>
    %33 = arith.mulf %32, %29 : vector<4x128xf32>
    %34 = arith.select %31, %29, %33 : vector<4x128xi1>, vector<4x128xf32>
    %cst_35 = arith.constant dense<0.000000e+00> : vector<10x128xf32>
    %35 = tpu.matmul %3, %34, %cst_35 {dimension_numbers = #tpu.dot_dimension_numbers<[1], [0], [0], [1], [0, 0, 1, 1], [], []>} : vector<10x4xf32>, vector<4x128xf32>, vector<10x128xf32> -> vector<10x128xf32>
    %cst_36 = arith.constant dense<0.000000e+00> : vector<10x320xf32>
    %36 = tpu.matmul %35, %4, %cst_36 {dimension_numbers = #tpu.dot_dimension_numbers<[1], [0], [0], [1], [0, 0, 1, 1], [], []>} : vector<10x128xf32>, vector<128x320xf32>, vector<10x320xf32> -> vector<10x320xf32>
    %37 = vector.extract_strided_slice %36 {offsets = [0, 0], sizes = [8, 320], strides = [1, 1]} : vector<10x320xf32> to vector<8x320xf32>
    %c0_37 = arith.constant 0 : index
    %c0_38 = arith.constant 0 : index
    %c0_39 = arith.constant 0 : index
    %38 = vector.load %arg5[%c0_37, %c0_38, %c0_39] : memref<3x320x128xbf16, #tpu.memory_space<vmem>>, vector<1x320x128xbf16>
    %39 = vector.shape_cast %38 : vector<1x320x128xbf16> to vector<320x128xbf16>
    %40 = arith.truncf %37 : vector<8x320xf32> to vector<8x320xbf16>
    %cst_40 = arith.constant dense<0.000000e+00> : vector<8x128xf32>
    %41 = tpu.matmul %40, %39, %cst_40 {dimension_numbers = #tpu.dot_dimension_numbers<[1], [0], [0], [1], [0, 0, 1, 1], [], []>} : vector<8x320xbf16>, vector<320x128xbf16>, vector<8x128xf32> -> vector<8x128xf32>
    %42 = vector.broadcast %1 : vector<1x128xf32> to vector<8x128xf32>
    %43 = arith.addf %42, %41 : vector<8x128xf32>
    %44 = vector.extract_strided_slice %36 {offsets = [1, 0], sizes = [8, 320], strides = [1, 1]} : vector<10x320xf32> to vector<8x320xf32>
    %c1_41 = arith.constant 1 : index
    %c0_42 = arith.constant 0 : index
    %c0_43 = arith.constant 0 : index
    %45 = vector.load %arg5[%c1_41, %c0_42, %c0_43] : memref<3x320x128xbf16, #tpu.memory_space<vmem>>, vector<1x320x128xbf16>
    %46 = vector.shape_cast %45 : vector<1x320x128xbf16> to vector<320x128xbf16>
    %47 = arith.truncf %44 : vector<8x320xf32> to vector<8x320xbf16>
    %cst_44 = arith.constant dense<0.000000e+00> : vector<8x128xf32>
    %48 = tpu.matmul %47, %46, %cst_44 {dimension_numbers = #tpu.dot_dimension_numbers<[1], [0], [0], [1], [0, 0, 1, 1], [], []>} : vector<8x320xbf16>, vector<320x128xbf16>, vector<8x128xf32> -> vector<8x128xf32>
    %49 = arith.addf %43, %48 : vector<8x128xf32>
    %50 = vector.extract_strided_slice %36 {offsets = [2, 0], sizes = [8, 320], strides = [1, 1]} : vector<10x320xf32> to vector<8x320xf32>
    %c2_45 = arith.constant 2 : index
    %c0_46 = arith.constant 0 : index
    %c0_47 = arith.constant 0 : index
    %51 = vector.load %arg5[%c2_45, %c0_46, %c0_47] : memref<3x320x128xbf16, #tpu.memory_space<vmem>>, vector<1x320x128xbf16>
    %52 = vector.shape_cast %51 : vector<1x320x128xbf16> to vector<320x128xbf16>
    %53 = arith.truncf %50 : vector<8x320xf32> to vector<8x320xbf16>
    %cst_48 = arith.constant dense<0.000000e+00> : vector<8x128xf32>
    %54 = tpu.matmul %53, %52, %cst_48 {dimension_numbers = #tpu.dot_dimension_numbers<[1], [0], [0], [1], [0, 0, 1, 1], [], []>} : vector<8x320xbf16>, vector<320x128xbf16>, vector<8x128xf32> -> vector<8x128xf32>
    %55 = arith.addf %49, %54 : vector<8x128xf32>
    %cst_49 = arith.constant 0.000000e+00 : f32
    %56 = vector.broadcast %cst_49 : f32 to vector<8x128xf32>
    %57 = arith.cmpf ogt, %55, %56 : vector<8x128xf32>
    %cst_50 = arith.constant 0.00999999977 : f32
    %58 = vector.broadcast %cst_50 : f32 to vector<8x128xf32>
    %59 = arith.mulf %58, %55 : vector<8x128xf32>
    %60 = arith.select %57, %55, %59 : vector<8x128xi1>, vector<8x128xf32>
    %cst_51 = arith.constant dense<0.000000e+00> : vector<16x128xf32>
    %61 = tpu.matmul %5, %60, %cst_51 {dimension_numbers = #tpu.dot_dimension_numbers<[1], [0], [0], [1], [0, 0, 1, 1], [], []>} : vector<16x8xf32>, vector<8x128xf32>, vector<16x128xf32> -> vector<16x128xf32>
    %cst_52 = arith.constant dense<0.000000e+00> : vector<16x256xf32>
    %62 = tpu.matmul %61, %6, %cst_52 {dimension_numbers = #tpu.dot_dimension_numbers<[1], [0], [0], [1], [0, 0, 1, 1], [], []>} : vector<16x128xf32>, vector<128x256xf32>, vector<16x256xf32> -> vector<16x256xf32>
    %63 = arith.truncf %62 : vector<16x256xf32> to vector<16x256xbf16>
    %cst_53 = arith.constant dense<0.000000e+00> : vector<16x64xf32>
    %64 = tpu.matmul %63, %7, %cst_53 {dimension_numbers = #tpu.dot_dimension_numbers<[1], [0], [0], [1], [0, 0, 1, 1], [], []>} : vector<16x256xbf16>, vector<256x64xbf16>, vector<16x64xf32> -> vector<16x64xf32>
    %65 = vector.broadcast %2 : vector<1x64xf32> to vector<16x64xf32>
    %66 = arith.addf %64, %65 : vector<16x64xf32>
    %cst_54 = arith.constant -1.000000e+00 : f32
    %cst_55 = arith.constant 1.000000e+00 : f32
    %67 = vector.broadcast %cst_54 : f32 to vector<16x64xf32>
    %68 = arith.maximumf %67, %66 : vector<16x64xf32>
    %69 = vector.broadcast %cst_55 : f32 to vector<16x64xf32>
    %70 = arith.minimumf %69, %68 : vector<16x64xf32>
    %c0_56 = arith.constant 0 : index
    %c0_57 = arith.constant 0 : index
    %c0_58 = arith.constant 0 : index
    %71 = vector.load %arg11[%c0_56, %c0_57, %c0_58] : memref<2x16x64xf32, #tpu.memory_space<vmem>>, vector<1x16x64xf32>
    %72 = vector.shape_cast %71 : vector<1x16x64xf32> to vector<16x64xf32>
    %73 = vector.shape_cast %70 : vector<16x64xf32> to vector<1x16x64xf32>
    tpu.vector_store %arg11[%c0_56, %c0_57, %c0_58], %73 {strides = array<i32>} : memref<2x16x64xf32, #tpu.memory_space<vmem>>, vector<1x16x64xf32>,
    %c1_59 = arith.constant 1 : index
    %c0_60 = arith.constant 0 : index
    %c0_61 = arith.constant 0 : index
    %74 = vector.load %arg0[%c1_59, %c0_60, %c0_61] : memref<2x6x192xf32, #tpu.memory_space<vmem>>, vector<1x4x192xf32>
    %75 = vector.shape_cast %74 : vector<1x4x192xf32> to vector<4x192xf32>
    %c0_62 = arith.constant 0 : index
    %c0_63 = arith.constant 0 : index
    %c0_64 = arith.constant 0 : index
    %76 = vector.load %arg1[%c0_62, %c0_63, %c0_64] : memref<3x192x128xbf16, #tpu.memory_space<vmem>>, vector<1x192x128xbf16>
    %77 = vector.shape_cast %76 : vector<1x192x128xbf16> to vector<192x128xbf16>
    %78 = arith.truncf %75 : vector<4x192xf32> to vector<4x192xbf16>
    %cst_65 = arith.constant dense<0.000000e+00> : vector<4x128xf32>
    %79 = tpu.matmul %78, %77, %cst_65 {dimension_numbers = #tpu.dot_dimension_numbers<[1], [0], [0], [1], [0, 0, 1, 1], [], []>} : vector<4x192xbf16>, vector<192x128xbf16>, vector<4x128xf32> -> vector<4x128xf32>
    %80 = vector.broadcast %0 : vector<1x128xf32> to vector<4x128xf32>
    %81 = arith.addf %80, %79 : vector<4x128xf32>
    %c1_66 = arith.constant 1 : index
    %c1_67 = arith.constant 1 : index
    %c0_68 = arith.constant 0 : index
    %82 = vector.load %arg0[%c1_66, %c1_67, %c0_68] : memref<2x6x192xf32, #tpu.memory_space<vmem>>, vector<1x4x192xf32>
    %83 = vector.shape_cast %82 : vector<1x4x192xf32> to vector<4x192xf32>
    %c1_69 = arith.constant 1 : index
    %c0_70 = arith.constant 0 : index
    %c0_71 = arith.constant 0 : index
    %84 = vector.load %arg1[%c1_69, %c0_70, %c0_71] : memref<3x192x128xbf16, #tpu.memory_space<vmem>>, vector<1x192x128xbf16>
    %85 = vector.shape_cast %84 : vector<1x192x128xbf16> to vector<192x128xbf16>
    %86 = arith.truncf %83 : vector<4x192xf32> to vector<4x192xbf16>
    %cst_72 = arith.constant dense<0.000000e+00> : vector<4x128xf32>
    %87 = tpu.matmul %86, %85, %cst_72 {dimension_numbers = #tpu.dot_dimension_numbers<[1], [0], [0], [1], [0, 0, 1, 1], [], []>} : vector<4x192xbf16>, vector<192x128xbf16>, vector<4x128xf32> -> vector<4x128xf32>
    %88 = arith.addf %81, %87 : vector<4x128xf32>
    %c1_73 = arith.constant 1 : index
    %c2_74 = arith.constant 2 : index
    %c0_75 = arith.constant 0 : index
    %89 = vector.load %arg0[%c1_73, %c2_74, %c0_75] : memref<2x6x192xf32, #tpu.memory_space<vmem>>, vector<1x4x192xf32>
    %90 = vector.shape_cast %89 : vector<1x4x192xf32> to vector<4x192xf32>
    %c2_76 = arith.constant 2 : index
    %c0_77 = arith.constant 0 : index
    %c0_78 = arith.constant 0 : index
    %91 = vector.load %arg1[%c2_76, %c0_77, %c0_78] : memref<3x192x128xbf16, #tpu.memory_space<vmem>>, vector<1x192x128xbf16>
    %92 = vector.shape_cast %91 : vector<1x192x128xbf16> to vector<192x128xbf16>
    %93 = arith.truncf %90 : vector<4x192xf32> to vector<4x192xbf16>
    %cst_79 = arith.constant dense<0.000000e+00> : vector<4x128xf32>
    %94 = tpu.matmul %93, %92, %cst_79 {dimension_numbers = #tpu.dot_dimension_numbers<[1], [0], [0], [1], [0, 0, 1, 1], [], []>} : vector<4x192xbf16>, vector<192x128xbf16>, vector<4x128xf32> -> vector<4x128xf32>
    %95 = arith.addf %88, %94 : vector<4x128xf32>
    %cst_80 = arith.constant 0.000000e+00 : f32
    %96 = vector.broadcast %cst_80 : f32 to vector<4x128xf32>
    %97 = arith.cmpf ogt, %95, %96 : vector<4x128xf32>
    %cst_81 = arith.constant 0.00999999977 : f32
    %98 = vector.broadcast %cst_81 : f32 to vector<4x128xf32>
    %99 = arith.mulf %98, %95 : vector<4x128xf32>
    %100 = arith.select %97, %95, %99 : vector<4x128xi1>, vector<4x128xf32>
    %cst_82 = arith.constant dense<0.000000e+00> : vector<10x128xf32>
    %101 = tpu.matmul %3, %100, %cst_82 {dimension_numbers = #tpu.dot_dimension_numbers<[1], [0], [0], [1], [0, 0, 1, 1], [], []>} : vector<10x4xf32>, vector<4x128xf32>, vector<10x128xf32> -> vector<10x128xf32>
    %cst_83 = arith.constant dense<0.000000e+00> : vector<10x320xf32>
    %102 = tpu.matmul %101, %4, %cst_83 {dimension_numbers = #tpu.dot_dimension_numbers<[1], [0], [0], [1], [0, 0, 1, 1], [], []>} : vector<10x128xf32>, vector<128x320xf32>, vector<10x320xf32> -> vector<10x320xf32>
    %103 = vector.extract_strided_slice %102 {offsets = [0, 0], sizes = [8, 320], strides = [1, 1]} : vector<10x320xf32> to vector<8x320xf32>
    %c0_84 = arith.constant 0 : index
    %c0_85 = arith.constant 0 : index
    %c0_86 = arith.constant 0 : index
    %104 = vector.load %arg5[%c0_84, %c0_85, %c0_86] : memref<3x320x128xbf16, #tpu.memory_space<vmem>>, vector<1x320x128xbf16>
    %105 = vector.shape_cast %104 : vector<1x320x128xbf16> to vector<320x128xbf16>
    %106 = arith.truncf %103 : vector<8x320xf32> to vector<8x320xbf16>
    %cst_87 = arith.constant dense<0.000000e+00> : vector<8x128xf32>
    %107 = tpu.matmul %106, %105, %cst_87 {dimension_numbers = #tpu.dot_dimension_numbers<[1], [0], [0], [1], [0, 0, 1, 1], [], []>} : vector<8x320xbf16>, vector<320x128xbf16>, vector<8x128xf32> -> vector<8x128xf32>
    %108 = vector.broadcast %1 : vector<1x128xf32> to vector<8x128xf32>
    %109 = arith.addf %108, %107 : vector<8x128xf32>
    %110 = vector.extract_strided_slice %102 {offsets = [1, 0], sizes = [8, 320], strides = [1, 1]} : vector<10x320xf32> to vector<8x320xf32>
    %c1_88 = arith.constant 1 : index
    %c0_89 = arith.constant 0 : index
    %c0_90 = arith.constant 0 : index
    %111 = vector.load %arg5[%c1_88, %c0_89, %c0_90] : memref<3x320x128xbf16, #tpu.memory_space<vmem>>, vector<1x320x128xbf16>
    %112 = vector.shape_cast %111 : vector<1x320x128xbf16> to vector<320x128xbf16>
    %113 = arith.truncf %110 : vector<8x320xf32> to vector<8x320xbf16>
    %cst_91 = arith.constant dense<0.000000e+00> : vector<8x128xf32>
    %114 = tpu.matmul %113, %112, %cst_91 {dimension_numbers = #tpu.dot_dimension_numbers<[1], [0], [0], [1], [0, 0, 1, 1], [], []>} : vector<8x320xbf16>, vector<320x128xbf16>, vector<8x128xf32> -> vector<8x128xf32>
    %115 = arith.addf %109, %114 : vector<8x128xf32>
    %116 = vector.extract_strided_slice %102 {offsets = [2, 0], sizes = [8, 320], strides = [1, 1]} : vector<10x320xf32> to vector<8x320xf32>
    %c2_92 = arith.constant 2 : index
    %c0_93 = arith.constant 0 : index
    %c0_94 = arith.constant 0 : index
    %117 = vector.load %arg5[%c2_92, %c0_93, %c0_94] : memref<3x320x128xbf16, #tpu.memory_space<vmem>>, vector<1x320x128xbf16>
    %118 = vector.shape_cast %117 : vector<1x320x128xbf16> to vector<320x128xbf16>
    %119 = arith.truncf %116 : vector<8x320xf32> to vector<8x320xbf16>
    %cst_95 = arith.constant dense<0.000000e+00> : vector<8x128xf32>
    %120 = tpu.matmul %119, %118, %cst_95 {dimension_numbers = #tpu.dot_dimension_numbers<[1], [0], [0], [1], [0, 0, 1, 1], [], []>} : vector<8x320xbf16>, vector<320x128xbf16>, vector<8x128xf32> -> vector<8x128xf32>
    %121 = arith.addf %115, %120 : vector<8x128xf32>
    %cst_96 = arith.constant 0.000000e+00 : f32
    %122 = vector.broadcast %cst_96 : f32 to vector<8x128xf32>
    %123 = arith.cmpf ogt, %121, %122 : vector<8x128xf32>
    %cst_97 = arith.constant 0.00999999977 : f32
    %124 = vector.broadcast %cst_97 : f32 to vector<8x128xf32>
    %125 = arith.mulf %124, %121 : vector<8x128xf32>
    %126 = arith.select %123, %121, %125 : vector<8x128xi1>, vector<8x128xf32>
    %cst_98 = arith.constant dense<0.000000e+00> : vector<16x128xf32>
    %127 = tpu.matmul %5, %126, %cst_98 {dimension_numbers = #tpu.dot_dimension_numbers<[1], [0], [0], [1], [0, 0, 1, 1], [], []>} : vector<16x8xf32>, vector<8x128xf32>, vector<16x128xf32> -> vector<16x128xf32>
    %cst_99 = arith.constant dense<0.000000e+00> : vector<16x256xf32>
    %128 = tpu.matmul %127, %6, %cst_99 {dimension_numbers = #tpu.dot_dimension_numbers<[1], [0], [0], [1], [0, 0, 1, 1], [], []>} : vector<16x128xf32>, vector<128x256xf32>, vector<16x256xf32> -> vector<16x256xf32>
    %129 = arith.truncf %128 : vector<16x256xf32> to vector<16x256xbf16>
    %cst_100 = arith.constant dense<0.000000e+00> : vector<16x64xf32>
    %130 = tpu.matmul %129, %7, %cst_100 {dimension_numbers = #tpu.dot_dimension_numbers<[1], [0], [0], [1], [0, 0, 1, 1], [], []>} : vector<16x256xbf16>, vector<256x64xbf16>, vector<16x64xf32> -> vector<16x64xf32>
    %131 = vector.broadcast %2 : vector<1x64xf32> to vector<16x64xf32>
    %132 = arith.addf %130, %131 : vector<16x64xf32>
    %cst_101 = arith.constant -1.000000e+00 : f32
    %cst_102 = arith.constant 1.000000e+00 : f32
    %133 = vector.broadcast %cst_101 : f32 to vector<16x64xf32>
    %134 = arith.maximumf %133, %132 : vector<16x64xf32>
    %135 = vector.broadcast %cst_102 : f32 to vector<16x64xf32>
    %136 = arith.minimumf %135, %134 : vector<16x64xf32>
    %c1_103 = arith.constant 1 : index
    %c0_104 = arith.constant 0 : index
    %c0_105 = arith.constant 0 : index
    %137 = vector.load %arg11[%c1_103, %c0_104, %c0_105] : memref<2x16x64xf32, #tpu.memory_space<vmem>>, vector<1x16x64xf32>
    %138 = vector.shape_cast %137 : vector<1x16x64xf32> to vector<16x64xf32>
    %139 = vector.shape_cast %136 : vector<16x64xf32> to vector<1x16x64xf32>
    tpu.vector_store %arg11[%c1_103, %c0_104, %c0_105], %139 {strides = array<i32>} : memref<2x16x64xf32, #tpu.memory_space<vmem>>, vector<1x16x64xf32>,
    return
  }
}

</mosaic_0001>

<llo_original>
// kernel: transitioner_forward.3
$region0: #{transitioner_forward.3}
  #allocation0 [shape = 'u32[]', space=smem, size = 0x4, offset = 0x4, fixed_abs, tag = 'smem constant byte address 0x4 - core index']
  #allocation1 [shape = 'u32[144,128]{1,0:T(1,128)}', space=vmem, size = 0x12000, scoped, tag = 'internal scratch']
  %s0 = inlined_call_operand.vmem [shape: f32[2,6,192], index: 0, kind: input, shape index: {}]
  %s1 = inlined_call_operand.vmem [shape: bf16[3,192,128], index: 1, kind: input, shape index: {}]
  %s2 = inlined_call_operand.vmem [shape: f32[1,128], index: 2, kind: input, shape index: {}]
  %s3 = inlined_call_operand.vmem [shape: f32[10,4], index: 3, kind: input, shape index: {}]
  %s4 = inlined_call_operand.vmem [shape: f32[128,320], index: 4, kind: input, shape index: {}]
  %s5 = inlined_call_operand.vmem [shape: bf16[3,320,128], index: 5, kind: input, shape index: {}]
  %s6 = inlined_call_operand.vmem [shape: f32[1,128], index: 6, kind: input, shape index: {}]
  %s7 = inlined_call_operand.vmem [shape: f32[16,8], index: 7, kind: input, shape index: {}]
  %s8 = inlined_call_operand.vmem [shape: f32[128,256], index: 8, kind: input, shape index: {}]
  %s9 = inlined_call_operand.vmem [shape: bf16[256,64], index: 9, kind: input, shape index: {}]
  %s10 = inlined_call_operand.vmem [shape: f32[1,64], index: 10, kind: input, shape index: {}]
  %s11 = inlined_call_operand.vmem [shape: f32[2,16,64], index: 11, kind: output, shape index: {}]
  %s12 = sld [smem:[#allocation0]]
  $region54: #{transitioner_forward.3} parent=0
    _
  %s14 = ssub.s32 1, %s12
  %s15 = scalar_select 0, %s14, %s12
  // Predicated region
  $region2: #{transitioner_forward.3} parent=0 // pred_check
    _
  $region3: #{transitioner_forward.3} parent=0 // pred_check_branch
    %17 = sbr.rel (0) target = $region5
  $region4: #{transitioner_forward.3} parent=0 // pred_region
    _
  $region5: #{transitioner_forward.3} parent=0 // pred_fallthru
    _
  // Predicated region
  $region6: #{transitioner_forward.3} parent=0 // pred_check
    _
  $region7: #{transitioner_forward.3} parent=0 // pred_check_branch
    %19 = sbr.rel (0) target = $region9
  $region8: #{transitioner_forward.3} parent=0 // pred_region
    _
  $region9: #{transitioner_forward.3} parent=0 // pred_fallthru
    _
  // Predicated region
  $region10: #{transitioner_forward.3} parent=0 // pred_check
    _
  $region11: #{transitioner_forward.3} parent=0 // pred_check_branch
    %21 = sbr.rel (0) target = $region13
  $region12: #{transitioner_forward.3} parent=0 // pred_region
    _
  $region13: #{transitioner_forward.3} parent=0 // pred_fallthru
    _
  // Predicated region
  $region14: #{transitioner_forward.3} parent=0 // pred_check
    _
  $region15: #{transitioner_forward.3} parent=0 // pred_check_branch
    %23 = sbr.rel (0) target = $region17
  $region16: #{transitioner_forward.3} parent=0 // pred_region
    _
  $region17: #{transitioner_forward.3} parent=0 // pred_fallthru
    _
  // Predicated region
  $region18: #{transitioner_forward.3} parent=0 // pred_check
    _
  $region19: #{transitioner_forward.3} parent=0 // pred_check_branch
    %25 = sbr.rel (0) target = $region21
  $region20: #{transitioner_forward.3} parent=0 // pred_region
    _
  $region21: #{transitioner_forward.3} parent=0 // pred_fallthru
    _
  // Predicated region
  $region22: #{transitioner_forward.3} parent=0 // pred_check
    _
  $region23: #{transitioner_forward.3} parent=0 // pred_check_branch
    %27 = sbr.rel (0) target = $region25
  $region24: #{transitioner_forward.3} parent=0 // pred_region
    _
  $region25: #{transitioner_forward.3} parent=0 // pred_fallthru
    _
  // Predicated region
  $region26: #{transitioner_forward.3} parent=0 // pred_check
    _
  $region27: #{transitioner_forward.3} parent=0 // pred_check_branch
    %29 = sbr.rel (0) target = $region29
  $region28: #{transitioner_forward.3} parent=0 // pred_region
    _
  $region29: #{transitioner_forward.3} parent=0 // pred_fallthru
    _
  // Predicated region
  $region30: #{transitioner_forward.3} parent=0 // pred_check
    _
  $region31: #{transitioner_forward.3} parent=0 // pred_check_branch
    %31 = sbr.rel (0) target = $region33
  $region32: #{transitioner_forward.3} parent=0 // pred_region
    _
  $region33: #{transitioner_forward.3} parent=0 // pred_fallthru
    _
  // Predicated region
  $region34: #{transitioner_forward.3} parent=0 // pred_check
    _
  $region35: #{transitioner_forward.3} parent=0 // pred_check_branch
    %33 = sbr.rel (0) target = $region37
  $region36: #{transitioner_forward.3} parent=0 // pred_region
    _
  $region37: #{transitioner_forward.3} parent=0 // pred_fallthru
    _
  // Predicated region
  $region38: #{transitioner_forward.3} parent=0 // pred_check
    _
  $region39: #{transitioner_forward.3} parent=0 // pred_check_branch
    %35 = sbr.rel (0) target = $region41
  $region40: #{transitioner_forward.3} parent=0 // pred_region
    _
  $region41: #{transitioner_forward.3} parent=0 // pred_fallthru
    _
  // Predicated region
  $region42: #{transitioner_forward.3} parent=0 // pred_check
    _
  $region43: #{transitioner_forward.3} parent=0 // pred_check_branch
    %37 = sbr.rel (0) target = $region45
  $region44: #{transitioner_forward.3} parent=0 // pred_region
    _
  $region45: #{transitioner_forward.3} parent=0 // pred_fallthru
    _
  %v39 = vld [vmem:[%s2] sm:$0x1]
  %v40 = vld [vmem:[%s6] sm:$0x1]
  %v41 = vld [vmem:[%s10] sm:$0x1]
  %v42 = vld [vmem:[%s3] sm:$0xff]
  %v43 = vld [vmem:[%s3 + $0x8] sm:$0x3]
  %v44 = vld [vmem:[%s4] sm:$0xff]
  %v45 = vld [vmem:[%s4 + $0x8] sm:$0xff]
  %v46 = vld [vmem:[%s4 + $0x10] sm:$0xff]
  %v47 = vld [vmem:[%s4 + $0x18] sm:$0xff]
  %v48 = vld [vmem:[%s4 + $0x20] sm:$0xff]
  %v49 = vld [vmem:[%s4 + $0x28] sm:$0xff]
  %v50 = vld [vmem:[%s4 + $0x30] sm:$0xff]
  %v51 = vld [vmem:[%s4 + $0x38] sm:$0xff]
  %v52 = vld [vmem:[%s4 + $0x40] sm:$0xff]
  %v53 = vld [vmem:[%s4 + $0x48] sm:$0xff]
  %v54 = vld [vmem:[%s4 + $0x50] sm:$0xff]
  %v55 = vld [vmem:[%s4 + $0x58] sm:$0xff]
  %v56 = vld [vmem:[%s4 + $0x60] sm:$0xff]
  %v57 = vld [vmem:[%s4 + $0x68] sm:$0xff]
  %v58 = vld [vmem:[%s4 + $0x70] sm:$0xff]
  %v59 = vld [vmem:[%s4 + $0x78] sm:$0xff]
  %v60 = vld [vmem:[%s4 + $0x80] sm:$0xff]
  %v61 = vld [vmem:[%s4 + $0x88] sm:$0xff]
  %v62 = vld [vmem:[%s4 + $0x90] sm:$0xff]
  %v63 = vld [vmem:[%s4 + $0x98] sm:$0xff]
  %v64 = vld [vmem:[%s4 + $0xa0] sm:$0xff]
  %v65 = vld [vmem:[%s4 + $0xa8] sm:$0xff]
  %v66 = vld [vmem:[%s4 + $0xb0] sm:$0xff]
  %v67 = vld [vmem:[%s4 + $0xb8] sm:$0xff]
  %v68 = vld [vmem:[%s4 + $0xc0] sm:$0xff]
  %v69 = vld [vmem:[%s4 + $0xc8] sm:$0xff]
  %v70 = vld [vmem:[%s4 + $0xd0] sm:$0xff]
  %v71 = vld [vmem:[%s4 + $0xd8] sm:$0xff]
  %v72 = vld [vmem:[%s4 + $0xe0] sm:$0xff]
  %v73 = vld [vmem:[%s4 + $0xe8] sm:$0xff]
  %v74 = vld [vmem:[%s4 + $0xf0] sm:$0xff]
  %v75 = vld [vmem:[%s4 + $0xf8] sm:$0xff]
  %v76 = vld [vmem:[%s4 + $0x100] sm:$0xff]
  %v77 = vld [vmem:[%s4 + $0x108] sm:$0xff]
  %v78 = vld [vmem:[%s4 + $0x110] sm:$0xff]
  %v79 = vld [vmem:[%s4 + $0x118] sm:$0xff]
  %v80 = vld [vmem:[%s4 + $0x120] sm:$0xff]
  %v81 = vld [vmem:[%s4 + $0x128] sm:$0xff]
  %v82 = vld [vmem:[%s4 + $0x130] sm:$0xff]
  %v83 = vld [vmem:[%s4 + $0x138] sm:$0xff]
  %v84 = vld [vmem:[%s4 + $0x140] sm:$0xff]
  %v85 = vld [vmem:[%s4 + $0x148] sm:$0xff]
  %v86 = vld [vmem:[%s4 + $0x150] sm:$0xff]
  %v87 = vld [vmem:[%s4 + $0x158] sm:$0xff]
  %v88 = vld [vmem:[%s4 + $0x160] sm:$0xff]
  %v89 = vld [vmem:[%s4 + $0x168] sm:$0xff]
  %v90 = vld [vmem:[%s4 + $0x170] sm:$0xff]
  %v91 = vld [vmem:[%s4 + $0x178] sm:$0xff]
  %v92 = vld [vmem:[%s7] sm:$0xff]
  %v93 = vld [vmem:[%s7 + $0x8] sm:$0xff]
  %v94 = vld [vmem:[%s8] sm:$0xff]
  %v95 = vld [vmem:[%s8 + $0x8] sm:$0xff]
  %v96 = vld [vmem:[%s8 + $0x10] sm:$0xff]
  %v97 = vld [vmem:[%s8 + $0x18] sm:$0xff]
  %v98 = vld [vmem:[%s8 + $0x20] sm:$0xff]
  %v99 = vld [vmem:[%s8 + $0x28] sm:$0xff]
  %v100 = vld [vmem:[%s8 + $0x30] sm:$0xff]
  %v101 = vld [vmem:[%s8 + $0x38] sm:$0xff]
  %v102 = vld [vmem:[%s8 + $0x40] sm:$0xff]
  %v103 = vld [vmem:[%s8 + $0x48] sm:$0xff]
  %v104 = vld [vmem:[%s8 + $0x50] sm:$0xff]
  %v105 = vld [vmem:[%s8 + $0x58] sm:$0xff]
  %v106 = vld [vmem:[%s8 + $0x60] sm:$0xff]
  %v107 = vld [vmem:[%s8 + $0x68] sm:$0xff]
  %v108 = vld [vmem:[%s8 + $0x70] sm:$0xff]
  %v109 = vld [vmem:[%s8 + $0x78] sm:$0xff]
  %v110 = vld [vmem:[%s8 + $0x80] sm:$0xff]
  %v111 = vld [vmem:[%s8 + $0x88] sm:$0xff]
  %v112 = vld [vmem:[%s8 + $0x90] sm:$0xff]
  %v113 = vld [vmem:[%s8 + $0x98] sm:$0xff]
  %v114 = vld [vmem:[%s8 + $0xa0] sm:$0xff]
  %v115 = vld [vmem:[%s8 + $0xa8] sm:$0xff]
  %v116 = vld [vmem:[%s8 + $0xb0] sm:$0xff]
  %v117 = vld [vmem:[%s8 + $0xb8] sm:$0xff]
  %v118 = vld [vmem:[%s8 + $0xc0] sm:$0xff]
  %v119 = vld [vmem:[%s8 + $0xc8] sm:$0xff]
  %v120 = vld [vmem:[%s8 + $0xd0] sm:$0xff]
  %v121 = vld [vmem:[%s8 + $0xd8] sm:$0xff]
  %v122 = vld [vmem:[%s8 + $0xe0] sm:$0xff]
  %v123 = vld [vmem:[%s8 + $0xe8] sm:$0xff]
  %v124 = vld [vmem:[%s8 + $0xf0] sm:$0xff]
  %v125 = vld [vmem:[%s8 + $0xf8] sm:$0xff]
  %v126 = vld [vmem:[%s9] sm:$0xf]
  %v127 = vld [vmem:[%s9 + $0x4] sm:$0xf]
  %v128 = vld [vmem:[%s9 + $0x8] sm:$0xf]
  %v129 = vld [vmem:[%s9 + $0xc] sm:$0xf]
  %v130 = vld [vmem:[%s9 + $0x10] sm:$0xf]
  %v131 = vld [vmem:[%s9 + $0x14] sm:$0xf]
  %v132 = vld [vmem:[%s9 + $0x18] sm:$0xf]
  %v133 = vld [vmem:[%s9 + $0x1c] sm:$0xf]
  %v134 = vld [vmem:[%s9 + $0x20] sm:$0xf]
  %v135 = vld [vmem:[%s9 + $0x24] sm:$0xf]
  %v136 = vld [vmem:[%s9 + $0x28] sm:$0xf]
  %v137 = vld [vmem:[%s9 + $0x2c] sm:$0xf]
  %v138 = vld [vmem:[%s9 + $0x30] sm:$0xf]
  %v139 = vld [vmem:[%s9 + $0x34] sm:$0xf]
  %v140 = vld [vmem:[%s9 + $0x38] sm:$0xf]
  %v141 = vld [vmem:[%s9 + $0x3c] sm:$0xf]
  %v142 = vld [vmem:[%s9 + $0x40] sm:$0xf]
  %v143 = vld [vmem:[%s9 + $0x44] sm:$0xf]
  %v144 = vld [vmem:[%s9 + $0x48] sm:$0xf]
  %v145 = vld [vmem:[%s9 + $0x4c] sm:$0xf]
  %v146 = vld [vmem:[%s9 + $0x50] sm:$0xf]
  %v147 = vld [vmem:[%s9 + $0x54] sm:$0xf]
  %v148 = vld [vmem:[%s9 + $0x58] sm:$0xf]
  %v149 = vld [vmem:[%s9 + $0x5c] sm:$0xf]
  %v150 = vld [vmem:[%s9 + $0x60] sm:$0xf]
  %v151 = vld [vmem:[%s9 + $0x64] sm:$0xf]
  %v152 = vld [vmem:[%s9 + $0x68] sm:$0xf]
  %v153 = vld [vmem:[%s9 + $0x6c] sm:$0xf]
  %v154 = vld [vmem:[%s9 + $0x70] sm:$0xf]
  %v155 = vld [vmem:[%s9 + $0x74] sm:$0xf]
  %v156 = vld [vmem:[%s9 + $0x78] sm:$0xf]
  %v157 = vld [vmem:[%s9 + $0x7c] sm:$0xf]
  %v158 = vld [vmem:[%s0] sm:$0xf]
  %v159 = vld [vmem:[%s0 + $0x8] sm:$0xf]
  %v160 = vld [vmem:[%s1] sm:$0xf]
  %v161 = vld [vmem:[%s1 + $0x4] sm:$0xf]
  %v162 = vld [vmem:[%s1 + $0x8] sm:$0xf]
  %v163 = vld [vmem:[%s1 + $0xc] sm:$0xf]
  %v164 = vld [vmem:[%s1 + $0x10] sm:$0xf]
  %v165 = vld [vmem:[%s1 + $0x14] sm:$0xf]
  %v166 = vld [vmem:[%s1 + $0x18] sm:$0xf]
  %v167 = vld [vmem:[%s1 + $0x1c] sm:$0xf]
  %v168 = vld [vmem:[%s1 + $0x20] sm:$0xf]
  %v169 = vld [vmem:[%s1 + $0x24] sm:$0xf]
  %v170 = vld [vmem:[%s1 + $0x28] sm:$0xf]
  %v171 = vld [vmem:[%s1 + $0x2c] sm:$0xf]
  %v172 = vld [vmem:[%s1 + $0x30] sm:$0xf]
  %v173 = vld [vmem:[%s1 + $0x34] sm:$0xf]
  %v174 = vld [vmem:[%s1 + $0x38] sm:$0xf]
  %v175 = vld [vmem:[%s1 + $0x3c] sm:$0xf]
  %v176 = vld [vmem:[%s1 + $0x40] sm:$0xf]
  %v177 = vld [vmem:[%s1 + $0x44] sm:$0xf]
  %v178 = vld [vmem:[%s1 + $0x48] sm:$0xf]
  %v179 = vld [vmem:[%s1 + $0x4c] sm:$0xf]
  %v180 = vld [vmem:[%s1 + $0x50] sm:$0xf]
  %v181 = vld [vmem:[%s1 + $0x54] sm:$0xf]
  %v182 = vld [vmem:[%s1 + $0x58] sm:$0xf]
  %v183 = vld [vmem:[%s1 + $0x5c] sm:$0xf]
  %v184 = vpack.c.bf16 %v158, %v158
  %v185 = vpack.c.bf16 %v159, %v159
  %v210 = vunpack.c.l.b16 %v160
  %v211 = vunpack.c.l.b16 %v161
  %v212 = vunpack.c.l.b16 %v162
  %v213 = vunpack.c.l.b16 %v163
  %v214 = vunpack.c.l.b16 %v164
  %v215 = vunpack.c.l.b16 %v165
  %v216 = vunpack.c.l.b16 %v166
  %v217 = vunpack.c.l.b16 %v167
  %v218 = vunpack.c.l.b16 %v168
  %v219 = vunpack.c.l.b16 %v169
  %v220 = vunpack.c.l.b16 %v170
  %v221 = vunpack.c.l.b16 %v171
  %v222 = vunpack.c.l.b16 %v172
  %v223 = vunpack.c.l.b16 %v173
  %v224 = vunpack.c.l.b16 %v174
  %v225 = vunpack.c.l.b16 %v175
  %v226 = vunpack.c.l.b16 %v176
  %v227 = vunpack.c.l.b16 %v177
  %v228 = vunpack.c.l.b16 %v178
  %v229 = vunpack.c.l.b16 %v179
  %v230 = vunpack.c.l.b16 %v180
  %v231 = vunpack.c.l.b16 %v181
  %v232 = vunpack.c.l.b16 %v182
  %v233 = vunpack.c.l.b16 %v183
  %v234 = vpack.c.b16 %v211, %v210
  %v235 = vpack.c.b16 %v213, %v212
  %v236 = vpack.c.b16 %v215, %v214
  %v237 = vpack.c.b16 %v217, %v216
  %v238 = vpack.c.b16 %v219, %v218
  %v239 = vpack.c.b16 %v221, %v220
  %v240 = vpack.c.b16 %v223, %v222
  %v241 = vpack.c.b16 %v225, %v224
  %v242 = vpack.c.b16 %v227, %v226
  %v243 = vpack.c.b16 %v229, %v228
  %v244 = vpack.c.b16 %v231, %v230
  %v245 = vpack.c.b16 %v233, %v232
  %vm258 = vcmask 523264
  %v260 = vsel %vm258, %v185, 0
  %262 = vmatprep.subr.bf16.mxu0 0
  %263 = vmatpush1.bf16.msra.mxu0 %v234
  %264 = vmatprep.subr.bf16.mxu0 0
  %265 = vmatpush1.bf16.msra.mxu0 %v235
  %266 = vmatprep.subr.bf16.mxu0 0
  %267 = vmatpush1.bf16.msra.mxu0 %v236
  %268 = vmatprep.subr.bf16.mxu0 0
  %269 = vmatpush1.bf16.msra.mxu0 %v237
  %270 = vmatprep.subr.bf16.mxu0 0
  %271 = vmatpush1.bf16.msra.mxu0 %v238
  %272 = vmatprep.subr.bf16.mxu0 0
  %273 = vmatpush1.bf16.msra.mxu0 %v239
  %274 = vmatprep.subr.bf16.mxu0 0
  %275 = vmatpush1.bf16.msra.mxu0 %v240
  %276 = vmatprep.subr.bf16.mxu0 0
  %277 = vmatpush1.bf16.msra.mxu0 %v241
  %278 = vmatprep.subr.bf16.mxu0 0
  %279 = vmatpush1.bf16.msra.mxu0 %v242
  %280 = vmatprep.subr.bf16.mxu0 0
  %281 = vmatpush1.bf16.msra.mxu0 %v243
  %282 = vmatprep.subr.bf16.mxu0 0
  %283 = vmatpush1.bf16.msra.mxu0 %v244
  %284 = vmatprep.subr.bf16.mxu0 0
  %285 = vmatpush1.bf16.msra.mxu0 %v245
  %286 = vmatprep.subr.bf16.mxu0 0
  %287 = vmatpush1.bf16.msra.mxu0 0
  %288 = vmatprep.subr.bf16.mxu0 0
  %289 = vmatpush1.bf16.msra.mxu0 0
  %290 = vmatprep.subr.bf16.mxu0 0
  %291 = vmatpush1.bf16.msra.mxu0 0
  %292 = vmatprep.subr.bf16.mxu0 0
  %293 = vmatpush1.bf16.msra.mxu0 0
  %294 = vmatprep.mubr.bf16.mxu0 %v260
  %295 = vmatmul.mubr.bf16.gmra.mrb[0].mxu0 %v184
  %v296 = vpop.f32.mrb[0].mxu0
  %v297 = vadd.f32 0.0, %v296
  %v298 = vpop.f32.mrb[0].mxu0
  %v299 = vpop.f32.mrb[0].mxu0
  %v300 = vpop.f32.mrb[0].mxu0
  %301 = vdwg.mxu0
  %v303 = vlaneseq
  %v304 = vshrl.u32 %v303, 7
  %v305 = vsub.s32 0, %v304
  %v306 = vrot.slane %v39, %v305
  %v308 = vadd.f32 %v306, %v297
  %v309 = vld [vmem:[%s0] sm:$0x1e]
  %v310 = vld [vmem:[%s0 + $0x8] sm:$0x1e]
  %s311 = scalar_lea.vmem %s1, 96
  %v312 = vld [vmem:[%s311] sm:$0xf]
  %v313 = vld [vmem:[%s311 + $0x4] sm:$0xf]
  %v314 = vld [vmem:[%s311 + $0x8] sm:$0xf]
  %v315 = vld [vmem:[%s311 + $0xc] sm:$0xf]
  %v316 = vld [vmem:[%s311 + $0x10] sm:$0xf]
  %v317 = vld [vmem:[%s311 + $0x14] sm:$0xf]
  %v318 = vld [vmem:[%s311 + $0x18] sm:$0xf]
  %v319 = vld [vmem:[%s311 + $0x1c] sm:$0xf]
  %v320 = vld [vmem:[%s311 + $0x20] sm:$0xf]
  %v321 = vld [vmem:[%s311 + $0x24] sm:$0xf]
  %v322 = vld [vmem:[%s311 + $0x28] sm:$0xf]
  %v323 = vld [vmem:[%s311 + $0x2c] sm:$0xf]
  %v324 = vld [vmem:[%s311 + $0x30] sm:$0xf]
  %v325 = vld [vmem:[%s311 + $0x34] sm:$0xf]
  %v326 = vld [vmem:[%s311 + $0x38] sm:$0xf]
  %v327 = vld [vmem:[%s311 + $0x3c] sm:$0xf]
  %v328 = vld [vmem:[%s311 + $0x40] sm:$0xf]
  %v329 = vld [vmem:[%s311 + $0x44] sm:$0xf]
  %v330 = vld [vmem:[%s311 + $0x48] sm:$0xf]
  %v331 = vld [vmem:[%s311 + $0x4c] sm:$0xf]
  %v332 = vld [vmem:[%s311 + $0x50] sm:$0xf]
  %v333 = vld [vmem:[%s311 + $0x54] sm:$0xf]
  %v334 = vld [vmem:[%s311 + $0x58] sm:$0xf]
  %v335 = vld [vmem:[%s311 + $0x5c] sm:$0xf]
  %v336 = vpack.c.bf16 %v309, %v309
  %v337 = vpack.c.bf16 %v310, %v310
  %v339 = vshrl.u32 %v336, 16
  %v341 = vshll.u32 %v336, 16
  %v343 = vrot.slane %v341, 1
  %v344 = vor.u32 %v339, %v343
  %v346 = vshrl.u32 %v337, 16
  %v348 = vshll.u32 %v337, 16
  %v350 = vrot.slane %v348, 1
  %v351 = vor.u32 %v346, %v350
  %v377 = vunpack.c.l.b16 %v312
  %v378 = vunpack.c.l.b16 %v313
  %v379 = vunpack.c.l.b16 %v314
  %v380 = vunpack.c.l.b16 %v315
  %v381 = vunpack.c.l.b16 %v316
  %v382 = vunpack.c.l.b16 %v317
  %v383 = vunpack.c.l.b16 %v318
  %v384 = vunpack.c.l.b16 %v319
  %v385 = vunpack.c.l.b16 %v320
  %v386 = vunpack.c.l.b16 %v321
  %v387 = vunpack.c.l.b16 %v322
  %v388 = vunpack.c.l.b16 %v323
  %v389 = vunpack.c.l.b16 %v324
  %v390 = vunpack.c.l.b16 %v325
  %v391 = vunpack.c.l.b16 %v326
  %v392 = vunpack.c.l.b16 %v327
  %v393 = vunpack.c.l.b16 %v328
  %v394 = vunpack.c.l.b16 %v329
  %v395 = vunpack.c.l.b16 %v330
  %v396 = vunpack.c.l.b16 %v331
  %v397 = vunpack.c.l.b16 %v332
  %v398 = vunpack.c.l.b16 %v333
  %v399 = vunpack.c.l.b16 %v334
  %v400 = vunpack.c.l.b16 %v335
  %v401 = vpack.c.b16 %v378, %v377
  %v402 = vpack.c.b16 %v380, %v379
  %v403 = vpack.c.b16 %v382, %v381
  %v404 = vpack.c.b16 %v384, %v383
  %v405 = vpack.c.b16 %v386, %v385
  %v406 = vpack.c.b16 %v388, %v387
  %v407 = vpack.c.b16 %v390, %v389
  %v408 = vpack.c.b16 %v392, %v391
  %v409 = vpack.c.b16 %v394, %v393
  %v410 = vpack.c.b16 %v396, %v395
  %v411 = vpack.c.b16 %v398, %v397
  %v412 = vpack.c.b16 %v400, %v399
  %v426 = vsel %vm258, %v351, 0
  %428 = vmatprep.subr.bf16.mxu0 0
  %429 = vmatpush1.bf16.msra.mxu0 %v401
  %430 = vmatprep.subr.bf16.mxu0 0
  %431 = vmatpush1.bf16.msra.mxu0 %v402
  %432 = vmatprep.subr.bf16.mxu0 0
  %433 = vmatpush1.bf16.msra.mxu0 %v403
  %434 = vmatprep.subr.bf16.mxu0 0
  %435 = vmatpush1.bf16.msra.mxu0 %v404
  %436 = vmatprep.subr.bf16.mxu0 0
  %437 = vmatpush1.bf16.msra.mxu0 %v405
  %438 = vmatprep.subr.bf16.mxu0 0
  %439 = vmatpush1.bf16.msra.mxu0 %v406
  %440 = vmatprep.subr.bf16.mxu0 0
  %441 = vmatpush1.bf16.msra.mxu0 %v407
  %442 = vmatprep.subr.bf16.mxu0 0
  %443 = vmatpush1.bf16.msra.mxu0 %v408
  %444 = vmatprep.subr.bf16.mxu0 0
  %445 = vmatpush1.bf16.msra.mxu0 %v409
  %446 = vmatprep.subr.bf16.mxu0 0
  %447 = vmatpush1.bf16.msra.mxu0 %v410
  %448 = vmatprep.subr.bf16.mxu0 0
  %449 = vmatpush1.bf16.msra.mxu0 %v411
  %450 = vmatprep.subr.bf16.mxu0 0
  %451 = vmatpush1.bf16.msra.mxu0 %v412
  %452 = vmatprep.subr.bf16.mxu0 0
  %453 = vmatpush1.bf16.msra.mxu0 0
  %454 = vmatprep.subr.bf16.mxu0 0
  %455 = vmatpush1.bf16.msra.mxu0 0
  %456 = vmatprep.subr.bf16.mxu0 0
  %457 = vmatpush1.bf16.msra.mxu0 0
  %458 = vmatprep.subr.bf16.mxu0 0
  %459 = vmatpush1.bf16.msra.mxu0 0
  %460 = vmatprep.mubr.bf16.mxu0 %v426
  %461 = vmatmul.mubr.bf16.gmra.mrb[0].mxu0 %v344
  %v462 = vpop.f32.mrb[0].mxu0
  %v463 = vadd.f32 0.0, %v462
  %v464 = vpop.f32.mrb[0].mxu0
  %v465 = vpop.f32.mrb[0].mxu0
  %v466 = vpop.f32.mrb[0].mxu0
  %467 = vdwg.mxu0
  %v468 = vadd.f32 %v308, %v463
  %v469 = vld [vmem:[%s0] sm:$0x3c]
  %v470 = vld [vmem:[%s0 + $0x8] sm:$0x3c]
  %s471 = scalar_lea.vmem %s1, 192
  %v472 = vld [vmem:[%s471] sm:$0xf]
  %v473 = vld [vmem:[%s471 + $0x4] sm:$0xf]
  %v474 = vld [vmem:[%s471 + $0x8] sm:$0xf]
  %v475 = vld [vmem:[%s471 + $0xc] sm:$0xf]
  %v476 = vld [vmem:[%s471 + $0x10] sm:$0xf]
  %v477 = vld [vmem:[%s471 + $0x14] sm:$0xf]
  %v478 = vld [vmem:[%s471 + $0x18] sm:$0xf]
  %v479 = vld [vmem:[%s471 + $0x1c] sm:$0xf]
  %v480 = vld [vmem:[%s471 + $0x20] sm:$0xf]
  %v481 = vld [vmem:[%s471 + $0x24] sm:$0xf]
  %v482 = vld [vmem:[%s471 + $0x28] sm:$0xf]
  %v483 = vld [vmem:[%s471 + $0x2c] sm:$0xf]
  %v484 = vld [vmem:[%s471 + $0x30] sm:$0xf]
  %v485 = vld [vmem:[%s471 + $0x34] sm:$0xf]
  %v486 = vld [vmem:[%s471 + $0x38] sm:$0xf]
  %v487 = vld [vmem:[%s471 + $0x3c] sm:$0xf]
  %v488 = vld [vmem:[%s471 + $0x40] sm:$0xf]
  %v489 = vld [vmem:[%s471 + $0x44] sm:$0xf]
  %v490 = vld [vmem:[%s471 + $0x48] sm:$0xf]
  %v491 = vld [vmem:[%s471 + $0x4c] sm:$0xf]
  %v492 = vld [vmem:[%s471 + $0x50] sm:$0xf]
  %v493 = vld [vmem:[%s471 + $0x54] sm:$0xf]
  %v494 = vld [vmem:[%s471 + $0x58] sm:$0xf]
  %v495 = vld [vmem:[%s471 + $0x5c] sm:$0xf]
  %v496 = vpack.c.bf16 %v469, %v469
  %v497 = vpack.c.bf16 %v470, %v470
  %v500 = vrot.slane %v496, 1
  %v501 = vrot.slane %v497, 1
  %v527 = vunpack.c.l.b16 %v472
  %v528 = vunpack.c.l.b16 %v473
  %v529 = vunpack.c.l.b16 %v474
  %v530 = vunpack.c.l.b16 %v475
  %v531 = vunpack.c.l.b16 %v476
  %v532 = vunpack.c.l.b16 %v477
  %v533 = vunpack.c.l.b16 %v478
  %v534 = vunpack.c.l.b16 %v479
  %v535 = vunpack.c.l.b16 %v480
  %v536 = vunpack.c.l.b16 %v481
  %v537 = vunpack.c.l.b16 %v482
  %v538 = vunpack.c.l.b16 %v483
  %v539 = vunpack.c.l.b16 %v484
  %v540 = vunpack.c.l.b16 %v485
  %v541 = vunpack.c.l.b16 %v486
  %v542 = vunpack.c.l.b16 %v487
  %v543 = vunpack.c.l.b16 %v488
  %v544 = vunpack.c.l.b16 %v489
  %v545 = vunpack.c.l.b16 %v490
  %v546 = vunpack.c.l.b16 %v491
  %v547 = vunpack.c.l.b16 %v492
  %v548 = vunpack.c.l.b16 %v493
  %v549 = vunpack.c.l.b16 %v494
  %v550 = vunpack.c.l.b16 %v495
  %v551 = vpack.c.b16 %v528, %v527
  %v552 = vpack.c.b16 %v530, %v529
  %v553 = vpack.c.b16 %v532, %v531
  %v554 = vpack.c.b16 %v534, %v533
  %v555 = vpack.c.b16 %v536, %v535
  %v556 = vpack.c.b16 %v538, %v537
  %v557 = vpack.c.b16 %v540, %v539
  %v558 = vpack.c.b16 %v542, %v541
  %v559 = vpack.c.b16 %v544, %v543
  %v560 = vpack.c.b16 %v546, %v545
  %v561 = vpack.c.b16 %v548, %v547
  %v562 = vpack.c.b16 %v550, %v549
  %v576 = vsel %vm258, %v501, 0
  %578 = vmatprep.subr.bf16.mxu0 0
  %579 = vmatpush1.bf16.msra.mxu0 %v551
  %580 = vmatprep.subr.bf16.mxu0 0
  %581 = vmatpush1.bf16.msra.mxu0 %v552
  %582 = vmatprep.subr.bf16.mxu0 0
  %583 = vmatpush1.bf16.msra.mxu0 %v553
  %584 = vmatprep.subr.bf16.mxu0 0
  %585 = vmatpush1.bf16.msra.mxu0 %v554
  %586 = vmatprep.subr.bf16.mxu0 0
  %587 = vmatpush1.bf16.msra.mxu0 %v555
  %588 = vmatprep.subr.bf16.mxu0 0
  %589 = vmatpush1.bf16.msra.mxu0 %v556
  %590 = vmatprep.subr.bf16.mxu0 0
  %591 = vmatpush1.bf16.msra.mxu0 %v557
  %592 = vmatprep.subr.bf16.mxu0 0
  %593 = vmatpush1.bf16.msra.mxu0 %v558
  %594 = vmatprep.subr.bf16.mxu0 0
  %595 = vmatpush1.bf16.msra.mxu0 %v559
  %596 = vmatprep.subr.bf16.mxu0 0
  %597 = vmatpush1.bf16.msra.mxu0 %v560
  %598 = vmatprep.subr.bf16.mxu0 0
  %599 = vmatpush1.bf16.msra.mxu0 %v561
  %600 = vmatprep.subr.bf16.mxu0 0
  %601 = vmatpush1.bf16.msra.mxu0 %v562
  %602 = vmatprep.subr.bf16.mxu0 0
  %603 = vmatpush1.bf16.msra.mxu0 0
  %604 = vmatprep.subr.bf16.mxu0 0
  %605 = vmatpush1.bf16.msra.mxu0 0
  %606 = vmatprep.subr.bf16.mxu0 0
  %607 = vmatpush1.bf16.msra.mxu0 0
  %608 = vmatprep.subr.bf16.mxu0 0
  %609 = vmatpush1.bf16.msra.mxu0 0
  %610 = vmatprep.mubr.bf16.mxu0 %v576
  %611 = vmatmul.mubr.bf16.gmra.mrb[0].mxu0 %v500
  %v612 = vpop.f32.mrb[0].mxu0
  %v613 = vadd.f32 0.0, %v612
  %v614 = vpop.f32.mrb[0].mxu0
  %v615 = vpop.f32.mrb[0].mxu0
  %v616 = vpop.f32.mrb[0].mxu0
  %617 = vdwg.mxu0
  %v618 = vadd.f32 %v468, %v613
  %vm619 = vcmp.gt.f32.partialorder %v618, 0.0
  %v620 = vmul.f32 %v618, 0.01
  %v621 = vsel %vm619, %v618, %v620
  %vm622 = vcmask 31744
  %v624 = vsel %vm622, %v42, 0
  %v627 = vsel %vm622, %v43, 0
  %vm629 = vcmask 1043456
  %v631 = vsel %vm629, %v621, 0
  %633 = vmatprep.subr.mxu0 0.0
  %634 = vmatpush1.msra.mxu0 %v631
  %635 = vmatprep.subr.mxu0 0.0
  %636 = vmatpush1.msra.mxu0 0.0
  %637 = vmatprep.subr.mxu0 0.0
  %638 = vmatpush1.msra.mxu0 0.0
  %639 = vmatprep.subr.mxu0 0.0
  %640 = vmatpush1.msra.mxu0 0.0
  %641 = vmatprep.subr.mxu0 0.0
  %642 = vmatpush1.msra.mxu0 0.0
  %643 = vmatprep.subr.mxu0 0.0
  %644 = vmatpush1.msra.mxu0 0.0
  %645 = vmatprep.subr.mxu0 0.0
  %646 = vmatpush1.msra.mxu0 0.0
  %647 = vmatprep.subr.mxu0 0.0
  %648 = vmatpush1.msra.mxu0 0.0
  %649 = vmatprep.subr.mxu0 0.0
  %650 = vmatpush1.msra.mxu0 0.0
  %651 = vmatprep.subr.mxu0 0.0
  %652 = vmatpush1.msra.mxu0 0.0
  %653 = vmatprep.subr.mxu0 0.0
  %654 = vmatpush1.msra.mxu0 0.0
  %655 = vmatprep.subr.mxu0 0.0
  %656 = vmatpush1.msra.mxu0 0.0
  %657 = vmatprep.subr.mxu0 0.0
  %658 = vmatpush1.msra.mxu0 0.0
  %659 = vmatprep.subr.mxu0 0.0
  %660 = vmatpush1.msra.mxu0 0.0
  %661 = vmatprep.subr.mxu0 0.0
  %662 = vmatpush1.msra.mxu0 0.0
  %663 = vmatprep.subr.mxu0 0.0
  %664 = vmatpush1.msra.mxu0 0.0
  %665 = vmatprep.subr.mxu0 0.0
  %666 = vmatpush1.msra.mxu0 0.0
  %667 = vmatprep.subr.mxu0 0.0
  %668 = vmatpush1.msra.mxu0 0.0
  %669 = vmatprep.subr.mxu0 0.0
  %670 = vmatpush1.msra.mxu0 0.0
  %671 = vmatprep.subr.mxu0 0.0
  %672 = vmatpush1.msra.mxu0 0.0
  %673 = vmatprep.subr.mxu0 0.0
  %674 = vmatpush1.msra.mxu0 0.0
  %675 = vmatprep.subr.mxu0 0.0
  %676 = vmatpush1.msra.mxu0 0.0
  %677 = vmatprep.subr.mxu0 0.0
  %678 = vmatpush1.msra.mxu0 0.0
  %679 = vmatprep.subr.mxu0 0.0
  %680 = vmatpush1.msra.mxu0 0.0
  %681 = vmatprep.subr.mxu0 0.0
  %682 = vmatpush1.msra.mxu0 0.0
  %683 = vmatprep.subr.mxu0 0.0
  %684 = vmatpush1.msra.mxu0 0.0
  %685 = vmatprep.subr.mxu0 0.0
  %686 = vmatpush1.msra.mxu0 0.0
  %687 = vmatprep.subr.mxu0 0.0
  %688 = vmatpush1.msra.mxu0 0.0
  %689 = vmatprep.subr.mxu0 0.0
  %690 = vmatpush1.msra.mxu0 0.0
  %691 = vmatprep.subr.mxu0 0.0
  %692 = vmatpush1.msra.mxu0 0.0
  %693 = vmatprep.subr.mxu0 0.0
  %694 = vmatpush1.msra.mxu0 0.0
  %695 = vmatprep.subr.mxu0 0.0
  %696 = vmatpush1.msra.mxu0 0.0
  %697 = vmatprep.mubr.f32.mxu0 0.0
  %698 = vmatmul.mubr.f32.gmra.mrb[0].mxu0 %v624
  %v699 = vpop.f32.mrb[0].mxu0
  %v700 = vadd.f32 0.0, %v699
  %v701 = vpop.f32.mrb[0].mxu0
  %702 = vmatprep.mubr.f32.mxu0 0.0
  %703 = vmatmul.mubr.f32.gmra.mrb[0].mxu0 %v627
  %v704 = vpop.f32.mrb[0].mxu0
  %v705 = vadd.f32 0.0, %v704
  %v706 = vpop.f32.mrb[0].mxu0
  %707 = vdwg.mxu0
  %708 = vmatprep.subr.mxu0 %v45
  %709 = vmatpush1.msra.mxu0 %v44
  %710 = vmatprep.subr.mxu0 %v48
  %711 = vmatpush1.msra.mxu0 %v47
  %712 = vmatprep.subr.mxu0 %v51
  %713 = vmatpush1.msra.mxu0 %v50
  %714 = vmatprep.subr.mxu0 %v54
  %715 = vmatpush1.msra.mxu0 %v53
  %716 = vmatprep.subr.mxu0 %v57
  %717 = vmatpush1.msra.mxu0 %v56
  %718 = vmatprep.subr.mxu0 %v60
  %719 = vmatpush1.msra.mxu0 %v59
  %720 = vmatprep.subr.mxu0 %v63
  %721 = vmatpush1.msra.mxu0 %v62
  %722 = vmatprep.subr.mxu0 %v66
  %723 = vmatpush1.msra.mxu0 %v65
  %724 = vmatprep.subr.mxu0 %v69
  %725 = vmatpush1.msra.mxu0 %v68
  %726 = vmatprep.subr.mxu0 %v72
  %727 = vmatpush1.msra.mxu0 %v71
  %728 = vmatprep.subr.mxu0 %v75
  %729 = vmatpush1.msra.mxu0 %v74
  %730 = vmatprep.subr.mxu0 %v78
  %731 = vmatpush1.msra.mxu0 %v77
  %732 = vmatprep.subr.mxu0 %v81
  %733 = vmatpush1.msra.mxu0 %v80
  %734 = vmatprep.subr.mxu0 %v84
  %735 = vmatpush1.msra.mxu0 %v83
  %736 = vmatprep.subr.mxu0 %v87
  %737 = vmatpush1.msra.mxu0 %v86
  %738 = vmatprep.subr.mxu0 %v90
  %739 = vmatpush1.msra.mxu0 %v89
  %740 = vmatprep.subr.mxu0 0.0
  %741 = vmatpush1.msra.mxu0 0.0
  %742 = vmatprep.subr.mxu0 0.0
  %743 = vmatpush1.msra.mxu0 0.0
  %744 = vmatprep.subr.mxu0 0.0
  %745 = vmatpush1.msra.mxu0 0.0
  %746 = vmatprep.subr.mxu0 0.0
  %747 = vmatpush1.msra.mxu0 0.0
  %748 = vmatprep.subr.mxu0 0.0
  %749 = vmatpush1.msra.mxu0 0.0
  %750 = vmatprep.subr.mxu0 0.0
  %751 = vmatpush1.msra.mxu0 0.0
  %752 = vmatprep.subr.mxu0 0.0
  %753 = vmatpush1.msra.mxu0 0.0
  %754 = vmatprep.subr.mxu0 0.0
  %755 = vmatpush1.msra.mxu0 0.0
  %756 = vmatprep.subr.mxu0 0.0
  %757 = vmatpush1.msra.mxu0 0.0
  %758 = vmatprep.subr.mxu0 0.0
  %759 = vmatpush1.msra.mxu0 0.0
  %760 = vmatprep.subr.mxu0 0.0
  %761 = vmatpush1.msra.mxu0 0.0
  %762 = vmatprep.subr.mxu0 0.0
  %763 = vmatpush1.msra.mxu0 0.0
  %764 = vmatprep.subr.mxu0 0.0
  %765 = vmatpush1.msra.mxu0 0.0
  %766 = vmatprep.subr.mxu0 0.0
  %767 = vmatpush1.msra.mxu0 0.0
  %768 = vmatprep.subr.mxu0 0.0
  %769 = vmatpush1.msra.mxu0 0.0
  %770 = vmatprep.subr.mxu0 0.0
  %771 = vmatpush1.msra.mxu0 0.0
  %772 = vmatprep.mubr.f32.mxu0 0.0
  %773 = vmatmul.mubr.f32.gmra.mrb[0].mxu0 %v700
  %v774 = vpop.f32.mrb[0].mxu0
  %v775 = vadd.f32 0.0, %v774
  %v776 = vpop.f32.mrb[0].mxu0
  %v777 = vadd.f32 0.0, %v776
  %778 = vmatprep.mubr.f32.mxu0 0.0
  %779 = vmatmul.mubr.f32.gmra.mrb[0].mxu0 %v705
  %v780 = vpop.f32.mrb[0].mxu0
  %v781 = vadd.f32 0.0, %v780
  %v782 = vpop.f32.mrb[0].mxu0
  %v783 = vadd.f32 0.0, %v782
  %784 = vdwg.mxu0
  %785 = vmatprep.subr.mxu0 0.0
  %786 = vmatpush1.msra.mxu0 %v46
  %787 = vmatprep.subr.mxu0 0.0
  %788 = vmatpush1.msra.mxu0 %v49
  %789 = vmatprep.subr.mxu0 0.0
  %790 = vmatpush1.msra.mxu0 %v52
  %791 = vmatprep.subr.mxu0 0.0
  %792 = vmatpush1.msra.mxu0 %v55
  %793 = vmatprep.subr.mxu0 0.0
  %794 = vmatpush1.msra.mxu0 %v58
  %795 = vmatprep.subr.mxu0 0.0
  %796 = vmatpush1.msra.mxu0 %v61
  %797 = vmatprep.subr.mxu0 0.0
  %798 = vmatpush1.msra.mxu0 %v64
  %799 = vmatprep.subr.mxu0 0.0
  %800 = vmatpush1.msra.mxu0 %v67
  %801 = vmatprep.subr.mxu0 0.0
  %802 = vmatpush1.msra.mxu0 %v70
  %803 = vmatprep.subr.mxu0 0.0
  %804 = vmatpush1.msra.mxu0 %v73
  %805 = vmatprep.subr.mxu0 0.0
  %806 = vmatpush1.msra.mxu0 %v76
  %807 = vmatprep.subr.mxu0 0.0
  %808 = vmatpush1.msra.mxu0 %v79
  %809 = vmatprep.subr.mxu0 0.0
  %810 = vmatpush1.msra.mxu0 %v82
  %811 = vmatprep.subr.mxu0 0.0
  %812 = vmatpush1.msra.mxu0 %v85
  %813 = vmatprep.subr.mxu0 0.0
  %814 = vmatpush1.msra.mxu0 %v88
  %815 = vmatprep.subr.mxu0 0.0
  %816 = vmatpush1.msra.mxu0 %v91
  %817 = vmatprep.subr.mxu0 0.0
  %818 = vmatpush1.msra.mxu0 0.0
  %819 = vmatprep.subr.mxu0 0.0
  %820 = vmatpush1.msra.mxu0 0.0
  %821 = vmatprep.subr.mxu0 0.0
  %822 = vmatpush1.msra.mxu0 0.0
  %823 = vmatprep.subr.mxu0 0.0
  %824 = vmatpush1.msra.mxu0 0.0
  %825 = vmatprep.subr.mxu0 0.0
  %826 = vmatpush1.msra.mxu0 0.0
  %827 = vmatprep.subr.mxu0 0.0
  %828 = vmatpush1.msra.mxu0 0.0
  %829 = vmatprep.subr.mxu0 0.0
  %830 = vmatpush1.msra.mxu0 0.0
  %831 = vmatprep.subr.mxu0 0.0
  %832 = vmatpush1.msra.mxu0 0.0
  %833 = vmatprep.subr.mxu0 0.0
  %834 = vmatpush1.msra.mxu0 0.0
  %835 = vmatprep.subr.mxu0 0.0
  %836 = vmatpush1.msra.mxu0 0.0
  %837 = vmatprep.subr.mxu0 0.0
  %838 = vmatpush1.msra.mxu0 0.0
  %839 = vmatprep.subr.mxu0 0.0
  %840 = vmatpush1.msra.mxu0 0.0
  %841 = vmatprep.subr.mxu0 0.0
  %842 = vmatpush1.msra.mxu0 0.0
  %843 = vmatprep.subr.mxu0 0.0
  %844 = vmatpush1.msra.mxu0 0.0
  %845 = vmatprep.subr.mxu0 0.0
  %846 = vmatpush1.msra.mxu0 0.0
  %847 = vmatprep.subr.mxu0 0.0
  %848 = vmatpush1.msra.mxu0 0.0
  %849 = vmatprep.mubr.f32.mxu0 0.0
  %850 = vmatmul.mubr.f32.gmra.mrb[0].mxu0 %v700
  %v851 = vpop.f32.mrb[0].mxu0
  %v852 = vadd.f32 0.0, %v851
  %v853 = vpop.f32.mrb[0].mxu0
  %854 = vmatprep.mubr.f32.mxu0 0.0
  %855 = vmatmul.mubr.f32.gmra.mrb[0].mxu0 %v705
  %v856 = vpop.f32.mrb[0].mxu0
  %v857 = vadd.f32 0.0, %v856
  %v858 = vpop.f32.mrb[0].mxu0
  %859 = vdwg.mxu0
  %v860 = vld [vmem:[%s5] sm:$0xf]
  %v861 = vld [vmem:[%s5 + $0x4] sm:$0xf]
  %v862 = vld [vmem:[%s5 + $0x8] sm:$0xf]
  %v863 = vld [vmem:[%s5 + $0xc] sm:$0xf]
  %v864 = vld [vmem:[%s5 + $0x10] sm:$0xf]
  %v865 = vld [vmem:[%s5 + $0x14] sm:$0xf]
  %v866 = vld [vmem:[%s5 + $0x18] sm:$0xf]
  %v867 = vld [vmem:[%s5 + $0x1c] sm:$0xf]
  %v868 = vld [vmem:[%s5 + $0x20] sm:$0xf]
  %v869 = vld [vmem:[%s5 + $0x24] sm:$0xf]
  %v870 = vld [vmem:[%s5 + $0x28] sm:$0xf]
  %v871 = vld [vmem:[%s5 + $0x2c] sm:$0xf]
  %v872 = vld [vmem:[%s5 + $0x30] sm:$0xf]
  %v873 = vld [vmem:[%s5 + $0x34] sm:$0xf]
  %v874 = vld [vmem:[%s5 + $0x38] sm:$0xf]
  %v875 = vld [vmem:[%s5 + $0x3c] sm:$0xf]
  %v876 = vld [vmem:[%s5 + $0x40] sm:$0xf]
  %v877 = vld [vmem:[%s5 + $0x44] sm:$0xf]
  %v878 = vld [vmem:[%s5 + $0x48] sm:$0xf]
  %v879 = vld [vmem:[%s5 + $0x4c] sm:$0xf]
  %v880 = vld [vmem:[%s5 + $0x50] sm:$0xf]
  %v881 = vld [vmem:[%s5 + $0x54] sm:$0xf]
  %v882 = vld [vmem:[%s5 + $0x58] sm:$0xf]
  %v883 = vld [vmem:[%s5 + $0x5c] sm:$0xf]
  %v884 = vld [vmem:[%s5 + $0x60] sm:$0xf]
  %v885 = vld [vmem:[%s5 + $0x64] sm:$0xf]
  %v886 = vld [vmem:[%s5 + $0x68] sm:$0xf]
  %v887 = vld [vmem:[%s5 + $0x6c] sm:$0xf]
  %v888 = vld [vmem:[%s5 + $0x70] sm:$0xf]
  %v889 = vld [vmem:[%s5 + $0x74] sm:$0xf]
  %v890 = vld [vmem:[%s5 + $0x78] sm:$0xf]
  %v891 = vld [vmem:[%s5 + $0x7c] sm:$0xf]
  %v892 = vld [vmem:[%s5 + $0x80] sm:$0xf]
  %v893 = vld [vmem:[%s5 + $0x84] sm:$0xf]
  %v894 = vld [vmem:[%s5 + $0x88] sm:$0xf]
  %v895 = vld [vmem:[%s5 + $0x8c] sm:$0xf]
  %v896 = vld [vmem:[%s5 + $0x90] sm:$0xf]
  %v897 = vld [vmem:[%s5 + $0x94] sm:$0xf]
  %v898 = vld [vmem:[%s5 + $0x98] sm:$0xf]
  %v899 = vld [vmem:[%s5 + $0x9c] sm:$0xf]
  %v900 = vpack.c.bf16 %v775, %v775
  %v901 = vpack.c.bf16 %v777, %v777
  %v902 = vpack.c.bf16 %v852, %v852
  %v943 = vunpack.c.l.b16 %v860
  %v944 = vunpack.c.l.b16 %v861
  %v945 = vunpack.c.l.b16 %v862
  %v946 = vunpack.c.l.b16 %v863
  %v947 = vunpack.c.l.b16 %v864
  %v948 = vunpack.c.l.b16 %v865
  %v949 = vunpack.c.l.b16 %v866
  %v950 = vunpack.c.l.b16 %v867
  %v951 = vunpack.c.l.b16 %v868
  %v952 = vunpack.c.l.b16 %v869
  %v953 = vunpack.c.l.b16 %v870
  %v954 = vunpack.c.l.b16 %v871
  %v955 = vunpack.c.l.b16 %v872
  %v956 = vunpack.c.l.b16 %v873
  %v957 = vunpack.c.l.b16 %v874
  %v958 = vunpack.c.l.b16 %v875
  %v959 = vunpack.c.l.b16 %v876
  %v960 = vunpack.c.l.b16 %v877
  %v961 = vunpack.c.l.b16 %v878
  %v962 = vunpack.c.l.b16 %v879
  %v963 = vunpack.c.l.b16 %v880
  %v964 = vunpack.c.l.b16 %v881
  %v965 = vunpack.c.l.b16 %v882
  %v966 = vunpack.c.l.b16 %v883
  %v967 = vunpack.c.l.b16 %v884
  %v968 = vunpack.c.l.b16 %v885
  %v969 = vunpack.c.l.b16 %v886
  %v970 = vunpack.c.l.b16 %v887
  %v971 = vunpack.c.l.b16 %v888
  %v972 = vunpack.c.l.b16 %v889
  %v973 = vunpack.c.l.b16 %v890
  %v974 = vunpack.c.l.b16 %v891
  %v975 = vunpack.c.l.b16 %v892
  %v976 = vunpack.c.l.b16 %v893
  %v977 = vunpack.c.l.b16 %v894
  %v978 = vunpack.c.l.b16 %v895
  %v979 = vunpack.c.l.b16 %v896
  %v980 = vunpack.c.l.b16 %v897
  %v981 = vunpack.c.l.b16 %v898
  %v982 = vunpack.c.l.b16 %v899
  %v983 = vpack.c.b16 %v944, %v943
  %v984 = vpack.c.b16 %v946, %v945
  %v985 = vpack.c.b16 %v948, %v947
  %v986 = vpack.c.b16 %v950, %v949
  %v987 = vpack.c.b16 %v952, %v951
  %v988 = vpack.c.b16 %v954, %v953
  %v989 = vpack.c.b16 %v956, %v955
  %v990 = vpack.c.b16 %v958, %v957
  %v991 = vpack.c.b16 %v960, %v959
  %v992 = vpack.c.b16 %v962, %v961
  %v993 = vpack.c.b16 %v964, %v963
  %v994 = vpack.c.b16 %v966, %v965
  %v995 = vpack.c.b16 %v968, %v967
  %v996 = vpack.c.b16 %v970, %v969
  %v997 = vpack.c.b16 %v972, %v971
  %v998 = vpack.c.b16 %v974, %v973
  %v999 = vpack.c.b16 %v976, %v975
  %v1000 = vpack.c.b16 %v978, %v977
  %v1001 = vpack.c.b16 %v980, %v979
  %v1002 = vpack.c.b16 %v982, %v981
  %v1024 = vsel %vm258, %v902, 0
  %1026 = vmatprep.subr.bf16.mxu0 0
  %1027 = vmatpush1.bf16.msra.mxu0 %v983
  %1028 = vmatprep.subr.bf16.mxu0 0
  %1029 = vmatpush1.bf16.msra.mxu0 %v984
  %1030 = vmatprep.subr.bf16.mxu0 0
  %1031 = vmatpush1.bf16.msra.mxu0 %v985
  %1032 = vmatprep.subr.bf16.mxu0 0
  %1033 = vmatpush1.bf16.msra.mxu0 %v986
  %1034 = vmatprep.subr.bf16.mxu0 0
  %1035 = vmatpush1.bf16.msra.mxu0 %v987
  %1036 = vmatprep.subr.bf16.mxu0 0
  %1037 = vmatpush1.bf16.msra.mxu0 %v988
  %1038 = vmatprep.subr.bf16.mxu0 0
  %1039 = vmatpush1.bf16.msra.mxu0 %v989
  %1040 = vmatprep.subr.bf16.mxu0 0
  %1041 = vmatpush1.bf16.msra.mxu0 %v990
  %1042 = vmatprep.subr.bf16.mxu0 0
  %1043 = vmatpush1.bf16.msra.mxu0 %v991
  %1044 = vmatprep.subr.bf16.mxu0 0
  %1045 = vmatpush1.bf16.msra.mxu0 %v992
  %1046 = vmatprep.subr.bf16.mxu0 0
  %1047 = vmatpush1.bf16.msra.mxu0 %v993
  %1048 = vmatprep.subr.bf16.mxu0 0
  %1049 = vmatpush1.bf16.msra.mxu0 %v994
  %1050 = vmatprep.subr.bf16.mxu0 0
  %1051 = vmatpush1.bf16.msra.mxu0 %v995
  %1052 = vmatprep.subr.bf16.mxu0 0
  %1053 = vmatpush1.bf16.msra.mxu0 %v996
  %1054 = vmatprep.subr.bf16.mxu0 0
  %1055 = vmatpush1.bf16.msra.mxu0 %v997
  %1056 = vmatprep.subr.bf16.mxu0 0
  %1057 = vmatpush1.bf16.msra.mxu0 %v998
  %1058 = vmatprep.mubr.bf16.mxu0 %v901
  %1059 = vmatmul.mubr.bf16.gmra.mrb[0].mxu0 %v900
  %v1060 = vpop.f32.mrb[0].mxu0
  %v1061 = vadd.f32 0.0, %v1060
  %v1062 = vpop.f32.mrb[0].mxu0
  %v1063 = vpop.f32.mrb[0].mxu0
  %v1064 = vpop.f32.mrb[0].mxu0
  %1065 = vdwg.mxu0
  %1066 = vmatprep.subr.bf16.mxu0 0
  %1067 = vmatpush1.bf16.msra.mxu0 %v999
  %1068 = vmatprep.subr.bf16.mxu0 0
  %1069 = vmatpush1.bf16.msra.mxu0 %v1000
  %1070 = vmatprep.subr.bf16.mxu0 0
  %1071 = vmatpush1.bf16.msra.mxu0 %v1001
  %1072 = vmatprep.subr.bf16.mxu0 0
  %1073 = vmatpush1.bf16.msra.mxu0 %v1002
  %1074 = vmatprep.subr.bf16.mxu0 0
  %1075 = vmatpush1.bf16.msra.mxu0 0
  %1076 = vmatprep.subr.bf16.mxu0 0
  %1077 = vmatpush1.bf16.msra.mxu0 0
  %1078 = vmatprep.subr.bf16.mxu0 0
  %1079 = vmatpush1.bf16.msra.mxu0 0
  %1080 = vmatprep.subr.bf16.mxu0 0
  %1081 = vmatpush1.bf16.msra.mxu0 0
  %1082 = vmatprep.subr.bf16.mxu0 0
  %1083 = vmatpush1.bf16.msra.mxu0 0
  %1084 = vmatprep.subr.bf16.mxu0 0
  %1085 = vmatpush1.bf16.msra.mxu0 0
  %1086 = vmatprep.subr.bf16.mxu0 0
  %1087 = vmatpush1.bf16.msra.mxu0 0
  %1088 = vmatprep.subr.bf16.mxu0 0
  %1089 = vmatpush1.bf16.msra.mxu0 0
  %1090 = vmatprep.subr.bf16.mxu0 0
  %1091 = vmatpush1.bf16.msra.mxu0 0
  %1092 = vmatprep.subr.bf16.mxu0 0
  %1093 = vmatpush1.bf16.msra.mxu0 0
  %1094 = vmatprep.subr.bf16.mxu0 0
  %1095 = vmatpush1.bf16.msra.mxu0 0
  %1096 = vmatprep.subr.bf16.mxu0 0
  %1097 = vmatpush1.bf16.msra.mxu0 0
  %1098 = vmatprep.mubr.bf16.mxu0 0
  %1099 = vmatmul.mubr.bf16.gmra.mrb[0].mxu0 %v1024
  %v1100 = vpop.f32.mrb[0].mxu0
  %v1101 = vadd.f32 %v1061, %v1100
  %v1102 = vpop.f32.mrb[0].mxu0
  %v1103 = vpop.f32.mrb[0].mxu0
  %v1104 = vpop.f32.mrb[0].mxu0
  %1105 = vdwg.mxu0
  %v1107 = vlaneseq
  %v1108 = vshrl.u32 %v1107, 7
  %v1109 = vsub.s32 0, %v1108
  %v1110 = vrot.slane %v40, %v1109
  %v1112 = vadd.f32 %v1110, %v1101
  %s1113 = scalar_lea.vmem %s5, 160
  %v1114 = vld [vmem:[%s1113] sm:$0xf]
  %v1115 = vld [vmem:[%s1113 + $0x4] sm:$0xf]
  %v1116 = vld [vmem:[%s1113 + $0x8] sm:$0xf]
  %v1117 = vld [vmem:[%s1113 + $0xc] sm:$0xf]
  %v1118 = vld [vmem:[%s1113 + $0x10] sm:$0xf]
  %v1119 = vld [vmem:[%s1113 + $0x14] sm:$0xf]
  %v1120 = vld [vmem:[%s1113 + $0x18] sm:$0xf]
  %v1121 = vld [vmem:[%s1113 + $0x1c] sm:$0xf]
  %v1122 = vld [vmem:[%s1113 + $0x20] sm:$0xf]
  %v1123 = vld [vmem:[%s1113 + $0x24] sm:$0xf]
  %v1124 = vld [vmem:[%s1113 + $0x28] sm:$0xf]
  %v1125 = vld [vmem:[%s1113 + $0x2c] sm:$0xf]
  %v1126 = vld [vmem:[%s1113 + $0x30] sm:$0xf]
  %v1127 = vld [vmem:[%s1113 + $0x34] sm:$0xf]
  %v1128 = vld [vmem:[%s1113 + $0x38] sm:$0xf]
  %v1129 = vld [vmem:[%s1113 + $0x3c] sm:$0xf]
  %v1130 = vld [vmem:[%s1113 + $0x40] sm:$0xf]
  %v1131 = vld [vmem:[%s1113 + $0x44] sm:$0xf]
  %v1132 = vld [vmem:[%s1113 + $0x48] sm:$0xf]
  %v1133 = vld [vmem:[%s1113 + $0x4c] sm:$0xf]
  %v1134 = vld [vmem:[%s1113 + $0x50] sm:$0xf]
  %v1135 = vld [vmem:[%s1113 + $0x54] sm:$0xf]
  %v1136 = vld [vmem:[%s1113 + $0x58] sm:$0xf]
  %v1137 = vld [vmem:[%s1113 + $0x5c] sm:$0xf]
  %v1138 = vld [vmem:[%s1113 + $0x60] sm:$0xf]
  %v1139 = vld [vmem:[%s1113 + $0x64] sm:$0xf]
  %v1140 = vld [vmem:[%s1113 + $0x68] sm:$0xf]
  %v1141 = vld [vmem:[%s1113 + $0x6c] sm:$0xf]
  %v1142 = vld [vmem:[%s1113 + $0x70] sm:$0xf]
  %v1143 = vld [vmem:[%s1113 + $0x74] sm:$0xf]
  %v1144 = vld [vmem:[%s1113 + $0x78] sm:$0xf]
  %v1145 = vld [vmem:[%s1113 + $0x7c] sm:$0xf]
  %v1146 = vld [vmem:[%s1113 + $0x80] sm:$0xf]
  %v1147 = vld [vmem:[%s1113 + $0x84] sm:$0xf]
  %v1148 = vld [vmem:[%s1113 + $0x88] sm:$0xf]
  %v1149 = vld [vmem:[%s1113 + $0x8c] sm:$0xf]
  %v1150 = vld [vmem:[%s1113 + $0x90] sm:$0xf]
  %v1151 = vld [vmem:[%s1113 + $0x94] sm:$0xf]
  %v1152 = vld [vmem:[%s1113 + $0x98] sm:$0xf]
  %v1153 = vld [vmem:[%s1113 + $0x9c] sm:$0xf]
  %v1154 = vpack.c.bf16 %v781, %v775
  %v1155 = vpack.c.bf16 %v783, %v777
  %v1156 = vpack.c.bf16 %v857, %v852
  %v1158 = vshrl.u32 %v1154, 16
  %v1160 = vshll.u32 %v1154, 16
  %v1162 = vrot.slane %v1160, 1
  %v1163 = vor.u32 %v1158, %v1162
  %v1165 = vshrl.u32 %v1155, 16
  %v1167 = vshll.u32 %v1155, 16
  %v1169 = vrot.slane %v1167, 1
  %v1170 = vor.u32 %v1165, %v1169
  %v1172 = vshrl.u32 %v1156, 16
  %v1174 = vshll.u32 %v1156, 16
  %v1176 = vrot.slane %v1174, 1
  %v1177 = vor.u32 %v1172, %v1176
  %v1220 = vunpack.c.l.b16 %v1114
  %v1221 = vunpack.c.l.b16 %v1115
  %v1222 = vunpack.c.l.b16 %v1116
  %v1223 = vunpack.c.l.b16 %v1117
  %v1224 = vunpack.c.l.b16 %v1118
  %v1225 = vunpack.c.l.b16 %v1119
  %v1226 = vunpack.c.l.b16 %v1120
  %v1227 = vunpack.c.l.b16 %v1121
  %v1228 = vunpack.c.l.b16 %v1122
  %v1229 = vunpack.c.l.b16 %v1123
  %v1230 = vunpack.c.l.b16 %v1124
  %v1231 = vunpack.c.l.b16 %v1125
  %v1232 = vunpack.c.l.b16 %v1126
  %v1233 = vunpack.c.l.b16 %v1127
  %v1234 = vunpack.c.l.b16 %v1128
  %v1235 = vunpack.c.l.b16 %v1129
  %v1236 = vunpack.c.l.b16 %v1130
  %v1237 = vunpack.c.l.b16 %v1131
  %v1238 = vunpack.c.l.b16 %v1132
  %v1239 = vunpack.c.l.b16 %v1133
  %v1240 = vunpack.c.l.b16 %v1134
  %v1241 = vunpack.c.l.b16 %v1135
  %v1242 = vunpack.c.l.b16 %v1136
  %v1243 = vunpack.c.l.b16 %v1137
  %v1244 = vunpack.c.l.b16 %v1138
  %v1245 = vunpack.c.l.b16 %v1139
  %v1246 = vunpack.c.l.b16 %v1140
  %v1247 = vunpack.c.l.b16 %v1141
  %v1248 = vunpack.c.l.b16 %v1142
  %v1249 = vunpack.c.l.b16 %v1143
  %v1250 = vunpack.c.l.b16 %v1144
  %v1251 = vunpack.c.l.b16 %v1145
  %v1252 = vunpack.c.l.b16 %v1146
  %v1253 = vunpack.c.l.b16 %v1147
  %v1254 = vunpack.c.l.b16 %v1148
  %v1255 = vunpack.c.l.b16 %v1149
  %v1256 = vunpack.c.l.b16 %v1150
  %v1257 = vunpack.c.l.b16 %v1151
  %v1258 = vunpack.c.l.b16 %v1152
  %v1259 = vunpack.c.l.b16 %v1153
  %v1260 = vpack.c.b16 %v1221, %v1220
  %v1261 = vpack.c.b16 %v1223, %v1222
  %v1262 = vpack.c.b16 %v1225, %v1224
  %v1263 = vpack.c.b16 %v1227, %v1226
  %v1264 = vpack.c.b16 %v1229, %v1228
  %v1265 = vpack.c.b16 %v1231, %v1230
  %v1266 = vpack.c.b16 %v1233, %v1232
  %v1267 = vpack.c.b16 %v1235, %v1234
  %v1268 = vpack.c.b16 %v1237, %v1236
  %v1269 = vpack.c.b16 %v1239, %v1238
  %v1270 = vpack.c.b16 %v1241, %v1240
  %v1271 = vpack.c.b16 %v1243, %v1242
  %v1272 = vpack.c.b16 %v1245, %v1244
  %v1273 = vpack.c.b16 %v1247, %v1246
  %v1274 = vpack.c.b16 %v1249, %v1248
  %v1275 = vpack.c.b16 %v1251, %v1250
  %v1276 = vpack.c.b16 %v1253, %v1252
  %v1277 = vpack.c.b16 %v1255, %v1254
  %v1278 = vpack.c.b16 %v1257, %v1256
  %v1279 = vpack.c.b16 %v1259, %v1258
  %v1301 = vsel %vm258, %v1177, 0
  %1303 = vmatprep.subr.bf16.mxu0 0
  %1304 = vmatpush1.bf16.msra.mxu0 %v1260
  %1305 = vmatprep.subr.bf16.mxu0 0
  %1306 = vmatpush1.bf16.msra.mxu0 %v1261
  %1307 = vmatprep.subr.bf16.mxu0 0
  %1308 = vmatpush1.bf16.msra.mxu0 %v1262
  %1309 = vmatprep.subr.bf16.mxu0 0
  %1310 = vmatpush1.bf16.msra.mxu0 %v1263
  %1311 = vmatprep.subr.bf16.mxu0 0
  %1312 = vmatpush1.bf16.msra.mxu0 %v1264
  %1313 = vmatprep.subr.bf16.mxu0 0
  %1314 = vmatpush1.bf16.msra.mxu0 %v1265
  %1315 = vmatprep.subr.bf16.mxu0 0
  %1316 = vmatpush1.bf16.msra.mxu0 %v1266
  %1317 = vmatprep.subr.bf16.mxu0 0
  %1318 = vmatpush1.bf16.msra.mxu0 %v1267
  %1319 = vmatprep.subr.bf16.mxu0 0
  %1320 = vmatpush1.bf16.msra.mxu0 %v1268
  %1321 = vmatprep.subr.bf16.mxu0 0
  %1322 = vmatpush1.bf16.msra.mxu0 %v1269
  %1323 = vmatprep.subr.bf16.mxu0 0
  %1324 = vmatpush1.bf16.msra.mxu0 %v1270
  %1325 = vmatprep.subr.bf16.mxu0 0
  %1326 = vmatpush1.bf16.msra.mxu0 %v1271
  %1327 = vmatprep.subr.bf16.mxu0 0
  %1328 = vmatpush1.bf16.msra.mxu0 %v1272
  %1329 = vmatprep.subr.bf16.mxu0 0
  %1330 = vmatpush1.bf16.msra.mxu0 %v1273
  %1331 = vmatprep.subr.bf16.mxu0 0
  %1332 = vmatpush1.bf16.msra.mxu0 %v1274
  %1333 = vmatprep.subr.bf16.mxu0 0
  %1334 = vmatpush1.bf16.msra.mxu0 %v1275
  %1335 = vmatprep.mubr.bf16.mxu0 %v1170
  %1336 = vmatmul.mubr.bf16.gmra.mrb[0].mxu0 %v1163
  %v1337 = vpop.f32.mrb[0].mxu0
  %v1338 = vadd.f32 0.0, %v1337
  %v1339 = vpop.f32.mrb[0].mxu0
  %v1340 = vpop.f32.mrb[0].mxu0
  %v1341 = vpop.f32.mrb[0].mxu0
  %1342 = vdwg.mxu0
  %1343 = vmatprep.subr.bf16.mxu0 0
  %1344 = vmatpush1.bf16.msra.mxu0 %v1276
  %1345 = vmatprep.subr.bf16.mxu0 0
  %1346 = vmatpush1.bf16.msra.mxu0 %v1277
  %1347 = vmatprep.subr.bf16.mxu0 0
  %1348 = vmatpush1.bf16.msra.mxu0 %v1278
  %1349 = vmatprep.subr.bf16.mxu0 0
  %1350 = vmatpush1.bf16.msra.mxu0 %v1279
  %1351 = vmatprep.subr.bf16.mxu0 0
  %1352 = vmatpush1.bf16.msra.mxu0 0
  %1353 = vmatprep.subr.bf16.mxu0 0
  %1354 = vmatpush1.bf16.msra.mxu0 0
  %1355 = vmatprep.subr.bf16.mxu0 0
  %1356 = vmatpush1.bf16.msra.mxu0 0
  %1357 = vmatprep.subr.bf16.mxu0 0
  %1358 = vmatpush1.bf16.msra.mxu0 0
  %1359 = vmatprep.subr.bf16.mxu0 0
  %1360 = vmatpush1.bf16.msra.mxu0 0
  %1361 = vmatprep.subr.bf16.mxu0 0
  %1362 = vmatpush1.bf16.msra.mxu0 0
  %1363 = vmatprep.subr.bf16.mxu0 0
  %1364 = vmatpush1.bf16.msra.mxu0 0
  %1365 = vmatprep.subr.bf16.mxu0 0
  %1366 = vmatpush1.bf16.msra.mxu0 0
  %1367 = vmatprep.subr.bf16.mxu0 0
  %1368 = vmatpush1.bf16.msra.mxu0 0
  %1369 = vmatprep.subr.bf16.mxu0 0
  %1370 = vmatpush1.bf16.msra.mxu0 0
  %1371 = vmatprep.subr.bf16.mxu0 0
  %1372 = vmatpush1.bf16.msra.mxu0 0
  %1373 = vmatprep.subr.bf16.mxu0 0
  %1374 = vmatpush1.bf16.msra.mxu0 0
  %1375 = vmatprep.mubr.bf16.mxu0 0
  %1376 = vmatmul.mubr.bf16.gmra.mrb[0].mxu0 %v1301
  %v1377 = vpop.f32.mrb[0].mxu0
  %v1378 = vadd.f32 %v1338, %v1377
  %v1379 = vpop.f32.mrb[0].mxu0
  %v1380 = vpop.f32.mrb[0].mxu0
  %v1381 = vpop.f32.mrb[0].mxu0
  %1382 = vdwg.mxu0
  %v1383 = vadd.f32 %v1112, %v1378
  %s1384 = scalar_lea.vmem %s5, 320
  %v1385 = vld [vmem:[%s1384] sm:$0xf]
  %v1386 = vld [vmem:[%s1384 + $0x4] sm:$0xf]
  %v1387 = vld [vmem:[%s1384 + $0x8] sm:$0xf]
  %v1388 = vld [vmem:[%s1384 + $0xc] sm:$0xf]
  %v1389 = vld [vmem:[%s1384 + $0x10] sm:$0xf]
  %v1390 = vld [vmem:[%s1384 + $0x14] sm:$0xf]
  %v1391 = vld [vmem:[%s1384 + $0x18] sm:$0xf]
  %v1392 = vld [vmem:[%s1384 + $0x1c] sm:$0xf]
  %v1393 = vld [vmem:[%s1384 + $0x20] sm:$0xf]
  %v1394 = vld [vmem:[%s1384 + $0x24] sm:$0xf]
  %v1395 = vld [vmem:[%s1384 + $0x28] sm:$0xf]
  %v1396 = vld [vmem:[%s1384 + $0x2c] sm:$0xf]
  %v1397 = vld [vmem:[%s1384 + $0x30] sm:$0xf]
  %v1398 = vld [vmem:[%s1384 + $0x34] sm:$0xf]
  %v1399 = vld [vmem:[%s1384 + $0x38] sm:$0xf]
  %v1400 = vld [vmem:[%s1384 + $0x3c] sm:$0xf]
  %v1401 = vld [vmem:[%s1384 + $0x40] sm:$0xf]
  %v1402 = vld [vmem:[%s1384 + $0x44] sm:$0xf]
  %v1403 = vld [vmem:[%s1384 + $0x48] sm:$0xf]
  %v1404 = vld [vmem:[%s1384 + $0x4c] sm:$0xf]
  %v1405 = vld [vmem:[%s1384 + $0x50] sm:$0xf]
  %v1406 = vld [vmem:[%s1384 + $0x54] sm:$0xf]
  %v1407 = vld [vmem:[%s1384 + $0x58] sm:$0xf]
  %v1408 = vld [vmem:[%s1384 + $0x5c] sm:$0xf]
  %v1409 = vld [vmem:[%s1384 + $0x60] sm:$0xf]
  %v1410 = vld [vmem:[%s1384 + $0x64] sm:$0xf]
  %v1411 = vld [vmem:[%s1384 + $0x68] sm:$0xf]
  %v1412 = vld [vmem:[%s1384 + $0x6c] sm:$0xf]
  %v1413 = vld [vmem:[%s1384 + $0x70] sm:$0xf]
  %v1414 = vld [vmem:[%s1384 + $0x74] sm:$0xf]
  %v1415 = vld [vmem:[%s1384 + $0x78] sm:$0xf]
  %v1416 = vld [vmem:[%s1384 + $0x7c] sm:$0xf]
  %v1417 = vld [vmem:[%s1384 + $0x80] sm:$0xf]
  %v1418 = vld [vmem:[%s1384 + $0x84] sm:$0xf]
  %v1419 = vld [vmem:[%s1384 + $0x88] sm:$0xf]
  %v1420 = vld [vmem:[%s1384 + $0x8c] sm:$0xf]
  %v1421 = vld [vmem:[%s1384 + $0x90] sm:$0xf]
  %v1422 = vld [vmem:[%s1384 + $0x94] sm:$0xf]
  %v1423 = vld [vmem:[%s1384 + $0x98] sm:$0xf]
  %v1424 = vld [vmem:[%s1384 + $0x9c] sm:$0xf]
  %v1428 = vrot.slane %v1154, 1
  %v1429 = vrot.slane %v1155, 1
  %v1430 = vrot.slane %v1156, 1
  %v1473 = vunpack.c.l.b16 %v1385
  %v1474 = vunpack.c.l.b16 %v1386
  %v1475 = vunpack.c.l.b16 %v1387
  %v1476 = vunpack.c.l.b16 %v1388
  %v1477 = vunpack.c.l.b16 %v1389
  %v1478 = vunpack.c.l.b16 %v1390
  %v1479 = vunpack.c.l.b16 %v1391
  %v1480 = vunpack.c.l.b16 %v1392
  %v1481 = vunpack.c.l.b16 %v1393
  %v1482 = vunpack.c.l.b16 %v1394
  %v1483 = vunpack.c.l.b16 %v1395
  %v1484 = vunpack.c.l.b16 %v1396
  %v1485 = vunpack.c.l.b16 %v1397
  %v1486 = vunpack.c.l.b16 %v1398
  %v1487 = vunpack.c.l.b16 %v1399
  %v1488 = vunpack.c.l.b16 %v1400
  %v1489 = vunpack.c.l.b16 %v1401
  %v1490 = vunpack.c.l.b16 %v1402
  %v1491 = vunpack.c.l.b16 %v1403
  %v1492 = vunpack.c.l.b16 %v1404
  %v1493 = vunpack.c.l.b16 %v1405
  %v1494 = vunpack.c.l.b16 %v1406
  %v1495 = vunpack.c.l.b16 %v1407
  %v1496 = vunpack.c.l.b16 %v1408
  %v1497 = vunpack.c.l.b16 %v1409
  %v1498 = vunpack.c.l.b16 %v1410
  %v1499 = vunpack.c.l.b16 %v1411
  %v1500 = vunpack.c.l.b16 %v1412
  %v1501 = vunpack.c.l.b16 %v1413
  %v1502 = vunpack.c.l.b16 %v1414
  %v1503 = vunpack.c.l.b16 %v1415
  %v1504 = vunpack.c.l.b16 %v1416
  %v1505 = vunpack.c.l.b16 %v1417
  %v1506 = vunpack.c.l.b16 %v1418
  %v1507 = vunpack.c.l.b16 %v1419
  %v1508 = vunpack.c.l.b16 %v1420
  %v1509 = vunpack.c.l.b16 %v1421
  %v1510 = vunpack.c.l.b16 %v1422
  %v1511 = vunpack.c.l.b16 %v1423
  %v1512 = vunpack.c.l.b16 %v1424
  %v1513 = vpack.c.b16 %v1474, %v1473
  %v1514 = vpack.c.b16 %v1476, %v1475
  %v1515 = vpack.c.b16 %v1478, %v1477
  %v1516 = vpack.c.b16 %v1480, %v1479
  %v1517 = vpack.c.b16 %v1482, %v1481
  %v1518 = vpack.c.b16 %v1484, %v1483
  %v1519 = vpack.c.b16 %v1486, %v1485
  %v1520 = vpack.c.b16 %v1488, %v1487
  %v1521 = vpack.c.b16 %v1490, %v1489
  %v1522 = vpack.c.b16 %v1492, %v1491
  %v1523 = vpack.c.b16 %v1494, %v1493
  %v1524 = vpack.c.b16 %v1496, %v1495
  %v1525 = vpack.c.b16 %v1498, %v1497
  %v1526 = vpack.c.b16 %v1500, %v1499
  %v1527 = vpack.c.b16 %v1502, %v1501
  %v1528 = vpack.c.b16 %v1504, %v1503
  %v1529 = vpack.c.b16 %v1506, %v1505
  %v1530 = vpack.c.b16 %v1508, %v1507
  %v1531 = vpack.c.b16 %v1510, %v1509
  %v1532 = vpack.c.b16 %v1512, %v1511
  %v1554 = vsel %vm258, %v1430, 0
  %1556 = vmatprep.subr.bf16.mxu0 0
  %1557 = vmatpush1.bf16.msra.mxu0 %v1513
  %1558 = vmatprep.subr.bf16.mxu0 0
  %1559 = vmatpush1.bf16.msra.mxu0 %v1514
  %1560 = vmatprep.subr.bf16.mxu0 0
  %1561 = vmatpush1.bf16.msra.mxu0 %v1515
  %1562 = vmatprep.subr.bf16.mxu0 0
  %1563 = vmatpush1.bf16.msra.mxu0 %v1516
  %1564 = vmatprep.subr.bf16.mxu0 0
  %1565 = vmatpush1.bf16.msra.mxu0 %v1517
  %1566 = vmatprep.subr.bf16.mxu0 0
  %1567 = vmatpush1.bf16.msra.mxu0 %v1518
  %1568 = vmatprep.subr.bf16.mxu0 0
  %1569 = vmatpush1.bf16.msra.mxu0 %v1519
  %1570 = vmatprep.subr.bf16.mxu0 0
  %1571 = vmatpush1.bf16.msra.mxu0 %v1520
  %1572 = vmatprep.subr.bf16.mxu0 0
  %1573 = vmatpush1.bf16.msra.mxu0 %v1521
  %1574 = vmatprep.subr.bf16.mxu0 0
  %1575 = vmatpush1.bf16.msra.mxu0 %v1522
  %1576 = vmatprep.subr.bf16.mxu0 0
  %1577 = vmatpush1.bf16.msra.mxu0 %v1523
  %1578 = vmatprep.subr.bf16.mxu0 0
  %1579 = vmatpush1.bf16.msra.mxu0 %v1524
  %1580 = vmatprep.subr.bf16.mxu0 0
  %1581 = vmatpush1.bf16.msra.mxu0 %v1525
  %1582 = vmatprep.subr.bf16.mxu0 0
  %1583 = vmatpush1.bf16.msra.mxu0 %v1526
  %1584 = vmatprep.subr.bf16.mxu0 0
  %1585 = vmatpush1.bf16.msra.mxu0 %v1527
  %1586 = vmatprep.subr.bf16.mxu0 0
  %1587 = vmatpush1.bf16.msra.mxu0 %v1528
  %1588 = vmatprep.mubr.bf16.mxu0 %v1429
  %1589 = vmatmul.mubr.bf16.gmra.mrb[0].mxu0 %v1428
  %v1590 = vpop.f32.mrb[0].mxu0
  %v1591 = vadd.f32 0.0, %v1590
  %v1592 = vpop.f32.mrb[0].mxu0
  %v1593 = vpop.f32.mrb[0].mxu0
  %v1594 = vpop.f32.mrb[0].mxu0
  %1595 = vdwg.mxu0
  %1596 = vmatprep.subr.bf16.mxu0 0
  %1597 = vmatpush1.bf16.msra.mxu0 %v1529
  %1598 = vmatprep.subr.bf16.mxu0 0
  %1599 = vmatpush1.bf16.msra.mxu0 %v1530
  %1600 = vmatprep.subr.bf16.mxu0 0
  %1601 = vmatpush1.bf16.msra.mxu0 %v1531
  %1602 = vmatprep.subr.bf16.mxu0 0
  %1603 = vmatpush1.bf16.msra.mxu0 %v1532
  %1604 = vmatprep.subr.bf16.mxu0 0
  %1605 = vmatpush1.bf16.msra.mxu0 0
  %1606 = vmatprep.subr.bf16.mxu0 0
  %1607 = vmatpush1.bf16.msra.mxu0 0
  %1608 = vmatprep.subr.bf16.mxu0 0
  %1609 = vmatpush1.bf16.msra.mxu0 0
  %1610 = vmatprep.subr.bf16.mxu0 0
  %1611 = vmatpush1.bf16.msra.mxu0 0
  %1612 = vmatprep.subr.bf16.mxu0 0
  %1613 = vmatpush1.bf16.msra.mxu0 0
  %1614 = vmatprep.subr.bf16.mxu0 0
  %1615 = vmatpush1.bf16.msra.mxu0 0
  %1616 = vmatprep.subr.bf16.mxu0 0
  %1617 = vmatpush1.bf16.msra.mxu0 0
  %1618 = vmatprep.subr.bf16.mxu0 0
  %1619 = vmatpush1.bf16.msra.mxu0 0
  %1620 = vmatprep.subr.bf16.mxu0 0
  %1621 = vmatpush1.bf16.msra.mxu0 0
  %1622 = vmatprep.subr.bf16.mxu0 0
  %1623 = vmatpush1.bf16.msra.mxu0 0
  %1624 = vmatprep.subr.bf16.mxu0 0
  %1625 = vmatpush1.bf16.msra.mxu0 0
  %1626 = vmatprep.subr.bf16.mxu0 0
  %1627 = vmatpush1.bf16.msra.mxu0 0
  %1628 = vmatprep.mubr.bf16.mxu0 0
  %1629 = vmatmul.mubr.bf16.gmra.mrb[0].mxu0 %v1554
  %v1630 = vpop.f32.mrb[0].mxu0
  %v1631 = vadd.f32 %v1591, %v1630
  %v1632 = vpop.f32.mrb[0].mxu0
  %v1633 = vpop.f32.mrb[0].mxu0
  %v1634 = vpop.f32.mrb[0].mxu0
  %1635 = vdwg.mxu0
  %v1636 = vadd.f32 %v1383, %v1631
  %vm1637 = vcmp.gt.f32.partialorder %v1636, 0.0
  %v1638 = vmul.f32 %v1636, 0.01
  %v1639 = vsel %vm1637, %v1636, %v1638
  %vm1640 = vcmask 64512
  %v1642 = vsel %vm1640, %v92, 0
  %v1645 = vsel %vm1640, %v93, 0
  %1647 = vmatprep.subr.mxu0 0.0
  %1648 = vmatpush1.msra.mxu0 %v1639
  %1649 = vmatprep.subr.mxu0 0.0
  %1650 = vmatpush1.msra.mxu0 0.0
  %1651 = vmatprep.subr.mxu0 0.0
  %1652 = vmatpush1.msra.mxu0 0.0
  %1653 = vmatprep.subr.mxu0 0.0
  %1654 = vmatpush1.msra.mxu0 0.0
  %1655 = vmatprep.subr.mxu0 0.0
  %1656 = vmatpush1.msra.mxu0 0.0
  %1657 = vmatprep.subr.mxu0 0.0
  %1658 = vmatpush1.msra.mxu0 0.0
  %1659 = vmatprep.subr.mxu0 0.0
  %1660 = vmatpush1.msra.mxu0 0.0
  %1661 = vmatprep.subr.mxu0 0.0
  %1662 = vmatpush1.msra.mxu0 0.0
  %1663 = vmatprep.subr.mxu0 0.0
  %1664 = vmatpush1.msra.mxu0 0.0
  %1665 = vmatprep.subr.mxu0 0.0
  %1666 = vmatpush1.msra.mxu0 0.0
  %1667 = vmatprep.subr.mxu0 0.0
  %1668 = vmatpush1.msra.mxu0 0.0
  %1669 = vmatprep.subr.mxu0 0.0
  %1670 = vmatpush1.msra.mxu0 0.0
  %1671 = vmatprep.subr.mxu0 0.0
  %1672 = vmatpush1.msra.mxu0 0.0
  %1673 = vmatprep.subr.mxu0 0.0
  %1674 = vmatpush1.msra.mxu0 0.0
  %1675 = vmatprep.subr.mxu0 0.0
  %1676 = vmatpush1.msra.mxu0 0.0
  %1677 = vmatprep.subr.mxu0 0.0
  %1678 = vmatpush1.msra.mxu0 0.0
  %1679 = vmatprep.subr.mxu0 0.0
  %1680 = vmatpush1.msra.mxu0 0.0
  %1681 = vmatprep.subr.mxu0 0.0
  %1682 = vmatpush1.msra.mxu0 0.0
  %1683 = vmatprep.subr.mxu0 0.0
  %1684 = vmatpush1.msra.mxu0 0.0
  %1685 = vmatprep.subr.mxu0 0.0
  %1686 = vmatpush1.msra.mxu0 0.0
  %1687 = vmatprep.subr.mxu0 0.0
  %1688 = vmatpush1.msra.mxu0 0.0
  %1689 = vmatprep.subr.mxu0 0.0
  %1690 = vmatpush1.msra.mxu0 0.0
  %1691 = vmatprep.subr.mxu0 0.0
  %1692 = vmatpush1.msra.mxu0 0.0
  %1693 = vmatprep.subr.mxu0 0.0
  %1694 = vmatpush1.msra.mxu0 0.0
  %1695 = vmatprep.subr.mxu0 0.0
  %1696 = vmatpush1.msra.mxu0 0.0
  %1697 = vmatprep.subr.mxu0 0.0
  %1698 = vmatpush1.msra.mxu0 0.0
  %1699 = vmatprep.subr.mxu0 0.0
  %1700 = vmatpush1.msra.mxu0 0.0
  %1701 = vmatprep.subr.mxu0 0.0
  %1702 = vmatpush1.msra.mxu0 0.0
  %1703 = vmatprep.subr.mxu0 0.0
  %1704 = vmatpush1.msra.mxu0 0.0
  %1705 = vmatprep.subr.mxu0 0.0
  %1706 = vmatpush1.msra.mxu0 0.0
  %1707 = vmatprep.subr.mxu0 0.0
  %1708 = vmatpush1.msra.mxu0 0.0
  %1709 = vmatprep.subr.mxu0 0.0
  %1710 = vmatpush1.msra.mxu0 0.0
  %1711 = vmatprep.mubr.f32.mxu0 0.0
  %1712 = vmatmul.mubr.f32.gmra.mrb[0].mxu0 %v1642
  %v1713 = vpop.f32.mrb[0].mxu0
  %v1714 = vadd.f32 0.0, %v1713
  %v1715 = vpop.f32.mrb[0].mxu0
  %1716 = vmatprep.mubr.f32.mxu0 0.0
  %1717 = vmatmul.mubr.f32.gmra.mrb[0].mxu0 %v1645
  %v1718 = vpop.f32.mrb[0].mxu0
  %v1719 = vadd.f32 0.0, %v1718
  %v1720 = vpop.f32.mrb[0].mxu0
  %1721 = vdwg.mxu0
  %1722 = vmatprep.subr.mxu0 %v95
  %1723 = vmatpush1.msra.mxu0 %v94
  %1724 = vmatprep.subr.mxu0 %v97
  %1725 = vmatpush1.msra.mxu0 %v96
  %1726 = vmatprep.subr.mxu0 %v99
  %1727 = vmatpush1.msra.mxu0 %v98
  %1728 = vmatprep.subr.mxu0 %v101
  %1729 = vmatpush1.msra.mxu0 %v100
  %1730 = vmatprep.subr.mxu0 %v103
  %1731 = vmatpush1.msra.mxu0 %v102
  %1732 = vmatprep.subr.mxu0 %v105
  %1733 = vmatpush1.msra.mxu0 %v104
  %1734 = vmatprep.subr.mxu0 %v107
  %1735 = vmatpush1.msra.mxu0 %v106
  %1736 = vmatprep.subr.mxu0 %v109
  %1737 = vmatpush1.msra.mxu0 %v108
  %1738 = vmatprep.subr.mxu0 %v111
  %1739 = vmatpush1.msra.mxu0 %v110
  %1740 = vmatprep.subr.mxu0 %v113
  %1741 = vmatpush1.msra.mxu0 %v112
  %1742 = vmatprep.subr.mxu0 %v115
  %1743 = vmatpush1.msra.mxu0 %v114
  %1744 = vmatprep.subr.mxu0 %v117
  %1745 = vmatpush1.msra.mxu0 %v116
  %1746 = vmatprep.subr.mxu0 %v119
  %1747 = vmatpush1.msra.mxu0 %v118
  %1748 = vmatprep.subr.mxu0 %v121
  %1749 = vmatpush1.msra.mxu0 %v120
  %1750 = vmatprep.subr.mxu0 %v123
  %1751 = vmatpush1.msra.mxu0 %v122
  %1752 = vmatprep.subr.mxu0 %v125
  %1753 = vmatpush1.msra.mxu0 %v124
  %1754 = vmatprep.subr.mxu0 0.0
  %1755 = vmatpush1.msra.mxu0 0.0
  %1756 = vmatprep.subr.mxu0 0.0
  %1757 = vmatpush1.msra.mxu0 0.0
  %1758 = vmatprep.subr.mxu0 0.0
  %1759 = vmatpush1.msra.mxu0 0.0
  %1760 = vmatprep.subr.mxu0 0.0
  %1761 = vmatpush1.msra.mxu0 0.0
  %1762 = vmatprep.subr.mxu0 0.0
  %1763 = vmatpush1.msra.mxu0 0.0
  %1764 = vmatprep.subr.mxu0 0.0
  %1765 = vmatpush1.msra.mxu0 0.0
  %1766 = vmatprep.subr.mxu0 0.0
  %1767 = vmatpush1.msra.mxu0 0.0
  %1768 = vmatprep.subr.mxu0 0.0
  %1769 = vmatpush1.msra.mxu0 0.0
  %1770 = vmatprep.subr.mxu0 0.0
  %1771 = vmatpush1.msra.mxu0 0.0
  %1772 = vmatprep.subr.mxu0 0.0
  %1773 = vmatpush1.msra.mxu0 0.0
  %1774 = vmatprep.subr.mxu0 0.0
  %1775 = vmatpush1.msra.mxu0 0.0
  %1776 = vmatprep.subr.mxu0 0.0
  %1777 = vmatpush1.msra.mxu0 0.0
  %1778 = vmatprep.subr.mxu0 0.0
  %1779 = vmatpush1.msra.mxu0 0.0
  %1780 = vmatprep.subr.mxu0 0.0
  %1781 = vmatpush1.msra.mxu0 0.0
  %1782 = vmatprep.subr.mxu0 0.0
  %1783 = vmatpush1.msra.mxu0 0.0
  %1784 = vmatprep.subr.mxu0 0.0
  %1785 = vmatpush1.msra.mxu0 0.0
  %1786 = vmatprep.mubr.f32.mxu0 0.0
  %1787 = vmatmul.mubr.f32.gmra.mrb[0].mxu0 %v1714
  %v1788 = vpop.f32.mrb[0].mxu0
  %v1789 = vadd.f32 0.0, %v1788
  %v1790 = vpop.f32.mrb[0].mxu0
  %v1791 = vadd.f32 0.0, %v1790
  %1792 = vmatprep.mubr.f32.mxu0 0.0
  %1793 = vmatmul.mubr.f32.gmra.mrb[0].mxu0 %v1719
  %v1794 = vpop.f32.mrb[0].mxu0
  %v1795 = vadd.f32 0.0, %v1794
  %v1796 = vpop.f32.mrb[0].mxu0
  %v1797 = vadd.f32 0.0, %v1796
  %1798 = vdwg.mxu0
  %v1799 = vpack.c.bf16 %v1795, %v1789
  %v1800 = vpack.c.bf16 %v1797, %v1791
  %v1802 = vlaneseq
  %v1803 = vshrl.u32 %v1802, 7
  %v1804 = vsub.s32 0, %v1803
  %v1805 = vrot.slane %v41, %v1804
  %v1839 = vunpack.c.l.b16 %v126
  %v1840 = vunpack.c.l.b16 %v127
  %v1841 = vunpack.c.l.b16 %v128
  %v1842 = vunpack.c.l.b16 %v129
  %v1843 = vunpack.c.l.b16 %v130
  %v1844 = vunpack.c.l.b16 %v131
  %v1845 = vunpack.c.l.b16 %v132
  %v1846 = vunpack.c.l.b16 %v133
  %v1847 = vunpack.c.l.b16 %v134
  %v1848 = vunpack.c.l.b16 %v135
  %v1849 = vunpack.c.l.b16 %v136
  %v1850 = vunpack.c.l.b16 %v137
  %v1851 = vunpack.c.l.b16 %v138
  %v1852 = vunpack.c.l.b16 %v139
  %v1853 = vunpack.c.l.b16 %v140
  %v1854 = vunpack.c.l.b16 %v141
  %v1855 = vunpack.c.l.b16 %v142
  %v1856 = vunpack.c.l.b16 %v143
  %v1857 = vunpack.c.l.b16 %v144
  %v1858 = vunpack.c.l.b16 %v145
  %v1859 = vunpack.c.l.b16 %v146
  %v1860 = vunpack.c.l.b16 %v147
  %v1861 = vunpack.c.l.b16 %v148
  %v1862 = vunpack.c.l.b16 %v149
  %v1863 = vunpack.c.l.b16 %v150
  %v1864 = vunpack.c.l.b16 %v151
  %v1865 = vunpack.c.l.b16 %v152
  %v1866 = vunpack.c.l.b16 %v153
  %v1867 = vunpack.c.l.b16 %v154
  %v1868 = vunpack.c.l.b16 %v155
  %v1869 = vunpack.c.l.b16 %v156
  %v1870 = vunpack.c.l.b16 %v157
  %v1871 = vpack.c.b16 %v1840, %v1839
  %v1872 = vpack.c.b16 %v1842, %v1841
  %v1873 = vpack.c.b16 %v1844, %v1843
  %v1874 = vpack.c.b16 %v1846, %v1845
  %v1875 = vpack.c.b16 %v1848, %v1847
  %v1876 = vpack.c.b16 %v1850, %v1849
  %v1877 = vpack.c.b16 %v1852, %v1851
  %v1878 = vpack.c.b16 %v1854, %v1853
  %v1879 = vpack.c.b16 %v1856, %v1855
  %v1880 = vpack.c.b16 %v1858, %v1857
  %v1881 = vpack.c.b16 %v1860, %v1859
  %v1882 = vpack.c.b16 %v1862, %v1861
  %v1883 = vpack.c.b16 %v1864, %v1863
  %v1884 = vpack.c.b16 %v1866, %v1865
  %v1885 = vpack.c.b16 %v1868, %v1867
  %v1886 = vpack.c.b16 %v1870, %v1869
  %1903 = vmatprep.subr.bf16.mxu0 0
  %1904 = vmatpush1.bf16.msra.mxu0 %v1871
  %1905 = vmatprep.subr.bf16.mxu0 0
  %1906 = vmatpush1.bf16.msra.mxu0 %v1872
  %1907 = vmatprep.subr.bf16.mxu0 0
  %1908 = vmatpush1.bf16.msra.mxu0 %v1873
  %1909 = vmatprep.subr.bf16.mxu0 0
  %1910 = vmatpush1.bf16.msra.mxu0 %v1874
  %1911 = vmatprep.subr.bf16.mxu0 0
  %1912 = vmatpush1.bf16.msra.mxu0 %v1875
  %1913 = vmatprep.subr.bf16.mxu0 0
  %1914 = vmatpush1.bf16.msra.mxu0 %v1876
  %1915 = vmatprep.subr.bf16.mxu0 0
  %1916 = vmatpush1.bf16.msra.mxu0 %v1877
  %1917 = vmatprep.subr.bf16.mxu0 0
  %1918 = vmatpush1.bf16.msra.mxu0 %v1878
  %1919 = vmatprep.subr.bf16.mxu0 0
  %1920 = vmatpush1.bf16.msra.mxu0 %v1879
  %1921 = vmatprep.subr.bf16.mxu0 0
  %1922 = vmatpush1.bf16.msra.mxu0 %v1880
  %1923 = vmatprep.subr.bf16.mxu0 0
  %1924 = vmatpush1.bf16.msra.mxu0 %v1881
  %1925 = vmatprep.subr.bf16.mxu0 0
  %1926 = vmatpush1.bf16.msra.mxu0 %v1882
  %1927 = vmatprep.subr.bf16.mxu0 0
  %1928 = vmatpush1.bf16.msra.mxu0 %v1883
  %1929 = vmatprep.subr.bf16.mxu0 0
  %1930 = vmatpush1.bf16.msra.mxu0 %v1884
  %1931 = vmatprep.subr.bf16.mxu0 0
  %1932 = vmatpush1.bf16.msra.mxu0 %v1885
  %1933 = vmatprep.subr.bf16.mxu0 0
  %1934 = vmatpush1.bf16.msra.mxu0 %v1886
  %1935 = vmatprep.mubr.bf16.mxu0 %v1800
  %1936 = vmatmul.mubr.bf16.gmra.mrb[0].mxu0 %v1799
  %v1937 = vpop.f32.mrb[0].mxu0
  %v1938 = vadd.f32 %v1805, %v1937
  %v1939 = vpop.f32.mrb[0].mxu0
  %v1940 = vpop.f32.mrb[0].mxu0
  %v1941 = vadd.f32 %v1805, %v1940
  %v1942 = vpop.f32.mrb[0].mxu0
  %1943 = vdwg.mxu0
  %v1944 = vmax.f32 %v1938, -1.0
  %v1945 = vmax.f32 %v1941, -1.0
  %v1946 = vmin.f32 %v1944, 1.0
  %v1947 = vmin.f32 %v1945, 1.0
  %1948 = vst.msk [vmem:[%s11] sm:$0xff] %vm258, %v1946
  %1949 = vst.msk [vmem:[%s11 + $0x8] sm:$0xff] %vm258, %v1947
  %s1950 = scalar_lea.vmem %s0, 16
  %v1951 = vld [vmem:[%s1950] sm:$0xf]
  %v1952 = vld [vmem:[%s1950 + $0x8] sm:$0xf]
  %v1953 = vld [vmem:[%s1] sm:$0xf]
  %v1954 = vld [vmem:[%s1 + $0x4] sm:$0xf]
  %v1955 = vld [vmem:[%s1 + $0x8] sm:$0xf]
  %v1956 = vld [vmem:[%s1 + $0xc] sm:$0xf]
  %v1957 = vld [vmem:[%s1 + $0x10] sm:$0xf]
  %v1958 = vld [vmem:[%s1 + $0x14] sm:$0xf]
  %v1959 = vld [vmem:[%s1 + $0x18] sm:$0xf]
  %v1960 = vld [vmem:[%s1 + $0x1c] sm:$0xf]
  %v1961 = vld [vmem:[%s1 + $0x20] sm:$0xf]
  %v1962 = vld [vmem:[%s1 + $0x24] sm:$0xf]
  %v1963 = vld [vmem:[%s1 + $0x28] sm:$0xf]
  %v1964 = vld [vmem:[%s1 + $0x2c] sm:$0xf]
  %v1965 = vld [vmem:[%s1 + $0x30] sm:$0xf]
  %v1966 = vld [vmem:[%s1 + $0x34] sm:$0xf]
  %v1967 = vld [vmem:[%s1 + $0x38] sm:$0xf]
  %v1968 = vld [vmem:[%s1 + $0x3c] sm:$0xf]
  %v1969 = vld [vmem:[%s1 + $0x40] sm:$0xf]
  %v1970 = vld [vmem:[%s1 + $0x44] sm:$0xf]
  %v1971 = vld [vmem:[%s1 + $0x48] sm:$0xf]
  %v1972 = vld [vmem:[%s1 + $0x4c] sm:$0xf]
  %v1973 = vld [vmem:[%s1 + $0x50] sm:$0xf]
  %v1974 = vld [vmem:[%s1 + $0x54] sm:$0xf]
  %v1975 = vld [vmem:[%s1 + $0x58] sm:$0xf]
  %v1976 = vld [vmem:[%s1 + $0x5c] sm:$0xf]
  %v1977 = vpack.c.bf16 %v1951, %v1951
  %v1978 = vpack.c.bf16 %v1952, %v1952
  %v2003 = vunpack.c.l.b16 %v1953
  %v2004 = vunpack.c.l.b16 %v1954
  %v2005 = vunpack.c.l.b16 %v1955
  %v2006 = vunpack.c.l.b16 %v1956
  %v2007 = vunpack.c.l.b16 %v1957
  %v2008 = vunpack.c.l.b16 %v1958
  %v2009 = vunpack.c.l.b16 %v1959
  %v2010 = vunpack.c.l.b16 %v1960
  %v2011 = vunpack.c.l.b16 %v1961
  %v2012 = vunpack.c.l.b16 %v1962
  %v2013 = vunpack.c.l.b16 %v1963
  %v2014 = vunpack.c.l.b16 %v1964
  %v2015 = vunpack.c.l.b16 %v1965
  %v2016 = vunpack.c.l.b16 %v1966
  %v2017 = vunpack.c.l.b16 %v1967
  %v2018 = vunpack.c.l.b16 %v1968
  %v2019 = vunpack.c.l.b16 %v1969
  %v2020 = vunpack.c.l.b16 %v1970
  %v2021 = vunpack.c.l.b16 %v1971
  %v2022 = vunpack.c.l.b16 %v1972
  %v2023 = vunpack.c.l.b16 %v1973
  %v2024 = vunpack.c.l.b16 %v1974
  %v2025 = vunpack.c.l.b16 %v1975
  %v2026 = vunpack.c.l.b16 %v1976
  %v2027 = vpack.c.b16 %v2004, %v2003
  %v2028 = vpack.c.b16 %v2006, %v2005
  %v2029 = vpack.c.b16 %v2008, %v2007
  %v2030 = vpack.c.b16 %v2010, %v2009
  %v2031 = vpack.c.b16 %v2012, %v2011
  %v2032 = vpack.c.b16 %v2014, %v2013
  %v2033 = vpack.c.b16 %v2016, %v2015
  %v2034 = vpack.c.b16 %v2018, %v2017
  %v2035 = vpack.c.b16 %v2020, %v2019
  %v2036 = vpack.c.b16 %v2022, %v2021
  %v2037 = vpack.c.b16 %v2024, %v2023
  %v2038 = vpack.c.b16 %v2026, %v2025
  %v2052 = vsel %vm258, %v1978, 0
  %2054 = vmatprep.subr.bf16.mxu0 0
  %2055 = vmatpush1.bf16.msra.mxu0 %v2027
  %2056 = vmatprep.subr.bf16.mxu0 0
  %2057 = vmatpush1.bf16.msra.mxu0 %v2028
  %2058 = vmatprep.subr.bf16.mxu0 0
  %2059 = vmatpush1.bf16.msra.mxu0 %v2029
  %2060 = vmatprep.subr.bf16.mxu0 0
  %2061 = vmatpush1.bf16.msra.mxu0 %v2030
  %2062 = vmatprep.subr.bf16.mxu0 0
  %2063 = vmatpush1.bf16.msra.mxu0 %v2031
  %2064 = vmatprep.subr.bf16.mxu0 0
  %2065 = vmatpush1.bf16.msra.mxu0 %v2032
  %2066 = vmatprep.subr.bf16.mxu0 0
  %2067 = vmatpush1.bf16.msra.mxu0 %v2033
  %2068 = vmatprep.subr.bf16.mxu0 0
  %2069 = vmatpush1.bf16.msra.mxu0 %v2034
  %2070 = vmatprep.subr.bf16.mxu0 0
  %2071 = vmatpush1.bf16.msra.mxu0 %v2035
  %2072 = vmatprep.subr.bf16.mxu0 0
  %2073 = vmatpush1.bf16.msra.mxu0 %v2036
  %2074 = vmatprep.subr.bf16.mxu0 0
  %2075 = vmatpush1.bf16.msra.mxu0 %v2037
  %2076 = vmatprep.subr.bf16.mxu0 0
  %2077 = vmatpush1.bf16.msra.mxu0 %v2038
  %2078 = vmatprep.subr.bf16.mxu0 0
  %2079 = vmatpush1.bf16.msra.mxu0 0
  %2080 = vmatprep.subr.bf16.mxu0 0
  %2081 = vmatpush1.bf16.msra.mxu0 0
  %2082 = vmatprep.subr.bf16.mxu0 0
  %2083 = vmatpush1.bf16.msra.mxu0 0
  %2084 = vmatprep.subr.bf16.mxu0 0
  %2085 = vmatpush1.bf16.msra.mxu0 0
  %2086 = vmatprep.mubr.bf16.mxu0 %v2052
  %2087 = vmatmul.mubr.bf16.gmra.mrb[0].mxu0 %v1977
  %v2088 = vpop.f32.mrb[0].mxu0
  %v2089 = vadd.f32 0.0, %v2088
  %v2090 = vpop.f32.mrb[0].mxu0
  %v2091 = vpop.f32.mrb[0].mxu0
  %v2092 = vpop.f32.mrb[0].mxu0
  %2093 = vdwg.mxu0
  %v2094 = vadd.f32 %v306, %v2089
  %v2095 = vld [vmem:[%s1950] sm:$0x1e]
  %v2096 = vld [vmem:[%s1950 + $0x8] sm:$0x1e]
  %v2097 = vld [vmem:[%s311] sm:$0xf]
  %v2098 = vld [vmem:[%s311 + $0x4] sm:$0xf]
  %v2099 = vld [vmem:[%s311 + $0x8] sm:$0xf]
  %v2100 = vld [vmem:[%s311 + $0xc] sm:$0xf]
  %v2101 = vld [vmem:[%s311 + $0x10] sm:$0xf]
  %v2102 = vld [vmem:[%s311 + $0x14] sm:$0xf]
  %v2103 = vld [vmem:[%s311 + $0x18] sm:$0xf]
  %v2104 = vld [vmem:[%s311 + $0x1c] sm:$0xf]
  %v2105 = vld [vmem:[%s311 + $0x20] sm:$0xf]
  %v2106 = vld [vmem:[%s311 + $0x24] sm:$0xf]
  %v2107 = vld [vmem:[%s311 + $0x28] sm:$0xf]
  %v2108 = vld [vmem:[%s311 + $0x2c] sm:$0xf]
  %v2109 = vld [vmem:[%s311 + $0x30] sm:$0xf]
  %v2110 = vld [vmem:[%s311 + $0x34] sm:$0xf]
  %v2111 = vld [vmem:[%s311 + $0x38] sm:$0xf]
  %v2112 = vld [vmem:[%s311 + $0x3c] sm:$0xf]
  %v2113 = vld [vmem:[%s311 + $0x40] sm:$0xf]
  %v2114 = vld [vmem:[%s311 + $0x44] sm:$0xf]
  %v2115 = vld [vmem:[%s311 + $0x48] sm:$0xf]
  %v2116 = vld [vmem:[%s311 + $0x4c] sm:$0xf]
  %v2117 = vld [vmem:[%s311 + $0x50] sm:$0xf]
  %v2118 = vld [vmem:[%s311 + $0x54] sm:$0xf]
  %v2119 = vld [vmem:[%s311 + $0x58] sm:$0xf]
  %v2120 = vld [vmem:[%s311 + $0x5c] sm:$0xf]
  %v2121 = vpack.c.bf16 %v2095, %v2095
  %v2122 = vpack.c.bf16 %v2096, %v2096
  %v2124 = vshrl.u32 %v2121, 16
  %v2126 = vshll.u32 %v2121, 16
  %v2128 = vrot.slane %v2126, 1
  %v2129 = vor.u32 %v2124, %v2128
  %v2131 = vshrl.u32 %v2122, 16
  %v2133 = vshll.u32 %v2122, 16
  %v2135 = vrot.slane %v2133, 1
  %v2136 = vor.u32 %v2131, %v2135
  %v2162 = vunpack.c.l.b16 %v2097
  %v2163 = vunpack.c.l.b16 %v2098
  %v2164 = vunpack.c.l.b16 %v2099
  %v2165 = vunpack.c.l.b16 %v2100
  %v2166 = vunpack.c.l.b16 %v2101
  %v2167 = vunpack.c.l.b16 %v2102
  %v2168 = vunpack.c.l.b16 %v2103
  %v2169 = vunpack.c.l.b16 %v2104
  %v2170 = vunpack.c.l.b16 %v2105
  %v2171 = vunpack.c.l.b16 %v2106
  %v2172 = vunpack.c.l.b16 %v2107
  %v2173 = vunpack.c.l.b16 %v2108
  %v2174 = vunpack.c.l.b16 %v2109
  %v2175 = vunpack.c.l.b16 %v2110
  %v2176 = vunpack.c.l.b16 %v2111
  %v2177 = vunpack.c.l.b16 %v2112
  %v2178 = vunpack.c.l.b16 %v2113
  %v2179 = vunpack.c.l.b16 %v2114
  %v2180 = vunpack.c.l.b16 %v2115
  %v2181 = vunpack.c.l.b16 %v2116
  %v2182 = vunpack.c.l.b16 %v2117
  %v2183 = vunpack.c.l.b16 %v2118
  %v2184 = vunpack.c.l.b16 %v2119
  %v2185 = vunpack.c.l.b16 %v2120
  %v2186 = vpack.c.b16 %v2163, %v2162
  %v2187 = vpack.c.b16 %v2165, %v2164
  %v2188 = vpack.c.b16 %v2167, %v2166
  %v2189 = vpack.c.b16 %v2169, %v2168
  %v2190 = vpack.c.b16 %v2171, %v2170
  %v2191 = vpack.c.b16 %v2173, %v2172
  %v2192 = vpack.c.b16 %v2175, %v2174
  %v2193 = vpack.c.b16 %v2177, %v2176
  %v2194 = vpack.c.b16 %v2179, %v2178
  %v2195 = vpack.c.b16 %v2181, %v2180
  %v2196 = vpack.c.b16 %v2183, %v2182
  %v2197 = vpack.c.b16 %v2185, %v2184
  %v2211 = vsel %vm258, %v2136, 0
  %2213 = vmatprep.subr.bf16.mxu0 0
  %2214 = vmatpush1.bf16.msra.mxu0 %v2186
  %2215 = vmatprep.subr.bf16.mxu0 0
  %2216 = vmatpush1.bf16.msra.mxu0 %v2187
  %2217 = vmatprep.subr.bf16.mxu0 0
  %2218 = vmatpush1.bf16.msra.mxu0 %v2188
  %2219 = vmatprep.subr.bf16.mxu0 0
  %2220 = vmatpush1.bf16.msra.mxu0 %v2189
  %2221 = vmatprep.subr.bf16.mxu0 0
  %2222 = vmatpush1.bf16.msra.mxu0 %v2190
  %2223 = vmatprep.subr.bf16.mxu0 0
  %2224 = vmatpush1.bf16.msra.mxu0 %v2191
  %2225 = vmatprep.subr.bf16.mxu0 0
  %2226 = vmatpush1.bf16.msra.mxu0 %v2192
  %2227 = vmatprep.subr.bf16.mxu0 0
  %2228 = vmatpush1.bf16.msra.mxu0 %v2193
  %2229 = vmatprep.subr.bf16.mxu0 0
  %2230 = vmatpush1.bf16.msra.mxu0 %v2194
  %2231 = vmatprep.subr.bf16.mxu0 0
  %2232 = vmatpush1.bf16.msra.mxu0 %v2195
  %2233 = vmatprep.subr.bf16.mxu0 0
  %2234 = vmatpush1.bf16.msra.mxu0 %v2196
  %2235 = vmatprep.subr.bf16.mxu0 0
  %2236 = vmatpush1.bf16.msra.mxu0 %v2197
  %2237 = vmatprep.subr.bf16.mxu0 0
  %2238 = vmatpush1.bf16.msra.mxu0 0
  %2239 = vmatprep.subr.bf16.mxu0 0
  %2240 = vmatpush1.bf16.msra.mxu0 0
  %2241 = vmatprep.subr.bf16.mxu0 0
  %2242 = vmatpush1.bf16.msra.mxu0 0
  %2243 = vmatprep.subr.bf16.mxu0 0
  %2244 = vmatpush1.bf16.msra.mxu0 0
  %2245 = vmatprep.mubr.bf16.mxu0 %v2211
  %2246 = vmatmul.mubr.bf16.gmra.mrb[0].mxu0 %v2129
  %v2247 = vpop.f32.mrb[0].mxu0
  %v2248 = vadd.f32 0.0, %v2247
  %v2249 = vpop.f32.mrb[0].mxu0
  %v2250 = vpop.f32.mrb[0].mxu0
  %v2251 = vpop.f32.mrb[0].mxu0
  %2252 = vdwg.mxu0
  %v2253 = vadd.f32 %v2094, %v2248
  %v2254 = vld [vmem:[%s1950] sm:$0x3c]
  %v2255 = vld [vmem:[%s1950 + $0x8] sm:$0x3c]
  %v2256 = vld [vmem:[%s471] sm:$0xf]
  %v2257 = vld [vmem:[%s471 + $0x4] sm:$0xf]
  %v2258 = vld [vmem:[%s471 + $0x8] sm:$0xf]
  %v2259 = vld [vmem:[%s471 + $0xc] sm:$0xf]
  %v2260 = vld [vmem:[%s471 + $0x10] sm:$0xf]
  %v2261 = vld [vmem:[%s471 + $0x14] sm:$0xf]
  %v2262 = vld [vmem:[%s471 + $0x18] sm:$0xf]
  %v2263 = vld [vmem:[%s471 + $0x1c] sm:$0xf]
  %v2264 = vld [vmem:[%s471 + $0x20] sm:$0xf]
  %v2265 = vld [vmem:[%s471 + $0x24] sm:$0xf]
  %v2266 = vld [vmem:[%s471 + $0x28] sm:$0xf]
  %v2267 = vld [vmem:[%s471 + $0x2c] sm:$0xf]
  %v2268 = vld [vmem:[%s471 + $0x30] sm:$0xf]
  %v2269 = vld [vmem:[%s471 + $0x34] sm:$0xf]
  %v2270 = vld [vmem:[%s471 + $0x38] sm:$0xf]
  %v2271 = vld [vmem:[%s471 + $0x3c] sm:$0xf]
  %v2272 = vld [vmem:[%s471 + $0x40] sm:$0xf]
  %v2273 = vld [vmem:[%s471 + $0x44] sm:$0xf]
  %v2274 = vld [vmem:[%s471 + $0x48] sm:$0xf]
  %v2275 = vld [vmem:[%s471 + $0x4c] sm:$0xf]
  %v2276 = vld [vmem:[%s471 + $0x50] sm:$0xf]
  %v2277 = vld [vmem:[%s471 + $0x54] sm:$0xf]
  %v2278 = vld [vmem:[%s471 + $0x58] sm:$0xf]
  %v2279 = vld [vmem:[%s471 + $0x5c] sm:$0xf]
  %v2280 = vpack.c.bf16 %v2254, %v2254
  %v2281 = vpack.c.bf16 %v2255, %v2255
  %v2284 = vrot.slane %v2280, 1
  %v2285 = vrot.slane %v2281, 1
  %v2311 = vunpack.c.l.b16 %v2256
  %v2312 = vunpack.c.l.b16 %v2257
  %v2313 = vunpack.c.l.b16 %v2258
  %v2314 = vunpack.c.l.b16 %v2259
  %v2315 = vunpack.c.l.b16 %v2260
  %v2316 = vunpack.c.l.b16 %v2261
  %v2317 = vunpack.c.l.b16 %v2262
  %v2318 = vunpack.c.l.b16 %v2263
  %v2319 = vunpack.c.l.b16 %v2264
  %v2320 = vunpack.c.l.b16 %v2265
  %v2321 = vunpack.c.l.b16 %v2266
  %v2322 = vunpack.c.l.b16 %v2267
  %v2323 = vunpack.c.l.b16 %v2268
  %v2324 = vunpack.c.l.b16 %v2269
  %v2325 = vunpack.c.l.b16 %v2270
  %v2326 = vunpack.c.l.b16 %v2271
  %v2327 = vunpack.c.l.b16 %v2272
  %v2328 = vunpack.c.l.b16 %v2273
  %v2329 = vunpack.c.l.b16 %v2274
  %v2330 = vunpack.c.l.b16 %v2275
  %v2331 = vunpack.c.l.b16 %v2276
  %v2332 = vunpack.c.l.b16 %v2277
  %v2333 = vunpack.c.l.b16 %v2278
  %v2334 = vunpack.c.l.b16 %v2279
  %v2335 = vpack.c.b16 %v2312, %v2311
  %v2336 = vpack.c.b16 %v2314, %v2313
  %v2337 = vpack.c.b16 %v2316, %v2315
  %v2338 = vpack.c.b16 %v2318, %v2317
  %v2339 = vpack.c.b16 %v2320, %v2319
  %v2340 = vpack.c.b16 %v2322, %v2321
  %v2341 = vpack.c.b16 %v2324, %v2323
  %v2342 = vpack.c.b16 %v2326, %v2325
  %v2343 = vpack.c.b16 %v2328, %v2327
  %v2344 = vpack.c.b16 %v2330, %v2329
  %v2345 = vpack.c.b16 %v2332, %v2331
  %v2346 = vpack.c.b16 %v2334, %v2333
  %v2360 = vsel %vm258, %v2285, 0
  %2362 = vmatprep.subr.bf16.mxu0 0
  %2363 = vmatpush1.bf16.msra.mxu0 %v2335
  %2364 = vmatprep.subr.bf16.mxu0 0
  %2365 = vmatpush1.bf16.msra.mxu0 %v2336
  %2366 = vmatprep.subr.bf16.mxu0 0
  %2367 = vmatpush1.bf16.msra.mxu0 %v2337
  %2368 = vmatprep.subr.bf16.mxu0 0
  %2369 = vmatpush1.bf16.msra.mxu0 %v2338
  %2370 = vmatprep.subr.bf16.mxu0 0
  %2371 = vmatpush1.bf16.msra.mxu0 %v2339
  %2372 = vmatprep.subr.bf16.mxu0 0
  %2373 = vmatpush1.bf16.msra.mxu0 %v2340
  %2374 = vmatprep.subr.bf16.mxu0 0
  %2375 = vmatpush1.bf16.msra.mxu0 %v2341
  %2376 = vmatprep.subr.bf16.mxu0 0
  %2377 = vmatpush1.bf16.msra.mxu0 %v2342
  %2378 = vmatprep.subr.bf16.mxu0 0
  %2379 = vmatpush1.bf16.msra.mxu0 %v2343
  %2380 = vmatprep.subr.bf16.mxu0 0
  %2381 = vmatpush1.bf16.msra.mxu0 %v2344
  %2382 = vmatprep.subr.bf16.mxu0 0
  %2383 = vmatpush1.bf16.msra.mxu0 %v2345
  %2384 = vmatprep.subr.bf16.mxu0 0
  %2385 = vmatpush1.bf16.msra.mxu0 %v2346
  %2386 = vmatprep.subr.bf16.mxu0 0
  %2387 = vmatpush1.bf16.msra.mxu0 0
  %2388 = vmatprep.subr.bf16.mxu0 0
  %2389 = vmatpush1.bf16.msra.mxu0 0
  %2390 = vmatprep.subr.bf16.mxu0 0
  %2391 = vmatpush1.bf16.msra.mxu0 0
  %2392 = vmatprep.subr.bf16.mxu0 0
  %2393 = vmatpush1.bf16.msra.mxu0 0
  %2394 = vmatprep.mubr.bf16.mxu0 %v2360
  %2395 = vmatmul.mubr.bf16.gmra.mrb[0].mxu0 %v2284
  %v2396 = vpop.f32.mrb[0].mxu0
  %v2397 = vadd.f32 0.0, %v2396
  %v2398 = vpop.f32.mrb[0].mxu0
  %v2399 = vpop.f32.mrb[0].mxu0
  %v2400 = vpop.f32.mrb[0].mxu0
  %2401 = vdwg.mxu0
  %v2402 = vadd.f32 %v2253, %v2397
  %vm2403 = vcmp.gt.f32.partialorder %v2402, 0.0
  %v2404 = vmul.f32 %v2402, 0.01
  %v2405 = vsel %vm2403, %v2402, %v2404
  %v2407 = vsel %vm629, %v2405, 0
  %2409 = vmatprep.subr.mxu0 0.0
  %2410 = vmatpush1.msra.mxu0 %v2407
  %2411 = vmatprep.subr.mxu0 0.0
  %2412 = vmatpush1.msra.mxu0 0.0
  %2413 = vmatprep.subr.mxu0 0.0
  %2414 = vmatpush1.msra.mxu0 0.0
  %2415 = vmatprep.subr.mxu0 0.0
  %2416 = vmatpush1.msra.mxu0 0.0
  %2417 = vmatprep.subr.mxu0 0.0
  %2418 = vmatpush1.msra.mxu0 0.0
  %2419 = vmatprep.subr.mxu0 0.0
  %2420 = vmatpush1.msra.mxu0 0.0
  %2421 = vmatprep.subr.mxu0 0.0
  %2422 = vmatpush1.msra.mxu0 0.0
  %2423 = vmatprep.subr.mxu0 0.0
  %2424 = vmatpush1.msra.mxu0 0.0
  %2425 = vmatprep.subr.mxu0 0.0
  %2426 = vmatpush1.msra.mxu0 0.0
  %2427 = vmatprep.subr.mxu0 0.0
  %2428 = vmatpush1.msra.mxu0 0.0
  %2429 = vmatprep.subr.mxu0 0.0
  %2430 = vmatpush1.msra.mxu0 0.0
  %2431 = vmatprep.subr.mxu0 0.0
  %2432 = vmatpush1.msra.mxu0 0.0
  %2433 = vmatprep.subr.mxu0 0.0
  %2434 = vmatpush1.msra.mxu0 0.0
  %2435 = vmatprep.subr.mxu0 0.0
  %2436 = vmatpush1.msra.mxu0 0.0
  %2437 = vmatprep.subr.mxu0 0.0
  %2438 = vmatpush1.msra.mxu0 0.0
  %2439 = vmatprep.subr.mxu0 0.0
  %2440 = vmatpush1.msra.mxu0 0.0
  %2441 = vmatprep.subr.mxu0 0.0
  %2442 = vmatpush1.msra.mxu0 0.0
  %2443 = vmatprep.subr.mxu0 0.0
  %2444 = vmatpush1.msra.mxu0 0.0
  %2445 = vmatprep.subr.mxu0 0.0
  %2446 = vmatpush1.msra.mxu0 0.0
  %2447 = vmatprep.subr.mxu0 0.0
  %2448 = vmatpush1.msra.mxu0 0.0
  %2449 = vmatprep.subr.mxu0 0.0
  %2450 = vmatpush1.msra.mxu0 0.0
  %2451 = vmatprep.subr.mxu0 0.0
  %2452 = vmatpush1.msra.mxu0 0.0
  %2453 = vmatprep.subr.mxu0 0.0
  %2454 = vmatpush1.msra.mxu0 0.0
  %2455 = vmatprep.subr.mxu0 0.0
  %2456 = vmatpush1.msra.mxu0 0.0
  %2457 = vmatprep.subr.mxu0 0.0
  %2458 = vmatpush1.msra.mxu0 0.0
  %2459 = vmatprep.subr.mxu0 0.0
  %2460 = vmatpush1.msra.mxu0 0.0
  %2461 = vmatprep.subr.mxu0 0.0
  %2462 = vmatpush1.msra.mxu0 0.0
  %2463 = vmatprep.subr.mxu0 0.0
  %2464 = vmatpush1.msra.mxu0 0.0
  %2465 = vmatprep.subr.mxu0 0.0
  %2466 = vmatpush1.msra.mxu0 0.0
  %2467 = vmatprep.subr.mxu0 0.0
  %2468 = vmatpush1.msra.mxu0 0.0
  %2469 = vmatprep.subr.mxu0 0.0
  %2470 = vmatpush1.msra.mxu0 0.0
  %2471 = vmatprep.subr.mxu0 0.0
  %2472 = vmatpush1.msra.mxu0 0.0
  %2473 = vmatprep.mubr.f32.mxu0 0.0
  %2474 = vmatmul.mubr.f32.gmra.mrb[0].mxu0 %v624
  %v2475 = vpop.f32.mrb[0].mxu0
  %v2476 = vadd.f32 0.0, %v2475
  %v2477 = vpop.f32.mrb[0].mxu0
  %2478 = vmatprep.mubr.f32.mxu0 0.0
  %2479 = vmatmul.mubr.f32.gmra.mrb[0].mxu0 %v627
  %v2480 = vpop.f32.mrb[0].mxu0
  %v2481 = vadd.f32 0.0, %v2480
  %v2482 = vpop.f32.mrb[0].mxu0
  %2483 = vdwg.mxu0
  %2484 = vmatprep.subr.mxu0 %v45
  %2485 = vmatpush1.msra.mxu0 %v44
  %2486 = vmatprep.subr.mxu0 %v48
  %2487 = vmatpush1.msra.mxu0 %v47
  %2488 = vmatprep.subr.mxu0 %v51
  %2489 = vmatpush1.msra.mxu0 %v50
  %2490 = vmatprep.subr.mxu0 %v54
  %2491 = vmatpush1.msra.mxu0 %v53
  %2492 = vmatprep.subr.mxu0 %v57
  %2493 = vmatpush1.msra.mxu0 %v56
  %2494 = vmatprep.subr.mxu0 %v60
  %2495 = vmatpush1.msra.mxu0 %v59
  %2496 = vmatprep.subr.mxu0 %v63
  %2497 = vmatpush1.msra.mxu0 %v62
  %2498 = vmatprep.subr.mxu0 %v66
  %2499 = vmatpush1.msra.mxu0 %v65
  %2500 = vmatprep.subr.mxu0 %v69
  %2501 = vmatpush1.msra.mxu0 %v68
  %2502 = vmatprep.subr.mxu0 %v72
  %2503 = vmatpush1.msra.mxu0 %v71
  %2504 = vmatprep.subr.mxu0 %v75
  %2505 = vmatpush1.msra.mxu0 %v74
  %2506 = vmatprep.subr.mxu0 %v78
  %2507 = vmatpush1.msra.mxu0 %v77
  %2508 = vmatprep.subr.mxu0 %v81
  %2509 = vmatpush1.msra.mxu0 %v80
  %2510 = vmatprep.subr.mxu0 %v84
  %2511 = vmatpush1.msra.mxu0 %v83
  %2512 = vmatprep.subr.mxu0 %v87
  %2513 = vmatpush1.msra.mxu0 %v86
  %2514 = vmatprep.subr.mxu0 %v90
  %2515 = vmatpush1.msra.mxu0 %v89
  %2516 = vmatprep.subr.mxu0 0.0
  %2517 = vmatpush1.msra.mxu0 0.0
  %2518 = vmatprep.subr.mxu0 0.0
  %2519 = vmatpush1.msra.mxu0 0.0
  %2520 = vmatprep.subr.mxu0 0.0
  %2521 = vmatpush1.msra.mxu0 0.0
  %2522 = vmatprep.subr.mxu0 0.0
  %2523 = vmatpush1.msra.mxu0 0.0
  %2524 = vmatprep.subr.mxu0 0.0
  %2525 = vmatpush1.msra.mxu0 0.0
  %2526 = vmatprep.subr.mxu0 0.0
  %2527 = vmatpush1.msra.mxu0 0.0
  %2528 = vmatprep.subr.mxu0 0.0
  %2529 = vmatpush1.msra.mxu0 0.0
  %2530 = vmatprep.subr.mxu0 0.0
  %2531 = vmatpush1.msra.mxu0 0.0
  %2532 = vmatprep.subr.mxu0 0.0
  %2533 = vmatpush1.msra.mxu0 0.0
  %2534 = vmatprep.subr.mxu0 0.0
  %2535 = vmatpush1.msra.mxu0 0.0
  %2536 = vmatprep.subr.mxu0 0.0
  %2537 = vmatpush1.msra.mxu0 0.0
  %2538 = vmatprep.subr.mxu0 0.0
  %2539 = vmatpush1.msra.mxu0 0.0
  %2540 = vmatprep.subr.mxu0 0.0
  %2541 = vmatpush1.msra.mxu0 0.0
  %2542 = vmatprep.subr.mxu0 0.0
  %2543 = vmatpush1.msra.mxu0 0.0
  %2544 = vmatprep.subr.mxu0 0.0
  %2545 = vmatpush1.msra.mxu0 0.0
  %2546 = vmatprep.subr.mxu0 0.0
  %2547 = vmatpush1.msra.mxu0 0.0
  %2548 = vmatprep.mubr.f32.mxu0 0.0
  %2549 = vmatmul.mubr.f32.gmra.mrb[0].mxu0 %v2476
  %v2550 = vpop.f32.mrb[0].mxu0
  %v2551 = vadd.f32 0.0, %v2550
  %v2552 = vpop.f32.mrb[0].mxu0
  %v2553 = vadd.f32 0.0, %v2552
  %2554 = vmatprep.mubr.f32.mxu0 0.0
  %2555 = vmatmul.mubr.f32.gmra.mrb[0].mxu0 %v2481
  %v2556 = vpop.f32.mrb[0].mxu0
  %v2557 = vadd.f32 0.0, %v2556
  %v2558 = vpop.f32.mrb[0].mxu0
  %v2559 = vadd.f32 0.0, %v2558
  %2560 = vdwg.mxu0
  %2561 = vmatprep.subr.mxu0 0.0
  %2562 = vmatpush1.msra.mxu0 %v46
  %2563 = vmatprep.subr.mxu0 0.0
  %2564 = vmatpush1.msra.mxu0 %v49
  %2565 = vmatprep.subr.mxu0 0.0
  %2566 = vmatpush1.msra.mxu0 %v52
  %2567 = vmatprep.subr.mxu0 0.0
  %2568 = vmatpush1.msra.mxu0 %v55
  %2569 = vmatprep.subr.mxu0 0.0
  %2570 = vmatpush1.msra.mxu0 %v58
  %2571 = vmatprep.subr.mxu0 0.0
  %2572 = vmatpush1.msra.mxu0 %v61
  %2573 = vmatprep.subr.mxu0 0.0
  %2574 = vmatpush1.msra.mxu0 %v64
  %2575 = vmatprep.subr.mxu0 0.0
  %2576 = vmatpush1.msra.mxu0 %v67
  %2577 = vmatprep.subr.mxu0 0.0
  %2578 = vmatpush1.msra.mxu0 %v70
  %2579 = vmatprep.subr.mxu0 0.0
  %2580 = vmatpush1.msra.mxu0 %v73
  %2581 = vmatprep.subr.mxu0 0.0
  %2582 = vmatpush1.msra.mxu0 %v76
  %2583 = vmatprep.subr.mxu0 0.0
  %2584 = vmatpush1.msra.mxu0 %v79
  %2585 = vmatprep.subr.mxu0 0.0
  %2586 = vmatpush1.msra.mxu0 %v82
  %2587 = vmatprep.subr.mxu0 0.0
  %2588 = vmatpush1.msra.mxu0 %v85
  %2589 = vmatprep.subr.mxu0 0.0
  %2590 = vmatpush1.msra.mxu0 %v88
  %2591 = vmatprep.subr.mxu0 0.0
  %2592 = vmatpush1.msra.mxu0 %v91
  %2593 = vmatprep.subr.mxu0 0.0
  %2594 = vmatpush1.msra.mxu0 0.0
  %2595 = vmatprep.subr.mxu0 0.0
  %2596 = vmatpush1.msra.mxu0 0.0
  %2597 = vmatprep.subr.mxu0 0.0
  %2598 = vmatpush1.msra.mxu0 0.0
  %2599 = vmatprep.subr.mxu0 0.0
  %2600 = vmatpush1.msra.mxu0 0.0
  %2601 = vmatprep.subr.mxu0 0.0
  %2602 = vmatpush1.msra.mxu0 0.0
  %2603 = vmatprep.subr.mxu0 0.0
  %2604 = vmatpush1.msra.mxu0 0.0
  %2605 = vmatprep.subr.mxu0 0.0
  %2606 = vmatpush1.msra.mxu0 0.0
  %2607 = vmatprep.subr.mxu0 0.0
  %2608 = vmatpush1.msra.mxu0 0.0
  %2609 = vmatprep.subr.mxu0 0.0
  %2610 = vmatpush1.msra.mxu0 0.0
  %2611 = vmatprep.subr.mxu0 0.0
  %2612 = vmatpush1.msra.mxu0 0.0
  %2613 = vmatprep.subr.mxu0 0.0
  %2614 = vmatpush1.msra.mxu0 0.0
  %2615 = vmatprep.subr.mxu0 0.0
  %2616 = vmatpush1.msra.mxu0 0.0
  %2617 = vmatprep.subr.mxu0 0.0
  %2618 = vmatpush1.msra.mxu0 0.0
  %2619 = vmatprep.subr.mxu0 0.0
  %2620 = vmatpush1.msra.mxu0 0.0
  %2621 = vmatprep.subr.mxu0 0.0
  %2622 = vmatpush1.msra.mxu0 0.0
  %2623 = vmatprep.subr.mxu0 0.0
  %2624 = vmatpush1.msra.mxu0 0.0
  %2625 = vmatprep.mubr.f32.mxu0 0.0
  %2626 = vmatmul.mubr.f32.gmra.mrb[0].mxu0 %v2476
  %v2627 = vpop.f32.mrb[0].mxu0
  %v2628 = vadd.f32 0.0, %v2627
  %v2629 = vpop.f32.mrb[0].mxu0
  %2630 = vmatprep.mubr.f32.mxu0 0.0
  %2631 = vmatmul.mubr.f32.gmra.mrb[0].mxu0 %v2481
  %v2632 = vpop.f32.mrb[0].mxu0
  %v2633 = vadd.f32 0.0, %v2632
  %v2634 = vpop.f32.mrb[0].mxu0
  %2635 = vdwg.mxu0
  %v2636 = vld [vmem:[%s5] sm:$0xf]
  %v2637 = vld [vmem:[%s5 + $0x4] sm:$0xf]
  %v2638 = vld [vmem:[%s5 + $0x8] sm:$0xf]
  %v2639 = vld [vmem:[%s5 + $0xc] sm:$0xf]
  %v2640 = vld [vmem:[%s5 + $0x10] sm:$0xf]
  %v2641 = vld [vmem:[%s5 + $0x14] sm:$0xf]
  %v2642 = vld [vmem:[%s5 + $0x18] sm:$0xf]
  %v2643 = vld [vmem:[%s5 + $0x1c] sm:$0xf]
  %v2644 = vld [vmem:[%s5 + $0x20] sm:$0xf]
  %v2645 = vld [vmem:[%s5 + $0x24] sm:$0xf]
  %v2646 = vld [vmem:[%s5 + $0x28] sm:$0xf]
  %v2647 = vld [vmem:[%s5 + $0x2c] sm:$0xf]
  %v2648 = vld [vmem:[%s5 + $0x30] sm:$0xf]
  %v2649 = vld [vmem:[%s5 + $0x34] sm:$0xf]
  %v2650 = vld [vmem:[%s5 + $0x38] sm:$0xf]
  %v2651 = vld [vmem:[%s5 + $0x3c] sm:$0xf]
  %v2652 = vld [vmem:[%s5 + $0x40] sm:$0xf]
  %v2653 = vld [vmem:[%s5 + $0x44] sm:$0xf]
  %v2654 = vld [vmem:[%s5 + $0x48] sm:$0xf]
  %v2655 = vld [vmem:[%s5 + $0x4c] sm:$0xf]
  %v2656 = vld [vmem:[%s5 + $0x50] sm:$0xf]
  %v2657 = vld [vmem:[%s5 + $0x54] sm:$0xf]
  %v2658 = vld [vmem:[%s5 + $0x58] sm:$0xf]
  %v2659 = vld [vmem:[%s5 + $0x5c] sm:$0xf]
  %v2660 = vld [vmem:[%s5 + $0x60] sm:$0xf]
  %v2661 = vld [vmem:[%s5 + $0x64] sm:$0xf]
  %v2662 = vld [vmem:[%s5 + $0x68] sm:$0xf]
  %v2663 = vld [vmem:[%s5 + $0x6c] sm:$0xf]
  %v2664 = vld [vmem:[%s5 + $0x70] sm:$0xf]
  %v2665 = vld [vmem:[%s5 + $0x74] sm:$0xf]
  %v2666 = vld [vmem:[%s5 + $0x78] sm:$0xf]
  %v2667 = vld [vmem:[%s5 + $0x7c] sm:$0xf]
  %v2668 = vld [vmem:[%s5 + $0x80] sm:$0xf]
  %v2669 = vld [vmem:[%s5 + $0x84] sm:$0xf]
  %v2670 = vld [vmem:[%s5 + $0x88] sm:$0xf]
  %v2671 = vld [vmem:[%s5 + $0x8c] sm:$0xf]
  %v2672 = vld [vmem:[%s5 + $0x90] sm:$0xf]
  %v2673 = vld [vmem:[%s5 + $0x94] sm:$0xf]
  %v2674 = vld [vmem:[%s5 + $0x98] sm:$0xf]
  %v2675 = vld [vmem:[%s5 + $0x9c] sm:$0xf]
  %v2676 = vpack.c.bf16 %v2551, %v2551
  %v2677 = vpack.c.bf16 %v2553, %v2553
  %v2678 = vpack.c.bf16 %v2628, %v2628
  %v2719 = vunpack.c.l.b16 %v2636
  %v2720 = vunpack.c.l.b16 %v2637
  %v2721 = vunpack.c.l.b16 %v2638
  %v2722 = vunpack.c.l.b16 %v2639
  %v2723 = vunpack.c.l.b16 %v2640
  %v2724 = vunpack.c.l.b16 %v2641
  %v2725 = vunpack.c.l.b16 %v2642
  %v2726 = vunpack.c.l.b16 %v2643
  %v2727 = vunpack.c.l.b16 %v2644
  %v2728 = vunpack.c.l.b16 %v2645
  %v2729 = vunpack.c.l.b16 %v2646
  %v2730 = vunpack.c.l.b16 %v2647
  %v2731 = vunpack.c.l.b16 %v2648
  %v2732 = vunpack.c.l.b16 %v2649
  %v2733 = vunpack.c.l.b16 %v2650
  %v2734 = vunpack.c.l.b16 %v2651
  %v2735 = vunpack.c.l.b16 %v2652
  %v2736 = vunpack.c.l.b16 %v2653
  %v2737 = vunpack.c.l.b16 %v2654
  %v2738 = vunpack.c.l.b16 %v2655
  %v2739 = vunpack.c.l.b16 %v2656
  %v2740 = vunpack.c.l.b16 %v2657
  %v2741 = vunpack.c.l.b16 %v2658
  %v2742 = vunpack.c.l.b16 %v2659
  %v2743 = vunpack.c.l.b16 %v2660
  %v2744 = vunpack.c.l.b16 %v2661
  %v2745 = vunpack.c.l.b16 %v2662
  %v2746 = vunpack.c.l.b16 %v2663
  %v2747 = vunpack.c.l.b16 %v2664
  %v2748 = vunpack.c.l.b16 %v2665
  %v2749 = vunpack.c.l.b16 %v2666
  %v2750 = vunpack.c.l.b16 %v2667
  %v2751 = vunpack.c.l.b16 %v2668
  %v2752 = vunpack.c.l.b16 %v2669
  %v2753 = vunpack.c.l.b16 %v2670
  %v2754 = vunpack.c.l.b16 %v2671
  %v2755 = vunpack.c.l.b16 %v2672
  %v2756 = vunpack.c.l.b16 %v2673
  %v2757 = vunpack.c.l.b16 %v2674
  %v2758 = vunpack.c.l.b16 %v2675
  %v2759 = vpack.c.b16 %v2720, %v2719
  %v2760 = vpack.c.b16 %v2722, %v2721
  %v2761 = vpack.c.b16 %v2724, %v2723
  %v2762 = vpack.c.b16 %v2726, %v2725
  %v2763 = vpack.c.b16 %v2728, %v2727
  %v2764 = vpack.c.b16 %v2730, %v2729
  %v2765 = vpack.c.b16 %v2732, %v2731
  %v2766 = vpack.c.b16 %v2734, %v2733
  %v2767 = vpack.c.b16 %v2736, %v2735
  %v2768 = vpack.c.b16 %v2738, %v2737
  %v2769 = vpack.c.b16 %v2740, %v2739
  %v2770 = vpack.c.b16 %v2742, %v2741
  %v2771 = vpack.c.b16 %v2744, %v2743
  %v2772 = vpack.c.b16 %v2746, %v2745
  %v2773 = vpack.c.b16 %v2748, %v2747
  %v2774 = vpack.c.b16 %v2750, %v2749
  %v2775 = vpack.c.b16 %v2752, %v2751
  %v2776 = vpack.c.b16 %v2754, %v2753
  %v2777 = vpack.c.b16 %v2756, %v2755
  %v2778 = vpack.c.b16 %v2758, %v2757
  %v2800 = vsel %vm258, %v2678, 0
  %2802 = vmatprep.subr.bf16.mxu0 0
  %2803 = vmatpush1.bf16.msra.mxu0 %v2759
  %2804 = vmatprep.subr.bf16.mxu0 0
  %2805 = vmatpush1.bf16.msra.mxu0 %v2760
  %2806 = vmatprep.subr.bf16.mxu0 0
  %2807 = vmatpush1.bf16.msra.mxu0 %v2761
  %2808 = vmatprep.subr.bf16.mxu0 0
  %2809 = vmatpush1.bf16.msra.mxu0 %v2762
  %2810 = vmatprep.subr.bf16.mxu0 0
  %2811 = vmatpush1.bf16.msra.mxu0 %v2763
  %2812 = vmatprep.subr.bf16.mxu0 0
  %2813 = vmatpush1.bf16.msra.mxu0 %v2764
  %2814 = vmatprep.subr.bf16.mxu0 0
  %2815 = vmatpush1.bf16.msra.mxu0 %v2765
  %2816 = vmatprep.subr.bf16.mxu0 0
  %2817 = vmatpush1.bf16.msra.mxu0 %v2766
  %2818 = vmatprep.subr.bf16.mxu0 0
  %2819 = vmatpush1.bf16.msra.mxu0 %v2767
  %2820 = vmatprep.subr.bf16.mxu0 0
  %2821 = vmatpush1.bf16.msra.mxu0 %v2768
  %2822 = vmatprep.subr.bf16.mxu0 0
  %2823 = vmatpush1.bf16.msra.mxu0 %v2769
  %2824 = vmatprep.subr.bf16.mxu0 0
  %2825 = vmatpush1.bf16.msra.mxu0 %v2770
  %2826 = vmatprep.subr.bf16.mxu0 0
  %2827 = vmatpush1.bf16.msra.mxu0 %v2771
  %2828 = vmatprep.subr.bf16.mxu0 0
  %2829 = vmatpush1.bf16.msra.mxu0 %v2772
  %2830 = vmatprep.subr.bf16.mxu0 0
  %2831 = vmatpush1.bf16.msra.mxu0 %v2773
  %2832 = vmatprep.subr.bf16.mxu0 0
  %2833 = vmatpush1.bf16.msra.mxu0 %v2774
  %2834 = vmatprep.mubr.bf16.mxu0 %v2677
  %2835 = vmatmul.mubr.bf16.gmra.mrb[0].mxu0 %v2676
  %v2836 = vpop.f32.mrb[0].mxu0
  %v2837 = vadd.f32 0.0, %v2836
  %v2838 = vpop.f32.mrb[0].mxu0
  %v2839 = vpop.f32.mrb[0].mxu0
  %v2840 = vpop.f32.mrb[0].mxu0
  %2841 = vdwg.mxu0
  %2842 = vmatprep.subr.bf16.mxu0 0
  %2843 = vmatpush1.bf16.msra.mxu0 %v2775
  %2844 = vmatprep.subr.bf16.mxu0 0
  %2845 = vmatpush1.bf16.msra.mxu0 %v2776
  %2846 = vmatprep.subr.bf16.mxu0 0
  %2847 = vmatpush1.bf16.msra.mxu0 %v2777
  %2848 = vmatprep.subr.bf16.mxu0 0
  %2849 = vmatpush1.bf16.msra.mxu0 %v2778
  %2850 = vmatprep.subr.bf16.mxu0 0
  %2851 = vmatpush1.bf16.msra.mxu0 0
  %2852 = vmatprep.subr.bf16.mxu0 0
  %2853 = vmatpush1.bf16.msra.mxu0 0
  %2854 = vmatprep.subr.bf16.mxu0 0
  %2855 = vmatpush1.bf16.msra.mxu0 0
  %2856 = vmatprep.subr.bf16.mxu0 0
  %2857 = vmatpush1.bf16.msra.mxu0 0
  %2858 = vmatprep.subr.bf16.mxu0 0
  %2859 = vmatpush1.bf16.msra.mxu0 0
  %2860 = vmatprep.subr.bf16.mxu0 0
  %2861 = vmatpush1.bf16.msra.mxu0 0
  %2862 = vmatprep.subr.bf16.mxu0 0
  %2863 = vmatpush1.bf16.msra.mxu0 0
  %2864 = vmatprep.subr.bf16.mxu0 0
  %2865 = vmatpush1.bf16.msra.mxu0 0
  %2866 = vmatprep.subr.bf16.mxu0 0
  %2867 = vmatpush1.bf16.msra.mxu0 0
  %2868 = vmatprep.subr.bf16.mxu0 0
  %2869 = vmatpush1.bf16.msra.mxu0 0
  %2870 = vmatprep.subr.bf16.mxu0 0
  %2871 = vmatpush1.bf16.msra.mxu0 0
  %2872 = vmatprep.subr.bf16.mxu0 0
  %2873 = vmatpush1.bf16.msra.mxu0 0
  %2874 = vmatprep.mubr.bf16.mxu0 0
  %2875 = vmatmul.mubr.bf16.gmra.mrb[0].mxu0 %v2800
  %v2876 = vpop.f32.mrb[0].mxu0
  %v2877 = vadd.f32 %v2837, %v2876
  %v2878 = vpop.f32.mrb[0].mxu0
  %v2879 = vpop.f32.mrb[0].mxu0
  %v2880 = vpop.f32.mrb[0].mxu0
  %2881 = vdwg.mxu0
  %v2882 = vadd.f32 %v1110, %v2877
  %v2883 = vld [vmem:[%s1113] sm:$0xf]
  %v2884 = vld [vmem:[%s1113 + $0x4] sm:$0xf]
  %v2885 = vld [vmem:[%s1113 + $0x8] sm:$0xf]
  %v2886 = vld [vmem:[%s1113 + $0xc] sm:$0xf]
  %v2887 = vld [vmem:[%s1113 + $0x10] sm:$0xf]
  %v2888 = vld [vmem:[%s1113 + $0x14] sm:$0xf]
  %v2889 = vld [vmem:[%s1113 + $0x18] sm:$0xf]
  %v2890 = vld [vmem:[%s1113 + $0x1c] sm:$0xf]
  %v2891 = vld [vmem:[%s1113 + $0x20] sm:$0xf]
  %v2892 = vld [vmem:[%s1113 + $0x24] sm:$0xf]
  %v2893 = vld [vmem:[%s1113 + $0x28] sm:$0xf]
  %v2894 = vld [vmem:[%s1113 + $0x2c] sm:$0xf]
  %v2895 = vld [vmem:[%s1113 + $0x30] sm:$0xf]
  %v2896 = vld [vmem:[%s1113 + $0x34] sm:$0xf]
  %v2897 = vld [vmem:[%s1113 + $0x38] sm:$0xf]
  %v2898 = vld [vmem:[%s1113 + $0x3c] sm:$0xf]
  %v2899 = vld [vmem:[%s1113 + $0x40] sm:$0xf]
  %v2900 = vld [vmem:[%s1113 + $0x44] sm:$0xf]
  %v2901 = vld [vmem:[%s1113 + $0x48] sm:$0xf]
  %v2902 = vld [vmem:[%s1113 + $0x4c] sm:$0xf]
  %v2903 = vld [vmem:[%s1113 + $0x50] sm:$0xf]
  %v2904 = vld [vmem:[%s1113 + $0x54] sm:$0xf]
  %v2905 = vld [vmem:[%s1113 + $0x58] sm:$0xf]
  %v2906 = vld [vmem:[%s1113 + $0x5c] sm:$0xf]
  %v2907 = vld [vmem:[%s1113 + $0x60] sm:$0xf]
  %v2908 = vld [vmem:[%s1113 + $0x64] sm:$0xf]
  %v2909 = vld [vmem:[%s1113 + $0x68] sm:$0xf]
  %v2910 = vld [vmem:[%s1113 + $0x6c] sm:$0xf]
  %v2911 = vld [vmem:[%s1113 + $0x70] sm:$0xf]
  %v2912 = vld [vmem:[%s1113 + $0x74] sm:$0xf]
  %v2913 = vld [vmem:[%s1113 + $0x78] sm:$0xf]
  %v2914 = vld [vmem:[%s1113 + $0x7c] sm:$0xf]
  %v2915 = vld [vmem:[%s1113 + $0x80] sm:$0xf]
  %v2916 = vld [vmem:[%s1113 + $0x84] sm:$0xf]
  %v2917 = vld [vmem:[%s1113 + $0x88] sm:$0xf]
  %v2918 = vld [vmem:[%s1113 + $0x8c] sm:$0xf]
  %v2919 = vld [vmem:[%s1113 + $0x90] sm:$0xf]
  %v2920 = vld [vmem:[%s1113 + $0x94] sm:$0xf]
  %v2921 = vld [vmem:[%s1113 + $0x98] sm:$0xf]
  %v2922 = vld [vmem:[%s1113 + $0x9c] sm:$0xf]
  %v2923 = vpack.c.bf16 %v2557, %v2551
  %v2924 = vpack.c.bf16 %v2559, %v2553
  %v2925 = vpack.c.bf16 %v2633, %v2628
  %v2927 = vshrl.u32 %v2923, 16
  %v2929 = vshll.u32 %v2923, 16
  %v2931 = vrot.slane %v2929, 1
  %v2932 = vor.u32 %v2927, %v2931
  %v2934 = vshrl.u32 %v2924, 16
  %v2936 = vshll.u32 %v2924, 16
  %v2938 = vrot.slane %v2936, 1
  %v2939 = vor.u32 %v2934, %v2938
  %v2941 = vshrl.u32 %v2925, 16
  %v2943 = vshll.u32 %v2925, 16
  %v2945 = vrot.slane %v2943, 1
  %v2946 = vor.u32 %v2941, %v2945
  %v2989 = vunpack.c.l.b16 %v2883
  %v2990 = vunpack.c.l.b16 %v2884
  %v2991 = vunpack.c.l.b16 %v2885
  %v2992 = vunpack.c.l.b16 %v2886
  %v2993 = vunpack.c.l.b16 %v2887
  %v2994 = vunpack.c.l.b16 %v2888
  %v2995 = vunpack.c.l.b16 %v2889
  %v2996 = vunpack.c.l.b16 %v2890
  %v2997 = vunpack.c.l.b16 %v2891
  %v2998 = vunpack.c.l.b16 %v2892
  %v2999 = vunpack.c.l.b16 %v2893
  %v3000 = vunpack.c.l.b16 %v2894
  %v3001 = vunpack.c.l.b16 %v2895
  %v3002 = vunpack.c.l.b16 %v2896
  %v3003 = vunpack.c.l.b16 %v2897
  %v3004 = vunpack.c.l.b16 %v2898
  %v3005 = vunpack.c.l.b16 %v2899
  %v3006 = vunpack.c.l.b16 %v2900
  %v3007 = vunpack.c.l.b16 %v2901
  %v3008 = vunpack.c.l.b16 %v2902
  %v3009 = vunpack.c.l.b16 %v2903
  %v3010 = vunpack.c.l.b16 %v2904
  %v3011 = vunpack.c.l.b16 %v2905
  %v3012 = vunpack.c.l.b16 %v2906
  %v3013 = vunpack.c.l.b16 %v2907
  %v3014 = vunpack.c.l.b16 %v2908
  %v3015 = vunpack.c.l.b16 %v2909
  %v3016 = vunpack.c.l.b16 %v2910
  %v3017 = vunpack.c.l.b16 %v2911
  %v3018 = vunpack.c.l.b16 %v2912
  %v3019 = vunpack.c.l.b16 %v2913
  %v3020 = vunpack.c.l.b16 %v2914
  %v3021 = vunpack.c.l.b16 %v2915
  %v3022 = vunpack.c.l.b16 %v2916
  %v3023 = vunpack.c.l.b16 %v2917
  %v3024 = vunpack.c.l.b16 %v2918
  %v3025 = vunpack.c.l.b16 %v2919
  %v3026 = vunpack.c.l.b16 %v2920
  %v3027 = vunpack.c.l.b16 %v2921
  %v3028 = vunpack.c.l.b16 %v2922
  %v3029 = vpack.c.b16 %v2990, %v2989
  %v3030 = vpack.c.b16 %v2992, %v2991
  %v3031 = vpack.c.b16 %v2994, %v2993
  %v3032 = vpack.c.b16 %v2996, %v2995
  %v3033 = vpack.c.b16 %v2998, %v2997
  %v3034 = vpack.c.b16 %v3000, %v2999
  %v3035 = vpack.c.b16 %v3002, %v3001
  %v3036 = vpack.c.b16 %v3004, %v3003
  %v3037 = vpack.c.b16 %v3006, %v3005
  %v3038 = vpack.c.b16 %v3008, %v3007
  %v3039 = vpack.c.b16 %v3010, %v3009
  %v3040 = vpack.c.b16 %v3012, %v3011
  %v3041 = vpack.c.b16 %v3014, %v3013
  %v3042 = vpack.c.b16 %v3016, %v3015
  %v3043 = vpack.c.b16 %v3018, %v3017
  %v3044 = vpack.c.b16 %v3020, %v3019
  %v3045 = vpack.c.b16 %v3022, %v3021
  %v3046 = vpack.c.b16 %v3024, %v3023
  %v3047 = vpack.c.b16 %v3026, %v3025
  %v3048 = vpack.c.b16 %v3028, %v3027
  %v3070 = vsel %vm258, %v2946, 0
  %3072 = vmatprep.subr.bf16.mxu0 0
  %3073 = vmatpush1.bf16.msra.mxu0 %v3029
  %3074 = vmatprep.subr.bf16.mxu0 0
  %3075 = vmatpush1.bf16.msra.mxu0 %v3030
  %3076 = vmatprep.subr.bf16.mxu0 0
  %3077 = vmatpush1.bf16.msra.mxu0 %v3031
  %3078 = vmatprep.subr.bf16.mxu0 0
  %3079 = vmatpush1.bf16.msra.mxu0 %v3032
  %3080 = vmatprep.subr.bf16.mxu0 0
  %3081 = vmatpush1.bf16.msra.mxu0 %v3033
  %3082 = vmatprep.subr.bf16.mxu0 0
  %3083 = vmatpush1.bf16.msra.mxu0 %v3034
  %3084 = vmatprep.subr.bf16.mxu0 0
  %3085 = vmatpush1.bf16.msra.mxu0 %v3035
  %3086 = vmatprep.subr.bf16.mxu0 0
  %3087 = vmatpush1.bf16.msra.mxu0 %v3036
  %3088 = vmatprep.subr.bf16.mxu0 0
  %3089 = vmatpush1.bf16.msra.mxu0 %v3037
  %3090 = vmatprep.subr.bf16.mxu0 0
  %3091 = vmatpush1.bf16.msra.mxu0 %v3038
  %3092 = vmatprep.subr.bf16.mxu0 0
  %3093 = vmatpush1.bf16.msra.mxu0 %v3039
  %3094 = vmatprep.subr.bf16.mxu0 0
  %3095 = vmatpush1.bf16.msra.mxu0 %v3040
  %3096 = vmatprep.subr.bf16.mxu0 0
  %3097 = vmatpush1.bf16.msra.mxu0 %v3041
  %3098 = vmatprep.subr.bf16.mxu0 0
  %3099 = vmatpush1.bf16.msra.mxu0 %v3042
  %3100 = vmatprep.subr.bf16.mxu0 0
  %3101 = vmatpush1.bf16.msra.mxu0 %v3043
  %3102 = vmatprep.subr.bf16.mxu0 0
  %3103 = vmatpush1.bf16.msra.mxu0 %v3044
  %3104 = vmatprep.mubr.bf16.mxu0 %v2939
  %3105 = vmatmul.mubr.bf16.gmra.mrb[0].mxu0 %v2932
  %v3106 = vpop.f32.mrb[0].mxu0
  %v3107 = vadd.f32 0.0, %v3106
  %v3108 = vpop.f32.mrb[0].mxu0
  %v3109 = vpop.f32.mrb[0].mxu0
  %v3110 = vpop.f32.mrb[0].mxu0
  %3111 = vdwg.mxu0
  %3112 = vmatprep.subr.bf16.mxu0 0
  %3113 = vmatpush1.bf16.msra.mxu0 %v3045
  %3114 = vmatprep.subr.bf16.mxu0 0
  %3115 = vmatpush1.bf16.msra.mxu0 %v3046
  %3116 = vmatprep.subr.bf16.mxu0 0
  %3117 = vmatpush1.bf16.msra.mxu0 %v3047
  %3118 = vmatprep.subr.bf16.mxu0 0
  %3119 = vmatpush1.bf16.msra.mxu0 %v3048
  %3120 = vmatprep.subr.bf16.mxu0 0
  %3121 = vmatpush1.bf16.msra.mxu0 0
  %3122 = vmatprep.subr.bf16.mxu0 0
  %3123 = vmatpush1.bf16.msra.mxu0 0
  %3124 = vmatprep.subr.bf16.mxu0 0
  %3125 = vmatpush1.bf16.msra.mxu0 0
  %3126 = vmatprep.subr.bf16.mxu0 0
  %3127 = vmatpush1.bf16.msra.mxu0 0
  %3128 = vmatprep.subr.bf16.mxu0 0
  %3129 = vmatpush1.bf16.msra.mxu0 0
  %3130 = vmatprep.subr.bf16.mxu0 0
  %3131 = vmatpush1.bf16.msra.mxu0 0
  %3132 = vmatprep.subr.bf16.mxu0 0
  %3133 = vmatpush1.bf16.msra.mxu0 0
  %3134 = vmatprep.subr.bf16.mxu0 0
  %3135 = vmatpush1.bf16.msra.mxu0 0
  %3136 = vmatprep.subr.bf16.mxu0 0
  %3137 = vmatpush1.bf16.msra.mxu0 0
  %3138 = vmatprep.subr.bf16.mxu0 0
  %3139 = vmatpush1.bf16.msra.mxu0 0
  %3140 = vmatprep.subr.bf16.mxu0 0
  %3141 = vmatpush1.bf16.msra.mxu0 0
  %3142 = vmatprep.subr.bf16.mxu0 0
  %3143 = vmatpush1.bf16.msra.mxu0 0
  %3144 = vmatprep.mubr.bf16.mxu0 0
  %3145 = vmatmul.mubr.bf16.gmra.mrb[0].mxu0 %v3070
  %v3146 = vpop.f32.mrb[0].mxu0
  %v3147 = vadd.f32 %v3107, %v3146
  %v3148 = vpop.f32.mrb[0].mxu0
  %v3149 = vpop.f32.mrb[0].mxu0
  %v3150 = vpop.f32.mrb[0].mxu0
  %3151 = vdwg.mxu0
  %v3152 = vadd.f32 %v2882, %v3147
  %v3153 = vld [vmem:[%s1384] sm:$0xf]
  %v3154 = vld [vmem:[%s1384 + $0x4] sm:$0xf]
  %v3155 = vld [vmem:[%s1384 + $0x8] sm:$0xf]
  %v3156 = vld [vmem:[%s1384 + $0xc] sm:$0xf]
  %v3157 = vld [vmem:[%s1384 + $0x10] sm:$0xf]
  %v3158 = vld [vmem:[%s1384 + $0x14] sm:$0xf]
  %v3159 = vld [vmem:[%s1384 + $0x18] sm:$0xf]
  %v3160 = vld [vmem:[%s1384 + $0x1c] sm:$0xf]
  %v3161 = vld [vmem:[%s1384 + $0x20] sm:$0xf]
  %v3162 = vld [vmem:[%s1384 + $0x24] sm:$0xf]
  %v3163 = vld [vmem:[%s1384 + $0x28] sm:$0xf]
  %v3164 = vld [vmem:[%s1384 + $0x2c] sm:$0xf]
  %v3165 = vld [vmem:[%s1384 + $0x30] sm:$0xf]
  %v3166 = vld [vmem:[%s1384 + $0x34] sm:$0xf]
  %v3167 = vld [vmem:[%s1384 + $0x38] sm:$0xf]
  %v3168 = vld [vmem:[%s1384 + $0x3c] sm:$0xf]
  %v3169 = vld [vmem:[%s1384 + $0x40] sm:$0xf]
  %v3170 = vld [vmem:[%s1384 + $0x44] sm:$0xf]
  %v3171 = vld [vmem:[%s1384 + $0x48] sm:$0xf]
  %v3172 = vld [vmem:[%s1384 + $0x4c] sm:$0xf]
  %v3173 = vld [vmem:[%s1384 + $0x50] sm:$0xf]
  %v3174 = vld [vmem:[%s1384 + $0x54] sm:$0xf]
  %v3175 = vld [vmem:[%s1384 + $0x58] sm:$0xf]
  %v3176 = vld [vmem:[%s1384 + $0x5c] sm:$0xf]
  %v3177 = vld [vmem:[%s1384 + $0x60] sm:$0xf]
  %v3178 = vld [vmem:[%s1384 + $0x64] sm:$0xf]
  %v3179 = vld [vmem:[%s1384 + $0x68] sm:$0xf]
  %v3180 = vld [vmem:[%s1384 + $0x6c] sm:$0xf]
  %v3181 = vld [vmem:[%s1384 + $0x70] sm:$0xf]
  %v3182 = vld [vmem:[%s1384 + $0x74] sm:$0xf]
  %v3183 = vld [vmem:[%s1384 + $0x78] sm:$0xf]
  %v3184 = vld [vmem:[%s1384 + $0x7c] sm:$0xf]
  %v3185 = vld [vmem:[%s1384 + $0x80] sm:$0xf]
  %v3186 = vld [vmem:[%s1384 + $0x84] sm:$0xf]
  %v3187 = vld [vmem:[%s1384 + $0x88] sm:$0xf]
  %v3188 = vld [vmem:[%s1384 + $0x8c] sm:$0xf]
  %v3189 = vld [vmem:[%s1384 + $0x90] sm:$0xf]
  %v3190 = vld [vmem:[%s1384 + $0x94] sm:$0xf]
  %v3191 = vld [vmem:[%s1384 + $0x98] sm:$0xf]
  %v3192 = vld [vmem:[%s1384 + $0x9c] sm:$0xf]
  %v3196 = vrot.slane %v2923, 1
  %v3197 = vrot.slane %v2924, 1
  %v3198 = vrot.slane %v2925, 1
  %v3241 = vunpack.c.l.b16 %v3153
  %v3242 = vunpack.c.l.b16 %v3154
  %v3243 = vunpack.c.l.b16 %v3155
  %v3244 = vunpack.c.l.b16 %v3156
  %v3245 = vunpack.c.l.b16 %v3157
  %v3246 = vunpack.c.l.b16 %v3158
  %v3247 = vunpack.c.l.b16 %v3159
  %v3248 = vunpack.c.l.b16 %v3160
  %v3249 = vunpack.c.l.b16 %v3161
  %v3250 = vunpack.c.l.b16 %v3162
  %v3251 = vunpack.c.l.b16 %v3163
  %v3252 = vunpack.c.l.b16 %v3164
  %v3253 = vunpack.c.l.b16 %v3165
  %v3254 = vunpack.c.l.b16 %v3166
  %v3255 = vunpack.c.l.b16 %v3167
  %v3256 = vunpack.c.l.b16 %v3168
  %v3257 = vunpack.c.l.b16 %v3169
  %v3258 = vunpack.c.l.b16 %v3170
  %v3259 = vunpack.c.l.b16 %v3171
  %v3260 = vunpack.c.l.b16 %v3172
  %v3261 = vunpack.c.l.b16 %v3173
  %v3262 = vunpack.c.l.b16 %v3174
  %v3263 = vunpack.c.l.b16 %v3175
  %v3264 = vunpack.c.l.b16 %v3176
  %v3265 = vunpack.c.l.b16 %v3177
  %v3266 = vunpack.c.l.b16 %v3178
  %v3267 = vunpack.c.l.b16 %v3179
  %v3268 = vunpack.c.l.b16 %v3180
  %v3269 = vunpack.c.l.b16 %v3181
  %v3270 = vunpack.c.l.b16 %v3182
  %v3271 = vunpack.c.l.b16 %v3183
  %v3272 = vunpack.c.l.b16 %v3184
  %v3273 = vunpack.c.l.b16 %v3185
  %v3274 = vunpack.c.l.b16 %v3186
  %v3275 = vunpack.c.l.b16 %v3187
  %v3276 = vunpack.c.l.b16 %v3188
  %v3277 = vunpack.c.l.b16 %v3189
  %v3278 = vunpack.c.l.b16 %v3190
  %v3279 = vunpack.c.l.b16 %v3191
  %v3280 = vunpack.c.l.b16 %v3192
  %v3281 = vpack.c.b16 %v3242, %v3241
  %v3282 = vpack.c.b16 %v3244, %v3243
  %v3283 = vpack.c.b16 %v3246, %v3245
  %v3284 = vpack.c.b16 %v3248, %v3247
  %v3285 = vpack.c.b16 %v3250, %v3249
  %v3286 = vpack.c.b16 %v3252, %v3251
  %v3287 = vpack.c.b16 %v3254, %v3253
  %v3288 = vpack.c.b16 %v3256, %v3255
  %v3289 = vpack.c.b16 %v3258, %v3257
  %v3290 = vpack.c.b16 %v3260, %v3259
  %v3291 = vpack.c.b16 %v3262, %v3261
  %v3292 = vpack.c.b16 %v3264, %v3263
  %v3293 = vpack.c.b16 %v3266, %v3265
  %v3294 = vpack.c.b16 %v3268, %v3267
  %v3295 = vpack.c.b16 %v3270, %v3269
  %v3296 = vpack.c.b16 %v3272, %v3271
  %v3297 = vpack.c.b16 %v3274, %v3273
  %v3298 = vpack.c.b16 %v3276, %v3275
  %v3299 = vpack.c.b16 %v3278, %v3277
  %v3300 = vpack.c.b16 %v3280, %v3279
  %v3322 = vsel %vm258, %v3198, 0
  %3324 = vmatprep.subr.bf16.mxu0 0
  %3325 = vmatpush1.bf16.msra.mxu0 %v3281
  %3326 = vmatprep.subr.bf16.mxu0 0
  %3327 = vmatpush1.bf16.msra.mxu0 %v3282
  %3328 = vmatprep.subr.bf16.mxu0 0
  %3329 = vmatpush1.bf16.msra.mxu0 %v3283
  %3330 = vmatprep.subr.bf16.mxu0 0
  %3331 = vmatpush1.bf16.msra.mxu0 %v3284
  %3332 = vmatprep.subr.bf16.mxu0 0
  %3333 = vmatpush1.bf16.msra.mxu0 %v3285
  %3334 = vmatprep.subr.bf16.mxu0 0
  %3335 = vmatpush1.bf16.msra.mxu0 %v3286
  %3336 = vmatprep.subr.bf16.mxu0 0
  %3337 = vmatpush1.bf16.msra.mxu0 %v3287
  %3338 = vmatprep.subr.bf16.mxu0 0
  %3339 = vmatpush1.bf16.msra.mxu0 %v3288
  %3340 = vmatprep.subr.bf16.mxu0 0
  %3341 = vmatpush1.bf16.msra.mxu0 %v3289
  %3342 = vmatprep.subr.bf16.mxu0 0
  %3343 = vmatpush1.bf16.msra.mxu0 %v3290
  %3344 = vmatprep.subr.bf16.mxu0 0
  %3345 = vmatpush1.bf16.msra.mxu0 %v3291
  %3346 = vmatprep.subr.bf16.mxu0 0
  %3347 = vmatpush1.bf16.msra.mxu0 %v3292
  %3348 = vmatprep.subr.bf16.mxu0 0
  %3349 = vmatpush1.bf16.msra.mxu0 %v3293
  %3350 = vmatprep.subr.bf16.mxu0 0
  %3351 = vmatpush1.bf16.msra.mxu0 %v3294
  %3352 = vmatprep.subr.bf16.mxu0 0
  %3353 = vmatpush1.bf16.msra.mxu0 %v3295
  %3354 = vmatprep.subr.bf16.mxu0 0
  %3355 = vmatpush1.bf16.msra.mxu0 %v3296
  %3356 = vmatprep.mubr.bf16.mxu0 %v3197
  %3357 = vmatmul.mubr.bf16.gmra.mrb[0].mxu0 %v3196
  %v3358 = vpop.f32.mrb[0].mxu0
  %v3359 = vadd.f32 0.0, %v3358
  %v3360 = vpop.f32.mrb[0].mxu0
  %v3361 = vpop.f32.mrb[0].mxu0
  %v3362 = vpop.f32.mrb[0].mxu0
  %3363 = vdwg.mxu0
  %3364 = vmatprep.subr.bf16.mxu0 0
  %3365 = vmatpush1.bf16.msra.mxu0 %v3297
  %3366 = vmatprep.subr.bf16.mxu0 0
  %3367 = vmatpush1.bf16.msra.mxu0 %v3298
  %3368 = vmatprep.subr.bf16.mxu0 0
  %3369 = vmatpush1.bf16.msra.mxu0 %v3299
  %3370 = vmatprep.subr.bf16.mxu0 0
  %3371 = vmatpush1.bf16.msra.mxu0 %v3300
  %3372 = vmatprep.subr.bf16.mxu0 0
  %3373 = vmatpush1.bf16.msra.mxu0 0
  %3374 = vmatprep.subr.bf16.mxu0 0
  %3375 = vmatpush1.bf16.msra.mxu0 0
  %3376 = vmatprep.subr.bf16.mxu0 0
  %3377 = vmatpush1.bf16.msra.mxu0 0
  %3378 = vmatprep.subr.bf16.mxu0 0
  %3379 = vmatpush1.bf16.msra.mxu0 0
  %3380 = vmatprep.subr.bf16.mxu0 0
  %3381 = vmatpush1.bf16.msra.mxu0 0
  %3382 = vmatprep.subr.bf16.mxu0 0
  %3383 = vmatpush1.bf16.msra.mxu0 0
  %3384 = vmatprep.subr.bf16.mxu0 0
  %3385 = vmatpush1.bf16.msra.mxu0 0
  %3386 = vmatprep.subr.bf16.mxu0 0
  %3387 = vmatpush1.bf16.msra.mxu0 0
  %3388 = vmatprep.subr.bf16.mxu0 0
  %3389 = vmatpush1.bf16.msra.mxu0 0
  %3390 = vmatprep.subr.bf16.mxu0 0
  %3391 = vmatpush1.bf16.msra.mxu0 0
  %3392 = vmatprep.subr.bf16.mxu0 0
  %3393 = vmatpush1.bf16.msra.mxu0 0
  %3394 = vmatprep.subr.bf16.mxu0 0
  %3395 = vmatpush1.bf16.msra.mxu0 0
  %3396 = vmatprep.mubr.bf16.mxu0 0
  %3397 = vmatmul.mubr.bf16.gmra.mrb[0].mxu0 %v3322
  %v3398 = vpop.f32.mrb[0].mxu0
  %v3399 = vadd.f32 %v3359, %v3398
  %v3400 = vpop.f32.mrb[0].mxu0
  %v3401 = vpop.f32.mrb[0].mxu0
  %v3402 = vpop.f32.mrb[0].mxu0
  %3403 = vdwg.mxu0
  %v3404 = vadd.f32 %v3152, %v3399
  %vm3405 = vcmp.gt.f32.partialorder %v3404, 0.0
  %v3406 = vmul.f32 %v3404, 0.01
  %v3407 = vsel %vm3405, %v3404, %v3406
  %3408 = vmatprep.subr.mxu0 0.0
  %3409 = vmatpush1.msra.mxu0 %v3407
  %3410 = vmatprep.subr.mxu0 0.0
  %3411 = vmatpush1.msra.mxu0 0.0
  %3412 = vmatprep.subr.mxu0 0.0
  %3413 = vmatpush1.msra.mxu0 0.0
  %3414 = vmatprep.subr.mxu0 0.0
  %3415 = vmatpush1.msra.mxu0 0.0
  %3416 = vmatprep.subr.mxu0 0.0
  %3417 = vmatpush1.msra.mxu0 0.0
  %3418 = vmatprep.subr.mxu0 0.0
  %3419 = vmatpush1.msra.mxu0 0.0
  %3420 = vmatprep.subr.mxu0 0.0
  %3421 = vmatpush1.msra.mxu0 0.0
  %3422 = vmatprep.subr.mxu0 0.0
  %3423 = vmatpush1.msra.mxu0 0.0
  %3424 = vmatprep.subr.mxu0 0.0
  %3425 = vmatpush1.msra.mxu0 0.0
  %3426 = vmatprep.subr.mxu0 0.0
  %3427 = vmatpush1.msra.mxu0 0.0
  %3428 = vmatprep.subr.mxu0 0.0
  %3429 = vmatpush1.msra.mxu0 0.0
  %3430 = vmatprep.subr.mxu0 0.0
  %3431 = vmatpush1.msra.mxu0 0.0
  %3432 = vmatprep.subr.mxu0 0.0
  %3433 = vmatpush1.msra.mxu0 0.0
  %3434 = vmatprep.subr.mxu0 0.0
  %3435 = vmatpush1.msra.mxu0 0.0
  %3436 = vmatprep.subr.mxu0 0.0
  %3437 = vmatpush1.msra.mxu0 0.0
  %3438 = vmatprep.subr.mxu0 0.0
  %3439 = vmatpush1.msra.mxu0 0.0
  %3440 = vmatprep.subr.mxu0 0.0
  %3441 = vmatpush1.msra.mxu0 0.0
  %3442 = vmatprep.subr.mxu0 0.0
  %3443 = vmatpush1.msra.mxu0 0.0
  %3444 = vmatprep.subr.mxu0 0.0
  %3445 = vmatpush1.msra.mxu0 0.0
  %3446 = vmatprep.subr.mxu0 0.0
  %3447 = vmatpush1.msra.mxu0 0.0
  %3448 = vmatprep.subr.mxu0 0.0
  %3449 = vmatpush1.msra.mxu0 0.0
  %3450 = vmatprep.subr.mxu0 0.0
  %3451 = vmatpush1.msra.mxu0 0.0
  %3452 = vmatprep.subr.mxu0 0.0
  %3453 = vmatpush1.msra.mxu0 0.0
  %3454 = vmatprep.subr.mxu0 0.0
  %3455 = vmatpush1.msra.mxu0 0.0
  %3456 = vmatprep.subr.mxu0 0.0
  %3457 = vmatpush1.msra.mxu0 0.0
  %3458 = vmatprep.subr.mxu0 0.0
  %3459 = vmatpush1.msra.mxu0 0.0
  %3460 = vmatprep.subr.mxu0 0.0
  %3461 = vmatpush1.msra.mxu0 0.0
  %3462 = vmatprep.subr.mxu0 0.0
  %3463 = vmatpush1.msra.mxu0 0.0
  %3464 = vmatprep.subr.mxu0 0.0
  %3465 = vmatpush1.msra.mxu0 0.0
  %3466 = vmatprep.subr.mxu0 0.0
  %3467 = vmatpush1.msra.mxu0 0.0
  %3468 = vmatprep.subr.mxu0 0.0
  %3469 = vmatpush1.msra.mxu0 0.0
  %3470 = vmatprep.subr.mxu0 0.0
  %3471 = vmatpush1.msra.mxu0 0.0
  %3472 = vmatprep.mubr.f32.mxu0 0.0
  %3473 = vmatmul.mubr.f32.gmra.mrb[0].mxu0 %v1642
  %v3474 = vpop.f32.mrb[0].mxu0
  %v3475 = vadd.f32 0.0, %v3474
  %v3476 = vpop.f32.mrb[0].mxu0
  %3477 = vmatprep.mubr.f32.mxu0 0.0
  %3478 = vmatmul.mubr.f32.gmra.mrb[0].mxu0 %v1645
  %v3479 = vpop.f32.mrb[0].mxu0
  %v3480 = vadd.f32 0.0, %v3479
  %v3481 = vpop.f32.mrb[0].mxu0
  %3482 = vdwg.mxu0
  %3483 = vmatprep.subr.mxu0 %v95
  %3484 = vmatpush1.msra.mxu0 %v94
  %3485 = vmatprep.subr.mxu0 %v97
  %3486 = vmatpush1.msra.mxu0 %v96
  %3487 = vmatprep.subr.mxu0 %v99
  %3488 = vmatpush1.msra.mxu0 %v98
  %3489 = vmatprep.subr.mxu0 %v101
  %3490 = vmatpush1.msra.mxu0 %v100
  %3491 = vmatprep.subr.mxu0 %v103
  %3492 = vmatpush1.msra.mxu0 %v102
  %3493 = vmatprep.subr.mxu0 %v105
  %3494 = vmatpush1.msra.mxu0 %v104
  %3495 = vmatprep.subr.mxu0 %v107
  %3496 = vmatpush1.msra.mxu0 %v106
  %3497 = vmatprep.subr.mxu0 %v109
  %3498 = vmatpush1.msra.mxu0 %v108
  %3499 = vmatprep.subr.mxu0 %v111
  %3500 = vmatpush1.msra.mxu0 %v110
  %3501 = vmatprep.subr.mxu0 %v113
  %3502 = vmatpush1.msra.mxu0 %v112
  %3503 = vmatprep.subr.mxu0 %v115
  %3504 = vmatpush1.msra.mxu0 %v114
  %3505 = vmatprep.subr.mxu0 %v117
  %3506 = vmatpush1.msra.mxu0 %v116
  %3507 = vmatprep.subr.mxu0 %v119
  %3508 = vmatpush1.msra.mxu0 %v118
  %3509 = vmatprep.subr.mxu0 %v121
  %3510 = vmatpush1.msra.mxu0 %v120
  %3511 = vmatprep.subr.mxu0 %v123
  %3512 = vmatpush1.msra.mxu0 %v122
  %3513 = vmatprep.subr.mxu0 %v125
  %3514 = vmatpush1.msra.mxu0 %v124
  %3515 = vmatprep.subr.mxu0 0.0
  %3516 = vmatpush1.msra.mxu0 0.0
  %3517 = vmatprep.subr.mxu0 0.0
  %3518 = vmatpush1.msra.mxu0 0.0
  %3519 = vmatprep.subr.mxu0 0.0
  %3520 = vmatpush1.msra.mxu0 0.0
  %3521 = vmatprep.subr.mxu0 0.0
  %3522 = vmatpush1.msra.mxu0 0.0
  %3523 = vmatprep.subr.mxu0 0.0
  %3524 = vmatpush1.msra.mxu0 0.0
  %3525 = vmatprep.subr.mxu0 0.0
  %3526 = vmatpush1.msra.mxu0 0.0
  %3527 = vmatprep.subr.mxu0 0.0
  %3528 = vmatpush1.msra.mxu0 0.0
  %3529 = vmatprep.subr.mxu0 0.0
  %3530 = vmatpush1.msra.mxu0 0.0
  %3531 = vmatprep.subr.mxu0 0.0
  %3532 = vmatpush1.msra.mxu0 0.0
  %3533 = vmatprep.subr.mxu0 0.0
  %3534 = vmatpush1.msra.mxu0 0.0
  %3535 = vmatprep.subr.mxu0 0.0
  %3536 = vmatpush1.msra.mxu0 0.0
  %3537 = vmatprep.subr.mxu0 0.0
  %3538 = vmatpush1.msra.mxu0 0.0
  %3539 = vmatprep.subr.mxu0 0.0
  %3540 = vmatpush1.msra.mxu0 0.0
  %3541 = vmatprep.subr.mxu0 0.0
  %3542 = vmatpush1.msra.mxu0 0.0
  %3543 = vmatprep.subr.mxu0 0.0
  %3544 = vmatpush1.msra.mxu0 0.0
  %3545 = vmatprep.subr.mxu0 0.0
  %3546 = vmatpush1.msra.mxu0 0.0
  %3547 = vmatprep.mubr.f32.mxu0 0.0
  %3548 = vmatmul.mubr.f32.gmra.mrb[0].mxu0 %v3475
  %v3549 = vpop.f32.mrb[0].mxu0
  %v3550 = vadd.f32 0.0, %v3549
  %v3551 = vpop.f32.mrb[0].mxu0
  %v3552 = vadd.f32 0.0, %v3551
  %3553 = vmatprep.mubr.f32.mxu0 0.0
  %3554 = vmatmul.mubr.f32.gmra.mrb[0].mxu0 %v3480
  %v3555 = vpop.f32.mrb[0].mxu0
  %v3556 = vadd.f32 0.0, %v3555
  %v3557 = vpop.f32.mrb[0].mxu0
  %v3558 = vadd.f32 0.0, %v3557
  %3559 = vdwg.mxu0
  %v3560 = vpack.c.bf16 %v3556, %v3550
  %v3561 = vpack.c.bf16 %v3558, %v3552
  %3562 = vmatprep.subr.bf16.mxu0 0
  %3563 = vmatpush1.bf16.msra.mxu0 %v1871
  %3564 = vmatprep.subr.bf16.mxu0 0
  %3565 = vmatpush1.bf16.msra.mxu0 %v1872
  %3566 = vmatprep.subr.bf16.mxu0 0
  %3567 = vmatpush1.bf16.msra.mxu0 %v1873
  %3568 = vmatprep.subr.bf16.mxu0 0
  %3569 = vmatpush1.bf16.msra.mxu0 %v1874
  %3570 = vmatprep.subr.bf16.mxu0 0
  %3571 = vmatpush1.bf16.msra.mxu0 %v1875
  %3572 = vmatprep.subr.bf16.mxu0 0
  %3573 = vmatpush1.bf16.msra.mxu0 %v1876
  %3574 = vmatprep.subr.bf16.mxu0 0
  %3575 = vmatpush1.bf16.msra.mxu0 %v1877
  %3576 = vmatprep.subr.bf16.mxu0 0
  %3577 = vmatpush1.bf16.msra.mxu0 %v1878
  %3578 = vmatprep.subr.bf16.mxu0 0
  %3579 = vmatpush1.bf16.msra.mxu0 %v1879
  %3580 = vmatprep.subr.bf16.mxu0 0
  %3581 = vmatpush1.bf16.msra.mxu0 %v1880
  %3582 = vmatprep.subr.bf16.mxu0 0
  %3583 = vmatpush1.bf16.msra.mxu0 %v1881
  %3584 = vmatprep.subr.bf16.mxu0 0
  %3585 = vmatpush1.bf16.msra.mxu0 %v1882
  %3586 = vmatprep.subr.bf16.mxu0 0
  %3587 = vmatpush1.bf16.msra.mxu0 %v1883
  %3588 = vmatprep.subr.bf16.mxu0 0
  %3589 = vmatpush1.bf16.msra.mxu0 %v1884
  %3590 = vmatprep.subr.bf16.mxu0 0
  %3591 = vmatpush1.bf16.msra.mxu0 %v1885
  %3592 = vmatprep.subr.bf16.mxu0 0
  %3593 = vmatpush1.bf16.msra.mxu0 %v1886
  %3594 = vmatprep.mubr.bf16.mxu0 %v3561
  %3595 = vmatmul.mubr.bf16.gmra.mrb[0].mxu0 %v3560
  %v3596 = vpop.f32.mrb[0].mxu0
  %v3597 = vadd.f32 %v1805, %v3596
  %v3598 = vpop.f32.mrb[0].mxu0
  %v3599 = vpop.f32.mrb[0].mxu0
  %v3600 = vadd.f32 %v1805, %v3599
  %v3601 = vpop.f32.mrb[0].mxu0
  %3602 = vdwg.mxu0
  %v3603 = vmax.f32 %v3597, -1.0
  %v3604 = vmax.f32 %v3600, -1.0
  %v3605 = vmin.f32 %v3603, 1.0
  %v3606 = vmin.f32 %v3604, 1.0
  %s3607 = scalar_lea.vmem %s11, 16
  %3608 = vst.msk [vmem:[%s3607] sm:$0xff] %vm258, %v3605
  %3609 = vst.msk [vmem:[%s3607 + $0x8] sm:$0xff] %vm258, %v3606
  // Predicated region
  $region46: #{transitioner_forward.3} parent=0 // pred_check
    _
  $region47: #{transitioner_forward.3} parent=0 // pred_check_branch
    %3611 = sbr.rel (0) target = $region49
  $region48: #{transitioner_forward.3} parent=0 // pred_region
    _
  $region49: #{transitioner_forward.3} parent=0 // pred_fallthru
    _
  // Predicated region
  $region50: #{transitioner_forward.3} parent=0 // pred_check
    _
  $region51: #{transitioner_forward.3} parent=0 // pred_check_branch
    %3613 = sbr.rel (0) target = $region53
  $region52: #{transitioner_forward.3} parent=0 // pred_region
    _
  $region53: #{transitioner_forward.3} parent=0 // pred_fallthru
    _

// kernel: transitioner_forward.2
$region0: #{transitioner_forward.2}
  #allocation0 [shape = 'u32[]', space=smem, size = 0x4, offset = 0x4, fixed_abs, tag = 'smem constant byte address 0x4 - core index']
  #allocation1 [shape = 'u32[144,128]{1,0:T(1,128)}', space=vmem, size = 0x12000, scoped, tag = 'internal scratch']
  #allocation2 [shape = 'f32[2,32]{1,0:T(2,128)}', space=vmem, size = 0x400, scoped, tag = 'scratch operand']
  %s0 = inlined_call_operand.smem [shape: u32[41], index: -1, kind: input, shape index: {}]
  %s1 = sld [smem:[%s0]]
  %s2 = scalar_lea.smem %s0, 1
  %s3 = sld [smem:[%s2]]
  %s4 = scalar_lea.smem %s0, 2
  %s5 = sld [smem:[%s4]]
  %s6 = scalar_lea.smem %s0, 3
  %s7 = sld [smem:[%s6]]
  %s8 = scalar_lea.smem %s0, 4
  %s9 = sld [smem:[%s8]]
  %s10 = scalar_lea.smem %s0, 5
  %s11 = sld [smem:[%s10]]
  %s12 = scalar_lea.smem %s0, 6
  %s13 = sld [smem:[%s12]]
  %s14 = scalar_lea.smem %s0, 7
  %s15 = sld [smem:[%s14]]
  %s16 = scalar_lea.smem %s0, 8
  %s17 = sld [smem:[%s16]]
  %s18 = scalar_lea.smem %s0, 9
  %s19 = sld [smem:[%s18]]
  %s20 = scalar_lea.smem %s0, 10
  %s21 = sld [smem:[%s20]]
  %s22 = scalar_lea.smem %s0, 11
  %s23 = sld [smem:[%s22]]
  %s24 = scalar_lea.smem %s0, 12
  %s25 = sld [smem:[%s24]]
  %s26 = scalar_lea.smem %s0, 13
  %s27 = sld [smem:[%s26]]
  %s28 = scalar_lea.smem %s0, 14
  %s29 = sld [smem:[%s28]]
  %s30 = scalar_lea.smem %s0, 15
  %s31 = sld [smem:[%s30]]
  %s32 = scalar_lea.smem %s0, 16
  %s33 = sld [smem:[%s32]]
  %s34 = scalar_lea.smem %s0, 17
  %s35 = sld [smem:[%s34]]
  %s36 = scalar_lea.smem %s0, 18
  %s37 = sld [smem:[%s36]]
  %s38 = scalar_lea.smem %s0, 19
  %s39 = sld [smem:[%s38]]
  %s40 = scalar_lea.smem %s0, 20
  %s41 = sld [smem:[%s40]]
  %s42 = scalar_lea.smem %s0, 21
  %s43 = sld [smem:[%s42]]
  %s44 = scalar_lea.smem %s0, 22
  %s45 = sld [smem:[%s44]]
  %s46 = scalar_lea.smem %s0, 23
  %s47 = sld [smem:[%s46]]
  %s48 = scalar_lea.smem %s0, 24
  %s49 = sld [smem:[%s48]]
  %s50 = scalar_lea.smem %s0, 25
  %s51 = sld [smem:[%s50]]
  %s52 = scalar_lea.smem %s0, 26
  %s53 = sld [smem:[%s52]]
  %s54 = scalar_lea.smem %s0, 27
  %s55 = sld [smem:[%s54]]
  %s56 = scalar_lea.smem %s0, 28
  %s57 = sld [smem:[%s56]]
  %s58 = scalar_lea.smem %s0, 29
  %s59 = sld [smem:[%s58]]
  %s60 = scalar_lea.smem %s0, 30
  %s61 = sld [smem:[%s60]]
  %s62 = scalar_lea.smem %s0, 31
  %s63 = sld [smem:[%s62]]
  %s64 = scalar_lea.smem %s0, 32
  %s65 = sld [smem:[%s64]]
  %s66 = scalar_lea.smem %s0, 33
  %s67 = sld [smem:[%s66]]
  %s68 = scalar_lea.smem %s0, 34
  %s69 = sld [smem:[%s68]]
  %s70 = scalar_lea.smem %s0, 35
  %s71 = sld [smem:[%s70]]
  %s72 = scalar_lea.smem %s0, 36
  %s73 = sld [smem:[%s72]]
  %s74 = scalar_lea.smem %s0, 37
  %s75 = sld [smem:[%s74]]
  %s76 = scalar_lea.smem %s0, 38
  %s77 = sld [smem:[%s76]]
  %s78 = scalar_lea.smem %s0, 39
  %s79 = sld [smem:[%s78]]
  %s80 = scalar_lea.smem %s0, 40
  %s81 = sld [smem:[%s80]]
  %82 = xla_tuple %s75, %s77, %s79, %s81
  %s83 = sld [smem:[#allocation0]]
  $region282: #{transitioner_forward.2} parent=0
    _
  %s85 = ssub.s32 1, %s83
  %s86 = scalar_select 0, %s85, %s83
  $region1: #{transitioner_forward.2} parent=0
    #allocation3 [shape = 'u8[1024]{0}', space=vmem, size = 0x400, scoped, tag = 'input window, operand 2, single buffered']
    #allocation4 [shape = 's32[1]{0}', space=sflag, size = 0x4, scoped, tag = 'scoped memory for transitioner_forward.2']
    #allocation5 [shape = 's32[1]{0}', space=sflag, size = 0x4, scoped, tag = 'scoped memory for transitioner_forward.2']
    #allocation6 [shape = 'u8[1024]{0}', space=vmem, size = 0x400, scoped, tag = 'input window, operand 3, single buffered']
    #allocation7 [shape = 's32[1]{0}', space=sflag, size = 0x4, scoped, tag = 'scoped memory for transitioner_forward.2']
    #allocation8 [shape = 'u8[110592]{0}', space=vmem, size = 0x1b000, scoped, tag = 'input window, operand 6, single buffered']
    #allocation9 [shape = 'u8[1024]{0}', space=vmem, size = 0x400, scoped, tag = 'input window, operand 7, single buffered']
    #allocation10 [shape = 's32[1]{0}', space=sflag, size = 0x4, scoped, tag = 'scoped memory for transitioner_forward.2']
    #allocation11 [shape = 'u8[8192]{0}', space=vmem, size = 0x2000, scoped, tag = 'input window, operand 8, single buffered']
    #allocation12 [shape = 'u8[8192]{0}', space=vmem, size = 0x2000, scoped, tag = 'input window, operand 9, single buffered']
    #allocation13 [shape = 's32[1]{0}', space=sflag, size = 0x4, scoped, tag = 'scoped memory for transitioner_forward.2']
    #allocation14 [shape = 'u8[512]{0}', space=vmem, size = 0x400, scoped, tag = 'input window, operand 14, single buffered']
    #allocation15 [shape = 'u8[512]{0}', space=vmem, size = 0x400, scoped, tag = 'input window, operand 15, single buffered']
    #allocation16 [shape = 's32[1]{0}', space=sflag, size = 0x4, scoped, tag = 'scoped memory for transitioner_forward.2']
    #allocation17 [shape = 'u8[512]{0}', space=vmem, size = 0x400, scoped, tag = 'input window, operand 16, single buffered']
    #allocation18 [shape = 'u8[512]{0}', space=vmem, size = 0x400, scoped, tag = 'input window, operand 17, single buffered']
    #allocation19 [shape = 's32[1]{0}', space=sflag, size = 0x4, scoped, tag = 'scoped memory for transitioner_forward.2']
    #allocation20 [shape = 'u8[512]{0}', space=vmem, size = 0x400, scoped, tag = 'input window, operand 18, single buffered']
    #allocation21 [shape = 'u8[512]{0}', space=vmem, size = 0x400, scoped, tag = 'input window, operand 19, single buffered']
    #allocation22 [shape = 's32[1]{0}', space=sflag, size = 0x4, scoped, tag = 'scoped memory for transitioner_forward.2']
    #allocation23 [shape = 'u8[8192]{0}', space=vmem, size = 0x2000, scoped, tag = 'input window, operand 20, single buffered']
    #allocation24 [shape = 'u8[8192]{0}', space=vmem, size = 0x2000, scoped, tag = 'input window, operand 21, single buffered']
    #allocation25 [shape = 's32[1]{0}', space=sflag, size = 0x4, scoped, tag = 'scoped memory for transitioner_forward.2']
    #allocation26 [shape = 'u8[8192]{0}', space=vmem, size = 0x2000, scoped, tag = 'input window, operand 22, single buffered']
    #allocation27 [shape = 'u8[512]{0}', space=vmem, size = 0x400, scoped, tag = 'input window, operand 24, single buffered']
    #allocation28 [shape = 's32[1]{0}', space=sflag, size = 0x4, scoped, tag = 'scoped memory for transitioner_forward.2']
    #allocation29 [shape = 'u8[512]{0}', space=vmem, size = 0x400, scoped, tag = 'input window, operand 26, single buffered']
    #allocation30 [shape = 'u8[512]{0}', space=vmem, size = 0x400, scoped, tag = 'input window, operand 28, single buffered']
    #allocation31 [shape = 's32[1]{0}', space=sflag, size = 0x4, scoped, tag = 'scoped memory for transitioner_forward.2']
    #allocation32 [shape = 'u8[8192]{0}', space=vmem, size = 0x2000, scoped, tag = 'input window, operand 29, single buffered']
    #allocation33 [shape = 'u8[8192]{0}', space=vmem, size = 0x2000, scoped, tag = 'input window, operand 30, single buffered']
    #allocation34 [shape = 's32[1]{0}', space=sflag, size = 0x4, scoped, tag = 'scoped memory for transitioner_forward.2']
    #allocation35 [shape = 'u8[512]{0}', space=vmem, size = 0x400, scoped, tag = 'input window, operand 31, single buffered']
    #allocation36 [shape = 'u8[8192]{0}', space=vmem, size = 0x2000, scoped, tag = 'input window, operand 32, single buffered']
    #allocation37 [shape = 's32[1]{0}', space=sflag, size = 0x4, scoped, tag = 'scoped memory for transitioner_forward.2']
    #allocation38 [shape = 'u8[512]{0}', space=vmem, size = 0x400, scoped, tag = 'input window, operand 33, single buffered']
    #allocation39 [shape = 'u8[2048]{0}', space=vmem, size = 0x800, scoped, tag = 'input window, operand 35, single buffered']
    #allocation40 [shape = 's32[1]{0}', space=sflag, size = 0x4, scoped, tag = 'scoped memory for transitioner_forward.2']
    #allocation41 [shape = 'u8[16384]{0}', space=vmem, size = 0x4000, scoped, tag = 'input window, operand 36, single buffered']
    #allocation42 [shape = 'u8[1024]{0}', space=vmem, size = 0x400, scoped, tag = 'output window, operand 1, single buffered']
    #allocation43 [shape = 'u8[1024]{0}', space=vmem, size = 0x400, scoped, tag = 'output window, operand 2, single buffered']
    #allocation44 [shape = 's32[1]{0}', space=sflag, size = 0x4, scoped, tag = 'scoped memory for transitioner_forward.2']
    %87 = vsyncpa [#allocation4], 0
    %88 = vsyncpa [#allocation7], 0
    %89 = vsyncpa [#allocation10], 0
    %90 = vsyncpa [#allocation13], 0
    %91 = vsyncpa [#allocation16], 0
    %92 = vsyncpa [#allocation19], 0
    %93 = vsyncpa [#allocation22], 0
    %94 = vsyncpa [#allocation25], 0
    %95 = vsyncpa [#allocation28], 0
    %96 = vsyncpa [#allocation31], 0
    %97 = vsyncpa [#allocation34], 0
    %98 = vsyncpa [#allocation37], 0
    %99 = vsyncpa [#allocation40], 0
    %100 = vsyncpa [#allocation5], 0
    %101 = vsyncpa [#allocation44], 0
    // Predicated region
    $region2: #{transitioner_forward.2} parent=1 // pred_check
      _
    $region3: #{transitioner_forward.2} parent=1 // pred_check_branch
      %103 = sbr.rel (0) target = $region5
    $region4: #{transitioner_forward.2} parent=1 // pred_region
      _
    $region5: #{transitioner_forward.2} parent=1 // pred_fallthru
      _
    // Predicated region
    $region6: #{transitioner_forward.2} parent=1 // pred_check
      _
    $region7: #{transitioner_forward.2} parent=1 // pred_check_branch
      %105 = sbr.rel (0) target = $region9
    $region8: #{transitioner_forward.2} parent=1 // pred_region
      _
    $region9: #{transitioner_forward.2} parent=1 // pred_fallthru
      _
    // Predicated region
    $region10: #{transitioner_forward.2} parent=1 // pred_check
      _
    $region11: #{transitioner_forward.2} parent=1 // pred_check_branch
      %107 = sbr.rel (0) target = $region13
    $region12: #{transitioner_forward.2} parent=1 // pred_region
      %s109 = ssub.s32 32, 32
      %110 = vsyncadd [#allocation4], %s109
      %s112 = sshll.u32 [#allocation3], 4
      %s113 = int_to_ptr.vmem [resolvable:$true] %s112
      %115 = dma.hbm_to_vmem [thread:$0]  %s5, 32, %s113, [#allocation4]
    $region13: #{transitioner_forward.2} parent=1 // pred_fallthru
      _
    // Predicated region
    $region14: #{transitioner_forward.2} parent=1 // pred_check
      _
    $region15: #{transitioner_forward.2} parent=1 // pred_check_branch
      %117 = sbr.rel (0) target = $region17
    $region16: #{transitioner_forward.2} parent=1 // pred_region
      %s119 = ssub.s32 32, 32
      %120 = vsyncadd [#allocation7], %s119
      %s122 = sshll.u32 [#allocation6], 4
      %s123 = int_to_ptr.vmem [resolvable:$true] %s122
      %125 = dma.hbm_to_vmem [thread:$0]  %s7, 32, %s123, [#allocation7]
    $region17: #{transitioner_forward.2} parent=1 // pred_fallthru
      _
    // Predicated region
    $region18: #{transitioner_forward.2} parent=1 // pred_check
      _
    $region19: #{transitioner_forward.2} parent=1 // pred_check_branch
      %127 = sbr.rel (0) target = $region21
    $region20: #{transitioner_forward.2} parent=1 // pred_region
      _
    $region21: #{transitioner_forward.2} parent=1 // pred_fallthru
      _
    // Predicated region
    $region22: #{transitioner_forward.2} parent=1 // pred_check
      _
    $region23: #{transitioner_forward.2} parent=1 // pred_check_branch
      %129 = sbr.rel (0) target = $region25
    $region24: #{transitioner_forward.2} parent=1 // pred_region
      _
    $region25: #{transitioner_forward.2} parent=1 // pred_fallthru
      _
    // Predicated region
    $region26: #{transitioner_forward.2} parent=1 // pred_check
      _
    $region27: #{transitioner_forward.2} parent=1 // pred_check_branch
      %131 = sbr.rel (0) target = $region29
    $region28: #{transitioner_forward.2} parent=1 // pred_region
      %s133 = ssub.s32 3456, 3456
      %134 = vsyncadd [#allocation7], %s133
      %s135 = sshll.u32 [#allocation8], 4
      %s136 = int_to_ptr.vmem [resolvable:$true] %s135
      %141 = dma.hbm_to_vmem [thread:$0]  %s13, 3456, %s136, [#allocation7], 128, 128, 8
    $region29: #{transitioner_forward.2} parent=1 // pred_fallthru
      _
    // Predicated region
    $region30: #{transitioner_forward.2} parent=1 // pred_check
      _
    $region31: #{transitioner_forward.2} parent=1 // pred_check_branch
      %143 = sbr.rel (0) target = $region33
    $region32: #{transitioner_forward.2} parent=1 // pred_region
      %s145 = ssub.s32 32, 32
      %146 = vsyncadd [#allocation10], %s145
      %s148 = sshll.u32 [#allocation9], 4
      %s149 = int_to_ptr.vmem [resolvable:$true] %s148
      %151 = dma.hbm_to_vmem [thread:$0]  %s15, 32, %s149, [#allocation10]
    $region33: #{transitioner_forward.2} parent=1 // pred_fallthru
      _
    // Predicated region
    $region34: #{transitioner_forward.2} parent=1 // pred_check
      _
    $region35: #{transitioner_forward.2} parent=1 // pred_check_branch
      %153 = sbr.rel (0) target = $region37
    $region36: #{transitioner_forward.2} parent=1 // pred_region
      %s155 = ssub.s32 256, 256
      %156 = vsyncadd [#allocation10], %s155
      %s157 = sshll.u32 [#allocation11], 4
      %s158 = int_to_ptr.vmem [resolvable:$true] %s157
      %163 = dma.hbm_to_vmem [thread:$0]  %s17, 256, %s158, [#allocation10], 128, 128, 8
    $region37: #{transitioner_forward.2} parent=1 // pred_fallthru
      _
    // Predicated region
    $region38: #{transitioner_forward.2} parent=1 // pred_check
      _
    $region39: #{transitioner_forward.2} parent=1 // pred_check_branch
      %165 = sbr.rel (0) target = $region41
    $region40: #{transitioner_forward.2} parent=1 // pred_region
      %s167 = ssub.s32 256, 256
      %168 = vsyncadd [#allocation13], %s167
      %s169 = sshll.u32 [#allocation12], 4
      %s170 = int_to_ptr.vmem [resolvable:$true] %s169
      %175 = dma.hbm_to_vmem [thread:$0]  %s19, 256, %s170, [#allocation13], 128, 128, 8
    $region41: #{transitioner_forward.2} parent=1 // pred_fallthru
      _
    // Predicated region
    $region42: #{transitioner_forward.2} parent=1 // pred_check
      _
    $region43: #{transitioner_forward.2} parent=1 // pred_check_branch
      %177 = sbr.rel (0) target = $region45
    $region44: #{transitioner_forward.2} parent=1 // pred_region
      _
    $region45: #{transitioner_forward.2} parent=1 // pred_fallthru
      _
    // Predicated region
    $region46: #{transitioner_forward.2} parent=1 // pred_check
      _
    $region47: #{transitioner_forward.2} parent=1 // pred_check_branch
      %179 = sbr.rel (0) target = $region49
    $region48: #{transitioner_forward.2} parent=1 // pred_region
      _
    $region49: #{transitioner_forward.2} parent=1 // pred_fallthru
      _
    // Predicated region
    $region50: #{transitioner_forward.2} parent=1 // pred_check
      _
    $region51: #{transitioner_forward.2} parent=1 // pred_check_branch
      %181 = sbr.rel (0) target = $region53
    $region52: #{transitioner_forward.2} parent=1 // pred_region
      _
    $region53: #{transitioner_forward.2} parent=1 // pred_fallthru
      _
    // Predicated region
    $region54: #{transitioner_forward.2} parent=1 // pred_check
      _
    $region55: #{transitioner_forward.2} parent=1 // pred_check_branch
      %183 = sbr.rel (0) target = $region57
    $region56: #{transitioner_forward.2} parent=1 // pred_region
      _
    $region57: #{transitioner_forward.2} parent=1 // pred_fallthru
      _
    // Predicated region
    $region58: #{transitioner_forward.2} parent=1 // pred_check
      _
    $region59: #{transitioner_forward.2} parent=1 // pred_check_branch
      %185 = sbr.rel (0) target = $region61
    $region60: #{transitioner_forward.2} parent=1 // pred_region
      %s187 = ssub.s32 16, 16
      %188 = vsyncadd [#allocation13], %s187
      %s190 = sshll.u32 [#allocation14], 4
      %s191 = int_to_ptr.vmem [resolvable:$true] %s190
      %193 = dma.hbm_to_vmem [thread:$0]  %s29, 16, %s191, [#allocation13]
    $region61: #{transitioner_forward.2} parent=1 // pred_fallthru
      _
    // Predicated region
    $region62: #{transitioner_forward.2} parent=1 // pred_check
      _
    $region63: #{transitioner_forward.2} parent=1 // pred_check_branch
      %195 = sbr.rel (0) target = $region65
    $region64: #{transitioner_forward.2} parent=1 // pred_region
      %s197 = ssub.s32 16, 16
      %198 = vsyncadd [#allocation16], %s197
      %s200 = sshll.u32 [#allocation15], 4
      %s201 = int_to_ptr.vmem [resolvable:$true] %s200
      %203 = dma.hbm_to_vmem [thread:$0]  %s31, 16, %s201, [#allocation16]
    $region65: #{transitioner_forward.2} parent=1 // pred_fallthru
      _
    // Predicated region
    $region66: #{transitioner_forward.2} parent=1 // pred_check
      _
    $region67: #{transitioner_forward.2} parent=1 // pred_check_branch
      %205 = sbr.rel (0) target = $region69
    $region68: #{transitioner_forward.2} parent=1 // pred_region
      %s207 = ssub.s32 16, 16
      %208 = vsyncadd [#allocation16], %s207
      %s210 = sshll.u32 [#allocation17], 4
      %s211 = int_to_ptr.vmem [resolvable:$true] %s210
      %213 = dma.hbm_to_vmem [thread:$0]  %s33, 16, %s211, [#allocation16]
    $region69: #{transitioner_forward.2} parent=1 // pred_fallthru
      _
    // Predicated region
    $region70: #{transitioner_forward.2} parent=1 // pred_check
      _
    $region71: #{transitioner_forward.2} parent=1 // pred_check_branch
      %215 = sbr.rel (0) target = $region73
    $region72: #{transitioner_forward.2} parent=1 // pred_region
      %s217 = ssub.s32 16, 16
      %218 = vsyncadd [#allocation19], %s217
      %s220 = sshll.u32 [#allocation18], 4
      %s221 = int_to_ptr.vmem [resolvable:$true] %s220
      %223 = dma.hbm_to_vmem [thread:$0]  %s35, 16, %s221, [#allocation19]
    $region73: #{transitioner_forward.2} parent=1 // pred_fallthru
      _
    // Predicated region
    $region74: #{transitioner_forward.2} parent=1 // pred_check
      _
    $region75: #{transitioner_forward.2} parent=1 // pred_check_branch
      %225 = sbr.rel (0) target = $region77
    $region76: #{transitioner_forward.2} parent=1 // pred_region
      %s227 = ssub.s32 16, 16
      %228 = vsyncadd [#allocation19], %s227
      %s230 = sshll.u32 [#allocation20], 4
      %s231 = int_to_ptr.vmem [resolvable:$true] %s230
      %233 = dma.hbm_to_vmem [thread:$0]  %s37, 16, %s231, [#allocation19]
    $region77: #{transitioner_forward.2} parent=1 // pred_fallthru
      _
    // Predicated region
    $region78: #{transitioner_forward.2} parent=1 // pred_check
      _
    $region79: #{transitioner_forward.2} parent=1 // pred_check_branch
      %235 = sbr.rel (0) target = $region81
    $region80: #{transitioner_forward.2} parent=1 // pred_region
      %s237 = ssub.s32 16, 16
      %238 = vsyncadd [#allocation22], %s237
      %s240 = sshll.u32 [#allocation21], 4
      %s241 = int_to_ptr.vmem [resolvable:$true] %s240
      %243 = dma.hbm_to_vmem [thread:$0]  %s39, 16, %s241, [#allocation22]
    $region81: #{transitioner_forward.2} parent=1 // pred_fallthru
      _
    // Predicated region
    $region82: #{transitioner_forward.2} parent=1 // pred_check
      _
    $region83: #{transitioner_forward.2} parent=1 // pred_check_branch
      %245 = sbr.rel (0) target = $region85
    $region84: #{transitioner_forward.2} parent=1 // pred_region
      %s247 = ssub.s32 256, 256
      %248 = vsyncadd [#allocation22], %s247
      %s249 = sshll.u32 [#allocation23], 4
      %s250 = int_to_ptr.vmem [resolvable:$true] %s249
      %255 = dma.hbm_to_vmem [thread:$0]  %s41, 256, %s250, [#allocation22], 64, 64, 4
    $region85: #{transitioner_forward.2} parent=1 // pred_fallthru
      _
    // Predicated region
    $region86: #{transitioner_forward.2} parent=1 // pred_check
      _
    $region87: #{transitioner_forward.2} parent=1 // pred_check_branch
      %257 = sbr.rel (0) target = $region89
    $region88: #{transitioner_forward.2} parent=1 // pred_region
      %s259 = ssub.s32 256, 256
      %260 = vsyncadd [#allocation25], %s259
      %s261 = sshll.u32 [#allocation24], 4
      %s262 = int_to_ptr.vmem [resolvable:$true] %s261
      %267 = dma.hbm_to_vmem [thread:$0]  %s43, 256, %s262, [#allocation25], 64, 64, 4
    $region89: #{transitioner_forward.2} parent=1 // pred_fallthru
      _
    // Predicated region
    $region90: #{transitioner_forward.2} parent=1 // pred_check
      _
    $region91: #{transitioner_forward.2} parent=1 // pred_check_branch
      %269 = sbr.rel (0) target = $region93
    $region92: #{transitioner_forward.2} parent=1 // pred_region
      %s271 = ssub.s32 256, 256
      %272 = vsyncadd [#allocation25], %s271
      %s273 = sshll.u32 [#allocation26], 4
      %s274 = int_to_ptr.vmem [resolvable:$true] %s273
      %279 = dma.hbm_to_vmem [thread:$0]  %s45, 256, %s274, [#allocation25], 64, 64, 4
    $region93: #{transitioner_forward.2} parent=1 // pred_fallthru
      _
    // Predicated region
    $region94: #{transitioner_forward.2} parent=1 // pred_check
      _
    $region95: #{transitioner_forward.2} parent=1 // pred_check_branch
      %281 = sbr.rel (0) target = $region97
    $region96: #{transitioner_forward.2} parent=1 // pred_region
      _
    $region97: #{transitioner_forward.2} parent=1 // pred_fallthru
      _
    // Predicated region
    $region98: #{transitioner_forward.2} parent=1 // pred_check
      _
    $region99: #{transitioner_forward.2} parent=1 // pred_check_branch
      %283 = sbr.rel (0) target = $region101
    $region100: #{transitioner_forward.2} parent=1 // pred_region
      %s285 = ssub.s32 16, 16
      %286 = vsyncadd [#allocation28], %s285
      %s288 = sshll.u32 [#allocation27], 4
      %s289 = int_to_ptr.vmem [resolvable:$true] %s288
      %291 = dma.hbm_to_vmem [thread:$0]  %s49, 16, %s289, [#allocation28]
    $region101: #{transitioner_forward.2} parent=1 // pred_fallthru
      _
    // Predicated region
    $region102: #{transitioner_forward.2} parent=1 // pred_check
      _
    $region103: #{transitioner_forward.2} parent=1 // pred_check_branch
      %293 = sbr.rel (0) target = $region105
    $region104: #{transitioner_forward.2} parent=1 // pred_region
      _
    $region105: #{transitioner_forward.2} parent=1 // pred_fallthru
      _
    // Predicated region
    $region106: #{transitioner_forward.2} parent=1 // pred_check
      _
    $region107: #{transitioner_forward.2} parent=1 // pred_check_branch
      %295 = sbr.rel (0) target = $region109
    $region108: #{transitioner_forward.2} parent=1 // pred_region
      %s297 = ssub.s32 16, 16
      %298 = vsyncadd [#allocation28], %s297
      %s300 = sshll.u32 [#allocation29], 4
      %s301 = int_to_ptr.vmem [resolvable:$true] %s300
      %303 = dma.hbm_to_vmem [thread:$0]  %s53, 16, %s301, [#allocation28]
    $region109: #{transitioner_forward.2} parent=1 // pred_fallthru
      _
    // Predicated region
    $region110: #{transitioner_forward.2} parent=1 // pred_check
      _
    $region111: #{transitioner_forward.2} parent=1 // pred_check_branch
      %305 = sbr.rel (0) target = $region113
    $region112: #{transitioner_forward.2} parent=1 // pred_region
      _
    $region113: #{transitioner_forward.2} parent=1 // pred_fallthru
      _
    // Predicated region
    $region114: #{transitioner_forward.2} parent=1 // pred_check
      _
    $region115: #{transitioner_forward.2} parent=1 // pred_check_branch
      %307 = sbr.rel (0) target = $region117
    $region116: #{transitioner_forward.2} parent=1 // pred_region
      %s309 = ssub.s32 16, 16
      %310 = vsyncadd [#allocation31], %s309
      %s312 = sshll.u32 [#allocation30], 4
      %s313 = int_to_ptr.vmem [resolvable:$true] %s312
      %315 = dma.hbm_to_vmem [thread:$0]  %s57, 16, %s313, [#allocation31]
    $region117: #{transitioner_forward.2} parent=1 // pred_fallthru
      _
    // Predicated region
    $region118: #{transitioner_forward.2} parent=1 // pred_check
      _
    $region119: #{transitioner_forward.2} parent=1 // pred_check_branch
      %317 = sbr.rel (0) target = $region121
    $region120: #{transitioner_forward.2} parent=1 // pred_region
      %s319 = ssub.s32 256, 256
      %320 = vsyncadd [#allocation31], %s319
      %s321 = sshll.u32 [#allocation32], 4
      %s322 = int_to_ptr.vmem [resolvable:$true] %s321
      %327 = dma.hbm_to_vmem [thread:$0]  %s59, 256, %s322, [#allocation31], 64, 64, 4
    $region121: #{transitioner_forward.2} parent=1 // pred_fallthru
      _
    // Predicated region
    $region122: #{transitioner_forward.2} parent=1 // pred_check
      _
    $region123: #{transitioner_forward.2} parent=1 // pred_check_branch
      %329 = sbr.rel (0) target = $region125
    $region124: #{transitioner_forward.2} parent=1 // pred_region
      %s331 = ssub.s32 256, 256
      %332 = vsyncadd [#allocation34], %s331
      %s333 = sshll.u32 [#allocation33], 4
      %s334 = int_to_ptr.vmem [resolvable:$true] %s333
      %339 = dma.hbm_to_vmem [thread:$0]  %s61, 256, %s334, [#allocation34], 64, 64, 4
    $region125: #{transitioner_forward.2} parent=1 // pred_fallthru
      _
    // Predicated region
    $region126: #{transitioner_forward.2} parent=1 // pred_check
      _
    $region127: #{transitioner_forward.2} parent=1 // pred_check_branch
      %341 = sbr.rel (0) target = $region129
    $region128: #{transitioner_forward.2} parent=1 // pred_region
      %s343 = ssub.s32 16, 16
      %344 = vsyncadd [#allocation34], %s343
      %s346 = sshll.u32 [#allocation35], 4
      %s347 = int_to_ptr.vmem [resolvable:$true] %s346
      %349 = dma.hbm_to_vmem [thread:$0]  %s63, 16, %s347, [#allocation34]
    $region129: #{transitioner_forward.2} parent=1 // pred_fallthru
      _
    // Predicated region
    $region130: #{transitioner_forward.2} parent=1 // pred_check
      _
    $region131: #{transitioner_forward.2} parent=1 // pred_check_branch
      %351 = sbr.rel (0) target = $region133
    $region132: #{transitioner_forward.2} parent=1 // pred_region
      %s353 = ssub.s32 256, 256
      %354 = vsyncadd [#allocation37], %s353
      %s355 = sshll.u32 [#allocation36], 4
      %s356 = int_to_ptr.vmem [resolvable:$true] %s355
      %361 = dma.hbm_to_vmem [thread:$0]  %s65, 256, %s356, [#allocation37], 64, 64, 4
    $region133: #{transitioner_forward.2} parent=1 // pred_fallthru
      _
    // Predicated region
    $region134: #{transitioner_forward.2} parent=1 // pred_check
      _
    $region135: #{transitioner_forward.2} parent=1 // pred_check_branch
      %363 = sbr.rel (0) target = $region137
    $region136: #{transitioner_forward.2} parent=1 // pred_region
      %s365 = ssub.s32 16, 16
      %366 = vsyncadd [#allocation37], %s365
      %s368 = sshll.u32 [#allocation38], 4
      %s369 = int_to_ptr.vmem [resolvable:$true] %s368
      %371 = dma.hbm_to_vmem [thread:$0]  %s67, 16, %s369, [#allocation37]
    $region137: #{transitioner_forward.2} parent=1 // pred_fallthru
      _
    // Predicated region
    $region138: #{transitioner_forward.2} parent=1 // pred_check
      _
    $region139: #{transitioner_forward.2} parent=1 // pred_check_branch
      %373 = sbr.rel (0) target = $region141
    $region140: #{transitioner_forward.2} parent=1 // pred_region
      _
    $region141: #{transitioner_forward.2} parent=1 // pred_fallthru
      _
    // Predicated region
    $region142: #{transitioner_forward.2} parent=1 // pred_check
      _
    $region143: #{transitioner_forward.2} parent=1 // pred_check_branch
      %375 = sbr.rel (0) target = $region145
    $region144: #{transitioner_forward.2} parent=1 // pred_region
      %s377 = ssub.s32 64, 64
      %378 = vsyncadd [#allocation40], %s377
      %s380 = sshll.u32 [#allocation39], 4
      %s381 = int_to_ptr.vmem [resolvable:$true] %s380
      %383 = dma.hbm_to_vmem [thread:$0]  %s71, 64, %s381, [#allocation40]
    $region145: #{transitioner_forward.2} parent=1 // pred_fallthru
      _
    // Predicated region
    $region146: #{transitioner_forward.2} parent=1 // pred_check
      _
    $region147: #{transitioner_forward.2} parent=1 // pred_check_branch
      %385 = sbr.rel (0) target = $region149
    $region148: #{transitioner_forward.2} parent=1 // pred_region
      %s387 = ssub.s32 512, 512
      %388 = vsyncadd [#allocation40], %s387
      %s389 = sshll.u32 [#allocation41], 4
      %s390 = int_to_ptr.vmem [resolvable:$true] %s389
      %395 = dma.hbm_to_vmem [thread:$0]  %s73, 512, %s390, [#allocation40], 128, 128, 8
    $region149: #{transitioner_forward.2} parent=1 // pred_fallthru
      _
    // Predicated region
    $region150: #{transitioner_forward.2} parent=1 // pred_check
      _
    $region151: #{transitioner_forward.2} parent=1 // pred_check_branch
      %397 = sbr.rel (0) target = $region153
    $region152: #{transitioner_forward.2} parent=1 // pred_region
      %398 = dma.done [#allocation4], 32
    $region153: #{transitioner_forward.2} parent=1 // pred_fallthru
      _
    // Predicated region
    $region154: #{transitioner_forward.2} parent=1 // pred_check
      _
    $region155: #{transitioner_forward.2} parent=1 // pred_check_branch
      %400 = sbr.rel (0) target = $region157
    $region156: #{transitioner_forward.2} parent=1 // pred_region
      %401 = dma.done [#allocation7], 32
    $region157: #{transitioner_forward.2} parent=1 // pred_fallthru
      _
    // Predicated region
    $region158: #{transitioner_forward.2} parent=1 // pred_check
      _
    $region159: #{transitioner_forward.2} parent=1 // pred_check_branch
      %403 = sbr.rel (0) target = $region161
    $region160: #{transitioner_forward.2} parent=1 // pred_region
      %404 = dma.done [#allocation7], 3456
    $region161: #{transitioner_forward.2} parent=1 // pred_fallthru
      _
    // Predicated region
    $region162: #{transitioner_forward.2} parent=1 // pred_check
      _
    $region163: #{transitioner_forward.2} parent=1 // pred_check_branch
      %406 = sbr.rel (0) target = $region165
    $region164: #{transitioner_forward.2} parent=1 // pred_region
      %407 = dma.done [#allocation10], 32
    $region165: #{transitioner_forward.2} parent=1 // pred_fallthru
      _
    // Predicated region
    $region166: #{transitioner_forward.2} parent=1 // pred_check
      _
    $region167: #{transitioner_forward.2} parent=1 // pred_check_branch
      %409 = sbr.rel (0) target = $region169
    $region168: #{transitioner_forward.2} parent=1 // pred_region
      %410 = dma.done [#allocation10], 256
    $region169: #{transitioner_forward.2} parent=1 // pred_fallthru
      _
    // Predicated region
    $region170: #{transitioner_forward.2} parent=1 // pred_check
      _
    $region171: #{transitioner_forward.2} parent=1 // pred_check_branch
      %412 = sbr.rel (0) target = $region173
    $region172: #{transitioner_forward.2} parent=1 // pred_region
      %413 = dma.done [#allocation13], 256
    $region173: #{transitioner_forward.2} parent=1 // pred_fallthru
      _
    // Predicated region
    $region174: #{transitioner_forward.2} parent=1 // pred_check
      _
    $region175: #{transitioner_forward.2} parent=1 // pred_check_branch
      %415 = sbr.rel (0) target = $region177
    $region176: #{transitioner_forward.2} parent=1 // pred_region
      %416 = dma.done [#allocation13], 16
    $region177: #{transitioner_forward.2} parent=1 // pred_fallthru
      _
    // Predicated region
    $region178: #{transitioner_forward.2} parent=1 // pred_check
      _
    $region179: #{transitioner_forward.2} parent=1 // pred_check_branch
      %418 = sbr.rel (0) target = $region181
    $region180: #{transitioner_forward.2} parent=1 // pred_region
      %419 = dma.done [#allocation16], 16
    $region181: #{transitioner_forward.2} parent=1 // pred_fallthru
      _
    // Predicated region
    $region182: #{transitioner_forward.2} parent=1 // pred_check
      _
    $region183: #{transitioner_forward.2} parent=1 // pred_check_branch
      %421 = sbr.rel (0) target = $region185
    $region184: #{transitioner_forward.2} parent=1 // pred_region
      %422 = dma.done [#allocation16], 16
    $region185: #{transitioner_forward.2} parent=1 // pred_fallthru
      _
    // Predicated region
    $region186: #{transitioner_forward.2} parent=1 // pred_check
      _
    $region187: #{transitioner_forward.2} parent=1 // pred_check_branch
      %424 = sbr.rel (0) target = $region189
    $region188: #{transitioner_forward.2} parent=1 // pred_region
      %425 = dma.done [#allocation19], 16
    $region189: #{transitioner_forward.2} parent=1 // pred_fallthru
      _
    // Predicated region
    $region190: #{transitioner_forward.2} parent=1 // pred_check
      _
    $region191: #{transitioner_forward.2} parent=1 // pred_check_branch
      %427 = sbr.rel (0) target = $region193
    $region192: #{transitioner_forward.2} parent=1 // pred_region
      %428 = dma.done [#allocation19], 16
    $region193: #{transitioner_forward.2} parent=1 // pred_fallthru
      _
    // Predicated region
    $region194: #{transitioner_forward.2} parent=1 // pred_check
      _
    $region195: #{transitioner_forward.2} parent=1 // pred_check_branch
      %430 = sbr.rel (0) target = $region197
    $region196: #{transitioner_forward.2} parent=1 // pred_region
      %431 = dma.done [#allocation22], 16
    $region197: #{transitioner_forward.2} parent=1 // pred_fallthru
      _
    // Predicated region
    $region198: #{transitioner_forward.2} parent=1 // pred_check
      _
    $region199: #{transitioner_forward.2} parent=1 // pred_check_branch
      %433 = sbr.rel (0) target = $region201
    $region200: #{transitioner_forward.2} parent=1 // pred_region
      %434 = dma.done [#allocation22], 256
    $region201: #{transitioner_forward.2} parent=1 // pred_fallthru
      _
    // Predicated region
    $region202: #{transitioner_forward.2} parent=1 // pred_check
      _
    $region203: #{transitioner_forward.2} parent=1 // pred_check_branch
      %436 = sbr.rel (0) target = $region205
    $region204: #{transitioner_forward.2} parent=1 // pred_region
      %437 = dma.done [#allocation25], 256
    $region205: #{transitioner_forward.2} parent=1 // pred_fallthru
      _
    // Predicated region
    $region206: #{transitioner_forward.2} parent=1 // pred_check
      _
    $region207: #{transitioner_forward.2} parent=1 // pred_check_branch
      %439 = sbr.rel (0) target = $region209
    $region208: #{transitioner_forward.2} parent=1 // pred_region
      %440 = dma.done [#allocation25], 256
    $region209: #{transitioner_forward.2} parent=1 // pred_fallthru
      _
    // Predicated region
    $region210: #{transitioner_forward.2} parent=1 // pred_check
      _
    $region211: #{transitioner_forward.2} parent=1 // pred_check_branch
      %442 = sbr.rel (0) target = $region213
    $region212: #{transitioner_forward.2} parent=1 // pred_region
      %443 = dma.done [#allocation28], 16
    $region213: #{transitioner_forward.2} parent=1 // pred_fallthru
      _
    // Predicated region
    $region214: #{transitioner_forward.2} parent=1 // pred_check
      _
    $region215: #{transitioner_forward.2} parent=1 // pred_check_branch
      %445 = sbr.rel (0) target = $region217
    $region216: #{transitioner_forward.2} parent=1 // pred_region
      %446 = dma.done [#allocation28], 16
    $region217: #{transitioner_forward.2} parent=1 // pred_fallthru
      _
    // Predicated region
    $region218: #{transitioner_forward.2} parent=1 // pred_check
      _
    $region219: #{transitioner_forward.2} parent=1 // pred_check_branch
      %448 = sbr.rel (0) target = $region221
    $region220: #{transitioner_forward.2} parent=1 // pred_region
      %449 = dma.done [#allocation31], 16
    $region221: #{transitioner_forward.2} parent=1 // pred_fallthru
      _
    // Predicated region
    $region222: #{transitioner_forward.2} parent=1 // pred_check
      _
    $region223: #{transitioner_forward.2} parent=1 // pred_check_branch
      %451 = sbr.rel (0) target = $region225
    $region224: #{transitioner_forward.2} parent=1 // pred_region
      %452 = dma.done [#allocation31], 256
    $region225: #{transitioner_forward.2} parent=1 // pred_fallthru
      _
    // Predicated region
    $region226: #{transitioner_forward.2} parent=1 // pred_check
      _
    $region227: #{transitioner_forward.2} parent=1 // pred_check_branch
      %454 = sbr.rel (0) target = $region229
    $region228: #{transitioner_forward.2} parent=1 // pred_region
      %455 = dma.done [#allocation34], 256
    $region229: #{transitioner_forward.2} parent=1 // pred_fallthru
      _
    // Predicated region
    $region230: #{transitioner_forward.2} parent=1 // pred_check
      _
    $region231: #{transitioner_forward.2} parent=1 // pred_check_branch
      %457 = sbr.rel (0) target = $region233
    $region232: #{transitioner_forward.2} parent=1 // pred_region
      %458 = dma.done [#allocation34], 16
    $region233: #{transitioner_forward.2} parent=1 // pred_fallthru
      _
    // Predicated region
    $region234: #{transitioner_forward.2} parent=1 // pred_check
      _
    $region235: #{transitioner_forward.2} parent=1 // pred_check_branch
      %460 = sbr.rel (0) target = $region237
    $region236: #{transitioner_forward.2} parent=1 // pred_region
      %461 = dma.done [#allocation37], 256
    $region237: #{transitioner_forward.2} parent=1 // pred_fallthru
      _
    // Predicated region
    $region238: #{transitioner_forward.2} parent=1 // pred_check
      _
    $region239: #{transitioner_forward.2} parent=1 // pred_check_branch
      %463 = sbr.rel (0) target = $region241
    $region240: #{transitioner_forward.2} parent=1 // pred_region
      %464 = dma.done [#allocation37], 16
    $region241: #{transitioner_forward.2} parent=1 // pred_fallthru
      _
    // Predicated region
    $region242: #{transitioner_forward.2} parent=1 // pred_check
      _
    $region243: #{transitioner_forward.2} parent=1 // pred_check_branch
      %466 = sbr.rel (0) target = $region245
    $region244: #{transitioner_forward.2} parent=1 // pred_region
      %467 = dma.done [#allocation40], 64
    $region245: #{transitioner_forward.2} parent=1 // pred_fallthru
      _
    // Predicated region
    $region246: #{transitioner_forward.2} parent=1 // pred_check
      _
    $region247: #{transitioner_forward.2} parent=1 // pred_check_branch
      %469 = sbr.rel (0) target = $region249
    $region248: #{transitioner_forward.2} parent=1 // pred_region
      %470 = dma.done [#allocation40], 512
    $region249: #{transitioner_forward.2} parent=1 // pred_fallthru
      _
    %v472 = vld [vmem:[#allocation9] sm:$0x3]
    %v473 = vld [vmem:[#allocation11] sm:$0xff]
    %v474 = vld [vmem:[#allocation11 + $0x8] sm:$0xff]
    %v475 = vld [vmem:[#allocation12] sm:$0xff]
    %v476 = vld [vmem:[#allocation12 + $0x8] sm:$0xff]
    %v477 = vld [vmem:[%s21] sm:$0xff]
    %v478 = vld [vmem:[%s21 + $0x8] sm:$0xff]
    %v479 = vld [vmem:[%s21 + $0x10] sm:$0xff]
    %v480 = vld [vmem:[%s21 + $0x18] sm:$0xff]
    %v481 = vld [vmem:[%s21 + $0x20] sm:$0xff]
    %v482 = vld [vmem:[%s21 + $0x28] sm:$0xff]
    %v483 = vld [vmem:[%s21 + $0x30] sm:$0xff]
    %v484 = vld [vmem:[%s21 + $0x38] sm:$0xff]
    %v485 = vld [vmem:[%s21 + $0x40] sm:$0xff]
    %v486 = vld [vmem:[%s21 + $0x48] sm:$0xff]
    %v487 = vld [vmem:[%s21 + $0x50] sm:$0xff]
    %v488 = vld [vmem:[%s21 + $0x58] sm:$0xff]
    %v489 = vld [vmem:[%s21 + $0x60] sm:$0xff]
    %v490 = vld [vmem:[%s21 + $0x68] sm:$0xff]
    %v491 = vld [vmem:[%s21 + $0x70] sm:$0xff]
    %v492 = vld [vmem:[%s21 + $0x78] sm:$0xff]
    %v493 = vld [vmem:[%s21 + $0x80] sm:$0xff]
    %v494 = vld [vmem:[%s21 + $0x88] sm:$0xff]
    %v495 = vld [vmem:[%s21 + $0x90] sm:$0xff]
    %v496 = vld [vmem:[%s21 + $0x98] sm:$0xff]
    %v497 = vld [vmem:[%s21 + $0xa0] sm:$0xff]
    %v498 = vld [vmem:[%s21 + $0xa8] sm:$0xff]
    %v499 = vld [vmem:[%s21 + $0xb0] sm:$0xff]
    %v500 = vld [vmem:[%s21 + $0xb8] sm:$0xff]
    %v501 = vld [vmem:[%s21 + $0xc0] sm:$0xff]
    %v502 = vld [vmem:[%s21 + $0xc8] sm:$0xff]
    %v503 = vld [vmem:[%s21 + $0xd0] sm:$0xff]
    %v504 = vld [vmem:[%s21 + $0xd8] sm:$0xff]
    %v505 = vld [vmem:[%s21 + $0xe0] sm:$0xff]
    %v506 = vld [vmem:[%s21 + $0xe8] sm:$0xff]
    %v507 = vld [vmem:[%s21 + $0xf0] sm:$0xff]
    %v508 = vld [vmem:[%s21 + $0xf8] sm:$0xff]
    %v509 = vld [vmem:[%s21 + $0x100] sm:$0xff]
    %v510 = vld [vmem:[%s21 + $0x108] sm:$0xff]
    %v511 = vld [vmem:[%s21 + $0x110] sm:$0xff]
    %v512 = vld [vmem:[%s21 + $0x118] sm:$0xff]
    %v513 = vld [vmem:[%s21 + $0x120] sm:$0xff]
    %v514 = vld [vmem:[%s21 + $0x128] sm:$0xff]
    %v515 = vld [vmem:[%s21 + $0x130] sm:$0xff]
    %v516 = vld [vmem:[%s21 + $0x138] sm:$0xff]
    %v517 = vld [vmem:[%s21 + $0x140] sm:$0xff]
    %v518 = vld [vmem:[%s21 + $0x148] sm:$0xff]
    %v519 = vld [vmem:[%s21 + $0x150] sm:$0xff]
    %v520 = vld [vmem:[%s21 + $0x158] sm:$0xff]
    %v521 = vld [vmem:[%s21 + $0x160] sm:$0xff]
    %v522 = vld [vmem:[%s21 + $0x168] sm:$0xff]
    %v523 = vld [vmem:[%s21 + $0x170] sm:$0xff]
    %v524 = vld [vmem:[%s21 + $0x178] sm:$0xff]
    %v525 = vld [vmem:[%s21 + $0x180] sm:$0xff]
    %v526 = vld [vmem:[%s21 + $0x188] sm:$0xff]
    %v527 = vld [vmem:[%s21 + $0x190] sm:$0xff]
    %v528 = vld [vmem:[%s21 + $0x198] sm:$0xff]
    %v529 = vld [vmem:[%s21 + $0x1a0] sm:$0xff]
    %v530 = vld [vmem:[%s21 + $0x1a8] sm:$0xff]
    %v531 = vld [vmem:[%s21 + $0x1b0] sm:$0xff]
    %v532 = vld [vmem:[%s21 + $0x1b8] sm:$0xff]
    %v533 = vld [vmem:[%s21 + $0x1c0] sm:$0xff]
    %v534 = vld [vmem:[%s21 + $0x1c8] sm:$0xff]
    %v535 = vld [vmem:[%s21 + $0x1d0] sm:$0xff]
    %v536 = vld [vmem:[%s21 + $0x1d8] sm:$0xff]
    %v537 = vld [vmem:[%s21 + $0x1e0] sm:$0xff]
    %v538 = vld [vmem:[%s21 + $0x1e8] sm:$0xff]
    %v539 = vld [vmem:[%s21 + $0x1f0] sm:$0xff]
    %v540 = vld [vmem:[%s21 + $0x1f8] sm:$0xff]
    %v541 = vld [vmem:[%s23] sm:$0xff]
    %v542 = vld [vmem:[%s23 + $0x8] sm:$0xff]
    %v543 = vld [vmem:[%s23 + $0x10] sm:$0xff]
    %v544 = vld [vmem:[%s23 + $0x18] sm:$0xff]
    %v545 = vld [vmem:[%s23 + $0x20] sm:$0xff]
    %v546 = vld [vmem:[%s23 + $0x28] sm:$0xff]
    %v547 = vld [vmem:[%s23 + $0x30] sm:$0xff]
    %v548 = vld [vmem:[%s23 + $0x38] sm:$0xff]
    %v549 = vld [vmem:[%s23 + $0x40] sm:$0xff]
    %v550 = vld [vmem:[%s23 + $0x48] sm:$0xff]
    %v551 = vld [vmem:[%s23 + $0x50] sm:$0xff]
    %v552 = vld [vmem:[%s23 + $0x58] sm:$0xff]
    %v553 = vld [vmem:[%s23 + $0x60] sm:$0xff]
    %v554 = vld [vmem:[%s23 + $0x68] sm:$0xff]
    %v555 = vld [vmem:[%s23 + $0x70] sm:$0xff]
    %v556 = vld [vmem:[%s23 + $0x78] sm:$0xff]
    %v557 = vld [vmem:[%s23 + $0x80] sm:$0xff]
    %v558 = vld [vmem:[%s23 + $0x88] sm:$0xff]
    %v559 = vld [vmem:[%s23 + $0x90] sm:$0xff]
    %v560 = vld [vmem:[%s23 + $0x98] sm:$0xff]
    %v561 = vld [vmem:[%s23 + $0xa0] sm:$0xff]
    %v562 = vld [vmem:[%s23 + $0xa8] sm:$0xff]
    %v563 = vld [vmem:[%s23 + $0xb0] sm:$0xff]
    %v564 = vld [vmem:[%s23 + $0xb8] sm:$0xff]
    %v565 = vld [vmem:[%s23 + $0xc0] sm:$0xff]
    %v566 = vld [vmem:[%s23 + $0xc8] sm:$0xff]
    %v567 = vld [vmem:[%s23 + $0xd0] sm:$0xff]
    %v568 = vld [vmem:[%s23 + $0xd8] sm:$0xff]
    %v569 = vld [vmem:[%s23 + $0xe0] sm:$0xff]
    %v570 = vld [vmem:[%s23 + $0xe8] sm:$0xff]
    %v571 = vld [vmem:[%s23 + $0xf0] sm:$0xff]
    %v572 = vld [vmem:[%s23 + $0xf8] sm:$0xff]
    %v573 = vld [vmem:[%s23 + $0x100] sm:$0xff]
    %v574 = vld [vmem:[%s23 + $0x108] sm:$0xff]
    %v575 = vld [vmem:[%s23 + $0x110] sm:$0xff]
    %v576 = vld [vmem:[%s23 + $0x118] sm:$0xff]
    %v577 = vld [vmem:[%s23 + $0x120] sm:$0xff]
    %v578 = vld [vmem:[%s23 + $0x128] sm:$0xff]
    %v579 = vld [vmem:[%s23 + $0x130] sm:$0xff]
    %v580 = vld [vmem:[%s23 + $0x138] sm:$0xff]
    %v581 = vld [vmem:[%s23 + $0x140] sm:$0xff]
    %v582 = vld [vmem:[%s23 + $0x148] sm:$0xff]
    %v583 = vld [vmem:[%s23 + $0x150] sm:$0xff]
    %v584 = vld [vmem:[%s23 + $0x158] sm:$0xff]
    %v585 = vld [vmem:[%s23 + $0x160] sm:$0xff]
    %v586 = vld [vmem:[%s23 + $0x168] sm:$0xff]
    %v587 = vld [vmem:[%s23 + $0x170] sm:$0xff]
    %v588 = vld [vmem:[%s23 + $0x178] sm:$0xff]
    %v589 = vld [vmem:[%s23 + $0x180] sm:$0xff]
    %v590 = vld [vmem:[%s23 + $0x188] sm:$0xff]
    %v591 = vld [vmem:[%s23 + $0x190] sm:$0xff]
    %v592 = vld [vmem:[%s23 + $0x198] sm:$0xff]
    %v593 = vld [vmem:[%s23 + $0x1a0] sm:$0xff]
    %v594 = vld [vmem:[%s23 + $0x1a8] sm:$0xff]
    %v595 = vld [vmem:[%s23 + $0x1b0] sm:$0xff]
    %v596 = vld [vmem:[%s23 + $0x1b8] sm:$0xff]
    %v597 = vld [vmem:[%s23 + $0x1c0] sm:$0xff]
    %v598 = vld [vmem:[%s23 + $0x1c8] sm:$0xff]
    %v599 = vld [vmem:[%s23 + $0x1d0] sm:$0xff]
    %v600 = vld [vmem:[%s23 + $0x1d8] sm:$0xff]
    %v601 = vld [vmem:[%s23 + $0x1e0] sm:$0xff]
    %v602 = vld [vmem:[%s23 + $0x1e8] sm:$0xff]
    %v603 = vld [vmem:[%s23 + $0x1f0] sm:$0xff]
    %v604 = vld [vmem:[%s23 + $0x1f8] sm:$0xff]
    %v605 = vld [vmem:[%s1] sm:$0xff]
    %v606 = vld [vmem:[%s1 + $0x8] sm:$0xff]
    %v607 = vld [vmem:[#allocation8] sm:$0xff]
    %v608 = vld [vmem:[#allocation8 + $0x8] sm:$0xff]
    %v609 = vld [vmem:[#allocation8 + $0x10] sm:$0xff]
    %v610 = vld [vmem:[#allocation8 + $0x18] sm:$0xff]
    %v611 = vld [vmem:[#allocation8 + $0x20] sm:$0xff]
    %v612 = vld [vmem:[#allocation8 + $0x28] sm:$0xff]
    %v613 = vld [vmem:[#allocation8 + $0x30] sm:$0xff]
    %v614 = vld [vmem:[#allocation8 + $0x38] sm:$0xff]
    %v615 = vld [vmem:[#allocation8 + $0x40] sm:$0xff]
    %v616 = vpack.c.bf16 %v606, %v605
    %v626 = vunpack.c.l.b16 %v607
    %v627 = vunpack.c.h.b16 %v607
    %v628 = vunpack.c.l.b16 %v608
    %v629 = vunpack.c.h.b16 %v608
    %v630 = vunpack.c.l.b16 %v609
    %v631 = vunpack.c.h.b16 %v609
    %v632 = vunpack.c.l.b16 %v610
    %v633 = vunpack.c.h.b16 %v610
    %v634 = vunpack.c.l.b16 %v611
    %v635 = vunpack.c.h.b16 %v611
    %v636 = vunpack.c.l.b16 %v612
    %v637 = vunpack.c.h.b16 %v612
    %v638 = vunpack.c.l.b16 %v613
    %v639 = vunpack.c.h.b16 %v613
    %v640 = vunpack.c.l.b16 %v614
    %v641 = vunpack.c.h.b16 %v614
    %v642 = vunpack.c.l.b16 %v615
    %v643 = vunpack.c.h.b16 %v615
    %v644 = vpack.c.b16 %v628, %v626
    %v645 = vpack.c.b16 %v629, %v627
    %v646 = vpack.c.b16 %v632, %v630
    %v647 = vpack.c.b16 %v633, %v631
    %v648 = vpack.c.b16 %v636, %v634
    %v649 = vpack.c.b16 %v637, %v635
    %v650 = vpack.c.b16 %v640, %v638
    %v651 = vpack.c.b16 %v641, %v639
    %v652 = vpack.c.b16 %v642, %v642
    %v653 = vpack.c.b16 %v643, %v643
    %vm662 = vcmask 588800
    %v664 = vsel %vm662, %v616, 0
    %vm666 = vcmask 1043456
    %v668 = vsel %vm666, %v652, 0
    %v671 = vsel %vm666, %v653, 0
    %673 = vmatprep.subr.bf16.mxu0 %v645
    %674 = vmatpush1.bf16.msra.mxu0 %v644
    %675 = vmatprep.subr.bf16.mxu0 %v647
    %676 = vmatpush1.bf16.msra.mxu0 %v646
    %677 = vmatprep.subr.bf16.mxu0 %v649
    %678 = vmatpush1.bf16.msra.mxu0 %v648
    %679 = vmatprep.subr.bf16.mxu0 %v651
    %680 = vmatpush1.bf16.msra.mxu0 %v650
    %681 = vmatprep.subr.bf16.mxu0 %v671
    %682 = vmatpush1.bf16.msra.mxu0 %v668
    %683 = vmatprep.subr.bf16.mxu0 0
    %684 = vmatpush1.bf16.msra.mxu0 0
    %685 = vmatprep.subr.bf16.mxu0 0
    %686 = vmatpush1.bf16.msra.mxu0 0
    %687 = vmatprep.subr.bf16.mxu0 0
    %688 = vmatpush1.bf16.msra.mxu0 0
    %689 = vmatprep.subr.bf16.mxu0 0
    %690 = vmatpush1.bf16.msra.mxu0 0
    %691 = vmatprep.subr.bf16.mxu0 0
    %692 = vmatpush1.bf16.msra.mxu0 0
    %693 = vmatprep.subr.bf16.mxu0 0
    %694 = vmatpush1.bf16.msra.mxu0 0
    %695 = vmatprep.subr.bf16.mxu0 0
    %696 = vmatpush1.bf16.msra.mxu0 0
    %697 = vmatprep.subr.bf16.mxu0 0
    %698 = vmatpush1.bf16.msra.mxu0 0
    %699 = vmatprep.subr.bf16.mxu0 0
    %700 = vmatpush1.bf16.msra.mxu0 0
    %701 = vmatprep.subr.bf16.mxu0 0
    %702 = vmatpush1.bf16.msra.mxu0 0
    %703 = vmatprep.subr.bf16.mxu0 0
    %704 = vmatpush1.bf16.msra.mxu0 0
    %705 = vmatprep.mubr.bf16.mxu0 0
    %706 = vmatmul.mubr.bf16.gmra.mrb[0].mxu0 %v664
    %v707 = vpop.f32.mrb[0].mxu0
    %v708 = vadd.f32 0.0, %v707
    %v709 = vpop.f32.mrb[0].mxu0
    %v710 = vadd.f32 0.0, %v709
    %v711 = vpop.f32.mrb[0].mxu0
    %v712 = vadd.f32 0.0, %v711
    %v713 = vpop.f32.mrb[0].mxu0
    %v714 = vadd.f32 0.0, %v713
    %715 = vdwg.mxu0
    %v717 = vlaneseq
    %v718 = vshrl.u32 %v717, 7
    %v719 = vsub.s32 0, %v718
    %v720 = vrot.slane %v472, %v719
    %v721 = vlaneseq
    %v722 = vshrl.u32 %v721, 7
    %v723 = vsub.s32 1, %v722
    %v724 = vrot.slane %v472, %v723
    %v727 = vadd.f32 %v720, %v708
    %v728 = vadd.f32 %v724, %v710
    %v729 = vadd.f32 %v720, %v712
    %v730 = vadd.f32 %v724, %v714
    %v731 = vld [vmem:[%s1 + $0x1] sm:$0xff]
    %v732 = vld [vmem:[%s1 + $0x9] sm:$0xff]
    %s733 = scalar_lea.vmem [#allocation8], 72
    %v734 = vld [vmem:[%s733] sm:$0xff]
    %v735 = vld [vmem:[%s733 + $0x8] sm:$0xff]
    %v736 = vld [vmem:[%s733 + $0x10] sm:$0xff]
    %v737 = vld [vmem:[%s733 + $0x18] sm:$0xff]
    %v738 = vld [vmem:[%s733 + $0x20] sm:$0xff]
    %v739 = vld [vmem:[%s733 + $0x28] sm:$0xff]
    %v740 = vld [vmem:[%s733 + $0x30] sm:$0xff]
    %v741 = vld [vmem:[%s733 + $0x38] sm:$0xff]
    %v742 = vld [vmem:[%s733 + $0x40] sm:$0xff]
    %v743 = vpack.c.bf16 %v732, %v731
    %v753 = vunpack.c.l.b16 %v734
    %v754 = vunpack.c.h.b16 %v734
    %v755 = vunpack.c.l.b16 %v735
    %v756 = vunpack.c.h.b16 %v735
    %v757 = vunpack.c.l.b16 %v736
    %v758 = vunpack.c.h.b16 %v736
    %v759 = vunpack.c.l.b16 %v737
    %v760 = vunpack.c.h.b16 %v737
    %v761 = vunpack.c.l.b16 %v738
    %v762 = vunpack.c.h.b16 %v738
    %v763 = vunpack.c.l.b16 %v739
    %v764 = vunpack.c.h.b16 %v739
    %v765 = vunpack.c.l.b16 %v740
    %v766 = vunpack.c.h.b16 %v740
    %v767 = vunpack.c.l.b16 %v741
    %v768 = vunpack.c.h.b16 %v741
    %v769 = vunpack.c.l.b16 %v742
    %v770 = vunpack.c.h.b16 %v742
    %v771 = vpack.c.b16 %v755, %v753
    %v772 = vpack.c.b16 %v756, %v754
    %v773 = vpack.c.b16 %v759, %v757
    %v774 = vpack.c.b16 %v760, %v758
    %v775 = vpack.c.b16 %v763, %v761
    %v776 = vpack.c.b16 %v764, %v762
    %v777 = vpack.c.b16 %v767, %v765
    %v778 = vpack.c.b16 %v768, %v766
    %v779 = vpack.c.b16 %v769, %v769
    %v780 = vpack.c.b16 %v770, %v770
    %v790 = vsel %vm662, %v743, 0
    %v793 = vsel %vm666, %v779, 0
    %v796 = vsel %vm666, %v780, 0
    %798 = vmatprep.subr.bf16.mxu0 %v772
    %799 = vmatpush1.bf16.msra.mxu0 %v771
    %800 = vmatprep.subr.bf16.mxu0 %v774
    %801 = vmatpush1.bf16.msra.mxu0 %v773
    %802 = vmatprep.subr.bf16.mxu0 %v776
    %803 = vmatpush1.bf16.msra.mxu0 %v775
    %804 = vmatprep.subr.bf16.mxu0 %v778
    %805 = vmatpush1.bf16.msra.mxu0 %v777
    %806 = vmatprep.subr.bf16.mxu0 %v796
    %807 = vmatpush1.bf16.msra.mxu0 %v793
    %808 = vmatprep.subr.bf16.mxu0 0
    %809 = vmatpush1.bf16.msra.mxu0 0
    %810 = vmatprep.subr.bf16.mxu0 0
    %811 = vmatpush1.bf16.msra.mxu0 0
    %812 = vmatprep.subr.bf16.mxu0 0
    %813 = vmatpush1.bf16.msra.mxu0 0
    %814 = vmatprep.subr.bf16.mxu0 0
    %815 = vmatpush1.bf16.msra.mxu0 0
    %816 = vmatprep.subr.bf16.mxu0 0
    %817 = vmatpush1.bf16.msra.mxu0 0
    %818 = vmatprep.subr.bf16.mxu0 0
    %819 = vmatpush1.bf16.msra.mxu0 0
    %820 = vmatprep.subr.bf16.mxu0 0
    %821 = vmatpush1.bf16.msra.mxu0 0
    %822 = vmatprep.subr.bf16.mxu0 0
    %823 = vmatpush1.bf16.msra.mxu0 0
    %824 = vmatprep.subr.bf16.mxu0 0
    %825 = vmatpush1.bf16.msra.mxu0 0
    %826 = vmatprep.subr.bf16.mxu0 0
    %827 = vmatpush1.bf16.msra.mxu0 0
    %828 = vmatprep.subr.bf16.mxu0 0
    %829 = vmatpush1.bf16.msra.mxu0 0
    %830 = vmatprep.mubr.bf16.mxu0 0
    %831 = vmatmul.mubr.bf16.gmra.mrb[0].mxu0 %v790
    %v832 = vpop.f32.mrb[0].mxu0
    %v833 = vadd.f32 0.0, %v832
    %v834 = vpop.f32.mrb[0].mxu0
    %v835 = vadd.f32 0.0, %v834
    %v836 = vpop.f32.mrb[0].mxu0
    %v837 = vadd.f32 0.0, %v836
    %v838 = vpop.f32.mrb[0].mxu0
    %v839 = vadd.f32 0.0, %v838
    %840 = vdwg.mxu0
    %v841 = vadd.f32 %v727, %v833
    %v842 = vadd.f32 %v728, %v835
    %v843 = vadd.f32 %v729, %v837
    %v844 = vadd.f32 %v730, %v839
    %v845 = vld [vmem:[%s1 + $0x2] sm:$0xff]
    %v846 = vld [vmem:[%s1 + $0xa] sm:$0xff]
    %s847 = scalar_lea.vmem [#allocation8], 144
    %v848 = vld [vmem:[%s847] sm:$0xff]
    %v849 = vld [vmem:[%s847 + $0x8] sm:$0xff]
    %v850 = vld [vmem:[%s847 + $0x10] sm:$0xff]
    %v851 = vld [vmem:[%s847 + $0x18] sm:$0xff]
    %v852 = vld [vmem:[%s847 + $0x20] sm:$0xff]
    %v853 = vld [vmem:[%s847 + $0x28] sm:$0xff]
    %v854 = vld [vmem:[%s847 + $0x30] sm:$0xff]
    %v855 = vld [vmem:[%s847 + $0x38] sm:$0xff]
    %v856 = vld [vmem:[%s847 + $0x40] sm:$0xff]
    %v857 = vpack.c.bf16 %v846, %v845
    %v867 = vunpack.c.l.b16 %v848
    %v868 = vunpack.c.h.b16 %v848
    %v869 = vunpack.c.l.b16 %v849
    %v870 = vunpack.c.h.b16 %v849
    %v871 = vunpack.c.l.b16 %v850
    %v872 = vunpack.c.h.b16 %v850
    %v873 = vunpack.c.l.b16 %v851
    %v874 = vunpack.c.h.b16 %v851
    %v875 = vunpack.c.l.b16 %v852
    %v876 = vunpack.c.h.b16 %v852
    %v877 = vunpack.c.l.b16 %v853
    %v878 = vunpack.c.h.b16 %v853
    %v879 = vunpack.c.l.b16 %v854
    %v880 = vunpack.c.h.b16 %v854
    %v881 = vunpack.c.l.b16 %v855
    %v882 = vunpack.c.h.b16 %v855
    %v883 = vunpack.c.l.b16 %v856
    %v884 = vunpack.c.h.b16 %v856
    %v885 = vpack.c.b16 %v869, %v867
    %v886 = vpack.c.b16 %v870, %v868
    %v887 = vpack.c.b16 %v873, %v871
    %v888 = vpack.c.b16 %v874, %v872
    %v889 = vpack.c.b16 %v877, %v875
    %v890 = vpack.c.b16 %v878, %v876
    %v891 = vpack.c.b16 %v881, %v879
    %v892 = vpack.c.b16 %v882, %v880
    %v893 = vpack.c.b16 %v883, %v883
    %v894 = vpack.c.b16 %v884, %v884
    %v904 = vsel %vm662, %v857, 0
    %v907 = vsel %vm666, %v893, 0
    %v910 = vsel %vm666, %v894, 0
    %912 = vmatprep.subr.bf16.mxu0 %v886
    %913 = vmatpush1.bf16.msra.mxu0 %v885
    %914 = vmatprep.subr.bf16.mxu0 %v888
    %915 = vmatpush1.bf16.msra.mxu0 %v887
    %916 = vmatprep.subr.bf16.mxu0 %v890
    %917 = vmatpush1.bf16.msra.mxu0 %v889
    %918 = vmatprep.subr.bf16.mxu0 %v892
    %919 = vmatpush1.bf16.msra.mxu0 %v891
    %920 = vmatprep.subr.bf16.mxu0 %v910
    %921 = vmatpush1.bf16.msra.mxu0 %v907
    %922 = vmatprep.subr.bf16.mxu0 0
    %923 = vmatpush1.bf16.msra.mxu0 0
    %924 = vmatprep.subr.bf16.mxu0 0
    %925 = vmatpush1.bf16.msra.mxu0 0
    %926 = vmatprep.subr.bf16.mxu0 0
    %927 = vmatpush1.bf16.msra.mxu0 0
    %928 = vmatprep.subr.bf16.mxu0 0
    %929 = vmatpush1.bf16.msra.mxu0 0
    %930 = vmatprep.subr.bf16.mxu0 0
    %931 = vmatpush1.bf16.msra.mxu0 0
    %932 = vmatprep.subr.bf16.mxu0 0
    %933 = vmatpush1.bf16.msra.mxu0 0
    %934 = vmatprep.subr.bf16.mxu0 0
    %935 = vmatpush1.bf16.msra.mxu0 0
    %936 = vmatprep.subr.bf16.mxu0 0
    %937 = vmatpush1.bf16.msra.mxu0 0
    %938 = vmatprep.subr.bf16.mxu0 0
    %939 = vmatpush1.bf16.msra.mxu0 0
    %940 = vmatprep.subr.bf16.mxu0 0
    %941 = vmatpush1.bf16.msra.mxu0 0
    %942 = vmatprep.subr.bf16.mxu0 0
    %943 = vmatpush1.bf16.msra.mxu0 0
    %944 = vmatprep.mubr.bf16.mxu0 0
    %945 = vmatmul.mubr.bf16.gmra.mrb[0].mxu0 %v904
    %v946 = vpop.f32.mrb[0].mxu0
    %v947 = vadd.f32 0.0, %v946
    %v948 = vpop.f32.mrb[0].mxu0
    %v949 = vadd.f32 0.0, %v948
    %v950 = vpop.f32.mrb[0].mxu0
    %v951 = vadd.f32 0.0, %v950
    %v952 = vpop.f32.mrb[0].mxu0
    %v953 = vadd.f32 0.0, %v952
    %954 = vdwg.mxu0
    %v955 = vadd.f32 %v841, %v947
    %v956 = vadd.f32 %v842, %v949
    %v957 = vadd.f32 %v843, %v951
    %v958 = vadd.f32 %v844, %v953
    %vm959 = vcmp.gt.f32.partialorder %v955, 0.0
    %vm960 = vcmp.gt.f32.partialorder %v956, 0.0
    %vm961 = vcmp.gt.f32.partialorder %v957, 0.0
    %vm962 = vcmp.gt.f32.partialorder %v958, 0.0
    %v963 = vmul.f32 %v955, 0.01
    %v964 = vmul.f32 %v956, 0.01
    %v965 = vmul.f32 %v957, 0.01
    %v966 = vmul.f32 %v958, 0.01
    %v967 = vsel %vm959, %v955, %v963
    %v968 = vsel %vm960, %v956, %v964
    %v969 = vsel %vm961, %v957, %v965
    %v970 = vsel %vm962, %v958, %v966
    %vm971 = vcmask 130048
    %v973 = vsel %vm971, %v473, 0
    %v976 = vsel %vm971, %v474, 0
    %978 = vmatprep.subr.mxu0 %v968
    %979 = vmatpush1.msra.mxu0 %v967
    %980 = vmatprep.subr.mxu0 %v970
    %981 = vmatpush1.msra.mxu0 %v969
    %982 = vmatprep.subr.mxu0 0.0
    %983 = vmatpush1.msra.mxu0 0.0
    %984 = vmatprep.subr.mxu0 0.0
    %985 = vmatpush1.msra.mxu0 0.0
    %986 = vmatprep.subr.mxu0 0.0
    %987 = vmatpush1.msra.mxu0 0.0
    %988 = vmatprep.subr.mxu0 0.0
    %989 = vmatpush1.msra.mxu0 0.0
    %990 = vmatprep.subr.mxu0 0.0
    %991 = vmatpush1.msra.mxu0 0.0
    %992 = vmatprep.subr.mxu0 0.0
    %993 = vmatpush1.msra.mxu0 0.0
    %994 = vmatprep.subr.mxu0 0.0
    %995 = vmatpush1.msra.mxu0 0.0
    %996 = vmatprep.subr.mxu0 0.0
    %997 = vmatpush1.msra.mxu0 0.0
    %998 = vmatprep.subr.mxu0 0.0
    %999 = vmatpush1.msra.mxu0 0.0
    %1000 = vmatprep.subr.mxu0 0.0
    %1001 = vmatpush1.msra.mxu0 0.0
    %1002 = vmatprep.subr.mxu0 0.0
    %1003 = vmatpush1.msra.mxu0 0.0
    %1004 = vmatprep.subr.mxu0 0.0
    %1005 = vmatpush1.msra.mxu0 0.0
    %1006 = vmatprep.subr.mxu0 0.0
    %1007 = vmatpush1.msra.mxu0 0.0
    %1008 = vmatprep.subr.mxu0 0.0
    %1009 = vmatpush1.msra.mxu0 0.0
    %1010 = vmatprep.subr.mxu0 0.0
    %1011 = vmatpush1.msra.mxu0 0.0
    %1012 = vmatprep.subr.mxu0 0.0
    %1013 = vmatpush1.msra.mxu0 0.0
    %1014 = vmatprep.subr.mxu0 0.0
    %1015 = vmatpush1.msra.mxu0 0.0
    %1016 = vmatprep.subr.mxu0 0.0
    %1017 = vmatpush1.msra.mxu0 0.0
    %1018 = vmatprep.subr.mxu0 0.0
    %1019 = vmatpush1.msra.mxu0 0.0
    %1020 = vmatprep.subr.mxu0 0.0
    %1021 = vmatpush1.msra.mxu0 0.0
    %1022 = vmatprep.subr.mxu0 0.0
    %1023 = vmatpush1.msra.mxu0 0.0
    %1024 = vmatprep.subr.mxu0 0.0
    %1025 = vmatpush1.msra.mxu0 0.0
    %1026 = vmatprep.subr.mxu0 0.0
    %1027 = vmatpush1.msra.mxu0 0.0
    %1028 = vmatprep.subr.mxu0 0.0
    %1029 = vmatpush1.msra.mxu0 0.0
    %1030 = vmatprep.subr.mxu0 0.0
    %1031 = vmatpush1.msra.mxu0 0.0
    %1032 = vmatprep.subr.mxu0 0.0
    %1033 = vmatpush1.msra.mxu0 0.0
    %1034 = vmatprep.subr.mxu0 0.0
    %1035 = vmatpush1.msra.mxu0 0.0
    %1036 = vmatprep.subr.mxu0 0.0
    %1037 = vmatpush1.msra.mxu0 0.0
    %1038 = vmatprep.subr.mxu0 0.0
    %1039 = vmatpush1.msra.mxu0 0.0
    %1040 = vmatprep.subr.mxu0 0.0
    %1041 = vmatpush1.msra.mxu0 0.0
    %1042 = vmatprep.mubr.f32.mxu0 0.0
    %1043 = vmatmul.mubr.f32.gmra.mrb[0].mxu0 %v973
    %v1044 = vpop.f32.mrb[0].mxu0
    %v1045 = vadd.f32 0.0, %v1044
    %v1046 = vpop.f32.mrb[0].mxu0
    %v1047 = vadd.f32 0.0, %v1046
    %1048 = vmatprep.mubr.f32.mxu0 0.0
    %1049 = vmatmul.mubr.f32.gmra.mrb[0].mxu0 %v976
    %v1050 = vpop.f32.mrb[0].mxu0
    %v1051 = vadd.f32 0.0, %v1050
    %v1052 = vpop.f32.mrb[0].mxu0
    %v1053 = vadd.f32 0.0, %v1052
    %1054 = vdwg.mxu0
    %v1056 = vsel %vm971, %v475, 0
    %v1059 = vsel %vm971, %v476, 0
    %1061 = vmatprep.subr.mxu0 %v968
    %1062 = vmatpush1.msra.mxu0 %v967
    %1063 = vmatprep.subr.mxu0 %v970
    %1064 = vmatpush1.msra.mxu0 %v969
    %1065 = vmatprep.subr.mxu0 0.0
    %1066 = vmatpush1.msra.mxu0 0.0
    %1067 = vmatprep.subr.mxu0 0.0
    %1068 = vmatpush1.msra.mxu0 0.0
    %1069 = vmatprep.subr.mxu0 0.0
    %1070 = vmatpush1.msra.mxu0 0.0
    %1071 = vmatprep.subr.mxu0 0.0
    %1072 = vmatpush1.msra.mxu0 0.0
    %1073 = vmatprep.subr.mxu0 0.0
    %1074 = vmatpush1.msra.mxu0 0.0
    %1075 = vmatprep.subr.mxu0 0.0
    %1076 = vmatpush1.msra.mxu0 0.0
    %1077 = vmatprep.subr.mxu0 0.0
    %1078 = vmatpush1.msra.mxu0 0.0
    %1079 = vmatprep.subr.mxu0 0.0
    %1080 = vmatpush1.msra.mxu0 0.0
    %1081 = vmatprep.subr.mxu0 0.0
    %1082 = vmatpush1.msra.mxu0 0.0
    %1083 = vmatprep.subr.mxu0 0.0
    %1084 = vmatpush1.msra.mxu0 0.0
    %1085 = vmatprep.subr.mxu0 0.0
    %1086 = vmatpush1.msra.mxu0 0.0
    %1087 = vmatprep.subr.mxu0 0.0
    %1088 = vmatpush1.msra.mxu0 0.0
    %1089 = vmatprep.subr.mxu0 0.0
    %1090 = vmatpush1.msra.mxu0 0.0
    %1091 = vmatprep.subr.mxu0 0.0
    %1092 = vmatpush1.msra.mxu0 0.0
    %1093 = vmatprep.subr.mxu0 0.0
    %1094 = vmatpush1.msra.mxu0 0.0
    %1095 = vmatprep.subr.mxu0 0.0
    %1096 = vmatpush1.msra.mxu0 0.0
    %1097 = vmatprep.subr.mxu0 0.0
    %1098 = vmatpush1.msra.mxu0 0.0
    %1099 = vmatprep.subr.mxu0 0.0
    %1100 = vmatpush1.msra.mxu0 0.0
    %1101 = vmatprep.subr.mxu0 0.0
    %1102 = vmatpush1.msra.mxu0 0.0
    %1103 = vmatprep.subr.mxu0 0.0
    %1104 = vmatpush1.msra.mxu0 0.0
    %1105 = vmatprep.subr.mxu0 0.0
    %1106 = vmatpush1.msra.mxu0 0.0
    %1107 = vmatprep.subr.mxu0 0.0
    %1108 = vmatpush1.msra.mxu0 0.0
    %1109 = vmatprep.subr.mxu0 0.0
    %1110 = vmatpush1.msra.mxu0 0.0
    %1111 = vmatprep.subr.mxu0 0.0
    %1112 = vmatpush1.msra.mxu0 0.0
    %1113 = vmatprep.subr.mxu0 0.0
    %1114 = vmatpush1.msra.mxu0 0.0
    %1115 = vmatprep.subr.mxu0 0.0
    %1116 = vmatpush1.msra.mxu0 0.0
    %1117 = vmatprep.subr.mxu0 0.0
    %1118 = vmatpush1.msra.mxu0 0.0
    %1119 = vmatprep.subr.mxu0 0.0
    %1120 = vmatpush1.msra.mxu0 0.0
    %1121 = vmatprep.subr.mxu0 0.0
    %1122 = vmatpush1.msra.mxu0 0.0
    %1123 = vmatprep.subr.mxu0 0.0
    %1124 = vmatpush1.msra.mxu0 0.0
    %1125 = vmatprep.mubr.f32.mxu0 0.0
    %1126 = vmatmul.mubr.f32.gmra.mrb[0].mxu0 %v1056
    %v1127 = vpop.f32.mrb[0].mxu0
    %v1128 = vadd.f32 0.0, %v1127
    %v1129 = vpop.f32.mrb[0].mxu0
    %v1130 = vadd.f32 0.0, %v1129
    %1131 = vmatprep.mubr.f32.mxu0 0.0
    %1132 = vmatmul.mubr.f32.gmra.mrb[0].mxu0 %v1059
    %v1133 = vpop.f32.mrb[0].mxu0
    %v1134 = vadd.f32 0.0, %v1133
    %v1135 = vpop.f32.mrb[0].mxu0
    %v1136 = vadd.f32 0.0, %v1135
    %1137 = vdwg.mxu0
    %v1138 = vmax.f32 %v1045, %v1128
    %v1139 = vmax.f32 %v1047, %v1130
    %v1140 = vmax.f32 %v1051, %v1134
    %v1141 = vmax.f32 %v1053, %v1136
    %v1142 = vmax.f32 %v967, %v1138
    %v1143 = vmax.f32 %v968, %v1139
    %v1144 = vmax.f32 %v969, %v1140
    %v1145 = vmax.f32 %v970, %v1141
    %1146 = vmatprep.subr.mxu0 %v478
    %1147 = vmatpush1.msra.mxu0 %v477
    %1148 = vmatprep.subr.mxu0 %v480
    %1149 = vmatpush1.msra.mxu0 %v479
    %1150 = vmatprep.subr.mxu0 %v482
    %1151 = vmatpush1.msra.mxu0 %v481
    %1152 = vmatprep.subr.mxu0 %v484
    %1153 = vmatpush1.msra.mxu0 %v483
    %1154 = vmatprep.subr.mxu0 %v486
    %1155 = vmatpush1.msra.mxu0 %v485
    %1156 = vmatprep.subr.mxu0 %v488
    %1157 = vmatpush1.msra.mxu0 %v487
    %1158 = vmatprep.subr.mxu0 %v490
    %1159 = vmatpush1.msra.mxu0 %v489
    %1160 = vmatprep.subr.mxu0 %v492
    %1161 = vmatpush1.msra.mxu0 %v491
    %1162 = vmatprep.subr.mxu0 %v494
    %1163 = vmatpush1.msra.mxu0 %v493
    %1164 = vmatprep.subr.mxu0 %v496
    %1165 = vmatpush1.msra.mxu0 %v495
    %1166 = vmatprep.subr.mxu0 %v498
    %1167 = vmatpush1.msra.mxu0 %v497
    %1168 = vmatprep.subr.mxu0 %v500
    %1169 = vmatpush1.msra.mxu0 %v499
    %1170 = vmatprep.subr.mxu0 %v502
    %1171 = vmatpush1.msra.mxu0 %v501
    %1172 = vmatprep.subr.mxu0 %v504
    %1173 = vmatpush1.msra.mxu0 %v503
    %1174 = vmatprep.subr.mxu0 %v506
    %1175 = vmatpush1.msra.mxu0 %v505
    %1176 = vmatprep.subr.mxu0 %v508
    %1177 = vmatpush1.msra.mxu0 %v507
    %1178 = vmatprep.subr.mxu0 %v510
    %1179 = vmatpush1.msra.mxu0 %v509
    %1180 = vmatprep.subr.mxu0 %v512
    %1181 = vmatpush1.msra.mxu0 %v511
    %1182 = vmatprep.subr.mxu0 %v514
    %1183 = vmatpush1.msra.mxu0 %v513
    %1184 = vmatprep.subr.mxu0 %v516
    %1185 = vmatpush1.msra.mxu0 %v515
    %1186 = vmatprep.subr.mxu0 %v518
    %1187 = vmatpush1.msra.mxu0 %v517
    %1188 = vmatprep.subr.mxu0 %v520
    %1189 = vmatpush1.msra.mxu0 %v519
    %1190 = vmatprep.subr.mxu0 %v522
    %1191 = vmatpush1.msra.mxu0 %v521
    %1192 = vmatprep.subr.mxu0 %v524
    %1193 = vmatpush1.msra.mxu0 %v523
    %1194 = vmatprep.subr.mxu0 %v526
    %1195 = vmatpush1.msra.mxu0 %v525
    %1196 = vmatprep.subr.mxu0 %v528
    %1197 = vmatpush1.msra.mxu0 %v527
    %1198 = vmatprep.subr.mxu0 %v530
    %1199 = vmatpush1.msra.mxu0 %v529
    %1200 = vmatprep.subr.mxu0 %v532
    %1201 = vmatpush1.msra.mxu0 %v531
    %1202 = vmatprep.subr.mxu0 %v534
    %1203 = vmatpush1.msra.mxu0 %v533
    %1204 = vmatprep.subr.mxu0 %v536
    %1205 = vmatpush1.msra.mxu0 %v535
    %1206 = vmatprep.subr.mxu0 %v538
    %1207 = vmatpush1.msra.mxu0 %v537
    %1208 = vmatprep.subr.mxu0 %v540
    %1209 = vmatpush1.msra.mxu0 %v539
    %1210 = vmatprep.mubr.f32.mxu0 %v1143
    %1211 = vmatmul.mubr.f32.gmra.mrb[0].mxu0 %v1142
    %v1212 = vpop.f32.mrb[0].mxu0
    %v1213 = vadd.f32 0.0, %v1212
    %v1214 = vpop.f32.mrb[0].mxu0
    %v1215 = vadd.f32 0.0, %v1214
    %1216 = vmatprep.mubr.f32.mxu0 %v1145
    %1217 = vmatmul.mubr.f32.gmra.mrb[0].mxu0 %v1144
    %v1218 = vpop.f32.mrb[0].mxu0
    %v1219 = vadd.f32 0.0, %v1218
    %v1220 = vpop.f32.mrb[0].mxu0
    %v1221 = vadd.f32 0.0, %v1220
    %1222 = vdwg.mxu0
    %1223 = vmatprep.subr.mxu0 %v542
    %1224 = vmatpush1.msra.mxu0 %v541
    %1225 = vmatprep.subr.mxu0 %v544
    %1226 = vmatpush1.msra.mxu0 %v543
    %1227 = vmatprep.subr.mxu0 %v546
    %1228 = vmatpush1.msra.mxu0 %v545
    %1229 = vmatprep.subr.mxu0 %v548
    %1230 = vmatpush1.msra.mxu0 %v547
    %1231 = vmatprep.subr.mxu0 %v550
    %1232 = vmatpush1.msra.mxu0 %v549
    %1233 = vmatprep.subr.mxu0 %v552
    %1234 = vmatpush1.msra.mxu0 %v551
    %1235 = vmatprep.subr.mxu0 %v554
    %1236 = vmatpush1.msra.mxu0 %v553
    %1237 = vmatprep.subr.mxu0 %v556
    %1238 = vmatpush1.msra.mxu0 %v555
    %1239 = vmatprep.subr.mxu0 %v558
    %1240 = vmatpush1.msra.mxu0 %v557
    %1241 = vmatprep.subr.mxu0 %v560
    %1242 = vmatpush1.msra.mxu0 %v559
    %1243 = vmatprep.subr.mxu0 %v562
    %1244 = vmatpush1.msra.mxu0 %v561
    %1245 = vmatprep.subr.mxu0 %v564
    %1246 = vmatpush1.msra.mxu0 %v563
    %1247 = vmatprep.subr.mxu0 %v566
    %1248 = vmatpush1.msra.mxu0 %v565
    %1249 = vmatprep.subr.mxu0 %v568
    %1250 = vmatpush1.msra.mxu0 %v567
    %1251 = vmatprep.subr.mxu0 %v570
    %1252 = vmatpush1.msra.mxu0 %v569
    %1253 = vmatprep.subr.mxu0 %v572
    %1254 = vmatpush1.msra.mxu0 %v571
    %1255 = vmatprep.subr.mxu0 %v574
    %1256 = vmatpush1.msra.mxu0 %v573
    %1257 = vmatprep.subr.mxu0 %v576
    %1258 = vmatpush1.msra.mxu0 %v575
    %1259 = vmatprep.subr.mxu0 %v578
    %1260 = vmatpush1.msra.mxu0 %v577
    %1261 = vmatprep.subr.mxu0 %v580
    %1262 = vmatpush1.msra.mxu0 %v579
    %1263 = vmatprep.subr.mxu0 %v582
    %1264 = vmatpush1.msra.mxu0 %v581
    %1265 = vmatprep.subr.mxu0 %v584
    %1266 = vmatpush1.msra.mxu0 %v583
    %1267 = vmatprep.subr.mxu0 %v586
    %1268 = vmatpush1.msra.mxu0 %v585
    %1269 = vmatprep.subr.mxu0 %v588
    %1270 = vmatpush1.msra.mxu0 %v587
    %1271 = vmatprep.subr.mxu0 %v590
    %1272 = vmatpush1.msra.mxu0 %v589
    %1273 = vmatprep.subr.mxu0 %v592
    %1274 = vmatpush1.msra.mxu0 %v591
    %1275 = vmatprep.subr.mxu0 %v594
    %1276 = vmatpush1.msra.mxu0 %v593
    %1277 = vmatprep.subr.mxu0 %v596
    %1278 = vmatpush1.msra.mxu0 %v595
    %1279 = vmatprep.subr.mxu0 %v598
    %1280 = vmatpush1.msra.mxu0 %v597
    %1281 = vmatprep.subr.mxu0 %v600
    %1282 = vmatpush1.msra.mxu0 %v599
    %1283 = vmatprep.subr.mxu0 %v602
    %1284 = vmatpush1.msra.mxu0 %v601
    %1285 = vmatprep.subr.mxu0 %v604
    %1286 = vmatpush1.msra.mxu0 %v603
    %1287 = vmatprep.mubr.f32.mxu0 %v1143
    %1288 = vmatmul.mubr.f32.gmra.mrb[0].mxu0 %v1142
    %v1289 = vpop.f32.mrb[0].mxu0
    %v1290 = vadd.f32 0.0, %v1289
    %v1291 = vpop.f32.mrb[0].mxu0
    %v1292 = vadd.f32 0.0, %v1291
    %1293 = vmatprep.mubr.f32.mxu0 %v1145
    %1294 = vmatmul.mubr.f32.gmra.mrb[0].mxu0 %v1144
    %v1295 = vpop.f32.mrb[0].mxu0
    %v1296 = vadd.f32 0.0, %v1295
    %v1297 = vpop.f32.mrb[0].mxu0
    %v1298 = vadd.f32 0.0, %v1297
    %1299 = vdwg.mxu0
    %v1300 = vmax.f32 %v1213, %v1290
    %v1301 = vmax.f32 %v1215, %v1292
    %v1302 = vmax.f32 %v1219, %v1296
    %v1303 = vmax.f32 %v1221, %v1298
    %v1304 = vmax.f32 %v1142, %v1300
    %v1305 = vmax.f32 %v1143, %v1301
    %v1306 = vmax.f32 %v1144, %v1302
    %v1307 = vmax.f32 %v1145, %v1303
    %v1308 = vld [vmem:[%s27] sm:$0x1]
    %v1309 = vld [vmem:[%s25] sm:$0xf]
    %v1310 = vld [vmem:[%s25 + $0x4] sm:$0xf]
    %v1311 = vld [vmem:[%s25 + $0x8] sm:$0xf]
    %v1312 = vld [vmem:[%s25 + $0xc] sm:$0xf]
    %v1313 = vld [vmem:[%s25 + $0x10] sm:$0xf]
    %v1314 = vld [vmem:[%s25 + $0x14] sm:$0xf]
    %v1315 = vld [vmem:[%s25 + $0x18] sm:$0xf]
    %v1316 = vld [vmem:[%s25 + $0x1c] sm:$0xf]
    %v1317 = vld [vmem:[%s25 + $0x20] sm:$0xf]
    %v1318 = vld [vmem:[%s25 + $0x24] sm:$0xf]
    %v1319 = vld [vmem:[%s25 + $0x28] sm:$0xf]
    %v1320 = vld [vmem:[%s25 + $0x2c] sm:$0xf]
    %v1321 = vld [vmem:[%s25 + $0x30] sm:$0xf]
    %v1322 = vld [vmem:[%s25 + $0x34] sm:$0xf]
    %v1323 = vld [vmem:[%s25 + $0x38] sm:$0xf]
    %v1324 = vld [vmem:[%s25 + $0x3c] sm:$0xf]
    %v1325 = vld [vmem:[%s25 + $0x40] sm:$0xf]
    %v1326 = vld [vmem:[%s25 + $0x44] sm:$0xf]
    %v1327 = vld [vmem:[%s25 + $0x48] sm:$0xf]
    %v1328 = vld [vmem:[%s25 + $0x4c] sm:$0xf]
    %v1329 = vld [vmem:[%s25 + $0x50] sm:$0xf]
    %v1330 = vld [vmem:[%s25 + $0x54] sm:$0xf]
    %v1331 = vld [vmem:[%s25 + $0x58] sm:$0xf]
    %v1332 = vld [vmem:[%s25 + $0x5c] sm:$0xf]
    %v1333 = vld [vmem:[%s25 + $0x60] sm:$0xf]
    %v1334 = vld [vmem:[%s25 + $0x64] sm:$0xf]
    %v1335 = vld [vmem:[%s25 + $0x68] sm:$0xf]
    %v1336 = vld [vmem:[%s25 + $0x6c] sm:$0xf]
    %v1337 = vld [vmem:[%s25 + $0x70] sm:$0xf]
    %v1338 = vld [vmem:[%s25 + $0x74] sm:$0xf]
    %v1339 = vld [vmem:[%s25 + $0x78] sm:$0xf]
    %v1340 = vld [vmem:[%s25 + $0x7c] sm:$0xf]
    %v1341 = vpack.c.bf16 %v1304, %v1304
    %v1342 = vpack.c.bf16 %v1305, %v1305
    %v1375 = vunpack.c.l.b16 %v1309
    %v1376 = vunpack.c.l.b16 %v1310
    %v1377 = vunpack.c.l.b16 %v1311
    %v1378 = vunpack.c.l.b16 %v1312
    %v1379 = vunpack.c.l.b16 %v1313
    %v1380 = vunpack.c.l.b16 %v1314
    %v1381 = vunpack.c.l.b16 %v1315
    %v1382 = vunpack.c.l.b16 %v1316
    %v1383 = vunpack.c.l.b16 %v1317
    %v1384 = vunpack.c.l.b16 %v1318
    %v1385 = vunpack.c.l.b16 %v1319
    %v1386 = vunpack.c.l.b16 %v1320
    %v1387 = vunpack.c.l.b16 %v1321
    %v1388 = vunpack.c.l.b16 %v1322
    %v1389 = vunpack.c.l.b16 %v1323
    %v1390 = vunpack.c.l.b16 %v1324
    %v1391 = vunpack.c.l.b16 %v1325
    %v1392 = vunpack.c.l.b16 %v1326
    %v1393 = vunpack.c.l.b16 %v1327
    %v1394 = vunpack.c.l.b16 %v1328
    %v1395 = vunpack.c.l.b16 %v1329
    %v1396 = vunpack.c.l.b16 %v1330
    %v1397 = vunpack.c.l.b16 %v1331
    %v1398 = vunpack.c.l.b16 %v1332
    %v1399 = vunpack.c.l.b16 %v1333
    %v1400 = vunpack.c.l.b16 %v1334
    %v1401 = vunpack.c.l.b16 %v1335
    %v1402 = vunpack.c.l.b16 %v1336
    %v1403 = vunpack.c.l.b16 %v1337
    %v1404 = vunpack.c.l.b16 %v1338
    %v1405 = vunpack.c.l.b16 %v1339
    %v1406 = vunpack.c.l.b16 %v1340
    %v1407 = vpack.c.b16 %v1376, %v1375
    %v1408 = vpack.c.b16 %v1378, %v1377
    %v1409 = vpack.c.b16 %v1380, %v1379
    %v1410 = vpack.c.b16 %v1382, %v1381
    %v1411 = vpack.c.b16 %v1384, %v1383
    %v1412 = vpack.c.b16 %v1386, %v1385
    %v1413 = vpack.c.b16 %v1388, %v1387
    %v1414 = vpack.c.b16 %v1390, %v1389
    %v1415 = vpack.c.b16 %v1392, %v1391
    %v1416 = vpack.c.b16 %v1394, %v1393
    %v1417 = vpack.c.b16 %v1396, %v1395
    %v1418 = vpack.c.b16 %v1398, %v1397
    %v1419 = vpack.c.b16 %v1400, %v1399
    %v1420 = vpack.c.b16 %v1402, %v1401
    %v1421 = vpack.c.b16 %v1404, %v1403
    %v1422 = vpack.c.b16 %v1406, %v1405
    %1439 = vmatprep.subr.bf16.mxu0 0
    %1440 = vmatpush1.bf16.msra.mxu0 %v1407
    %1441 = vmatprep.subr.bf16.mxu0 0
    %1442 = vmatpush1.bf16.msra.mxu0 %v1408
    %1443 = vmatprep.subr.bf16.mxu0 0
    %1444 = vmatpush1.bf16.msra.mxu0 %v1409
    %1445 = vmatprep.subr.bf16.mxu0 0
    %1446 = vmatpush1.bf16.msra.mxu0 %v1410
    %1447 = vmatprep.subr.bf16.mxu0 0
    %1448 = vmatpush1.bf16.msra.mxu0 %v1411
    %1449 = vmatprep.subr.bf16.mxu0 0
    %1450 = vmatpush1.bf16.msra.mxu0 %v1412
    %1451 = vmatprep.subr.bf16.mxu0 0
    %1452 = vmatpush1.bf16.msra.mxu0 %v1413
    %1453 = vmatprep.subr.bf16.mxu0 0
    %1454 = vmatpush1.bf16.msra.mxu0 %v1414
    %1455 = vmatprep.subr.bf16.mxu0 0
    %1456 = vmatpush1.bf16.msra.mxu0 %v1415
    %1457 = vmatprep.subr.bf16.mxu0 0
    %1458 = vmatpush1.bf16.msra.mxu0 %v1416
    %1459 = vmatprep.subr.bf16.mxu0 0
    %1460 = vmatpush1.bf16.msra.mxu0 %v1417
    %1461 = vmatprep.subr.bf16.mxu0 0
    %1462 = vmatpush1.bf16.msra.mxu0 %v1418
    %1463 = vmatprep.subr.bf16.mxu0 0
    %1464 = vmatpush1.bf16.msra.mxu0 %v1419
    %1465 = vmatprep.subr.bf16.mxu0 0
    %1466 = vmatpush1.bf16.msra.mxu0 %v1420
    %1467 = vmatprep.subr.bf16.mxu0 0
    %1468 = vmatpush1.bf16.msra.mxu0 %v1421
    %1469 = vmatprep.subr.bf16.mxu0 0
    %1470 = vmatpush1.bf16.msra.mxu0 %v1422
    %1471 = vmatprep.mubr.bf16.mxu0 %v1342
    %1472 = vmatmul.mubr.bf16.gmra.mrb[0].mxu0 %v1341
    %v1473 = vpop.f32.mrb[0].mxu0
    %v1474 = vadd.f32 0.0, %v1473
    %v1475 = vpop.f32.mrb[0].mxu0
    %v1476 = vpop.f32.mrb[0].mxu0
    %v1477 = vpop.f32.mrb[0].mxu0
    %1478 = vdwg.mxu0
    %v1479 = vadd.f32 %v1308, %v1474
    %s1480 = scalar_lea.vmem %s25, 128
    %v1481 = vld [vmem:[%s1480] sm:$0xf]
    %v1482 = vld [vmem:[%s1480 + $0x4] sm:$0xf]
    %v1483 = vld [vmem:[%s1480 + $0x8] sm:$0xf]
    %v1484 = vld [vmem:[%s1480 + $0xc] sm:$0xf]
    %v1485 = vld [vmem:[%s1480 + $0x10] sm:$0xf]
    %v1486 = vld [vmem:[%s1480 + $0x14] sm:$0xf]
    %v1487 = vld [vmem:[%s1480 + $0x18] sm:$0xf]
    %v1488 = vld [vmem:[%s1480 + $0x1c] sm:$0xf]
    %v1489 = vld [vmem:[%s1480 + $0x20] sm:$0xf]
    %v1490 = vld [vmem:[%s1480 + $0x24] sm:$0xf]
    %v1491 = vld [vmem:[%s1480 + $0x28] sm:$0xf]
    %v1492 = vld [vmem:[%s1480 + $0x2c] sm:$0xf]
    %v1493 = vld [vmem:[%s1480 + $0x30] sm:$0xf]
    %v1494 = vld [vmem:[%s1480 + $0x34] sm:$0xf]
    %v1495 = vld [vmem:[%s1480 + $0x38] sm:$0xf]
    %v1496 = vld [vmem:[%s1480 + $0x3c] sm:$0xf]
    %v1497 = vld [vmem:[%s1480 + $0x40] sm:$0xf]
    %v1498 = vld [vmem:[%s1480 + $0x44] sm:$0xf]
    %v1499 = vld [vmem:[%s1480 + $0x48] sm:$0xf]
    %v1500 = vld [vmem:[%s1480 + $0x4c] sm:$0xf]
    %v1501 = vld [vmem:[%s1480 + $0x50] sm:$0xf]
    %v1502 = vld [vmem:[%s1480 + $0x54] sm:$0xf]
    %v1503 = vld [vmem:[%s1480 + $0x58] sm:$0xf]
    %v1504 = vld [vmem:[%s1480 + $0x5c] sm:$0xf]
    %v1505 = vld [vmem:[%s1480 + $0x60] sm:$0xf]
    %v1506 = vld [vmem:[%s1480 + $0x64] sm:$0xf]
    %v1507 = vld [vmem:[%s1480 + $0x68] sm:$0xf]
    %v1508 = vld [vmem:[%s1480 + $0x6c] sm:$0xf]
    %v1509 = vld [vmem:[%s1480 + $0x70] sm:$0xf]
    %v1510 = vld [vmem:[%s1480 + $0x74] sm:$0xf]
    %v1511 = vld [vmem:[%s1480 + $0x78] sm:$0xf]
    %v1512 = vld [vmem:[%s1480 + $0x7c] sm:$0xf]
    %v1515 = vrot.slane %v1341, 1
    %v1516 = vrot.slane %v1342, 1
    %v1551 = vunpack.c.l.b16 %v1481
    %v1552 = vunpack.c.l.b16 %v1482
    %v1553 = vunpack.c.l.b16 %v1483
    %v1554 = vunpack.c.l.b16 %v1484
    %v1555 = vunpack.c.l.b16 %v1485
    %v1556 = vunpack.c.l.b16 %v1486
    %v1557 = vunpack.c.l.b16 %v1487
    %v1558 = vunpack.c.l.b16 %v1488
    %v1559 = vunpack.c.l.b16 %v1489
    %v1560 = vunpack.c.l.b16 %v1490
    %v1561 = vunpack.c.l.b16 %v1491
    %v1562 = vunpack.c.l.b16 %v1492
    %v1563 = vunpack.c.l.b16 %v1493
    %v1564 = vunpack.c.l.b16 %v1494
    %v1565 = vunpack.c.l.b16 %v1495
    %v1566 = vunpack.c.l.b16 %v1496
    %v1567 = vunpack.c.l.b16 %v1497
    %v1568 = vunpack.c.l.b16 %v1498
    %v1569 = vunpack.c.l.b16 %v1499
    %v1570 = vunpack.c.l.b16 %v1500
    %v1571 = vunpack.c.l.b16 %v1501
    %v1572 = vunpack.c.l.b16 %v1502
    %v1573 = vunpack.c.l.b16 %v1503
    %v1574 = vunpack.c.l.b16 %v1504
    %v1575 = vunpack.c.l.b16 %v1505
    %v1576 = vunpack.c.l.b16 %v1506
    %v1577 = vunpack.c.l.b16 %v1507
    %v1578 = vunpack.c.l.b16 %v1508
    %v1579 = vunpack.c.l.b16 %v1509
    %v1580 = vunpack.c.l.b16 %v1510
    %v1581 = vunpack.c.l.b16 %v1511
    %v1582 = vunpack.c.l.b16 %v1512
    %v1583 = vpack.c.b16 %v1552, %v1551
    %v1584 = vpack.c.b16 %v1554, %v1553
    %v1585 = vpack.c.b16 %v1556, %v1555
    %v1586 = vpack.c.b16 %v1558, %v1557
    %v1587 = vpack.c.b16 %v1560, %v1559
    %v1588 = vpack.c.b16 %v1562, %v1561
    %v1589 = vpack.c.b16 %v1564, %v1563
    %v1590 = vpack.c.b16 %v1566, %v1565
    %v1591 = vpack.c.b16 %v1568, %v1567
    %v1592 = vpack.c.b16 %v1570, %v1569
    %v1593 = vpack.c.b16 %v1572, %v1571
    %v1594 = vpack.c.b16 %v1574, %v1573
    %v1595 = vpack.c.b16 %v1576, %v1575
    %v1596 = vpack.c.b16 %v1578, %v1577
    %v1597 = vpack.c.b16 %v1580, %v1579
    %v1598 = vpack.c.b16 %v1582, %v1581
    %1615 = vmatprep.subr.bf16.mxu0 0
    %1616 = vmatpush1.bf16.msra.mxu0 %v1583
    %1617 = vmatprep.subr.bf16.mxu0 0
    %1618 = vmatpush1.bf16.msra.mxu0 %v1584
    %1619 = vmatprep.subr.bf16.mxu0 0
    %1620 = vmatpush1.bf16.msra.mxu0 %v1585
    %1621 = vmatprep.subr.bf16.mxu0 0
    %1622 = vmatpush1.bf16.msra.mxu0 %v1586
    %1623 = vmatprep.subr.bf16.mxu0 0
    %1624 = vmatpush1.bf16.msra.mxu0 %v1587
    %1625 = vmatprep.subr.bf16.mxu0 0
    %1626 = vmatpush1.bf16.msra.mxu0 %v1588
    %1627 = vmatprep.subr.bf16.mxu0 0
    %1628 = vmatpush1.bf16.msra.mxu0 %v1589
    %1629 = vmatprep.subr.bf16.mxu0 0
    %1630 = vmatpush1.bf16.msra.mxu0 %v1590
    %1631 = vmatprep.subr.bf16.mxu0 0
    %1632 = vmatpush1.bf16.msra.mxu0 %v1591
    %1633 = vmatprep.subr.bf16.mxu0 0
    %1634 = vmatpush1.bf16.msra.mxu0 %v1592
    %1635 = vmatprep.subr.bf16.mxu0 0
    %1636 = vmatpush1.bf16.msra.mxu0 %v1593
    %1637 = vmatprep.subr.bf16.mxu0 0
    %1638 = vmatpush1.bf16.msra.mxu0 %v1594
    %1639 = vmatprep.subr.bf16.mxu0 0
    %1640 = vmatpush1.bf16.msra.mxu0 %v1595
    %1641 = vmatprep.subr.bf16.mxu0 0
    %1642 = vmatpush1.bf16.msra.mxu0 %v1596
    %1643 = vmatprep.subr.bf16.mxu0 0
    %1644 = vmatpush1.bf16.msra.mxu0 %v1597
    %1645 = vmatprep.subr.bf16.mxu0 0
    %1646 = vmatpush1.bf16.msra.mxu0 %v1598
    %1647 = vmatprep.mubr.bf16.mxu0 %v1516
    %1648 = vmatmul.mubr.bf16.gmra.mrb[0].mxu0 %v1515
    %v1649 = vpop.f32.mrb[0].mxu0
    %v1650 = vadd.f32 0.0, %v1649
    %v1651 = vpop.f32.mrb[0].mxu0
    %v1652 = vpop.f32.mrb[0].mxu0
    %v1653 = vpop.f32.mrb[0].mxu0
    %1654 = vdwg.mxu0
    %v1655 = vadd.f32 %v1479, %v1650
    %s1656 = scalar_lea.vmem %s25, 256
    %v1657 = vld [vmem:[%s1656] sm:$0xf]
    %v1658 = vld [vmem:[%s1656 + $0x4] sm:$0xf]
    %v1659 = vld [vmem:[%s1656 + $0x8] sm:$0xf]
    %v1660 = vld [vmem:[%s1656 + $0xc] sm:$0xf]
    %v1661 = vld [vmem:[%s1656 + $0x10] sm:$0xf]
    %v1662 = vld [vmem:[%s1656 + $0x14] sm:$0xf]
    %v1663 = vld [vmem:[%s1656 + $0x18] sm:$0xf]
    %v1664 = vld [vmem:[%s1656 + $0x1c] sm:$0xf]
    %v1665 = vld [vmem:[%s1656 + $0x20] sm:$0xf]
    %v1666 = vld [vmem:[%s1656 + $0x24] sm:$0xf]
    %v1667 = vld [vmem:[%s1656 + $0x28] sm:$0xf]
    %v1668 = vld [vmem:[%s1656 + $0x2c] sm:$0xf]
    %v1669 = vld [vmem:[%s1656 + $0x30] sm:$0xf]
    %v1670 = vld [vmem:[%s1656 + $0x34] sm:$0xf]
    %v1671 = vld [vmem:[%s1656 + $0x38] sm:$0xf]
    %v1672 = vld [vmem:[%s1656 + $0x3c] sm:$0xf]
    %v1673 = vld [vmem:[%s1656 + $0x40] sm:$0xf]
    %v1674 = vld [vmem:[%s1656 + $0x44] sm:$0xf]
    %v1675 = vld [vmem:[%s1656 + $0x48] sm:$0xf]
    %v1676 = vld [vmem:[%s1656 + $0x4c] sm:$0xf]
    %v1677 = vld [vmem:[%s1656 + $0x50] sm:$0xf]
    %v1678 = vld [vmem:[%s1656 + $0x54] sm:$0xf]
    %v1679 = vld [vmem:[%s1656 + $0x58] sm:$0xf]
    %v1680 = vld [vmem:[%s1656 + $0x5c] sm:$0xf]
    %v1681 = vld [vmem:[%s1656 + $0x60] sm:$0xf]
    %v1682 = vld [vmem:[%s1656 + $0x64] sm:$0xf]
    %v1683 = vld [vmem:[%s1656 + $0x68] sm:$0xf]
    %v1684 = vld [vmem:[%s1656 + $0x6c] sm:$0xf]
    %v1685 = vld [vmem:[%s1656 + $0x70] sm:$0xf]
    %v1686 = vld [vmem:[%s1656 + $0x74] sm:$0xf]
    %v1687 = vld [vmem:[%s1656 + $0x78] sm:$0xf]
    %v1688 = vld [vmem:[%s1656 + $0x7c] sm:$0xf]
    %v1689 = vrot.slane %v1341, 2
    %v1690 = vrot.slane %v1342, 2
    %v1725 = vunpack.c.l.b16 %v1657
    %v1726 = vunpack.c.l.b16 %v1658
    %v1727 = vunpack.c.l.b16 %v1659
    %v1728 = vunpack.c.l.b16 %v1660
    %v1729 = vunpack.c.l.b16 %v1661
    %v1730 = vunpack.c.l.b16 %v1662
    %v1731 = vunpack.c.l.b16 %v1663
    %v1732 = vunpack.c.l.b16 %v1664
    %v1733 = vunpack.c.l.b16 %v1665
    %v1734 = vunpack.c.l.b16 %v1666
    %v1735 = vunpack.c.l.b16 %v1667
    %v1736 = vunpack.c.l.b16 %v1668
    %v1737 = vunpack.c.l.b16 %v1669
    %v1738 = vunpack.c.l.b16 %v1670
    %v1739 = vunpack.c.l.b16 %v1671
    %v1740 = vunpack.c.l.b16 %v1672
    %v1741 = vunpack.c.l.b16 %v1673
    %v1742 = vunpack.c.l.b16 %v1674
    %v1743 = vunpack.c.l.b16 %v1675
    %v1744 = vunpack.c.l.b16 %v1676
    %v1745 = vunpack.c.l.b16 %v1677
    %v1746 = vunpack.c.l.b16 %v1678
    %v1747 = vunpack.c.l.b16 %v1679
    %v1748 = vunpack.c.l.b16 %v1680
    %v1749 = vunpack.c.l.b16 %v1681
    %v1750 = vunpack.c.l.b16 %v1682
    %v1751 = vunpack.c.l.b16 %v1683
    %v1752 = vunpack.c.l.b16 %v1684
    %v1753 = vunpack.c.l.b16 %v1685
    %v1754 = vunpack.c.l.b16 %v1686
    %v1755 = vunpack.c.l.b16 %v1687
    %v1756 = vunpack.c.l.b16 %v1688
    %v1757 = vpack.c.b16 %v1726, %v1725
    %v1758 = vpack.c.b16 %v1728, %v1727
    %v1759 = vpack.c.b16 %v1730, %v1729
    %v1760 = vpack.c.b16 %v1732, %v1731
    %v1761 = vpack.c.b16 %v1734, %v1733
    %v1762 = vpack.c.b16 %v1736, %v1735
    %v1763 = vpack.c.b16 %v1738, %v1737
    %v1764 = vpack.c.b16 %v1740, %v1739
    %v1765 = vpack.c.b16 %v1742, %v1741
    %v1766 = vpack.c.b16 %v1744, %v1743
    %v1767 = vpack.c.b16 %v1746, %v1745
    %v1768 = vpack.c.b16 %v1748, %v1747
    %v1769 = vpack.c.b16 %v1750, %v1749
    %v1770 = vpack.c.b16 %v1752, %v1751
    %v1771 = vpack.c.b16 %v1754, %v1753
    %v1772 = vpack.c.b16 %v1756, %v1755
    %1789 = vmatprep.subr.bf16.mxu0 0
    %1790 = vmatpush1.bf16.msra.mxu0 %v1757
    %1791 = vmatprep.subr.bf16.mxu0 0
    %1792 = vmatpush1.bf16.msra.mxu0 %v1758
    %1793 = vmatprep.subr.bf16.mxu0 0
    %1794 = vmatpush1.bf16.msra.mxu0 %v1759
    %1795 = vmatprep.subr.bf16.mxu0 0
    %1796 = vmatpush1.bf16.msra.mxu0 %v1760
    %1797 = vmatprep.subr.bf16.mxu0 0
    %1798 = vmatpush1.bf16.msra.mxu0 %v1761
    %1799 = vmatprep.subr.bf16.mxu0 0
    %1800 = vmatpush1.bf16.msra.mxu0 %v1762
    %1801 = vmatprep.subr.bf16.mxu0 0
    %1802 = vmatpush1.bf16.msra.mxu0 %v1763
    %1803 = vmatprep.subr.bf16.mxu0 0
    %1804 = vmatpush1.bf16.msra.mxu0 %v1764
    %1805 = vmatprep.subr.bf16.mxu0 0
    %1806 = vmatpush1.bf16.msra.mxu0 %v1765
    %1807 = vmatprep.subr.bf16.mxu0 0
    %1808 = vmatpush1.bf16.msra.mxu0 %v1766
    %1809 = vmatprep.subr.bf16.mxu0 0
    %1810 = vmatpush1.bf16.msra.mxu0 %v1767
    %1811 = vmatprep.subr.bf16.mxu0 0
    %1812 = vmatpush1.bf16.msra.mxu0 %v1768
    %1813 = vmatprep.subr.bf16.mxu0 0
    %1814 = vmatpush1.bf16.msra.mxu0 %v1769
    %1815 = vmatprep.subr.bf16.mxu0 0
    %1816 = vmatpush1.bf16.msra.mxu0 %v1770
    %1817 = vmatprep.subr.bf16.mxu0 0
    %1818 = vmatpush1.bf16.msra.mxu0 %v1771
    %1819 = vmatprep.subr.bf16.mxu0 0
    %1820 = vmatpush1.bf16.msra.mxu0 %v1772
    %1821 = vmatprep.mubr.bf16.mxu0 %v1690
    %1822 = vmatmul.mubr.bf16.gmra.mrb[0].mxu0 %v1689
    %v1823 = vpop.f32.mrb[0].mxu0
    %v1824 = vadd.f32 0.0, %v1823
    %v1825 = vpop.f32.mrb[0].mxu0
    %v1826 = vpop.f32.mrb[0].mxu0
    %v1827 = vpop.f32.mrb[0].mxu0
    %1828 = vdwg.mxu0
    %v1829 = vadd.f32 %v1655, %v1824
    %s1830 = scalar_lea.vmem %s25, 384
    %v1831 = vld [vmem:[%s1830] sm:$0xf]
    %v1832 = vld [vmem:[%s1830 + $0x4] sm:$0xf]
    %v1833 = vld [vmem:[%s1830 + $0x8] sm:$0xf]
    %v1834 = vld [vmem:[%s1830 + $0xc] sm:$0xf]
    %v1835 = vld [vmem:[%s1830 + $0x10] sm:$0xf]
    %v1836 = vld [vmem:[%s1830 + $0x14] sm:$0xf]
    %v1837 = vld [vmem:[%s1830 + $0x18] sm:$0xf]
    %v1838 = vld [vmem:[%s1830 + $0x1c] sm:$0xf]
    %v1839 = vld [vmem:[%s1830 + $0x20] sm:$0xf]
    %v1840 = vld [vmem:[%s1830 + $0x24] sm:$0xf]
    %v1841 = vld [vmem:[%s1830 + $0x28] sm:$0xf]
    %v1842 = vld [vmem:[%s1830 + $0x2c] sm:$0xf]
    %v1843 = vld [vmem:[%s1830 + $0x30] sm:$0xf]
    %v1844 = vld [vmem:[%s1830 + $0x34] sm:$0xf]
    %v1845 = vld [vmem:[%s1830 + $0x38] sm:$0xf]
    %v1846 = vld [vmem:[%s1830 + $0x3c] sm:$0xf]
    %v1847 = vld [vmem:[%s1830 + $0x40] sm:$0xf]
    %v1848 = vld [vmem:[%s1830 + $0x44] sm:$0xf]
    %v1849 = vld [vmem:[%s1830 + $0x48] sm:$0xf]
    %v1850 = vld [vmem:[%s1830 + $0x4c] sm:$0xf]
    %v1851 = vld [vmem:[%s1830 + $0x50] sm:$0xf]
    %v1852 = vld [vmem:[%s1830 + $0x54] sm:$0xf]
    %v1853 = vld [vmem:[%s1830 + $0x58] sm:$0xf]
    %v1854 = vld [vmem:[%s1830 + $0x5c] sm:$0xf]
    %v1855 = vld [vmem:[%s1830 + $0x60] sm:$0xf]
    %v1856 = vld [vmem:[%s1830 + $0x64] sm:$0xf]
    %v1857 = vld [vmem:[%s1830 + $0x68] sm:$0xf]
    %v1858 = vld [vmem:[%s1830 + $0x6c] sm:$0xf]
    %v1859 = vld [vmem:[%s1830 + $0x70] sm:$0xf]
    %v1860 = vld [vmem:[%s1830 + $0x74] sm:$0xf]
    %v1861 = vld [vmem:[%s1830 + $0x78] sm:$0xf]
    %v1862 = vld [vmem:[%s1830 + $0x7c] sm:$0xf]
    %v1863 = vrot.slane %v1341, 3
    %v1864 = vrot.slane %v1342, 3
    %v1899 = vunpack.c.l.b16 %v1831
    %v1900 = vunpack.c.l.b16 %v1832
    %v1901 = vunpack.c.l.b16 %v1833
    %v1902 = vunpack.c.l.b16 %v1834
    %v1903 = vunpack.c.l.b16 %v1835
    %v1904 = vunpack.c.l.b16 %v1836
    %v1905 = vunpack.c.l.b16 %v1837
    %v1906 = vunpack.c.l.b16 %v1838
    %v1907 = vunpack.c.l.b16 %v1839
    %v1908 = vunpack.c.l.b16 %v1840
    %v1909 = vunpack.c.l.b16 %v1841
    %v1910 = vunpack.c.l.b16 %v1842
    %v1911 = vunpack.c.l.b16 %v1843
    %v1912 = vunpack.c.l.b16 %v1844
    %v1913 = vunpack.c.l.b16 %v1845
    %v1914 = vunpack.c.l.b16 %v1846
    %v1915 = vunpack.c.l.b16 %v1847
    %v1916 = vunpack.c.l.b16 %v1848
    %v1917 = vunpack.c.l.b16 %v1849
    %v1918 = vunpack.c.l.b16 %v1850
    %v1919 = vunpack.c.l.b16 %v1851
    %v1920 = vunpack.c.l.b16 %v1852
    %v1921 = vunpack.c.l.b16 %v1853
    %v1922 = vunpack.c.l.b16 %v1854
    %v1923 = vunpack.c.l.b16 %v1855
    %v1924 = vunpack.c.l.b16 %v1856
    %v1925 = vunpack.c.l.b16 %v1857
    %v1926 = vunpack.c.l.b16 %v1858
    %v1927 = vunpack.c.l.b16 %v1859
    %v1928 = vunpack.c.l.b16 %v1860
    %v1929 = vunpack.c.l.b16 %v1861
    %v1930 = vunpack.c.l.b16 %v1862
    %v1931 = vpack.c.b16 %v1900, %v1899
    %v1932 = vpack.c.b16 %v1902, %v1901
    %v1933 = vpack.c.b16 %v1904, %v1903
    %v1934 = vpack.c.b16 %v1906, %v1905
    %v1935 = vpack.c.b16 %v1908, %v1907
    %v1936 = vpack.c.b16 %v1910, %v1909
    %v1937 = vpack.c.b16 %v1912, %v1911
    %v1938 = vpack.c.b16 %v1914, %v1913
    %v1939 = vpack.c.b16 %v1916, %v1915
    %v1940 = vpack.c.b16 %v1918, %v1917
    %v1941 = vpack.c.b16 %v1920, %v1919
    %v1942 = vpack.c.b16 %v1922, %v1921
    %v1943 = vpack.c.b16 %v1924, %v1923
    %v1944 = vpack.c.b16 %v1926, %v1925
    %v1945 = vpack.c.b16 %v1928, %v1927
    %v1946 = vpack.c.b16 %v1930, %v1929
    %1963 = vmatprep.subr.bf16.mxu0 0
    %1964 = vmatpush1.bf16.msra.mxu0 %v1931
    %1965 = vmatprep.subr.bf16.mxu0 0
    %1966 = vmatpush1.bf16.msra.mxu0 %v1932
    %1967 = vmatprep.subr.bf16.mxu0 0
    %1968 = vmatpush1.bf16.msra.mxu0 %v1933
    %1969 = vmatprep.subr.bf16.mxu0 0
    %1970 = vmatpush1.bf16.msra.mxu0 %v1934
    %1971 = vmatprep.subr.bf16.mxu0 0
    %1972 = vmatpush1.bf16.msra.mxu0 %v1935
    %1973 = vmatprep.subr.bf16.mxu0 0
    %1974 = vmatpush1.bf16.msra.mxu0 %v1936
    %1975 = vmatprep.subr.bf16.mxu0 0
    %1976 = vmatpush1.bf16.msra.mxu0 %v1937
    %1977 = vmatprep.subr.bf16.mxu0 0
    %1978 = vmatpush1.bf16.msra.mxu0 %v1938
    %1979 = vmatprep.subr.bf16.mxu0 0
    %1980 = vmatpush1.bf16.msra.mxu0 %v1939
    %1981 = vmatprep.subr.bf16.mxu0 0
    %1982 = vmatpush1.bf16.msra.mxu0 %v1940
    %1983 = vmatprep.subr.bf16.mxu0 0
    %1984 = vmatpush1.bf16.msra.mxu0 %v1941
    %1985 = vmatprep.subr.bf16.mxu0 0
    %1986 = vmatpush1.bf16.msra.mxu0 %v1942
    %1987 = vmatprep.subr.bf16.mxu0 0
    %1988 = vmatpush1.bf16.msra.mxu0 %v1943
    %1989 = vmatprep.subr.bf16.mxu0 0
    %1990 = vmatpush1.bf16.msra.mxu0 %v1944
    %1991 = vmatprep.subr.bf16.mxu0 0
    %1992 = vmatpush1.bf16.msra.mxu0 %v1945
    %1993 = vmatprep.subr.bf16.mxu0 0
    %1994 = vmatpush1.bf16.msra.mxu0 %v1946
    %1995 = vmatprep.mubr.bf16.mxu0 %v1864
    %1996 = vmatmul.mubr.bf16.gmra.mrb[0].mxu0 %v1863
    %v1997 = vpop.f32.mrb[0].mxu0
    %v1998 = vadd.f32 0.0, %v1997
    %v1999 = vpop.f32.mrb[0].mxu0
    %v2000 = vpop.f32.mrb[0].mxu0
    %v2001 = vpop.f32.mrb[0].mxu0
    %2002 = vdwg.mxu0
    %v2003 = vadd.f32 %v1829, %v1998
    %s2004 = scalar_lea.vmem %s25, 512
    %v2005 = vld [vmem:[%s2004] sm:$0xf]
    %v2006 = vld [vmem:[%s2004 + $0x4] sm:$0xf]
    %v2007 = vld [vmem:[%s2004 + $0x8] sm:$0xf]
    %v2008 = vld [vmem:[%s2004 + $0xc] sm:$0xf]
    %v2009 = vld [vmem:[%s2004 + $0x10] sm:$0xf]
    %v2010 = vld [vmem:[%s2004 + $0x14] sm:$0xf]
    %v2011 = vld [vmem:[%s2004 + $0x18] sm:$0xf]
    %v2012 = vld [vmem:[%s2004 + $0x1c] sm:$0xf]
    %v2013 = vld [vmem:[%s2004 + $0x20] sm:$0xf]
    %v2014 = vld [vmem:[%s2004 + $0x24] sm:$0xf]
    %v2015 = vld [vmem:[%s2004 + $0x28] sm:$0xf]
    %v2016 = vld [vmem:[%s2004 + $0x2c] sm:$0xf]
    %v2017 = vld [vmem:[%s2004 + $0x30] sm:$0xf]
    %v2018 = vld [vmem:[%s2004 + $0x34] sm:$0xf]
    %v2019 = vld [vmem:[%s2004 + $0x38] sm:$0xf]
    %v2020 = vld [vmem:[%s2004 + $0x3c] sm:$0xf]
    %v2021 = vld [vmem:[%s2004 + $0x40] sm:$0xf]
    %v2022 = vld [vmem:[%s2004 + $0x44] sm:$0xf]
    %v2023 = vld [vmem:[%s2004 + $0x48] sm:$0xf]
    %v2024 = vld [vmem:[%s2004 + $0x4c] sm:$0xf]
    %v2025 = vld [vmem:[%s2004 + $0x50] sm:$0xf]
    %v2026 = vld [vmem:[%s2004 + $0x54] sm:$0xf]
    %v2027 = vld [vmem:[%s2004 + $0x58] sm:$0xf]
    %v2028 = vld [vmem:[%s2004 + $0x5c] sm:$0xf]
    %v2029 = vld [vmem:[%s2004 + $0x60] sm:$0xf]
    %v2030 = vld [vmem:[%s2004 + $0x64] sm:$0xf]
    %v2031 = vld [vmem:[%s2004 + $0x68] sm:$0xf]
    %v2032 = vld [vmem:[%s2004 + $0x6c] sm:$0xf]
    %v2033 = vld [vmem:[%s2004 + $0x70] sm:$0xf]
    %v2034 = vld [vmem:[%s2004 + $0x74] sm:$0xf]
    %v2035 = vld [vmem:[%s2004 + $0x78] sm:$0xf]
    %v2036 = vld [vmem:[%s2004 + $0x7c] sm:$0xf]
    %v2037 = vpack.c.bf16 %v1306, %v1306
    %v2038 = vpack.c.bf16 %v1307, %v1307
    %v2071 = vunpack.c.l.b16 %v2005
    %v2072 = vunpack.c.l.b16 %v2006
    %v2073 = vunpack.c.l.b16 %v2007
    %v2074 = vunpack.c.l.b16 %v2008
    %v2075 = vunpack.c.l.b16 %v2009
    %v2076 = vunpack.c.l.b16 %v2010
    %v2077 = vunpack.c.l.b16 %v2011
    %v2078 = vunpack.c.l.b16 %v2012
    %v2079 = vunpack.c.l.b16 %v2013
    %v2080 = vunpack.c.l.b16 %v2014
    %v2081 = vunpack.c.l.b16 %v2015
    %v2082 = vunpack.c.l.b16 %v2016
    %v2083 = vunpack.c.l.b16 %v2017
    %v2084 = vunpack.c.l.b16 %v2018
    %v2085 = vunpack.c.l.b16 %v2019
    %v2086 = vunpack.c.l.b16 %v2020
    %v2087 = vunpack.c.l.b16 %v2021
    %v2088 = vunpack.c.l.b16 %v2022
    %v2089 = vunpack.c.l.b16 %v2023
    %v2090 = vunpack.c.l.b16 %v2024
    %v2091 = vunpack.c.l.b16 %v2025
    %v2092 = vunpack.c.l.b16 %v2026
    %v2093 = vunpack.c.l.b16 %v2027
    %v2094 = vunpack.c.l.b16 %v2028
    %v2095 = vunpack.c.l.b16 %v2029
    %v2096 = vunpack.c.l.b16 %v2030
    %v2097 = vunpack.c.l.b16 %v2031
    %v2098 = vunpack.c.l.b16 %v2032
    %v2099 = vunpack.c.l.b16 %v2033
    %v2100 = vunpack.c.l.b16 %v2034
    %v2101 = vunpack.c.l.b16 %v2035
    %v2102 = vunpack.c.l.b16 %v2036
    %v2103 = vpack.c.b16 %v2072, %v2071
    %v2104 = vpack.c.b16 %v2074, %v2073
    %v2105 = vpack.c.b16 %v2076, %v2075
    %v2106 = vpack.c.b16 %v2078, %v2077
    %v2107 = vpack.c.b16 %v2080, %v2079
    %v2108 = vpack.c.b16 %v2082, %v2081
    %v2109 = vpack.c.b16 %v2084, %v2083
    %v2110 = vpack.c.b16 %v2086, %v2085
    %v2111 = vpack.c.b16 %v2088, %v2087
    %v2112 = vpack.c.b16 %v2090, %v2089
    %v2113 = vpack.c.b16 %v2092, %v2091
    %v2114 = vpack.c.b16 %v2094, %v2093
    %v2115 = vpack.c.b16 %v2096, %v2095
    %v2116 = vpack.c.b16 %v2098, %v2097
    %v2117 = vpack.c.b16 %v2100, %v2099
    %v2118 = vpack.c.b16 %v2102, %v2101
    %2135 = vmatprep.subr.bf16.mxu0 0
    %2136 = vmatpush1.bf16.msra.mxu0 %v2103
    %2137 = vmatprep.subr.bf16.mxu0 0
    %2138 = vmatpush1.bf16.msra.mxu0 %v2104
    %2139 = vmatprep.subr.bf16.mxu0 0
    %2140 = vmatpush1.bf16.msra.mxu0 %v2105
    %2141 = vmatprep.subr.bf16.mxu0 0
    %2142 = vmatpush1.bf16.msra.mxu0 %v2106
    %2143 = vmatprep.subr.bf16.mxu0 0
    %2144 = vmatpush1.bf16.msra.mxu0 %v2107
    %2145 = vmatprep.subr.bf16.mxu0 0
    %2146 = vmatpush1.bf16.msra.mxu0 %v2108
    %2147 = vmatprep.subr.bf16.mxu0 0
    %2148 = vmatpush1.bf16.msra.mxu0 %v2109
    %2149 = vmatprep.subr.bf16.mxu0 0
    %2150 = vmatpush1.bf16.msra.mxu0 %v2110
    %2151 = vmatprep.subr.bf16.mxu0 0
    %2152 = vmatpush1.bf16.msra.mxu0 %v2111
    %2153 = vmatprep.subr.bf16.mxu0 0
    %2154 = vmatpush1.bf16.msra.mxu0 %v2112
    %2155 = vmatprep.subr.bf16.mxu0 0
    %2156 = vmatpush1.bf16.msra.mxu0 %v2113
    %2157 = vmatprep.subr.bf16.mxu0 0
    %2158 = vmatpush1.bf16.msra.mxu0 %v2114
    %2159 = vmatprep.subr.bf16.mxu0 0
    %2160 = vmatpush1.bf16.msra.mxu0 %v2115
    %2161 = vmatprep.subr.bf16.mxu0 0
    %2162 = vmatpush1.bf16.msra.mxu0 %v2116
    %2163 = vmatprep.subr.bf16.mxu0 0
    %2164 = vmatpush1.bf16.msra.mxu0 %v2117
    %2165 = vmatprep.subr.bf16.mxu0 0
    %2166 = vmatpush1.bf16.msra.mxu0 %v2118
    %2167 = vmatprep.mubr.bf16.mxu0 %v2038
    %2168 = vmatmul.mubr.bf16.gmra.mrb[0].mxu0 %v2037
    %v2169 = vpop.f32.mrb[0].mxu0
    %v2170 = vadd.f32 0.0, %v2169
    %v2171 = vpop.f32.mrb[0].mxu0
    %v2172 = vpop.f32.mrb[0].mxu0
    %v2173 = vpop.f32.mrb[0].mxu0
    %2174 = vdwg.mxu0
    %v2175 = vadd.f32 %v2003, %v2170
    %s2176 = scalar_lea.vmem %s25, 640
    %v2177 = vld [vmem:[%s2176] sm:$0xf]
    %v2178 = vld [vmem:[%s2176 + $0x4] sm:$0xf]
    %v2179 = vld [vmem:[%s2176 + $0x8] sm:$0xf]
    %v2180 = vld [vmem:[%s2176 + $0xc] sm:$0xf]
    %v2181 = vld [vmem:[%s2176 + $0x10] sm:$0xf]
    %v2182 = vld [vmem:[%s2176 + $0x14] sm:$0xf]
    %v2183 = vld [vmem:[%s2176 + $0x18] sm:$0xf]
    %v2184 = vld [vmem:[%s2176 + $0x1c] sm:$0xf]
    %v2185 = vld [vmem:[%s2176 + $0x20] sm:$0xf]
    %v2186 = vld [vmem:[%s2176 + $0x24] sm:$0xf]
    %v2187 = vld [vmem:[%s2176 + $0x28] sm:$0xf]
    %v2188 = vld [vmem:[%s2176 + $0x2c] sm:$0xf]
    %v2189 = vld [vmem:[%s2176 + $0x30] sm:$0xf]
    %v2190 = vld [vmem:[%s2176 + $0x34] sm:$0xf]
    %v2191 = vld [vmem:[%s2176 + $0x38] sm:$0xf]
    %v2192 = vld [vmem:[%s2176 + $0x3c] sm:$0xf]
    %v2193 = vld [vmem:[%s2176 + $0x40] sm:$0xf]
    %v2194 = vld [vmem:[%s2176 + $0x44] sm:$0xf]
    %v2195 = vld [vmem:[%s2176 + $0x48] sm:$0xf]
    %v2196 = vld [vmem:[%s2176 + $0x4c] sm:$0xf]
    %v2197 = vld [vmem:[%s2176 + $0x50] sm:$0xf]
    %v2198 = vld [vmem:[%s2176 + $0x54] sm:$0xf]
    %v2199 = vld [vmem:[%s2176 + $0x58] sm:$0xf]
    %v2200 = vld [vmem:[%s2176 + $0x5c] sm:$0xf]
    %v2201 = vld [vmem:[%s2176 + $0x60] sm:$0xf]
    %v2202 = vld [vmem:[%s2176 + $0x64] sm:$0xf]
    %v2203 = vld [vmem:[%s2176 + $0x68] sm:$0xf]
    %v2204 = vld [vmem:[%s2176 + $0x6c] sm:$0xf]
    %v2205 = vld [vmem:[%s2176 + $0x70] sm:$0xf]
    %v2206 = vld [vmem:[%s2176 + $0x74] sm:$0xf]
    %v2207 = vld [vmem:[%s2176 + $0x78] sm:$0xf]
    %v2208 = vld [vmem:[%s2176 + $0x7c] sm:$0xf]
    %v2211 = vrot.slane %v2037, 1
    %v2212 = vrot.slane %v2038, 1
    %v2247 = vunpack.c.l.b16 %v2177
    %v2248 = vunpack.c.l.b16 %v2178
    %v2249 = vunpack.c.l.b16 %v2179
    %v2250 = vunpack.c.l.b16 %v2180
    %v2251 = vunpack.c.l.b16 %v2181
    %v2252 = vunpack.c.l.b16 %v2182
    %v2253 = vunpack.c.l.b16 %v2183
    %v2254 = vunpack.c.l.b16 %v2184
    %v2255 = vunpack.c.l.b16 %v2185
    %v2256 = vunpack.c.l.b16 %v2186
    %v2257 = vunpack.c.l.b16 %v2187
    %v2258 = vunpack.c.l.b16 %v2188
    %v2259 = vunpack.c.l.b16 %v2189
    %v2260 = vunpack.c.l.b16 %v2190
    %v2261 = vunpack.c.l.b16 %v2191
    %v2262 = vunpack.c.l.b16 %v2192
    %v2263 = vunpack.c.l.b16 %v2193
    %v2264 = vunpack.c.l.b16 %v2194
    %v2265 = vunpack.c.l.b16 %v2195
    %v2266 = vunpack.c.l.b16 %v2196
    %v2267 = vunpack.c.l.b16 %v2197
    %v2268 = vunpack.c.l.b16 %v2198
    %v2269 = vunpack.c.l.b16 %v2199
    %v2270 = vunpack.c.l.b16 %v2200
    %v2271 = vunpack.c.l.b16 %v2201
    %v2272 = vunpack.c.l.b16 %v2202
    %v2273 = vunpack.c.l.b16 %v2203
    %v2274 = vunpack.c.l.b16 %v2204
    %v2275 = vunpack.c.l.b16 %v2205
    %v2276 = vunpack.c.l.b16 %v2206
    %v2277 = vunpack.c.l.b16 %v2207
    %v2278 = vunpack.c.l.b16 %v2208
    %v2279 = vpack.c.b16 %v2248, %v2247
    %v2280 = vpack.c.b16 %v2250, %v2249
    %v2281 = vpack.c.b16 %v2252, %v2251
    %v2282 = vpack.c.b16 %v2254, %v2253
    %v2283 = vpack.c.b16 %v2256, %v2255
    %v2284 = vpack.c.b16 %v2258, %v2257
    %v2285 = vpack.c.b16 %v2260, %v2259
    %v2286 = vpack.c.b16 %v2262, %v2261
    %v2287 = vpack.c.b16 %v2264, %v2263
    %v2288 = vpack.c.b16 %v2266, %v2265
    %v2289 = vpack.c.b16 %v2268, %v2267
    %v2290 = vpack.c.b16 %v2270, %v2269
    %v2291 = vpack.c.b16 %v2272, %v2271
    %v2292 = vpack.c.b16 %v2274, %v2273
    %v2293 = vpack.c.b16 %v2276, %v2275
    %v2294 = vpack.c.b16 %v2278, %v2277
    %2311 = vmatprep.subr.bf16.mxu0 0
    %2312 = vmatpush1.bf16.msra.mxu0 %v2279
    %2313 = vmatprep.subr.bf16.mxu0 0
    %2314 = vmatpush1.bf16.msra.mxu0 %v2280
    %2315 = vmatprep.subr.bf16.mxu0 0
    %2316 = vmatpush1.bf16.msra.mxu0 %v2281
    %2317 = vmatprep.subr.bf16.mxu0 0
    %2318 = vmatpush1.bf16.msra.mxu0 %v2282
    %2319 = vmatprep.subr.bf16.mxu0 0
    %2320 = vmatpush1.bf16.msra.mxu0 %v2283
    %2321 = vmatprep.subr.bf16.mxu0 0
    %2322 = vmatpush1.bf16.msra.mxu0 %v2284
    %2323 = vmatprep.subr.bf16.mxu0 0
    %2324 = vmatpush1.bf16.msra.mxu0 %v2285
    %2325 = vmatprep.subr.bf16.mxu0 0
    %2326 = vmatpush1.bf16.msra.mxu0 %v2286
    %2327 = vmatprep.subr.bf16.mxu0 0
    %2328 = vmatpush1.bf16.msra.mxu0 %v2287
    %2329 = vmatprep.subr.bf16.mxu0 0
    %2330 = vmatpush1.bf16.msra.mxu0 %v2288
    %2331 = vmatprep.subr.bf16.mxu0 0
    %2332 = vmatpush1.bf16.msra.mxu0 %v2289
    %2333 = vmatprep.subr.bf16.mxu0 0
    %2334 = vmatpush1.bf16.msra.mxu0 %v2290
    %2335 = vmatprep.subr.bf16.mxu0 0
    %2336 = vmatpush1.bf16.msra.mxu0 %v2291
    %2337 = vmatprep.subr.bf16.mxu0 0
    %2338 = vmatpush1.bf16.msra.mxu0 %v2292
    %2339 = vmatprep.subr.bf16.mxu0 0
    %2340 = vmatpush1.bf16.msra.mxu0 %v2293
    %2341 = vmatprep.subr.bf16.mxu0 0
    %2342 = vmatpush1.bf16.msra.mxu0 %v2294
    %2343 = vmatprep.mubr.bf16.mxu0 %v2212
    %2344 = vmatmul.mubr.bf16.gmra.mrb[0].mxu0 %v2211
    %v2345 = vpop.f32.mrb[0].mxu0
    %v2346 = vadd.f32 0.0, %v2345
    %v2347 = vpop.f32.mrb[0].mxu0
    %v2348 = vpop.f32.mrb[0].mxu0
    %v2349 = vpop.f32.mrb[0].mxu0
    %2350 = vdwg.mxu0
    %v2351 = vadd.f32 %v2175, %v2346
    %s2352 = scalar_lea.vmem %s25, 768
    %v2353 = vld [vmem:[%s2352] sm:$0xf]
    %v2354 = vld [vmem:[%s2352 + $0x4] sm:$0xf]
    %v2355 = vld [vmem:[%s2352 + $0x8] sm:$0xf]
    %v2356 = vld [vmem:[%s2352 + $0xc] sm:$0xf]
    %v2357 = vld [vmem:[%s2352 + $0x10] sm:$0xf]
    %v2358 = vld [vmem:[%s2352 + $0x14] sm:$0xf]
    %v2359 = vld [vmem:[%s2352 + $0x18] sm:$0xf]
    %v2360 = vld [vmem:[%s2352 + $0x1c] sm:$0xf]
    %v2361 = vld [vmem:[%s2352 + $0x20] sm:$0xf]
    %v2362 = vld [vmem:[%s2352 + $0x24] sm:$0xf]
    %v2363 = vld [vmem:[%s2352 + $0x28] sm:$0xf]
    %v2364 = vld [vmem:[%s2352 + $0x2c] sm:$0xf]
    %v2365 = vld [vmem:[%s2352 + $0x30] sm:$0xf]
    %v2366 = vld [vmem:[%s2352 + $0x34] sm:$0xf]
    %v2367 = vld [vmem:[%s2352 + $0x38] sm:$0xf]
    %v2368 = vld [vmem:[%s2352 + $0x3c] sm:$0xf]
    %v2369 = vld [vmem:[%s2352 + $0x40] sm:$0xf]
    %v2370 = vld [vmem:[%s2352 + $0x44] sm:$0xf]
    %v2371 = vld [vmem:[%s2352 + $0x48] sm:$0xf]
    %v2372 = vld [vmem:[%s2352 + $0x4c] sm:$0xf]
    %v2373 = vld [vmem:[%s2352 + $0x50] sm:$0xf]
    %v2374 = vld [vmem:[%s2352 + $0x54] sm:$0xf]
    %v2375 = vld [vmem:[%s2352 + $0x58] sm:$0xf]
    %v2376 = vld [vmem:[%s2352 + $0x5c] sm:$0xf]
    %v2377 = vld [vmem:[%s2352 + $0x60] sm:$0xf]
    %v2378 = vld [vmem:[%s2352 + $0x64] sm:$0xf]
    %v2379 = vld [vmem:[%s2352 + $0x68] sm:$0xf]
    %v2380 = vld [vmem:[%s2352 + $0x6c] sm:$0xf]
    %v2381 = vld [vmem:[%s2352 + $0x70] sm:$0xf]
    %v2382 = vld [vmem:[%s2352 + $0x74] sm:$0xf]
    %v2383 = vld [vmem:[%s2352 + $0x78] sm:$0xf]
    %v2384 = vld [vmem:[%s2352 + $0x7c] sm:$0xf]
    %v2385 = vrot.slane %v2037, 2
    %v2386 = vrot.slane %v2038, 2
    %v2421 = vunpack.c.l.b16 %v2353
    %v2422 = vunpack.c.l.b16 %v2354
    %v2423 = vunpack.c.l.b16 %v2355
    %v2424 = vunpack.c.l.b16 %v2356
    %v2425 = vunpack.c.l.b16 %v2357
    %v2426 = vunpack.c.l.b16 %v2358
    %v2427 = vunpack.c.l.b16 %v2359
    %v2428 = vunpack.c.l.b16 %v2360
    %v2429 = vunpack.c.l.b16 %v2361
    %v2430 = vunpack.c.l.b16 %v2362
    %v2431 = vunpack.c.l.b16 %v2363
    %v2432 = vunpack.c.l.b16 %v2364
    %v2433 = vunpack.c.l.b16 %v2365
    %v2434 = vunpack.c.l.b16 %v2366
    %v2435 = vunpack.c.l.b16 %v2367
    %v2436 = vunpack.c.l.b16 %v2368
    %v2437 = vunpack.c.l.b16 %v2369
    %v2438 = vunpack.c.l.b16 %v2370
    %v2439 = vunpack.c.l.b16 %v2371
    %v2440 = vunpack.c.l.b16 %v2372
    %v2441 = vunpack.c.l.b16 %v2373
    %v2442 = vunpack.c.l.b16 %v2374
    %v2443 = vunpack.c.l.b16 %v2375
    %v2444 = vunpack.c.l.b16 %v2376
    %v2445 = vunpack.c.l.b16 %v2377
    %v2446 = vunpack.c.l.b16 %v2378
    %v2447 = vunpack.c.l.b16 %v2379
    %v2448 = vunpack.c.l.b16 %v2380
    %v2449 = vunpack.c.l.b16 %v2381
    %v2450 = vunpack.c.l.b16 %v2382
    %v2451 = vunpack.c.l.b16 %v2383
    %v2452 = vunpack.c.l.b16 %v2384
    %v2453 = vpack.c.b16 %v2422, %v2421
    %v2454 = vpack.c.b16 %v2424, %v2423
    %v2455 = vpack.c.b16 %v2426, %v2425
    %v2456 = vpack.c.b16 %v2428, %v2427
    %v2457 = vpack.c.b16 %v2430, %v2429
    %v2458 = vpack.c.b16 %v2432, %v2431
    %v2459 = vpack.c.b16 %v2434, %v2433
    %v2460 = vpack.c.b16 %v2436, %v2435
    %v2461 = vpack.c.b16 %v2438, %v2437
    %v2462 = vpack.c.b16 %v2440, %v2439
    %v2463 = vpack.c.b16 %v2442, %v2441
    %v2464 = vpack.c.b16 %v2444, %v2443
    %v2465 = vpack.c.b16 %v2446, %v2445
    %v2466 = vpack.c.b16 %v2448, %v2447
    %v2467 = vpack.c.b16 %v2450, %v2449
    %v2468 = vpack.c.b16 %v2452, %v2451
    %2485 = vmatprep.subr.bf16.mxu0 0
    %2486 = vmatpush1.bf16.msra.mxu0 %v2453
    %2487 = vmatprep.subr.bf16.mxu0 0
    %2488 = vmatpush1.bf16.msra.mxu0 %v2454
    %2489 = vmatprep.subr.bf16.mxu0 0
    %2490 = vmatpush1.bf16.msra.mxu0 %v2455
    %2491 = vmatprep.subr.bf16.mxu0 0
    %2492 = vmatpush1.bf16.msra.mxu0 %v2456
    %2493 = vmatprep.subr.bf16.mxu0 0
    %2494 = vmatpush1.bf16.msra.mxu0 %v2457
    %2495 = vmatprep.subr.bf16.mxu0 0
    %2496 = vmatpush1.bf16.msra.mxu0 %v2458
    %2497 = vmatprep.subr.bf16.mxu0 0
    %2498 = vmatpush1.bf16.msra.mxu0 %v2459
    %2499 = vmatprep.subr.bf16.mxu0 0
    %2500 = vmatpush1.bf16.msra.mxu0 %v2460
    %2501 = vmatprep.subr.bf16.mxu0 0
    %2502 = vmatpush1.bf16.msra.mxu0 %v2461
    %2503 = vmatprep.subr.bf16.mxu0 0
    %2504 = vmatpush1.bf16.msra.mxu0 %v2462
    %2505 = vmatprep.subr.bf16.mxu0 0
    %2506 = vmatpush1.bf16.msra.mxu0 %v2463
    %2507 = vmatprep.subr.bf16.mxu0 0
    %2508 = vmatpush1.bf16.msra.mxu0 %v2464
    %2509 = vmatprep.subr.bf16.mxu0 0
    %2510 = vmatpush1.bf16.msra.mxu0 %v2465
    %2511 = vmatprep.subr.bf16.mxu0 0
    %2512 = vmatpush1.bf16.msra.mxu0 %v2466
    %2513 = vmatprep.subr.bf16.mxu0 0
    %2514 = vmatpush1.bf16.msra.mxu0 %v2467
    %2515 = vmatprep.subr.bf16.mxu0 0
    %2516 = vmatpush1.bf16.msra.mxu0 %v2468
    %2517 = vmatprep.mubr.bf16.mxu0 %v2386
    %2518 = vmatmul.mubr.bf16.gmra.mrb[0].mxu0 %v2385
    %v2519 = vpop.f32.mrb[0].mxu0
    %v2520 = vadd.f32 0.0, %v2519
    %v2521 = vpop.f32.mrb[0].mxu0
    %v2522 = vpop.f32.mrb[0].mxu0
    %v2523 = vpop.f32.mrb[0].mxu0
    %2524 = vdwg.mxu0
    %v2525 = vadd.f32 %v2351, %v2520
    %s2526 = scalar_lea.vmem %s25, 896
    %v2527 = vld [vmem:[%s2526] sm:$0xf]
    %v2528 = vld [vmem:[%s2526 + $0x4] sm:$0xf]
    %v2529 = vld [vmem:[%s2526 + $0x8] sm:$0xf]
    %v2530 = vld [vmem:[%s2526 + $0xc] sm:$0xf]
    %v2531 = vld [vmem:[%s2526 + $0x10] sm:$0xf]
    %v2532 = vld [vmem:[%s2526 + $0x14] sm:$0xf]
    %v2533 = vld [vmem:[%s2526 + $0x18] sm:$0xf]
    %v2534 = vld [vmem:[%s2526 + $0x1c] sm:$0xf]
    %v2535 = vld [vmem:[%s2526 + $0x20] sm:$0xf]
    %v2536 = vld [vmem:[%s2526 + $0x24] sm:$0xf]
    %v2537 = vld [vmem:[%s2526 + $0x28] sm:$0xf]
    %v2538 = vld [vmem:[%s2526 + $0x2c] sm:$0xf]
    %v2539 = vld [vmem:[%s2526 + $0x30] sm:$0xf]
    %v2540 = vld [vmem:[%s2526 + $0x34] sm:$0xf]
    %v2541 = vld [vmem:[%s2526 + $0x38] sm:$0xf]
    %v2542 = vld [vmem:[%s2526 + $0x3c] sm:$0xf]
    %v2543 = vld [vmem:[%s2526 + $0x40] sm:$0xf]
    %v2544 = vld [vmem:[%s2526 + $0x44] sm:$0xf]
    %v2545 = vld [vmem:[%s2526 + $0x48] sm:$0xf]
    %v2546 = vld [vmem:[%s2526 + $0x4c] sm:$0xf]
    %v2547 = vld [vmem:[%s2526 + $0x50] sm:$0xf]
    %v2548 = vld [vmem:[%s2526 + $0x54] sm:$0xf]
    %v2549 = vld [vmem:[%s2526 + $0x58] sm:$0xf]
    %v2550 = vld [vmem:[%s2526 + $0x5c] sm:$0xf]
    %v2551 = vld [vmem:[%s2526 + $0x60] sm:$0xf]
    %v2552 = vld [vmem:[%s2526 + $0x64] sm:$0xf]
    %v2553 = vld [vmem:[%s2526 + $0x68] sm:$0xf]
    %v2554 = vld [vmem:[%s2526 + $0x6c] sm:$0xf]
    %v2555 = vld [vmem:[%s2526 + $0x70] sm:$0xf]
    %v2556 = vld [vmem:[%s2526 + $0x74] sm:$0xf]
    %v2557 = vld [vmem:[%s2526 + $0x78] sm:$0xf]
    %v2558 = vld [vmem:[%s2526 + $0x7c] sm:$0xf]
    %v2559 = vrot.slane %v2037, 3
    %v2560 = vrot.slane %v2038, 3
    %v2595 = vunpack.c.l.b16 %v2527
    %v2596 = vunpack.c.l.b16 %v2528
    %v2597 = vunpack.c.l.b16 %v2529
    %v2598 = vunpack.c.l.b16 %v2530
    %v2599 = vunpack.c.l.b16 %v2531
    %v2600 = vunpack.c.l.b16 %v2532
    %v2601 = vunpack.c.l.b16 %v2533
    %v2602 = vunpack.c.l.b16 %v2534
    %v2603 = vunpack.c.l.b16 %v2535
    %v2604 = vunpack.c.l.b16 %v2536
    %v2605 = vunpack.c.l.b16 %v2537
    %v2606 = vunpack.c.l.b16 %v2538
    %v2607 = vunpack.c.l.b16 %v2539
    %v2608 = vunpack.c.l.b16 %v2540
    %v2609 = vunpack.c.l.b16 %v2541
    %v2610 = vunpack.c.l.b16 %v2542
    %v2611 = vunpack.c.l.b16 %v2543
    %v2612 = vunpack.c.l.b16 %v2544
    %v2613 = vunpack.c.l.b16 %v2545
    %v2614 = vunpack.c.l.b16 %v2546
    %v2615 = vunpack.c.l.b16 %v2547
    %v2616 = vunpack.c.l.b16 %v2548
    %v2617 = vunpack.c.l.b16 %v2549
    %v2618 = vunpack.c.l.b16 %v2550
    %v2619 = vunpack.c.l.b16 %v2551
    %v2620 = vunpack.c.l.b16 %v2552
    %v2621 = vunpack.c.l.b16 %v2553
    %v2622 = vunpack.c.l.b16 %v2554
    %v2623 = vunpack.c.l.b16 %v2555
    %v2624 = vunpack.c.l.b16 %v2556
    %v2625 = vunpack.c.l.b16 %v2557
    %v2626 = vunpack.c.l.b16 %v2558
    %v2627 = vpack.c.b16 %v2596, %v2595
    %v2628 = vpack.c.b16 %v2598, %v2597
    %v2629 = vpack.c.b16 %v2600, %v2599
    %v2630 = vpack.c.b16 %v2602, %v2601
    %v2631 = vpack.c.b16 %v2604, %v2603
    %v2632 = vpack.c.b16 %v2606, %v2605
    %v2633 = vpack.c.b16 %v2608, %v2607
    %v2634 = vpack.c.b16 %v2610, %v2609
    %v2635 = vpack.c.b16 %v2612, %v2611
    %v2636 = vpack.c.b16 %v2614, %v2613
    %v2637 = vpack.c.b16 %v2616, %v2615
    %v2638 = vpack.c.b16 %v2618, %v2617
    %v2639 = vpack.c.b16 %v2620, %v2619
    %v2640 = vpack.c.b16 %v2622, %v2621
    %v2641 = vpack.c.b16 %v2624, %v2623
    %v2642 = vpack.c.b16 %v2626, %v2625
    %2659 = vmatprep.subr.bf16.mxu0 0
    %2660 = vmatpush1.bf16.msra.mxu0 %v2627
    %2661 = vmatprep.subr.bf16.mxu0 0
    %2662 = vmatpush1.bf16.msra.mxu0 %v2628
    %2663 = vmatprep.subr.bf16.mxu0 0
    %2664 = vmatpush1.bf16.msra.mxu0 %v2629
    %2665 = vmatprep.subr.bf16.mxu0 0
    %2666 = vmatpush1.bf16.msra.mxu0 %v2630
    %2667 = vmatprep.subr.bf16.mxu0 0
    %2668 = vmatpush1.bf16.msra.mxu0 %v2631
    %2669 = vmatprep.subr.bf16.mxu0 0
    %2670 = vmatpush1.bf16.msra.mxu0 %v2632
    %2671 = vmatprep.subr.bf16.mxu0 0
    %2672 = vmatpush1.bf16.msra.mxu0 %v2633
    %2673 = vmatprep.subr.bf16.mxu0 0
    %2674 = vmatpush1.bf16.msra.mxu0 %v2634
    %2675 = vmatprep.subr.bf16.mxu0 0
    %2676 = vmatpush1.bf16.msra.mxu0 %v2635
    %2677 = vmatprep.subr.bf16.mxu0 0
    %2678 = vmatpush1.bf16.msra.mxu0 %v2636
    %2679 = vmatprep.subr.bf16.mxu0 0
    %2680 = vmatpush1.bf16.msra.mxu0 %v2637
    %2681 = vmatprep.subr.bf16.mxu0 0
    %2682 = vmatpush1.bf16.msra.mxu0 %v2638
    %2683 = vmatprep.subr.bf16.mxu0 0
    %2684 = vmatpush1.bf16.msra.mxu0 %v2639
    %2685 = vmatprep.subr.bf16.mxu0 0
    %2686 = vmatpush1.bf16.msra.mxu0 %v2640
    %2687 = vmatprep.subr.bf16.mxu0 0
    %2688 = vmatpush1.bf16.msra.mxu0 %v2641
    %2689 = vmatprep.subr.bf16.mxu0 0
    %2690 = vmatpush1.bf16.msra.mxu0 %v2642
    %2691 = vmatprep.mubr.bf16.mxu0 %v2560
    %2692 = vmatmul.mubr.bf16.gmra.mrb[0].mxu0 %v2559
    %v2693 = vpop.f32.mrb[0].mxu0
    %v2694 = vadd.f32 0.0, %v2693
    %v2695 = vpop.f32.mrb[0].mxu0
    %v2696 = vpop.f32.mrb[0].mxu0
    %v2697 = vpop.f32.mrb[0].mxu0
    %2698 = vdwg.mxu0
    %v2699 = vadd.f32 %v2525, %v2694
    %vm2700 = vcmp.gt.f32.partialorder %v2699, 0.0
    %v2701 = vmul.f32 %v2699, 0.01
    %v2702 = vsel %vm2700, %v2699, %v2701
    %vm2703 = vcmask 253952
    %2704 = vst.msk [vmem:[#allocation2] sm:$0x1] %vm2703, %v2702
    %s2705 = scalar_lea.vmem %s1, 24
    %v2706 = vld [vmem:[%s2705] sm:$0xff]
    %v2707 = vld [vmem:[%s2705 + $0x8] sm:$0xff]
    %v2708 = vld [vmem:[#allocation8] sm:$0xff]
    %v2709 = vld [vmem:[#allocation8 + $0x8] sm:$0xff]
    %v2710 = vld [vmem:[#allocation8 + $0x10] sm:$0xff]
    %v2711 = vld [vmem:[#allocation8 + $0x18] sm:$0xff]
    %v2712 = vld [vmem:[#allocation8 + $0x20] sm:$0xff]
    %v2713 = vld [vmem:[#allocation8 + $0x28] sm:$0xff]
    %v2714 = vld [vmem:[#allocation8 + $0x30] sm:$0xff]
    %v2715 = vld [vmem:[#allocation8 + $0x38] sm:$0xff]
    %v2716 = vld [vmem:[#allocation8 + $0x40] sm:$0xff]
    %v2717 = vpack.c.bf16 %v2707, %v2706
    %v2727 = vunpack.c.l.b16 %v2708
    %v2728 = vunpack.c.h.b16 %v2708
    %v2729 = vunpack.c.l.b16 %v2709
    %v2730 = vunpack.c.h.b16 %v2709
    %v2731 = vunpack.c.l.b16 %v2710
    %v2732 = vunpack.c.h.b16 %v2710
    %v2733 = vunpack.c.l.b16 %v2711
    %v2734 = vunpack.c.h.b16 %v2711
    %v2735 = vunpack.c.l.b16 %v2712
    %v2736 = vunpack.c.h.b16 %v2712
    %v2737 = vunpack.c.l.b16 %v2713
    %v2738 = vunpack.c.h.b16 %v2713
    %v2739 = vunpack.c.l.b16 %v2714
    %v2740 = vunpack.c.h.b16 %v2714
    %v2741 = vunpack.c.l.b16 %v2715
    %v2742 = vunpack.c.h.b16 %v2715
    %v2743 = vunpack.c.l.b16 %v2716
    %v2744 = vunpack.c.h.b16 %v2716
    %v2745 = vpack.c.b16 %v2729, %v2727
    %v2746 = vpack.c.b16 %v2730, %v2728
    %v2747 = vpack.c.b16 %v2733, %v2731
    %v2748 = vpack.c.b16 %v2734, %v2732
    %v2749 = vpack.c.b16 %v2737, %v2735
    %v2750 = vpack.c.b16 %v2738, %v2736
    %v2751 = vpack.c.b16 %v2741, %v2739
    %v2752 = vpack.c.b16 %v2742, %v2740
    %v2753 = vpack.c.b16 %v2743, %v2743
    %v2754 = vpack.c.b16 %v2744, %v2744
    %v2764 = vsel %vm662, %v2717, 0
    %v2767 = vsel %vm666, %v2753, 0
    %v2770 = vsel %vm666, %v2754, 0
    %2772 = vmatprep.subr.bf16.mxu0 %v2746
    %2773 = vmatpush1.bf16.msra.mxu0 %v2745
    %2774 = vmatprep.subr.bf16.mxu0 %v2748
    %2775 = vmatpush1.bf16.msra.mxu0 %v2747
    %2776 = vmatprep.subr.bf16.mxu0 %v2750
    %2777 = vmatpush1.bf16.msra.mxu0 %v2749
    %2778 = vmatprep.subr.bf16.mxu0 %v2752
    %2779 = vmatpush1.bf16.msra.mxu0 %v2751
    %2780 = vmatprep.subr.bf16.mxu0 %v2770
    %2781 = vmatpush1.bf16.msra.mxu0 %v2767
    %2782 = vmatprep.subr.bf16.mxu0 0
    %2783 = vmatpush1.bf16.msra.mxu0 0
    %2784 = vmatprep.subr.bf16.mxu0 0
    %2785 = vmatpush1.bf16.msra.mxu0 0
    %2786 = vmatprep.subr.bf16.mxu0 0
    %2787 = vmatpush1.bf16.msra.mxu0 0
    %2788 = vmatprep.subr.bf16.mxu0 0
    %2789 = vmatpush1.bf16.msra.mxu0 0
    %2790 = vmatprep.subr.bf16.mxu0 0
    %2791 = vmatpush1.bf16.msra.mxu0 0
    %2792 = vmatprep.subr.bf16.mxu0 0
    %2793 = vmatpush1.bf16.msra.mxu0 0
    %2794 = vmatprep.subr.bf16.mxu0 0
    %2795 = vmatpush1.bf16.msra.mxu0 0
    %2796 = vmatprep.subr.bf16.mxu0 0
    %2797 = vmatpush1.bf16.msra.mxu0 0
    %2798 = vmatprep.subr.bf16.mxu0 0
    %2799 = vmatpush1.bf16.msra.mxu0 0
    %2800 = vmatprep.subr.bf16.mxu0 0
    %2801 = vmatpush1.bf16.msra.mxu0 0
    %2802 = vmatprep.subr.bf16.mxu0 0
    %2803 = vmatpush1.bf16.msra.mxu0 0
    %2804 = vmatprep.mubr.bf16.mxu0 0
    %2805 = vmatmul.mubr.bf16.gmra.mrb[0].mxu0 %v2764
    %v2806 = vpop.f32.mrb[0].mxu0
    %v2807 = vadd.f32 0.0, %v2806
    %v2808 = vpop.f32.mrb[0].mxu0
    %v2809 = vadd.f32 0.0, %v2808
    %v2810 = vpop.f32.mrb[0].mxu0
    %v2811 = vadd.f32 0.0, %v2810
    %v2812 = vpop.f32.mrb[0].mxu0
    %v2813 = vadd.f32 0.0, %v2812
    %2814 = vdwg.mxu0
    %v2815 = vadd.f32 %v720, %v2807
    %v2816 = vadd.f32 %v724, %v2809
    %v2817 = vadd.f32 %v720, %v2811
    %v2818 = vadd.f32 %v724, %v2813
    %v2819 = vld [vmem:[%s2705 + $0x1] sm:$0xff]
    %v2820 = vld [vmem:[%s2705 + $0x9] sm:$0xff]
    %v2821 = vld [vmem:[%s733] sm:$0xff]
    %v2822 = vld [vmem:[%s733 + $0x8] sm:$0xff]
    %v2823 = vld [vmem:[%s733 + $0x10] sm:$0xff]
    %v2824 = vld [vmem:[%s733 + $0x18] sm:$0xff]
    %v2825 = vld [vmem:[%s733 + $0x20] sm:$0xff]
    %v2826 = vld [vmem:[%s733 + $0x28] sm:$0xff]
    %v2827 = vld [vmem:[%s733 + $0x30] sm:$0xff]
    %v2828 = vld [vmem:[%s733 + $0x38] sm:$0xff]
    %v2829 = vld [vmem:[%s733 + $0x40] sm:$0xff]
    %v2830 = vpack.c.bf16 %v2820, %v2819
    %v2840 = vunpack.c.l.b16 %v2821
    %v2841 = vunpack.c.h.b16 %v2821
    %v2842 = vunpack.c.l.b16 %v2822
    %v2843 = vunpack.c.h.b16 %v2822
    %v2844 = vunpack.c.l.b16 %v2823
    %v2845 = vunpack.c.h.b16 %v2823
    %v2846 = vunpack.c.l.b16 %v2824
    %v2847 = vunpack.c.h.b16 %v2824
    %v2848 = vunpack.c.l.b16 %v2825
    %v2849 = vunpack.c.h.b16 %v2825
    %v2850 = vunpack.c.l.b16 %v2826
    %v2851 = vunpack.c.h.b16 %v2826
    %v2852 = vunpack.c.l.b16 %v2827
    %v2853 = vunpack.c.h.b16 %v2827
    %v2854 = vunpack.c.l.b16 %v2828
    %v2855 = vunpack.c.h.b16 %v2828
    %v2856 = vunpack.c.l.b16 %v2829
    %v2857 = vunpack.c.h.b16 %v2829
    %v2858 = vpack.c.b16 %v2842, %v2840
    %v2859 = vpack.c.b16 %v2843, %v2841
    %v2860 = vpack.c.b16 %v2846, %v2844
    %v2861 = vpack.c.b16 %v2847, %v2845
    %v2862 = vpack.c.b16 %v2850, %v2848
    %v2863 = vpack.c.b16 %v2851, %v2849
    %v2864 = vpack.c.b16 %v2854, %v2852
    %v2865 = vpack.c.b16 %v2855, %v2853
    %v2866 = vpack.c.b16 %v2856, %v2856
    %v2867 = vpack.c.b16 %v2857, %v2857
    %v2877 = vsel %vm662, %v2830, 0
    %v2880 = vsel %vm666, %v2866, 0
    %v2883 = vsel %vm666, %v2867, 0
    %2885 = vmatprep.subr.bf16.mxu0 %v2859
    %2886 = vmatpush1.bf16.msra.mxu0 %v2858
    %2887 = vmatprep.subr.bf16.mxu0 %v2861
    %2888 = vmatpush1.bf16.msra.mxu0 %v2860
    %2889 = vmatprep.subr.bf16.mxu0 %v2863
    %2890 = vmatpush1.bf16.msra.mxu0 %v2862
    %2891 = vmatprep.subr.bf16.mxu0 %v2865
    %2892 = vmatpush1.bf16.msra.mxu0 %v2864
    %2893 = vmatprep.subr.bf16.mxu0 %v2883
    %2894 = vmatpush1.bf16.msra.mxu0 %v2880
    %2895 = vmatprep.subr.bf16.mxu0 0
    %2896 = vmatpush1.bf16.msra.mxu0 0
    %2897 = vmatprep.subr.bf16.mxu0 0
    %2898 = vmatpush1.bf16.msra.mxu0 0
    %2899 = vmatprep.subr.bf16.mxu0 0
    %2900 = vmatpush1.bf16.msra.mxu0 0
    %2901 = vmatprep.subr.bf16.mxu0 0
    %2902 = vmatpush1.bf16.msra.mxu0 0
    %2903 = vmatprep.subr.bf16.mxu0 0
    %2904 = vmatpush1.bf16.msra.mxu0 0
    %2905 = vmatprep.subr.bf16.mxu0 0
    %2906 = vmatpush1.bf16.msra.mxu0 0
    %2907 = vmatprep.subr.bf16.mxu0 0
    %2908 = vmatpush1.bf16.msra.mxu0 0
    %2909 = vmatprep.subr.bf16.mxu0 0
    %2910 = vmatpush1.bf16.msra.mxu0 0
    %2911 = vmatprep.subr.bf16.mxu0 0
    %2912 = vmatpush1.bf16.msra.mxu0 0
    %2913 = vmatprep.subr.bf16.mxu0 0
    %2914 = vmatpush1.bf16.msra.mxu0 0
    %2915 = vmatprep.subr.bf16.mxu0 0
    %2916 = vmatpush1.bf16.msra.mxu0 0
    %2917 = vmatprep.mubr.bf16.mxu0 0
    %2918 = vmatmul.mubr.bf16.gmra.mrb[0].mxu0 %v2877
    %v2919 = vpop.f32.mrb[0].mxu0
    %v2920 = vadd.f32 0.0, %v2919
    %v2921 = vpop.f32.mrb[0].mxu0
    %v2922 = vadd.f32 0.0, %v2921
    %v2923 = vpop.f32.mrb[0].mxu0
    %v2924 = vadd.f32 0.0, %v2923
    %v2925 = vpop.f32.mrb[0].mxu0
    %v2926 = vadd.f32 0.0, %v2925
    %2927 = vdwg.mxu0
    %v2928 = vadd.f32 %v2815, %v2920
    %v2929 = vadd.f32 %v2816, %v2922
    %v2930 = vadd.f32 %v2817, %v2924
    %v2931 = vadd.f32 %v2818, %v2926
    %v2932 = vld [vmem:[%s2705 + $0x2] sm:$0xff]
    %v2933 = vld [vmem:[%s2705 + $0xa] sm:$0xff]
    %v2934 = vld [vmem:[%s847] sm:$0xff]
    %v2935 = vld [vmem:[%s847 + $0x8] sm:$0xff]
    %v2936 = vld [vmem:[%s847 + $0x10] sm:$0xff]
    %v2937 = vld [vmem:[%s847 + $0x18] sm:$0xff]
    %v2938 = vld [vmem:[%s847 + $0x20] sm:$0xff]
    %v2939 = vld [vmem:[%s847 + $0x28] sm:$0xff]
    %v2940 = vld [vmem:[%s847 + $0x30] sm:$0xff]
    %v2941 = vld [vmem:[%s847 + $0x38] sm:$0xff]
    %v2942 = vld [vmem:[%s847 + $0x40] sm:$0xff]
    %v2943 = vpack.c.bf16 %v2933, %v2932
    %v2953 = vunpack.c.l.b16 %v2934
    %v2954 = vunpack.c.h.b16 %v2934
    %v2955 = vunpack.c.l.b16 %v2935
    %v2956 = vunpack.c.h.b16 %v2935
    %v2957 = vunpack.c.l.b16 %v2936
    %v2958 = vunpack.c.h.b16 %v2936
    %v2959 = vunpack.c.l.b16 %v2937
    %v2960 = vunpack.c.h.b16 %v2937
    %v2961 = vunpack.c.l.b16 %v2938
    %v2962 = vunpack.c.h.b16 %v2938
    %v2963 = vunpack.c.l.b16 %v2939
    %v2964 = vunpack.c.h.b16 %v2939
    %v2965 = vunpack.c.l.b16 %v2940
    %v2966 = vunpack.c.h.b16 %v2940
    %v2967 = vunpack.c.l.b16 %v2941
    %v2968 = vunpack.c.h.b16 %v2941
    %v2969 = vunpack.c.l.b16 %v2942
    %v2970 = vunpack.c.h.b16 %v2942
    %v2971 = vpack.c.b16 %v2955, %v2953
    %v2972 = vpack.c.b16 %v2956, %v2954
    %v2973 = vpack.c.b16 %v2959, %v2957
    %v2974 = vpack.c.b16 %v2960, %v2958
    %v2975 = vpack.c.b16 %v2963, %v2961
    %v2976 = vpack.c.b16 %v2964, %v2962
    %v2977 = vpack.c.b16 %v2967, %v2965
    %v2978 = vpack.c.b16 %v2968, %v2966
    %v2979 = vpack.c.b16 %v2969, %v2969
    %v2980 = vpack.c.b16 %v2970, %v2970
    %v2990 = vsel %vm662, %v2943, 0
    %v2993 = vsel %vm666, %v2979, 0
    %v2996 = vsel %vm666, %v2980, 0
    %2998 = vmatprep.subr.bf16.mxu0 %v2972
    %2999 = vmatpush1.bf16.msra.mxu0 %v2971
    %3000 = vmatprep.subr.bf16.mxu0 %v2974
    %3001 = vmatpush1.bf16.msra.mxu0 %v2973
    %3002 = vmatprep.subr.bf16.mxu0 %v2976
    %3003 = vmatpush1.bf16.msra.mxu0 %v2975
    %3004 = vmatprep.subr.bf16.mxu0 %v2978
    %3005 = vmatpush1.bf16.msra.mxu0 %v2977
    %3006 = vmatprep.subr.bf16.mxu0 %v2996
    %3007 = vmatpush1.bf16.msra.mxu0 %v2993
    %3008 = vmatprep.subr.bf16.mxu0 0
    %3009 = vmatpush1.bf16.msra.mxu0 0
    %3010 = vmatprep.subr.bf16.mxu0 0
    %3011 = vmatpush1.bf16.msra.mxu0 0
    %3012 = vmatprep.subr.bf16.mxu0 0
    %3013 = vmatpush1.bf16.msra.mxu0 0
    %3014 = vmatprep.subr.bf16.mxu0 0
    %3015 = vmatpush1.bf16.msra.mxu0 0
    %3016 = vmatprep.subr.bf16.mxu0 0
    %3017 = vmatpush1.bf16.msra.mxu0 0
    %3018 = vmatprep.subr.bf16.mxu0 0
    %3019 = vmatpush1.bf16.msra.mxu0 0
    %3020 = vmatprep.subr.bf16.mxu0 0
    %3021 = vmatpush1.bf16.msra.mxu0 0
    %3022 = vmatprep.subr.bf16.mxu0 0
    %3023 = vmatpush1.bf16.msra.mxu0 0
    %3024 = vmatprep.subr.bf16.mxu0 0
    %3025 = vmatpush1.bf16.msra.mxu0 0
    %3026 = vmatprep.subr.bf16.mxu0 0
    %3027 = vmatpush1.bf16.msra.mxu0 0
    %3028 = vmatprep.subr.bf16.mxu0 0
    %3029 = vmatpush1.bf16.msra.mxu0 0
    %3030 = vmatprep.mubr.bf16.mxu0 0
    %3031 = vmatmul.mubr.bf16.gmra.mrb[0].mxu0 %v2990
    %v3032 = vpop.f32.mrb[0].mxu0
    %v3033 = vadd.f32 0.0, %v3032
    %v3034 = vpop.f32.mrb[0].mxu0
    %v3035 = vadd.f32 0.0, %v3034
    %v3036 = vpop.f32.mrb[0].mxu0
    %v3037 = vadd.f32 0.0, %v3036
    %v3038 = vpop.f32.mrb[0].mxu0
    %v3039 = vadd.f32 0.0, %v3038
    %3040 = vdwg.mxu0
    %v3041 = vadd.f32 %v2928, %v3033
    %v3042 = vadd.f32 %v2929, %v3035
    %v3043 = vadd.f32 %v2930, %v3037
    %v3044 = vadd.f32 %v2931, %v3039
    %vm3045 = vcmp.gt.f32.partialorder %v3041, 0.0
    %vm3046 = vcmp.gt.f32.partialorder %v3042, 0.0
    %vm3047 = vcmp.gt.f32.partialorder %v3043, 0.0
    %vm3048 = vcmp.gt.f32.partialorder %v3044, 0.0
    %v3049 = vmul.f32 %v3041, 0.01
    %v3050 = vmul.f32 %v3042, 0.01
    %v3051 = vmul.f32 %v3043, 0.01
    %v3052 = vmul.f32 %v3044, 0.01
    %v3053 = vsel %vm3045, %v3041, %v3049
    %v3054 = vsel %vm3046, %v3042, %v3050
    %v3055 = vsel %vm3047, %v3043, %v3051
    %v3056 = vsel %vm3048, %v3044, %v3052
    %3057 = vmatprep.subr.mxu0 %v3054
    %3058 = vmatpush1.msra.mxu0 %v3053
    %3059 = vmatprep.subr.mxu0 %v3056
    %3060 = vmatpush1.msra.mxu0 %v3055
    %3061 = vmatprep.subr.mxu0 0.0
    %3062 = vmatpush1.msra.mxu0 0.0
    %3063 = vmatprep.subr.mxu0 0.0
    %3064 = vmatpush1.msra.mxu0 0.0
    %3065 = vmatprep.subr.mxu0 0.0
    %3066 = vmatpush1.msra.mxu0 0.0
    %3067 = vmatprep.subr.mxu0 0.0
    %3068 = vmatpush1.msra.mxu0 0.0
    %3069 = vmatprep.subr.mxu0 0.0
    %3070 = vmatpush1.msra.mxu0 0.0
    %3071 = vmatprep.subr.mxu0 0.0
    %3072 = vmatpush1.msra.mxu0 0.0
    %3073 = vmatprep.subr.mxu0 0.0
    %3074 = vmatpush1.msra.mxu0 0.0
    %3075 = vmatprep.subr.mxu0 0.0
    %3076 = vmatpush1.msra.mxu0 0.0
    %3077 = vmatprep.subr.mxu0 0.0
    %3078 = vmatpush1.msra.mxu0 0.0
    %3079 = vmatprep.subr.mxu0 0.0
    %3080 = vmatpush1.msra.mxu0 0.0
    %3081 = vmatprep.subr.mxu0 0.0
    %3082 = vmatpush1.msra.mxu0 0.0
    %3083 = vmatprep.subr.mxu0 0.0
    %3084 = vmatpush1.msra.mxu0 0.0
    %3085 = vmatprep.subr.mxu0 0.0
    %3086 = vmatpush1.msra.mxu0 0.0
    %3087 = vmatprep.subr.mxu0 0.0
    %3088 = vmatpush1.msra.mxu0 0.0
    %3089 = vmatprep.subr.mxu0 0.0
    %3090 = vmatpush1.msra.mxu0 0.0
    %3091 = vmatprep.subr.mxu0 0.0
    %3092 = vmatpush1.msra.mxu0 0.0
    %3093 = vmatprep.subr.mxu0 0.0
    %3094 = vmatpush1.msra.mxu0 0.0
    %3095 = vmatprep.subr.mxu0 0.0
    %3096 = vmatpush1.msra.mxu0 0.0
    %3097 = vmatprep.subr.mxu0 0.0
    %3098 = vmatpush1.msra.mxu0 0.0
    %3099 = vmatprep.subr.mxu0 0.0
    %3100 = vmatpush1.msra.mxu0 0.0
    %3101 = vmatprep.subr.mxu0 0.0
    %3102 = vmatpush1.msra.mxu0 0.0
    %3103 = vmatprep.subr.mxu0 0.0
    %3104 = vmatpush1.msra.mxu0 0.0
    %3105 = vmatprep.subr.mxu0 0.0
    %3106 = vmatpush1.msra.mxu0 0.0
    %3107 = vmatprep.subr.mxu0 0.0
    %3108 = vmatpush1.msra.mxu0 0.0
    %3109 = vmatprep.subr.mxu0 0.0
    %3110 = vmatpush1.msra.mxu0 0.0
    %3111 = vmatprep.subr.mxu0 0.0
    %3112 = vmatpush1.msra.mxu0 0.0
    %3113 = vmatprep.subr.mxu0 0.0
    %3114 = vmatpush1.msra.mxu0 0.0
    %3115 = vmatprep.subr.mxu0 0.0
    %3116 = vmatpush1.msra.mxu0 0.0
    %3117 = vmatprep.subr.mxu0 0.0
    %3118 = vmatpush1.msra.mxu0 0.0
    %3119 = vmatprep.subr.mxu0 0.0
    %3120 = vmatpush1.msra.mxu0 0.0
    %3121 = vmatprep.mubr.f32.mxu0 0.0
    %3122 = vmatmul.mubr.f32.gmra.mrb[0].mxu0 %v973
    %v3123 = vpop.f32.mrb[0].mxu0
    %v3124 = vadd.f32 0.0, %v3123
    %v3125 = vpop.f32.mrb[0].mxu0
    %v3126 = vadd.f32 0.0, %v3125
    %3127 = vmatprep.mubr.f32.mxu0 0.0
    %3128 = vmatmul.mubr.f32.gmra.mrb[0].mxu0 %v976
    %v3129 = vpop.f32.mrb[0].mxu0
    %v3130 = vadd.f32 0.0, %v3129
    %v3131 = vpop.f32.mrb[0].mxu0
    %v3132 = vadd.f32 0.0, %v3131
    %3133 = vdwg.mxu0
    %3134 = vmatprep.subr.mxu0 %v3054
    %3135 = vmatpush1.msra.mxu0 %v3053
    %3136 = vmatprep.subr.mxu0 %v3056
    %3137 = vmatpush1.msra.mxu0 %v3055
    %3138 = vmatprep.subr.mxu0 0.0
    %3139 = vmatpush1.msra.mxu0 0.0
    %3140 = vmatprep.subr.mxu0 0.0
    %3141 = vmatpush1.msra.mxu0 0.0
    %3142 = vmatprep.subr.mxu0 0.0
    %3143 = vmatpush1.msra.mxu0 0.0
    %3144 = vmatprep.subr.mxu0 0.0
    %3145 = vmatpush1.msra.mxu0 0.0
    %3146 = vmatprep.subr.mxu0 0.0
    %3147 = vmatpush1.msra.mxu0 0.0
    %3148 = vmatprep.subr.mxu0 0.0
    %3149 = vmatpush1.msra.mxu0 0.0
    %3150 = vmatprep.subr.mxu0 0.0
    %3151 = vmatpush1.msra.mxu0 0.0
    %3152 = vmatprep.subr.mxu0 0.0
    %3153 = vmatpush1.msra.mxu0 0.0
    %3154 = vmatprep.subr.mxu0 0.0
    %3155 = vmatpush1.msra.mxu0 0.0
    %3156 = vmatprep.subr.mxu0 0.0
    %3157 = vmatpush1.msra.mxu0 0.0
    %3158 = vmatprep.subr.mxu0 0.0
    %3159 = vmatpush1.msra.mxu0 0.0
    %3160 = vmatprep.subr.mxu0 0.0
    %3161 = vmatpush1.msra.mxu0 0.0
    %3162 = vmatprep.subr.mxu0 0.0
    %3163 = vmatpush1.msra.mxu0 0.0
    %3164 = vmatprep.subr.mxu0 0.0
    %3165 = vmatpush1.msra.mxu0 0.0
    %3166 = vmatprep.subr.mxu0 0.0
    %3167 = vmatpush1.msra.mxu0 0.0
    %3168 = vmatprep.subr.mxu0 0.0
    %3169 = vmatpush1.msra.mxu0 0.0
    %3170 = vmatprep.subr.mxu0 0.0
    %3171 = vmatpush1.msra.mxu0 0.0
    %3172 = vmatprep.subr.mxu0 0.0
    %3173 = vmatpush1.msra.mxu0 0.0
    %3174 = vmatprep.subr.mxu0 0.0
    %3175 = vmatpush1.msra.mxu0 0.0
    %3176 = vmatprep.subr.mxu0 0.0
    %3177 = vmatpush1.msra.mxu0 0.0
    %3178 = vmatprep.subr.mxu0 0.0
    %3179 = vmatpush1.msra.mxu0 0.0
    %3180 = vmatprep.subr.mxu0 0.0
    %3181 = vmatpush1.msra.mxu0 0.0
    %3182 = vmatprep.subr.mxu0 0.0
    %3183 = vmatpush1.msra.mxu0 0.0
    %3184 = vmatprep.subr.mxu0 0.0
    %3185 = vmatpush1.msra.mxu0 0.0
    %3186 = vmatprep.subr.mxu0 0.0
    %3187 = vmatpush1.msra.mxu0 0.0
    %3188 = vmatprep.subr.mxu0 0.0
    %3189 = vmatpush1.msra.mxu0 0.0
    %3190 = vmatprep.subr.mxu0 0.0
    %3191 = vmatpush1.msra.mxu0 0.0
    %3192 = vmatprep.subr.mxu0 0.0
    %3193 = vmatpush1.msra.mxu0 0.0
    %3194 = vmatprep.subr.mxu0 0.0
    %3195 = vmatpush1.msra.mxu0 0.0
    %3196 = vmatprep.subr.mxu0 0.0
    %3197 = vmatpush1.msra.mxu0 0.0
    %3198 = vmatprep.mubr.f32.mxu0 0.0
    %3199 = vmatmul.mubr.f32.gmra.mrb[0].mxu0 %v1056
    %v3200 = vpop.f32.mrb[0].mxu0
    %v3201 = vadd.f32 0.0, %v3200
    %v3202 = vpop.f32.mrb[0].mxu0
    %v3203 = vadd.f32 0.0, %v3202
    %3204 = vmatprep.mubr.f32.mxu0 0.0
    %3205 = vmatmul.mubr.f32.gmra.mrb[0].mxu0 %v1059
    %v3206 = vpop.f32.mrb[0].mxu0
    %v3207 = vadd.f32 0.0, %v3206
    %v3208 = vpop.f32.mrb[0].mxu0
    %v3209 = vadd.f32 0.0, %v3208
    %3210 = vdwg.mxu0
    %v3211 = vmax.f32 %v3124, %v3201
    %v3212 = vmax.f32 %v3126, %v3203
    %v3213 = vmax.f32 %v3130, %v3207
    %v3214 = vmax.f32 %v3132, %v3209
    %v3215 = vmax.f32 %v3053, %v3211
    %v3216 = vmax.f32 %v3054, %v3212
    %v3217 = vmax.f32 %v3055, %v3213
    %v3218 = vmax.f32 %v3056, %v3214
    %3219 = vmatprep.subr.mxu0 %v478
    %3220 = vmatpush1.msra.mxu0 %v477
    %3221 = vmatprep.subr.mxu0 %v480
    %3222 = vmatpush1.msra.mxu0 %v479
    %3223 = vmatprep.subr.mxu0 %v482
    %3224 = vmatpush1.msra.mxu0 %v481
    %3225 = vmatprep.subr.mxu0 %v484
    %3226 = vmatpush1.msra.mxu0 %v483
    %3227 = vmatprep.subr.mxu0 %v486
    %3228 = vmatpush1.msra.mxu0 %v485
    %3229 = vmatprep.subr.mxu0 %v488
    %3230 = vmatpush1.msra.mxu0 %v487
    %3231 = vmatprep.subr.mxu0 %v490
    %3232 = vmatpush1.msra.mxu0 %v489
    %3233 = vmatprep.subr.mxu0 %v492
    %3234 = vmatpush1.msra.mxu0 %v491
    %3235 = vmatprep.subr.mxu0 %v494
    %3236 = vmatpush1.msra.mxu0 %v493
    %3237 = vmatprep.subr.mxu0 %v496
    %3238 = vmatpush1.msra.mxu0 %v495
    %3239 = vmatprep.subr.mxu0 %v498
    %3240 = vmatpush1.msra.mxu0 %v497
    %3241 = vmatprep.subr.mxu0 %v500
    %3242 = vmatpush1.msra.mxu0 %v499
    %3243 = vmatprep.subr.mxu0 %v502
    %3244 = vmatpush1.msra.mxu0 %v501
    %3245 = vmatprep.subr.mxu0 %v504
    %3246 = vmatpush1.msra.mxu0 %v503
    %3247 = vmatprep.subr.mxu0 %v506
    %3248 = vmatpush1.msra.mxu0 %v505
    %3249 = vmatprep.subr.mxu0 %v508
    %3250 = vmatpush1.msra.mxu0 %v507
    %3251 = vmatprep.subr.mxu0 %v510
    %3252 = vmatpush1.msra.mxu0 %v509
    %3253 = vmatprep.subr.mxu0 %v512
    %3254 = vmatpush1.msra.mxu0 %v511
    %3255 = vmatprep.subr.mxu0 %v514
    %3256 = vmatpush1.msra.mxu0 %v513
    %3257 = vmatprep.subr.mxu0 %v516
    %3258 = vmatpush1.msra.mxu0 %v515
    %3259 = vmatprep.subr.mxu0 %v518
    %3260 = vmatpush1.msra.mxu0 %v517
    %3261 = vmatprep.subr.mxu0 %v520
    %3262 = vmatpush1.msra.mxu0 %v519
    %3263 = vmatprep.subr.mxu0 %v522
    %3264 = vmatpush1.msra.mxu0 %v521
    %3265 = vmatprep.subr.mxu0 %v524
    %3266 = vmatpush1.msra.mxu0 %v523
    %3267 = vmatprep.subr.mxu0 %v526
    %3268 = vmatpush1.msra.mxu0 %v525
    %3269 = vmatprep.subr.mxu0 %v528
    %3270 = vmatpush1.msra.mxu0 %v527
    %3271 = vmatprep.subr.mxu0 %v530
    %3272 = vmatpush1.msra.mxu0 %v529
    %3273 = vmatprep.subr.mxu0 %v532
    %3274 = vmatpush1.msra.mxu0 %v531
    %3275 = vmatprep.subr.mxu0 %v534
    %3276 = vmatpush1.msra.mxu0 %v533
    %3277 = vmatprep.subr.mxu0 %v536
    %3278 = vmatpush1.msra.mxu0 %v535
    %3279 = vmatprep.subr.mxu0 %v538
    %3280 = vmatpush1.msra.mxu0 %v537
    %3281 = vmatprep.subr.mxu0 %v540
    %3282 = vmatpush1.msra.mxu0 %v539
    %3283 = vmatprep.mubr.f32.mxu0 %v3216
    %3284 = vmatmul.mubr.f32.gmra.mrb[0].mxu0 %v3215
    %v3285 = vpop.f32.mrb[0].mxu0
    %v3286 = vadd.f32 0.0, %v3285
    %v3287 = vpop.f32.mrb[0].mxu0
    %v3288 = vadd.f32 0.0, %v3287
    %3289 = vmatprep.mubr.f32.mxu0 %v3218
    %3290 = vmatmul.mubr.f32.gmra.mrb[0].mxu0 %v3217
    %v3291 = vpop.f32.mrb[0].mxu0
    %v3292 = vadd.f32 0.0, %v3291
    %v3293 = vpop.f32.mrb[0].mxu0
    %v3294 = vadd.f32 0.0, %v3293
    %3295 = vdwg.mxu0
    %3296 = vmatprep.subr.mxu0 %v542
    %3297 = vmatpush1.msra.mxu0 %v541
    %3298 = vmatprep.subr.mxu0 %v544
    %3299 = vmatpush1.msra.mxu0 %v543
    %3300 = vmatprep.subr.mxu0 %v546
    %3301 = vmatpush1.msra.mxu0 %v545
    %3302 = vmatprep.subr.mxu0 %v548
    %3303 = vmatpush1.msra.mxu0 %v547
    %3304 = vmatprep.subr.mxu0 %v550
    %3305 = vmatpush1.msra.mxu0 %v549
    %3306 = vmatprep.subr.mxu0 %v552
    %3307 = vmatpush1.msra.mxu0 %v551
    %3308 = vmatprep.subr.mxu0 %v554
    %3309 = vmatpush1.msra.mxu0 %v553
    %3310 = vmatprep.subr.mxu0 %v556
    %3311 = vmatpush1.msra.mxu0 %v555
    %3312 = vmatprep.subr.mxu0 %v558
    %3313 = vmatpush1.msra.mxu0 %v557
    %3314 = vmatprep.subr.mxu0 %v560
    %3315 = vmatpush1.msra.mxu0 %v559
    %3316 = vmatprep.subr.mxu0 %v562
    %3317 = vmatpush1.msra.mxu0 %v561
    %3318 = vmatprep.subr.mxu0 %v564
    %3319 = vmatpush1.msra.mxu0 %v563
    %3320 = vmatprep.subr.mxu0 %v566
    %3321 = vmatpush1.msra.mxu0 %v565
    %3322 = vmatprep.subr.mxu0 %v568
    %3323 = vmatpush1.msra.mxu0 %v567
    %3324 = vmatprep.subr.mxu0 %v570
    %3325 = vmatpush1.msra.mxu0 %v569
    %3326 = vmatprep.subr.mxu0 %v572
    %3327 = vmatpush1.msra.mxu0 %v571
    %3328 = vmatprep.subr.mxu0 %v574
    %3329 = vmatpush1.msra.mxu0 %v573
    %3330 = vmatprep.subr.mxu0 %v576
    %3331 = vmatpush1.msra.mxu0 %v575
    %3332 = vmatprep.subr.mxu0 %v578
    %3333 = vmatpush1.msra.mxu0 %v577
    %3334 = vmatprep.subr.mxu0 %v580
    %3335 = vmatpush1.msra.mxu0 %v579
    %3336 = vmatprep.subr.mxu0 %v582
    %3337 = vmatpush1.msra.mxu0 %v581
    %3338 = vmatprep.subr.mxu0 %v584
    %3339 = vmatpush1.msra.mxu0 %v583
    %3340 = vmatprep.subr.mxu0 %v586
    %3341 = vmatpush1.msra.mxu0 %v585
    %3342 = vmatprep.subr.mxu0 %v588
    %3343 = vmatpush1.msra.mxu0 %v587
    %3344 = vmatprep.subr.mxu0 %v590
    %3345 = vmatpush1.msra.mxu0 %v589
    %3346 = vmatprep.subr.mxu0 %v592
    %3347 = vmatpush1.msra.mxu0 %v591
    %3348 = vmatprep.subr.mxu0 %v594
    %3349 = vmatpush1.msra.mxu0 %v593
    %3350 = vmatprep.subr.mxu0 %v596
    %3351 = vmatpush1.msra.mxu0 %v595
    %3352 = vmatprep.subr.mxu0 %v598
    %3353 = vmatpush1.msra.mxu0 %v597
    %3354 = vmatprep.subr.mxu0 %v600
    %3355 = vmatpush1.msra.mxu0 %v599
    %3356 = vmatprep.subr.mxu0 %v602
    %3357 = vmatpush1.msra.mxu0 %v601
    %3358 = vmatprep.subr.mxu0 %v604
    %3359 = vmatpush1.msra.mxu0 %v603
    %3360 = vmatprep.mubr.f32.mxu0 %v3216
    %3361 = vmatmul.mubr.f32.gmra.mrb[0].mxu0 %v3215
    %v3362 = vpop.f32.mrb[0].mxu0
    %v3363 = vadd.f32 0.0, %v3362
    %v3364 = vpop.f32.mrb[0].mxu0
    %v3365 = vadd.f32 0.0, %v3364
    %3366 = vmatprep.mubr.f32.mxu0 %v3218
    %3367 = vmatmul.mubr.f32.gmra.mrb[0].mxu0 %v3217
    %v3368 = vpop.f32.mrb[0].mxu0
    %v3369 = vadd.f32 0.0, %v3368
    %v3370 = vpop.f32.mrb[0].mxu0
    %v3371 = vadd.f32 0.0, %v3370
    %3372 = vdwg.mxu0
    %v3373 = vmax.f32 %v3286, %v3363
    %v3374 = vmax.f32 %v3288, %v3365
    %v3375 = vmax.f32 %v3292, %v3369
    %v3376 = vmax.f32 %v3294, %v3371
    %v3377 = vmax.f32 %v3215, %v3373
    %v3378 = vmax.f32 %v3216, %v3374
    %v3379 = vmax.f32 %v3217, %v3375
    %v3380 = vmax.f32 %v3218, %v3376
    %v3381 = vld [vmem:[%s27] sm:$0x1]
    %v3382 = vld [vmem:[%s25] sm:$0xf]
    %v3383 = vld [vmem:[%s25 + $0x4] sm:$0xf]
    %v3384 = vld [vmem:[%s25 + $0x8] sm:$0xf]
    %v3385 = vld [vmem:[%s25 + $0xc] sm:$0xf]
    %v3386 = vld [vmem:[%s25 + $0x10] sm:$0xf]
    %v3387 = vld [vmem:[%s25 + $0x14] sm:$0xf]
    %v3388 = vld [vmem:[%s25 + $0x18] sm:$0xf]
    %v3389 = vld [vmem:[%s25 + $0x1c] sm:$0xf]
    %v3390 = vld [vmem:[%s25 + $0x20] sm:$0xf]
    %v3391 = vld [vmem:[%s25 + $0x24] sm:$0xf]
    %v3392 = vld [vmem:[%s25 + $0x28] sm:$0xf]
    %v3393 = vld [vmem:[%s25 + $0x2c] sm:$0xf]
    %v3394 = vld [vmem:[%s25 + $0x30] sm:$0xf]
    %v3395 = vld [vmem:[%s25 + $0x34] sm:$0xf]
    %v3396 = vld [vmem:[%s25 + $0x38] sm:$0xf]
    %v3397 = vld [vmem:[%s25 + $0x3c] sm:$0xf]
    %v3398 = vld [vmem:[%s25 + $0x40] sm:$0xf]
    %v3399 = vld [vmem:[%s25 + $0x44] sm:$0xf]
    %v3400 = vld [vmem:[%s25 + $0x48] sm:$0xf]
    %v3401 = vld [vmem:[%s25 + $0x4c] sm:$0xf]
    %v3402 = vld [vmem:[%s25 + $0x50] sm:$0xf]
    %v3403 = vld [vmem:[%s25 + $0x54] sm:$0xf]
    %v3404 = vld [vmem:[%s25 + $0x58] sm:$0xf]
    %v3405 = vld [vmem:[%s25 + $0x5c] sm:$0xf]
    %v3406 = vld [vmem:[%s25 + $0x60] sm:$0xf]
    %v3407 = vld [vmem:[%s25 + $0x64] sm:$0xf]
    %v3408 = vld [vmem:[%s25 + $0x68] sm:$0xf]
    %v3409 = vld [vmem:[%s25 + $0x6c] sm:$0xf]
    %v3410 = vld [vmem:[%s25 + $0x70] sm:$0xf]
    %v3411 = vld [vmem:[%s25 + $0x74] sm:$0xf]
    %v3412 = vld [vmem:[%s25 + $0x78] sm:$0xf]
    %v3413 = vld [vmem:[%s25 + $0x7c] sm:$0xf]
    %v3414 = vpack.c.bf16 %v3377, %v3377
    %v3415 = vpack.c.bf16 %v3378, %v3378
    %v3448 = vunpack.c.l.b16 %v3382
    %v3449 = vunpack.c.l.b16 %v3383
    %v3450 = vunpack.c.l.b16 %v3384
    %v3451 = vunpack.c.l.b16 %v3385
    %v3452 = vunpack.c.l.b16 %v3386
    %v3453 = vunpack.c.l.b16 %v3387
    %v3454 = vunpack.c.l.b16 %v3388
    %v3455 = vunpack.c.l.b16 %v3389
    %v3456 = vunpack.c.l.b16 %v3390
    %v3457 = vunpack.c.l.b16 %v3391
    %v3458 = vunpack.c.l.b16 %v3392
    %v3459 = vunpack.c.l.b16 %v3393
    %v3460 = vunpack.c.l.b16 %v3394
    %v3461 = vunpack.c.l.b16 %v3395
    %v3462 = vunpack.c.l.b16 %v3396
    %v3463 = vunpack.c.l.b16 %v3397
    %v3464 = vunpack.c.l.b16 %v3398
    %v3465 = vunpack.c.l.b16 %v3399
    %v3466 = vunpack.c.l.b16 %v3400
    %v3467 = vunpack.c.l.b16 %v3401
    %v3468 = vunpack.c.l.b16 %v3402
    %v3469 = vunpack.c.l.b16 %v3403
    %v3470 = vunpack.c.l.b16 %v3404
    %v3471 = vunpack.c.l.b16 %v3405
    %v3472 = vunpack.c.l.b16 %v3406
    %v3473 = vunpack.c.l.b16 %v3407
    %v3474 = vunpack.c.l.b16 %v3408
    %v3475 = vunpack.c.l.b16 %v3409
    %v3476 = vunpack.c.l.b16 %v3410
    %v3477 = vunpack.c.l.b16 %v3411
    %v3478 = vunpack.c.l.b16 %v3412
    %v3479 = vunpack.c.l.b16 %v3413
    %v3480 = vpack.c.b16 %v3449, %v3448
    %v3481 = vpack.c.b16 %v3451, %v3450
    %v3482 = vpack.c.b16 %v3453, %v3452
    %v3483 = vpack.c.b16 %v3455, %v3454
    %v3484 = vpack.c.b16 %v3457, %v3456
    %v3485 = vpack.c.b16 %v3459, %v3458
    %v3486 = vpack.c.b16 %v3461, %v3460
    %v3487 = vpack.c.b16 %v3463, %v3462
    %v3488 = vpack.c.b16 %v3465, %v3464
    %v3489 = vpack.c.b16 %v3467, %v3466
    %v3490 = vpack.c.b16 %v3469, %v3468
    %v3491 = vpack.c.b16 %v3471, %v3470
    %v3492 = vpack.c.b16 %v3473, %v3472
    %v3493 = vpack.c.b16 %v3475, %v3474
    %v3494 = vpack.c.b16 %v3477, %v3476
    %v3495 = vpack.c.b16 %v3479, %v3478
    %3512 = vmatprep.subr.bf16.mxu0 0
    %3513 = vmatpush1.bf16.msra.mxu0 %v3480
    %3514 = vmatprep.subr.bf16.mxu0 0
    %3515 = vmatpush1.bf16.msra.mxu0 %v3481
    %3516 = vmatprep.subr.bf16.mxu0 0
    %3517 = vmatpush1.bf16.msra.mxu0 %v3482
    %3518 = vmatprep.subr.bf16.mxu0 0
    %3519 = vmatpush1.bf16.msra.mxu0 %v3483
    %3520 = vmatprep.subr.bf16.mxu0 0
    %3521 = vmatpush1.bf16.msra.mxu0 %v3484
    %3522 = vmatprep.subr.bf16.mxu0 0
    %3523 = vmatpush1.bf16.msra.mxu0 %v3485
    %3524 = vmatprep.subr.bf16.mxu0 0
    %3525 = vmatpush1.bf16.msra.mxu0 %v3486
    %3526 = vmatprep.subr.bf16.mxu0 0
    %3527 = vmatpush1.bf16.msra.mxu0 %v3487
    %3528 = vmatprep.subr.bf16.mxu0 0
    %3529 = vmatpush1.bf16.msra.mxu0 %v3488
    %3530 = vmatprep.subr.bf16.mxu0 0
    %3531 = vmatpush1.bf16.msra.mxu0 %v3489
    %3532 = vmatprep.subr.bf16.mxu0 0
    %3533 = vmatpush1.bf16.msra.mxu0 %v3490
    %3534 = vmatprep.subr.bf16.mxu0 0
    %3535 = vmatpush1.bf16.msra.mxu0 %v3491
    %3536 = vmatprep.subr.bf16.mxu0 0
    %3537 = vmatpush1.bf16.msra.mxu0 %v3492
    %3538 = vmatprep.subr.bf16.mxu0 0
    %3539 = vmatpush1.bf16.msra.mxu0 %v3493
    %3540 = vmatprep.subr.bf16.mxu0 0
    %3541 = vmatpush1.bf16.msra.mxu0 %v3494
    %3542 = vmatprep.subr.bf16.mxu0 0
    %3543 = vmatpush1.bf16.msra.mxu0 %v3495
    %3544 = vmatprep.mubr.bf16.mxu0 %v3415
    %3545 = vmatmul.mubr.bf16.gmra.mrb[0].mxu0 %v3414
    %v3546 = vpop.f32.mrb[0].mxu0
    %v3547 = vadd.f32 0.0, %v3546
    %v3548 = vpop.f32.mrb[0].mxu0
    %v3549 = vpop.f32.mrb[0].mxu0
    %v3550 = vpop.f32.mrb[0].mxu0
    %3551 = vdwg.mxu0
    %v3552 = vadd.f32 %v3381, %v3547
    %v3553 = vld [vmem:[%s1480] sm:$0xf]
    %v3554 = vld [vmem:[%s1480 + $0x4] sm:$0xf]
    %v3555 = vld [vmem:[%s1480 + $0x8] sm:$0xf]
    %v3556 = vld [vmem:[%s1480 + $0xc] sm:$0xf]
    %v3557 = vld [vmem:[%s1480 + $0x10] sm:$0xf]
    %v3558 = vld [vmem:[%s1480 + $0x14] sm:$0xf]
    %v3559 = vld [vmem:[%s1480 + $0x18] sm:$0xf]
    %v3560 = vld [vmem:[%s1480 + $0x1c] sm:$0xf]
    %v3561 = vld [vmem:[%s1480 + $0x20] sm:$0xf]
    %v3562 = vld [vmem:[%s1480 + $0x24] sm:$0xf]
    %v3563 = vld [vmem:[%s1480 + $0x28] sm:$0xf]
    %v3564 = vld [vmem:[%s1480 + $0x2c] sm:$0xf]
    %v3565 = vld [vmem:[%s1480 + $0x30] sm:$0xf]
    %v3566 = vld [vmem:[%s1480 + $0x34] sm:$0xf]
    %v3567 = vld [vmem:[%s1480 + $0x38] sm:$0xf]
    %v3568 = vld [vmem:[%s1480 + $0x3c] sm:$0xf]
    %v3569 = vld [vmem:[%s1480 + $0x40] sm:$0xf]
    %v3570 = vld [vmem:[%s1480 + $0x44] sm:$0xf]
    %v3571 = vld [vmem:[%s1480 + $0x48] sm:$0xf]
    %v3572 = vld [vmem:[%s1480 + $0x4c] sm:$0xf]
    %v3573 = vld [vmem:[%s1480 + $0x50] sm:$0xf]
    %v3574 = vld [vmem:[%s1480 + $0x54] sm:$0xf]
    %v3575 = vld [vmem:[%s1480 + $0x58] sm:$0xf]
    %v3576 = vld [vmem:[%s1480 + $0x5c] sm:$0xf]
    %v3577 = vld [vmem:[%s1480 + $0x60] sm:$0xf]
    %v3578 = vld [vmem:[%s1480 + $0x64] sm:$0xf]
    %v3579 = vld [vmem:[%s1480 + $0x68] sm:$0xf]
    %v3580 = vld [vmem:[%s1480 + $0x6c] sm:$0xf]
    %v3581 = vld [vmem:[%s1480 + $0x70] sm:$0xf]
    %v3582 = vld [vmem:[%s1480 + $0x74] sm:$0xf]
    %v3583 = vld [vmem:[%s1480 + $0x78] sm:$0xf]
    %v3584 = vld [vmem:[%s1480 + $0x7c] sm:$0xf]
    %v3587 = vrot.slane %v3414, 1
    %v3588 = vrot.slane %v3415, 1
    %v3623 = vunpack.c.l.b16 %v3553
    %v3624 = vunpack.c.l.b16 %v3554
    %v3625 = vunpack.c.l.b16 %v3555
    %v3626 = vunpack.c.l.b16 %v3556
    %v3627 = vunpack.c.l.b16 %v3557
    %v3628 = vunpack.c.l.b16 %v3558
    %v3629 = vunpack.c.l.b16 %v3559
    %v3630 = vunpack.c.l.b16 %v3560
    %v3631 = vunpack.c.l.b16 %v3561
    %v3632 = vunpack.c.l.b16 %v3562
    %v3633 = vunpack.c.l.b16 %v3563
    %v3634 = vunpack.c.l.b16 %v3564
    %v3635 = vunpack.c.l.b16 %v3565
    %v3636 = vunpack.c.l.b16 %v3566
    %v3637 = vunpack.c.l.b16 %v3567
    %v3638 = vunpack.c.l.b16 %v3568
    %v3639 = vunpack.c.l.b16 %v3569
    %v3640 = vunpack.c.l.b16 %v3570
    %v3641 = vunpack.c.l.b16 %v3571
    %v3642 = vunpack.c.l.b16 %v3572
    %v3643 = vunpack.c.l.b16 %v3573
    %v3644 = vunpack.c.l.b16 %v3574
    %v3645 = vunpack.c.l.b16 %v3575
    %v3646 = vunpack.c.l.b16 %v3576
    %v3647 = vunpack.c.l.b16 %v3577
    %v3648 = vunpack.c.l.b16 %v3578
    %v3649 = vunpack.c.l.b16 %v3579
    %v3650 = vunpack.c.l.b16 %v3580
    %v3651 = vunpack.c.l.b16 %v3581
    %v3652 = vunpack.c.l.b16 %v3582
    %v3653 = vunpack.c.l.b16 %v3583
    %v3654 = vunpack.c.l.b16 %v3584
    %v3655 = vpack.c.b16 %v3624, %v3623
    %v3656 = vpack.c.b16 %v3626, %v3625
    %v3657 = vpack.c.b16 %v3628, %v3627
    %v3658 = vpack.c.b16 %v3630, %v3629
    %v3659 = vpack.c.b16 %v3632, %v3631
    %v3660 = vpack.c.b16 %v3634, %v3633
    %v3661 = vpack.c.b16 %v3636, %v3635
    %v3662 = vpack.c.b16 %v3638, %v3637
    %v3663 = vpack.c.b16 %v3640, %v3639
    %v3664 = vpack.c.b16 %v3642, %v3641
    %v3665 = vpack.c.b16 %v3644, %v3643
    %v3666 = vpack.c.b16 %v3646, %v3645
    %v3667 = vpack.c.b16 %v3648, %v3647
    %v3668 = vpack.c.b16 %v3650, %v3649
    %v3669 = vpack.c.b16 %v3652, %v3651
    %v3670 = vpack.c.b16 %v3654, %v3653
    %3687 = vmatprep.subr.bf16.mxu0 0
    %3688 = vmatpush1.bf16.msra.mxu0 %v3655
    %3689 = vmatprep.subr.bf16.mxu0 0
    %3690 = vmatpush1.bf16.msra.mxu0 %v3656
    %3691 = vmatprep.subr.bf16.mxu0 0
    %3692 = vmatpush1.bf16.msra.mxu0 %v3657
    %3693 = vmatprep.subr.bf16.mxu0 0
    %3694 = vmatpush1.bf16.msra.mxu0 %v3658
    %3695 = vmatprep.subr.bf16.mxu0 0
    %3696 = vmatpush1.bf16.msra.mxu0 %v3659
    %3697 = vmatprep.subr.bf16.mxu0 0
    %3698 = vmatpush1.bf16.msra.mxu0 %v3660
    %3699 = vmatprep.subr.bf16.mxu0 0
    %3700 = vmatpush1.bf16.msra.mxu0 %v3661
    %3701 = vmatprep.subr.bf16.mxu0 0
    %3702 = vmatpush1.bf16.msra.mxu0 %v3662
    %3703 = vmatprep.subr.bf16.mxu0 0
    %3704 = vmatpush1.bf16.msra.mxu0 %v3663
    %3705 = vmatprep.subr.bf16.mxu0 0
    %3706 = vmatpush1.bf16.msra.mxu0 %v3664
    %3707 = vmatprep.subr.bf16.mxu0 0
    %3708 = vmatpush1.bf16.msra.mxu0 %v3665
    %3709 = vmatprep.subr.bf16.mxu0 0
    %3710 = vmatpush1.bf16.msra.mxu0 %v3666
    %3711 = vmatprep.subr.bf16.mxu0 0
    %3712 = vmatpush1.bf16.msra.mxu0 %v3667
    %3713 = vmatprep.subr.bf16.mxu0 0
    %3714 = vmatpush1.bf16.msra.mxu0 %v3668
    %3715 = vmatprep.subr.bf16.mxu0 0
    %3716 = vmatpush1.bf16.msra.mxu0 %v3669
    %3717 = vmatprep.subr.bf16.mxu0 0
    %3718 = vmatpush1.bf16.msra.mxu0 %v3670
    %3719 = vmatprep.mubr.bf16.mxu0 %v3588
    %3720 = vmatmul.mubr.bf16.gmra.mrb[0].mxu0 %v3587
    %v3721 = vpop.f32.mrb[0].mxu0
    %v3722 = vadd.f32 0.0, %v3721
    %v3723 = vpop.f32.mrb[0].mxu0
    %v3724 = vpop.f32.mrb[0].mxu0
    %v3725 = vpop.f32.mrb[0].mxu0
    %3726 = vdwg.mxu0
    %v3727 = vadd.f32 %v3552, %v3722
    %v3728 = vld [vmem:[%s1656] sm:$0xf]
    %v3729 = vld [vmem:[%s1656 + $0x4] sm:$0xf]
    %v3730 = vld [vmem:[%s1656 + $0x8] sm:$0xf]
    %v3731 = vld [vmem:[%s1656 + $0xc] sm:$0xf]
    %v3732 = vld [vmem:[%s1656 + $0x10] sm:$0xf]
    %v3733 = vld [vmem:[%s1656 + $0x14] sm:$0xf]
    %v3734 = vld [vmem:[%s1656 + $0x18] sm:$0xf]
    %v3735 = vld [vmem:[%s1656 + $0x1c] sm:$0xf]
    %v3736 = vld [vmem:[%s1656 + $0x20] sm:$0xf]
    %v3737 = vld [vmem:[%s1656 + $0x24] sm:$0xf]
    %v3738 = vld [vmem:[%s1656 + $0x28] sm:$0xf]
    %v3739 = vld [vmem:[%s1656 + $0x2c] sm:$0xf]
    %v3740 = vld [vmem:[%s1656 + $0x30] sm:$0xf]
    %v3741 = vld [vmem:[%s1656 + $0x34] sm:$0xf]
    %v3742 = vld [vmem:[%s1656 + $0x38] sm:$0xf]
    %v3743 = vld [vmem:[%s1656 + $0x3c] sm:$0xf]
    %v3744 = vld [vmem:[%s1656 + $0x40] sm:$0xf]
    %v3745 = vld [vmem:[%s1656 + $0x44] sm:$0xf]
    %v3746 = vld [vmem:[%s1656 + $0x48] sm:$0xf]
    %v3747 = vld [vmem:[%s1656 + $0x4c] sm:$0xf]
    %v3748 = vld [vmem:[%s1656 + $0x50] sm:$0xf]
    %v3749 = vld [vmem:[%s1656 + $0x54] sm:$0xf]
    %v3750 = vld [vmem:[%s1656 + $0x58] sm:$0xf]
    %v3751 = vld [vmem:[%s1656 + $0x5c] sm:$0xf]
    %v3752 = vld [vmem:[%s1656 + $0x60] sm:$0xf]
    %v3753 = vld [vmem:[%s1656 + $0x64] sm:$0xf]
    %v3754 = vld [vmem:[%s1656 + $0x68] sm:$0xf]
    %v3755 = vld [vmem:[%s1656 + $0x6c] sm:$0xf]
    %v3756 = vld [vmem:[%s1656 + $0x70] sm:$0xf]
    %v3757 = vld [vmem:[%s1656 + $0x74] sm:$0xf]
    %v3758 = vld [vmem:[%s1656 + $0x78] sm:$0xf]
    %v3759 = vld [vmem:[%s1656 + $0x7c] sm:$0xf]
    %v3760 = vrot.slane %v3414, 2
    %v3761 = vrot.slane %v3415, 2
    %v3796 = vunpack.c.l.b16 %v3728
    %v3797 = vunpack.c.l.b16 %v3729
    %v3798 = vunpack.c.l.b16 %v3730
    %v3799 = vunpack.c.l.b16 %v3731
    %v3800 = vunpack.c.l.b16 %v3732
    %v3801 = vunpack.c.l.b16 %v3733
    %v3802 = vunpack.c.l.b16 %v3734
    %v3803 = vunpack.c.l.b16 %v3735
    %v3804 = vunpack.c.l.b16 %v3736
    %v3805 = vunpack.c.l.b16 %v3737
    %v3806 = vunpack.c.l.b16 %v3738
    %v3807 = vunpack.c.l.b16 %v3739
    %v3808 = vunpack.c.l.b16 %v3740
    %v3809 = vunpack.c.l.b16 %v3741
    %v3810 = vunpack.c.l.b16 %v3742
    %v3811 = vunpack.c.l.b16 %v3743
    %v3812 = vunpack.c.l.b16 %v3744
    %v3813 = vunpack.c.l.b16 %v3745
    %v3814 = vunpack.c.l.b16 %v3746
    %v3815 = vunpack.c.l.b16 %v3747
    %v3816 = vunpack.c.l.b16 %v3748
    %v3817 = vunpack.c.l.b16 %v3749
    %v3818 = vunpack.c.l.b16 %v3750
    %v3819 = vunpack.c.l.b16 %v3751
    %v3820 = vunpack.c.l.b16 %v3752
    %v3821 = vunpack.c.l.b16 %v3753
    %v3822 = vunpack.c.l.b16 %v3754
    %v3823 = vunpack.c.l.b16 %v3755
    %v3824 = vunpack.c.l.b16 %v3756
    %v3825 = vunpack.c.l.b16 %v3757
    %v3826 = vunpack.c.l.b16 %v3758
    %v3827 = vunpack.c.l.b16 %v3759
    %v3828 = vpack.c.b16 %v3797, %v3796
    %v3829 = vpack.c.b16 %v3799, %v3798
    %v3830 = vpack.c.b16 %v3801, %v3800
    %v3831 = vpack.c.b16 %v3803, %v3802
    %v3832 = vpack.c.b16 %v3805, %v3804
    %v3833 = vpack.c.b16 %v3807, %v3806
    %v3834 = vpack.c.b16 %v3809, %v3808
    %v3835 = vpack.c.b16 %v3811, %v3810
    %v3836 = vpack.c.b16 %v3813, %v3812
    %v3837 = vpack.c.b16 %v3815, %v3814
    %v3838 = vpack.c.b16 %v3817, %v3816
    %v3839 = vpack.c.b16 %v3819, %v3818
    %v3840 = vpack.c.b16 %v3821, %v3820
    %v3841 = vpack.c.b16 %v3823, %v3822
    %v3842 = vpack.c.b16 %v3825, %v3824
    %v3843 = vpack.c.b16 %v3827, %v3826
    %3860 = vmatprep.subr.bf16.mxu0 0
    %3861 = vmatpush1.bf16.msra.mxu0 %v3828
    %3862 = vmatprep.subr.bf16.mxu0 0
    %3863 = vmatpush1.bf16.msra.mxu0 %v3829
    %3864 = vmatprep.subr.bf16.mxu0 0
    %3865 = vmatpush1.bf16.msra.mxu0 %v3830
    %3866 = vmatprep.subr.bf16.mxu0 0
    %3867 = vmatpush1.bf16.msra.mxu0 %v3831
    %3868 = vmatprep.subr.bf16.mxu0 0
    %3869 = vmatpush1.bf16.msra.mxu0 %v3832
    %3870 = vmatprep.subr.bf16.mxu0 0
    %3871 = vmatpush1.bf16.msra.mxu0 %v3833
    %3872 = vmatprep.subr.bf16.mxu0 0
    %3873 = vmatpush1.bf16.msra.mxu0 %v3834
    %3874 = vmatprep.subr.bf16.mxu0 0
    %3875 = vmatpush1.bf16.msra.mxu0 %v3835
    %3876 = vmatprep.subr.bf16.mxu0 0
    %3877 = vmatpush1.bf16.msra.mxu0 %v3836
    %3878 = vmatprep.subr.bf16.mxu0 0
    %3879 = vmatpush1.bf16.msra.mxu0 %v3837
    %3880 = vmatprep.subr.bf16.mxu0 0
    %3881 = vmatpush1.bf16.msra.mxu0 %v3838
    %3882 = vmatprep.subr.bf16.mxu0 0
    %3883 = vmatpush1.bf16.msra.mxu0 %v3839
    %3884 = vmatprep.subr.bf16.mxu0 0
    %3885 = vmatpush1.bf16.msra.mxu0 %v3840
    %3886 = vmatprep.subr.bf16.mxu0 0
    %3887 = vmatpush1.bf16.msra.mxu0 %v3841
    %3888 = vmatprep.subr.bf16.mxu0 0
    %3889 = vmatpush1.bf16.msra.mxu0 %v3842
    %3890 = vmatprep.subr.bf16.mxu0 0
    %3891 = vmatpush1.bf16.msra.mxu0 %v3843
    %3892 = vmatprep.mubr.bf16.mxu0 %v3761
    %3893 = vmatmul.mubr.bf16.gmra.mrb[0].mxu0 %v3760
    %v3894 = vpop.f32.mrb[0].mxu0
    %v3895 = vadd.f32 0.0, %v3894
    %v3896 = vpop.f32.mrb[0].mxu0
    %v3897 = vpop.f32.mrb[0].mxu0
    %v3898 = vpop.f32.mrb[0].mxu0
    %3899 = vdwg.mxu0
    %v3900 = vadd.f32 %v3727, %v3895
    %v3901 = vld [vmem:[%s1830] sm:$0xf]
    %v3902 = vld [vmem:[%s1830 + $0x4] sm:$0xf]
    %v3903 = vld [vmem:[%s1830 + $0x8] sm:$0xf]
    %v3904 = vld [vmem:[%s1830 + $0xc] sm:$0xf]
    %v3905 = vld [vmem:[%s1830 + $0x10] sm:$0xf]
    %v3906 = vld [vmem:[%s1830 + $0x14] sm:$0xf]
    %v3907 = vld [vmem:[%s1830 + $0x18] sm:$0xf]
    %v3908 = vld [vmem:[%s1830 + $0x1c] sm:$0xf]
    %v3909 = vld [vmem:[%s1830 + $0x20] sm:$0xf]
    %v3910 = vld [vmem:[%s1830 + $0x24] sm:$0xf]
    %v3911 = vld [vmem:[%s1830 + $0x28] sm:$0xf]
    %v3912 = vld [vmem:[%s1830 + $0x2c] sm:$0xf]
    %v3913 = vld [vmem:[%s1830 + $0x30] sm:$0xf]
    %v3914 = vld [vmem:[%s1830 + $0x34] sm:$0xf]
    %v3915 = vld [vmem:[%s1830 + $0x38] sm:$0xf]
    %v3916 = vld [vmem:[%s1830 + $0x3c] sm:$0xf]
    %v3917 = vld [vmem:[%s1830 + $0x40] sm:$0xf]
    %v3918 = vld [vmem:[%s1830 + $0x44] sm:$0xf]
    %v3919 = vld [vmem:[%s1830 + $0x48] sm:$0xf]
    %v3920 = vld [vmem:[%s1830 + $0x4c] sm:$0xf]
    %v3921 = vld [vmem:[%s1830 + $0x50] sm:$0xf]
    %v3922 = vld [vmem:[%s1830 + $0x54] sm:$0xf]
    %v3923 = vld [vmem:[%s1830 + $0x58] sm:$0xf]
    %v3924 = vld [vmem:[%s1830 + $0x5c] sm:$0xf]
    %v3925 = vld [vmem:[%s1830 + $0x60] sm:$0xf]
    %v3926 = vld [vmem:[%s1830 + $0x64] sm:$0xf]
    %v3927 = vld [vmem:[%s1830 + $0x68] sm:$0xf]
    %v3928 = vld [vmem:[%s1830 + $0x6c] sm:$0xf]
    %v3929 = vld [vmem:[%s1830 + $0x70] sm:$0xf]
    %v3930 = vld [vmem:[%s1830 + $0x74] sm:$0xf]
    %v3931 = vld [vmem:[%s1830 + $0x78] sm:$0xf]
    %v3932 = vld [vmem:[%s1830 + $0x7c] sm:$0xf]
    %v3933 = vrot.slane %v3414, 3
    %v3934 = vrot.slane %v3415, 3
    %v3969 = vunpack.c.l.b16 %v3901
    %v3970 = vunpack.c.l.b16 %v3902
    %v3971 = vunpack.c.l.b16 %v3903
    %v3972 = vunpack.c.l.b16 %v3904
    %v3973 = vunpack.c.l.b16 %v3905
    %v3974 = vunpack.c.l.b16 %v3906
    %v3975 = vunpack.c.l.b16 %v3907
    %v3976 = vunpack.c.l.b16 %v3908
    %v3977 = vunpack.c.l.b16 %v3909
    %v3978 = vunpack.c.l.b16 %v3910
    %v3979 = vunpack.c.l.b16 %v3911
    %v3980 = vunpack.c.l.b16 %v3912
    %v3981 = vunpack.c.l.b16 %v3913
    %v3982 = vunpack.c.l.b16 %v3914
    %v3983 = vunpack.c.l.b16 %v3915
    %v3984 = vunpack.c.l.b16 %v3916
    %v3985 = vunpack.c.l.b16 %v3917
    %v3986 = vunpack.c.l.b16 %v3918
    %v3987 = vunpack.c.l.b16 %v3919
    %v3988 = vunpack.c.l.b16 %v3920
    %v3989 = vunpack.c.l.b16 %v3921
    %v3990 = vunpack.c.l.b16 %v3922
    %v3991 = vunpack.c.l.b16 %v3923
    %v3992 = vunpack.c.l.b16 %v3924
    %v3993 = vunpack.c.l.b16 %v3925
    %v3994 = vunpack.c.l.b16 %v3926
    %v3995 = vunpack.c.l.b16 %v3927
    %v3996 = vunpack.c.l.b16 %v3928
    %v3997 = vunpack.c.l.b16 %v3929
    %v3998 = vunpack.c.l.b16 %v3930
    %v3999 = vunpack.c.l.b16 %v3931
    %v4000 = vunpack.c.l.b16 %v3932
    %v4001 = vpack.c.b16 %v3970, %v3969
    %v4002 = vpack.c.b16 %v3972, %v3971
    %v4003 = vpack.c.b16 %v3974, %v3973
    %v4004 = vpack.c.b16 %v3976, %v3975
    %v4005 = vpack.c.b16 %v3978, %v3977
    %v4006 = vpack.c.b16 %v3980, %v3979
    %v4007 = vpack.c.b16 %v3982, %v3981
    %v4008 = vpack.c.b16 %v3984, %v3983
    %v4009 = vpack.c.b16 %v3986, %v3985
    %v4010 = vpack.c.b16 %v3988, %v3987
    %v4011 = vpack.c.b16 %v3990, %v3989
    %v4012 = vpack.c.b16 %v3992, %v3991
    %v4013 = vpack.c.b16 %v3994, %v3993
    %v4014 = vpack.c.b16 %v3996, %v3995
    %v4015 = vpack.c.b16 %v3998, %v3997
    %v4016 = vpack.c.b16 %v4000, %v3999
    %4033 = vmatprep.subr.bf16.mxu0 0
    %4034 = vmatpush1.bf16.msra.mxu0 %v4001
    %4035 = vmatprep.subr.bf16.mxu0 0
    %4036 = vmatpush1.bf16.msra.mxu0 %v4002
    %4037 = vmatprep.subr.bf16.mxu0 0
    %4038 = vmatpush1.bf16.msra.mxu0 %v4003
    %4039 = vmatprep.subr.bf16.mxu0 0
    %4040 = vmatpush1.bf16.msra.mxu0 %v4004
    %4041 = vmatprep.subr.bf16.mxu0 0
    %4042 = vmatpush1.bf16.msra.mxu0 %v4005
    %4043 = vmatprep.subr.bf16.mxu0 0
    %4044 = vmatpush1.bf16.msra.mxu0 %v4006
    %4045 = vmatprep.subr.bf16.mxu0 0
    %4046 = vmatpush1.bf16.msra.mxu0 %v4007
    %4047 = vmatprep.subr.bf16.mxu0 0
    %4048 = vmatpush1.bf16.msra.mxu0 %v4008
    %4049 = vmatprep.subr.bf16.mxu0 0
    %4050 = vmatpush1.bf16.msra.mxu0 %v4009
    %4051 = vmatprep.subr.bf16.mxu0 0
    %4052 = vmatpush1.bf16.msra.mxu0 %v4010
    %4053 = vmatprep.subr.bf16.mxu0 0
    %4054 = vmatpush1.bf16.msra.mxu0 %v4011
    %4055 = vmatprep.subr.bf16.mxu0 0
    %4056 = vmatpush1.bf16.msra.mxu0 %v4012
    %4057 = vmatprep.subr.bf16.mxu0 0
    %4058 = vmatpush1.bf16.msra.mxu0 %v4013
    %4059 = vmatprep.subr.bf16.mxu0 0
    %4060 = vmatpush1.bf16.msra.mxu0 %v4014
    %4061 = vmatprep.subr.bf16.mxu0 0
    %4062 = vmatpush1.bf16.msra.mxu0 %v4015
    %4063 = vmatprep.subr.bf16.mxu0 0
    %4064 = vmatpush1.bf16.msra.mxu0 %v4016
    %4065 = vmatprep.mubr.bf16.mxu0 %v3934
    %4066 = vmatmul.mubr.bf16.gmra.mrb[0].mxu0 %v3933
    %v4067 = vpop.f32.mrb[0].mxu0
    %v4068 = vadd.f32 0.0, %v4067
    %v4069 = vpop.f32.mrb[0].mxu0
    %v4070 = vpop.f32.mrb[0].mxu0
    %v4071 = vpop.f32.mrb[0].mxu0
    %4072 = vdwg.mxu0
    %v4073 = vadd.f32 %v3900, %v4068
    %v4074 = vld [vmem:[%s2004] sm:$0xf]
    %v4075 = vld [vmem:[%s2004 + $0x4] sm:$0xf]
    %v4076 = vld [vmem:[%s2004 + $0x8] sm:$0xf]
    %v4077 = vld [vmem:[%s2004 + $0xc] sm:$0xf]
    %v4078 = vld [vmem:[%s2004 + $0x10] sm:$0xf]
    %v4079 = vld [vmem:[%s2004 + $0x14] sm:$0xf]
    %v4080 = vld [vmem:[%s2004 + $0x18] sm:$0xf]
    %v4081 = vld [vmem:[%s2004 + $0x1c] sm:$0xf]
    %v4082 = vld [vmem:[%s2004 + $0x20] sm:$0xf]
    %v4083 = vld [vmem:[%s2004 + $0x24] sm:$0xf]
    %v4084 = vld [vmem:[%s2004 + $0x28] sm:$0xf]
    %v4085 = vld [vmem:[%s2004 + $0x2c] sm:$0xf]
    %v4086 = vld [vmem:[%s2004 + $0x30] sm:$0xf]
    %v4087 = vld [vmem:[%s2004 + $0x34] sm:$0xf]
    %v4088 = vld [vmem:[%s2004 + $0x38] sm:$0xf]
    %v4089 = vld [vmem:[%s2004 + $0x3c] sm:$0xf]
    %v4090 = vld [vmem:[%s2004 + $0x40] sm:$0xf]
    %v4091 = vld [vmem:[%s2004 + $0x44] sm:$0xf]
    %v4092 = vld [vmem:[%s2004 + $0x48] sm:$0xf]
    %v4093 = vld [vmem:[%s2004 + $0x4c] sm:$0xf]
    %v4094 = vld [vmem:[%s2004 + $0x50] sm:$0xf]
    %v4095 = vld [vmem:[%s2004 + $0x54] sm:$0xf]
    %v4096 = vld [vmem:[%s2004 + $0x58] sm:$0xf]
    %v4097 = vld [vmem:[%s2004 + $0x5c] sm:$0xf]
    %v4098 = vld [vmem:[%s2004 + $0x60] sm:$0xf]
    %v4099 = vld [vmem:[%s2004 + $0x64] sm:$0xf]
    %v4100 = vld [vmem:[%s2004 + $0x68] sm:$0xf]
    %v4101 = vld [vmem:[%s2004 + $0x6c] sm:$0xf]
    %v4102 = vld [vmem:[%s2004 + $0x70] sm:$0xf]
    %v4103 = vld [vmem:[%s2004 + $0x74] sm:$0xf]
    %v4104 = vld [vmem:[%s2004 + $0x78] sm:$0xf]
    %v4105 = vld [vmem:[%s2004 + $0x7c] sm:$0xf]
    %v4106 = vpack.c.bf16 %v3379, %v3379
    %v4107 = vpack.c.bf16 %v3380, %v3380
    %v4140 = vunpack.c.l.b16 %v4074
    %v4141 = vunpack.c.l.b16 %v4075
    %v4142 = vunpack.c.l.b16 %v4076
    %v4143 = vunpack.c.l.b16 %v4077
    %v4144 = vunpack.c.l.b16 %v4078
    %v4145 = vunpack.c.l.b16 %v4079
    %v4146 = vunpack.c.l.b16 %v4080
    %v4147 = vunpack.c.l.b16 %v4081
    %v4148 = vunpack.c.l.b16 %v4082
    %v4149 = vunpack.c.l.b16 %v4083
    %v4150 = vunpack.c.l.b16 %v4084
    %v4151 = vunpack.c.l.b16 %v4085
    %v4152 = vunpack.c.l.b16 %v4086
    %v4153 = vunpack.c.l.b16 %v4087
    %v4154 = vunpack.c.l.b16 %v4088
    %v4155 = vunpack.c.l.b16 %v4089
    %v4156 = vunpack.c.l.b16 %v4090
    %v4157 = vunpack.c.l.b16 %v4091
    %v4158 = vunpack.c.l.b16 %v4092
    %v4159 = vunpack.c.l.b16 %v4093
    %v4160 = vunpack.c.l.b16 %v4094
    %v4161 = vunpack.c.l.b16 %v4095
    %v4162 = vunpack.c.l.b16 %v4096
    %v4163 = vunpack.c.l.b16 %v4097
    %v4164 = vunpack.c.l.b16 %v4098
    %v4165 = vunpack.c.l.b16 %v4099
    %v4166 = vunpack.c.l.b16 %v4100
    %v4167 = vunpack.c.l.b16 %v4101
    %v4168 = vunpack.c.l.b16 %v4102
    %v4169 = vunpack.c.l.b16 %v4103
    %v4170 = vunpack.c.l.b16 %v4104
    %v4171 = vunpack.c.l.b16 %v4105
    %v4172 = vpack.c.b16 %v4141, %v4140
    %v4173 = vpack.c.b16 %v4143, %v4142
    %v4174 = vpack.c.b16 %v4145, %v4144
    %v4175 = vpack.c.b16 %v4147, %v4146
    %v4176 = vpack.c.b16 %v4149, %v4148
    %v4177 = vpack.c.b16 %v4151, %v4150
    %v4178 = vpack.c.b16 %v4153, %v4152
    %v4179 = vpack.c.b16 %v4155, %v4154
    %v4180 = vpack.c.b16 %v4157, %v4156
    %v4181 = vpack.c.b16 %v4159, %v4158
    %v4182 = vpack.c.b16 %v4161, %v4160
    %v4183 = vpack.c.b16 %v4163, %v4162
    %v4184 = vpack.c.b16 %v4165, %v4164
    %v4185 = vpack.c.b16 %v4167, %v4166
    %v4186 = vpack.c.b16 %v4169, %v4168
    %v4187 = vpack.c.b16 %v4171, %v4170
    %4204 = vmatprep.subr.bf16.mxu0 0
    %4205 = vmatpush1.bf16.msra.mxu0 %v4172
    %4206 = vmatprep.subr.bf16.mxu0 0
    %4207 = vmatpush1.bf16.msra.mxu0 %v4173
    %4208 = vmatprep.subr.bf16.mxu0 0
    %4209 = vmatpush1.bf16.msra.mxu0 %v4174
    %4210 = vmatprep.subr.bf16.mxu0 0
    %4211 = vmatpush1.bf16.msra.mxu0 %v4175
    %4212 = vmatprep.subr.bf16.mxu0 0
    %4213 = vmatpush1.bf16.msra.mxu0 %v4176
    %4214 = vmatprep.subr.bf16.mxu0 0
    %4215 = vmatpush1.bf16.msra.mxu0 %v4177
    %4216 = vmatprep.subr.bf16.mxu0 0
    %4217 = vmatpush1.bf16.msra.mxu0 %v4178
    %4218 = vmatprep.subr.bf16.mxu0 0
    %4219 = vmatpush1.bf16.msra.mxu0 %v4179
    %4220 = vmatprep.subr.bf16.mxu0 0
    %4221 = vmatpush1.bf16.msra.mxu0 %v4180
    %4222 = vmatprep.subr.bf16.mxu0 0
    %4223 = vmatpush1.bf16.msra.mxu0 %v4181
    %4224 = vmatprep.subr.bf16.mxu0 0
    %4225 = vmatpush1.bf16.msra.mxu0 %v4182
    %4226 = vmatprep.subr.bf16.mxu0 0
    %4227 = vmatpush1.bf16.msra.mxu0 %v4183
    %4228 = vmatprep.subr.bf16.mxu0 0
    %4229 = vmatpush1.bf16.msra.mxu0 %v4184
    %4230 = vmatprep.subr.bf16.mxu0 0
    %4231 = vmatpush1.bf16.msra.mxu0 %v4185
    %4232 = vmatprep.subr.bf16.mxu0 0
    %4233 = vmatpush1.bf16.msra.mxu0 %v4186
    %4234 = vmatprep.subr.bf16.mxu0 0
    %4235 = vmatpush1.bf16.msra.mxu0 %v4187
    %4236 = vmatprep.mubr.bf16.mxu0 %v4107
    %4237 = vmatmul.mubr.bf16.gmra.mrb[0].mxu0 %v4106
    %v4238 = vpop.f32.mrb[0].mxu0
    %v4239 = vadd.f32 0.0, %v4238
    %v4240 = vpop.f32.mrb[0].mxu0
    %v4241 = vpop.f32.mrb[0].mxu0
    %v4242 = vpop.f32.mrb[0].mxu0
    %4243 = vdwg.mxu0
    %v4244 = vadd.f32 %v4073, %v4239
    %v4245 = vld [vmem:[%s2176] sm:$0xf]
    %v4246 = vld [vmem:[%s2176 + $0x4] sm:$0xf]
    %v4247 = vld [vmem:[%s2176 + $0x8] sm:$0xf]
    %v4248 = vld [vmem:[%s2176 + $0xc] sm:$0xf]
    %v4249 = vld [vmem:[%s2176 + $0x10] sm:$0xf]
    %v4250 = vld [vmem:[%s2176 + $0x14] sm:$0xf]
    %v4251 = vld [vmem:[%s2176 + $0x18] sm:$0xf]
    %v4252 = vld [vmem:[%s2176 + $0x1c] sm:$0xf]
    %v4253 = vld [vmem:[%s2176 + $0x20] sm:$0xf]
    %v4254 = vld [vmem:[%s2176 + $0x24] sm:$0xf]
    %v4255 = vld [vmem:[%s2176 + $0x28] sm:$0xf]
    %v4256 = vld [vmem:[%s2176 + $0x2c] sm:$0xf]
    %v4257 = vld [vmem:[%s2176 + $0x30] sm:$0xf]
    %v4258 = vld [vmem:[%s2176 + $0x34] sm:$0xf]
    %v4259 = vld [vmem:[%s2176 + $0x38] sm:$0xf]
    %v4260 = vld [vmem:[%s2176 + $0x3c] sm:$0xf]
    %v4261 = vld [vmem:[%s2176 + $0x40] sm:$0xf]
    %v4262 = vld [vmem:[%s2176 + $0x44] sm:$0xf]
    %v4263 = vld [vmem:[%s2176 + $0x48] sm:$0xf]
    %v4264 = vld [vmem:[%s2176 + $0x4c] sm:$0xf]
    %v4265 = vld [vmem:[%s2176 + $0x50] sm:$0xf]
    %v4266 = vld [vmem:[%s2176 + $0x54] sm:$0xf]
    %v4267 = vld [vmem:[%s2176 + $0x58] sm:$0xf]
    %v4268 = vld [vmem:[%s2176 + $0x5c] sm:$0xf]
    %v4269 = vld [vmem:[%s2176 + $0x60] sm:$0xf]
    %v4270 = vld [vmem:[%s2176 + $0x64] sm:$0xf]
    %v4271 = vld [vmem:[%s2176 + $0x68] sm:$0xf]
    %v4272 = vld [vmem:[%s2176 + $0x6c] sm:$0xf]
    %v4273 = vld [vmem:[%s2176 + $0x70] sm:$0xf]
    %v4274 = vld [vmem:[%s2176 + $0x74] sm:$0xf]
    %v4275 = vld [vmem:[%s2176 + $0x78] sm:$0xf]
    %v4276 = vld [vmem:[%s2176 + $0x7c] sm:$0xf]
    %v4279 = vrot.slane %v4106, 1
    %v4280 = vrot.slane %v4107, 1
    %v4315 = vunpack.c.l.b16 %v4245
    %v4316 = vunpack.c.l.b16 %v4246
    %v4317 = vunpack.c.l.b16 %v4247
    %v4318 = vunpack.c.l.b16 %v4248
    %v4319 = vunpack.c.l.b16 %v4249
    %v4320 = vunpack.c.l.b16 %v4250
    %v4321 = vunpack.c.l.b16 %v4251
    %v4322 = vunpack.c.l.b16 %v4252
    %v4323 = vunpack.c.l.b16 %v4253
    %v4324 = vunpack.c.l.b16 %v4254
    %v4325 = vunpack.c.l.b16 %v4255
    %v4326 = vunpack.c.l.b16 %v4256
    %v4327 = vunpack.c.l.b16 %v4257
    %v4328 = vunpack.c.l.b16 %v4258
    %v4329 = vunpack.c.l.b16 %v4259
    %v4330 = vunpack.c.l.b16 %v4260
    %v4331 = vunpack.c.l.b16 %v4261
    %v4332 = vunpack.c.l.b16 %v4262
    %v4333 = vunpack.c.l.b16 %v4263
    %v4334 = vunpack.c.l.b16 %v4264
    %v4335 = vunpack.c.l.b16 %v4265
    %v4336 = vunpack.c.l.b16 %v4266
    %v4337 = vunpack.c.l.b16 %v4267
    %v4338 = vunpack.c.l.b16 %v4268
    %v4339 = vunpack.c.l.b16 %v4269
    %v4340 = vunpack.c.l.b16 %v4270
    %v4341 = vunpack.c.l.b16 %v4271
    %v4342 = vunpack.c.l.b16 %v4272
    %v4343 = vunpack.c.l.b16 %v4273
    %v4344 = vunpack.c.l.b16 %v4274
    %v4345 = vunpack.c.l.b16 %v4275
    %v4346 = vunpack.c.l.b16 %v4276
    %v4347 = vpack.c.b16 %v4316, %v4315
    %v4348 = vpack.c.b16 %v4318, %v4317
    %v4349 = vpack.c.b16 %v4320, %v4319
    %v4350 = vpack.c.b16 %v4322, %v4321
    %v4351 = vpack.c.b16 %v4324, %v4323
    %v4352 = vpack.c.b16 %v4326, %v4325
    %v4353 = vpack.c.b16 %v4328, %v4327
    %v4354 = vpack.c.b16 %v4330, %v4329
    %v4355 = vpack.c.b16 %v4332, %v4331
    %v4356 = vpack.c.b16 %v4334, %v4333
    %v4357 = vpack.c.b16 %v4336, %v4335
    %v4358 = vpack.c.b16 %v4338, %v4337
    %v4359 = vpack.c.b16 %v4340, %v4339
    %v4360 = vpack.c.b16 %v4342, %v4341
    %v4361 = vpack.c.b16 %v4344, %v4343
    %v4362 = vpack.c.b16 %v4346, %v4345
    %4379 = vmatprep.subr.bf16.mxu0 0
    %4380 = vmatpush1.bf16.msra.mxu0 %v4347
    %4381 = vmatprep.subr.bf16.mxu0 0
    %4382 = vmatpush1.bf16.msra.mxu0 %v4348
    %4383 = vmatprep.subr.bf16.mxu0 0
    %4384 = vmatpush1.bf16.msra.mxu0 %v4349
    %4385 = vmatprep.subr.bf16.mxu0 0
    %4386 = vmatpush1.bf16.msra.mxu0 %v4350
    %4387 = vmatprep.subr.bf16.mxu0 0
    %4388 = vmatpush1.bf16.msra.mxu0 %v4351
    %4389 = vmatprep.subr.bf16.mxu0 0
    %4390 = vmatpush1.bf16.msra.mxu0 %v4352
    %4391 = vmatprep.subr.bf16.mxu0 0
    %4392 = vmatpush1.bf16.msra.mxu0 %v4353
    %4393 = vmatprep.subr.bf16.mxu0 0
    %4394 = vmatpush1.bf16.msra.mxu0 %v4354
    %4395 = vmatprep.subr.bf16.mxu0 0
    %4396 = vmatpush1.bf16.msra.mxu0 %v4355
    %4397 = vmatprep.subr.bf16.mxu0 0
    %4398 = vmatpush1.bf16.msra.mxu0 %v4356
    %4399 = vmatprep.subr.bf16.mxu0 0
    %4400 = vmatpush1.bf16.msra.mxu0 %v4357
    %4401 = vmatprep.subr.bf16.mxu0 0
    %4402 = vmatpush1.bf16.msra.mxu0 %v4358
    %4403 = vmatprep.subr.bf16.mxu0 0
    %4404 = vmatpush1.bf16.msra.mxu0 %v4359
    %4405 = vmatprep.subr.bf16.mxu0 0
    %4406 = vmatpush1.bf16.msra.mxu0 %v4360
    %4407 = vmatprep.subr.bf16.mxu0 0
    %4408 = vmatpush1.bf16.msra.mxu0 %v4361
    %4409 = vmatprep.subr.bf16.mxu0 0
    %4410 = vmatpush1.bf16.msra.mxu0 %v4362
    %4411 = vmatprep.mubr.bf16.mxu0 %v4280
    %4412 = vmatmul.mubr.bf16.gmra.mrb[0].mxu0 %v4279
    %v4413 = vpop.f32.mrb[0].mxu0
    %v4414 = vadd.f32 0.0, %v4413
    %v4415 = vpop.f32.mrb[0].mxu0
    %v4416 = vpop.f32.mrb[0].mxu0
    %v4417 = vpop.f32.mrb[0].mxu0
    %4418 = vdwg.mxu0
    %v4419 = vadd.f32 %v4244, %v4414
    %v4420 = vld [vmem:[%s2352] sm:$0xf]
    %v4421 = vld [vmem:[%s2352 + $0x4] sm:$0xf]
    %v4422 = vld [vmem:[%s2352 + $0x8] sm:$0xf]
    %v4423 = vld [vmem:[%s2352 + $0xc] sm:$0xf]
    %v4424 = vld [vmem:[%s2352 + $0x10] sm:$0xf]
    %v4425 = vld [vmem:[%s2352 + $0x14] sm:$0xf]
    %v4426 = vld [vmem:[%s2352 + $0x18] sm:$0xf]
    %v4427 = vld [vmem:[%s2352 + $0x1c] sm:$0xf]
    %v4428 = vld [vmem:[%s2352 + $0x20] sm:$0xf]
    %v4429 = vld [vmem:[%s2352 + $0x24] sm:$0xf]
    %v4430 = vld [vmem:[%s2352 + $0x28] sm:$0xf]
    %v4431 = vld [vmem:[%s2352 + $0x2c] sm:$0xf]
    %v4432 = vld [vmem:[%s2352 + $0x30] sm:$0xf]
    %v4433 = vld [vmem:[%s2352 + $0x34] sm:$0xf]
    %v4434 = vld [vmem:[%s2352 + $0x38] sm:$0xf]
    %v4435 = vld [vmem:[%s2352 + $0x3c] sm:$0xf]
    %v4436 = vld [vmem:[%s2352 + $0x40] sm:$0xf]
    %v4437 = vld [vmem:[%s2352 + $0x44] sm:$0xf]
    %v4438 = vld [vmem:[%s2352 + $0x48] sm:$0xf]
    %v4439 = vld [vmem:[%s2352 + $0x4c] sm:$0xf]
    %v4440 = vld [vmem:[%s2352 + $0x50] sm:$0xf]
    %v4441 = vld [vmem:[%s2352 + $0x54] sm:$0xf]
    %v4442 = vld [vmem:[%s2352 + $0x58] sm:$0xf]
    %v4443 = vld [vmem:[%s2352 + $0x5c] sm:$0xf]
    %v4444 = vld [vmem:[%s2352 + $0x60] sm:$0xf]
    %v4445 = vld [vmem:[%s2352 + $0x64] sm:$0xf]
    %v4446 = vld [vmem:[%s2352 + $0x68] sm:$0xf]
    %v4447 = vld [vmem:[%s2352 + $0x6c] sm:$0xf]
    %v4448 = vld [vmem:[%s2352 + $0x70] sm:$0xf]
    %v4449 = vld [vmem:[%s2352 + $0x74] sm:$0xf]
    %v4450 = vld [vmem:[%s2352 + $0x78] sm:$0xf]
    %v4451 = vld [vmem:[%s2352 + $0x7c] sm:$0xf]
    %v4452 = vrot.slane %v4106, 2
    %v4453 = vrot.slane %v4107, 2
    %v4488 = vunpack.c.l.b16 %v4420
    %v4489 = vunpack.c.l.b16 %v4421
    %v4490 = vunpack.c.l.b16 %v4422
    %v4491 = vunpack.c.l.b16 %v4423
    %v4492 = vunpack.c.l.b16 %v4424
    %v4493 = vunpack.c.l.b16 %v4425
    %v4494 = vunpack.c.l.b16 %v4426
    %v4495 = vunpack.c.l.b16 %v4427
    %v4496 = vunpack.c.l.b16 %v4428
    %v4497 = vunpack.c.l.b16 %v4429
    %v4498 = vunpack.c.l.b16 %v4430
    %v4499 = vunpack.c.l.b16 %v4431
    %v4500 = vunpack.c.l.b16 %v4432
    %v4501 = vunpack.c.l.b16 %v4433
    %v4502 = vunpack.c.l.b16 %v4434
    %v4503 = vunpack.c.l.b16 %v4435
    %v4504 = vunpack.c.l.b16 %v4436
    %v4505 = vunpack.c.l.b16 %v4437
    %v4506 = vunpack.c.l.b16 %v4438
    %v4507 = vunpack.c.l.b16 %v4439
    %v4508 = vunpack.c.l.b16 %v4440
    %v4509 = vunpack.c.l.b16 %v4441
    %v4510 = vunpack.c.l.b16 %v4442
    %v4511 = vunpack.c.l.b16 %v4443
    %v4512 = vunpack.c.l.b16 %v4444
    %v4513 = vunpack.c.l.b16 %v4445
    %v4514 = vunpack.c.l.b16 %v4446
    %v4515 = vunpack.c.l.b16 %v4447
    %v4516 = vunpack.c.l.b16 %v4448
    %v4517 = vunpack.c.l.b16 %v4449
    %v4518 = vunpack.c.l.b16 %v4450
    %v4519 = vunpack.c.l.b16 %v4451
    %v4520 = vpack.c.b16 %v4489, %v4488
    %v4521 = vpack.c.b16 %v4491, %v4490
    %v4522 = vpack.c.b16 %v4493, %v4492
    %v4523 = vpack.c.b16 %v4495, %v4494
    %v4524 = vpack.c.b16 %v4497, %v4496
    %v4525 = vpack.c.b16 %v4499, %v4498
    %v4526 = vpack.c.b16 %v4501, %v4500
    %v4527 = vpack.c.b16 %v4503, %v4502
    %v4528 = vpack.c.b16 %v4505, %v4504
    %v4529 = vpack.c.b16 %v4507, %v4506
    %v4530 = vpack.c.b16 %v4509, %v4508
    %v4531 = vpack.c.b16 %v4511, %v4510
    %v4532 = vpack.c.b16 %v4513, %v4512
    %v4533 = vpack.c.b16 %v4515, %v4514
    %v4534 = vpack.c.b16 %v4517, %v4516
    %v4535 = vpack.c.b16 %v4519, %v4518
    %4552 = vmatprep.subr.bf16.mxu0 0
    %4553 = vmatpush1.bf16.msra.mxu0 %v4520
    %4554 = vmatprep.subr.bf16.mxu0 0
    %4555 = vmatpush1.bf16.msra.mxu0 %v4521
    %4556 = vmatprep.subr.bf16.mxu0 0
    %4557 = vmatpush1.bf16.msra.mxu0 %v4522
    %4558 = vmatprep.subr.bf16.mxu0 0
    %4559 = vmatpush1.bf16.msra.mxu0 %v4523
    %4560 = vmatprep.subr.bf16.mxu0 0
    %4561 = vmatpush1.bf16.msra.mxu0 %v4524
    %4562 = vmatprep.subr.bf16.mxu0 0
    %4563 = vmatpush1.bf16.msra.mxu0 %v4525
    %4564 = vmatprep.subr.bf16.mxu0 0
    %4565 = vmatpush1.bf16.msra.mxu0 %v4526
    %4566 = vmatprep.subr.bf16.mxu0 0
    %4567 = vmatpush1.bf16.msra.mxu0 %v4527
    %4568 = vmatprep.subr.bf16.mxu0 0
    %4569 = vmatpush1.bf16.msra.mxu0 %v4528
    %4570 = vmatprep.subr.bf16.mxu0 0
    %4571 = vmatpush1.bf16.msra.mxu0 %v4529
    %4572 = vmatprep.subr.bf16.mxu0 0
    %4573 = vmatpush1.bf16.msra.mxu0 %v4530
    %4574 = vmatprep.subr.bf16.mxu0 0
    %4575 = vmatpush1.bf16.msra.mxu0 %v4531
    %4576 = vmatprep.subr.bf16.mxu0 0
    %4577 = vmatpush1.bf16.msra.mxu0 %v4532
    %4578 = vmatprep.subr.bf16.mxu0 0
    %4579 = vmatpush1.bf16.msra.mxu0 %v4533
    %4580 = vmatprep.subr.bf16.mxu0 0
    %4581 = vmatpush1.bf16.msra.mxu0 %v4534
    %4582 = vmatprep.subr.bf16.mxu0 0
    %4583 = vmatpush1.bf16.msra.mxu0 %v4535
    %4584 = vmatprep.mubr.bf16.mxu0 %v4453
    %4585 = vmatmul.mubr.bf16.gmra.mrb[0].mxu0 %v4452
    %v4586 = vpop.f32.mrb[0].mxu0
    %v4587 = vadd.f32 0.0, %v4586
    %v4588 = vpop.f32.mrb[0].mxu0
    %v4589 = vpop.f32.mrb[0].mxu0
    %v4590 = vpop.f32.mrb[0].mxu0
    %4591 = vdwg.mxu0
    %v4592 = vadd.f32 %v4419, %v4587
    %v4593 = vld [vmem:[%s2526] sm:$0xf]
    %v4594 = vld [vmem:[%s2526 + $0x4] sm:$0xf]
    %v4595 = vld [vmem:[%s2526 + $0x8] sm:$0xf]
    %v4596 = vld [vmem:[%s2526 + $0xc] sm:$0xf]
    %v4597 = vld [vmem:[%s2526 + $0x10] sm:$0xf]
    %v4598 = vld [vmem:[%s2526 + $0x14] sm:$0xf]
    %v4599 = vld [vmem:[%s2526 + $0x18] sm:$0xf]
    %v4600 = vld [vmem:[%s2526 + $0x1c] sm:$0xf]
    %v4601 = vld [vmem:[%s2526 + $0x20] sm:$0xf]
    %v4602 = vld [vmem:[%s2526 + $0x24] sm:$0xf]
    %v4603 = vld [vmem:[%s2526 + $0x28] sm:$0xf]
    %v4604 = vld [vmem:[%s2526 + $0x2c] sm:$0xf]
    %v4605 = vld [vmem:[%s2526 + $0x30] sm:$0xf]
    %v4606 = vld [vmem:[%s2526 + $0x34] sm:$0xf]
    %v4607 = vld [vmem:[%s2526 + $0x38] sm:$0xf]
    %v4608 = vld [vmem:[%s2526 + $0x3c] sm:$0xf]
    %v4609 = vld [vmem:[%s2526 + $0x40] sm:$0xf]
    %v4610 = vld [vmem:[%s2526 + $0x44] sm:$0xf]
    %v4611 = vld [vmem:[%s2526 + $0x48] sm:$0xf]
    %v4612 = vld [vmem:[%s2526 + $0x4c] sm:$0xf]
    %v4613 = vld [vmem:[%s2526 + $0x50] sm:$0xf]
    %v4614 = vld [vmem:[%s2526 + $0x54] sm:$0xf]
    %v4615 = vld [vmem:[%s2526 + $0x58] sm:$0xf]
    %v4616 = vld [vmem:[%s2526 + $0x5c] sm:$0xf]
    %v4617 = vld [vmem:[%s2526 + $0x60] sm:$0xf]
    %v4618 = vld [vmem:[%s2526 + $0x64] sm:$0xf]
    %v4619 = vld [vmem:[%s2526 + $0x68] sm:$0xf]
    %v4620 = vld [vmem:[%s2526 + $0x6c] sm:$0xf]
    %v4621 = vld [vmem:[%s2526 + $0x70] sm:$0xf]
    %v4622 = vld [vmem:[%s2526 + $0x74] sm:$0xf]
    %v4623 = vld [vmem:[%s2526 + $0x78] sm:$0xf]
    %v4624 = vld [vmem:[%s2526 + $0x7c] sm:$0xf]
    %v4625 = vrot.slane %v4106, 3
    %v4626 = vrot.slane %v4107, 3
    %v4661 = vunpack.c.l.b16 %v4593
    %v4662 = vunpack.c.l.b16 %v4594
    %v4663 = vunpack.c.l.b16 %v4595
    %v4664 = vunpack.c.l.b16 %v4596
    %v4665 = vunpack.c.l.b16 %v4597
    %v4666 = vunpack.c.l.b16 %v4598
    %v4667 = vunpack.c.l.b16 %v4599
    %v4668 = vunpack.c.l.b16 %v4600
    %v4669 = vunpack.c.l.b16 %v4601
    %v4670 = vunpack.c.l.b16 %v4602
    %v4671 = vunpack.c.l.b16 %v4603
    %v4672 = vunpack.c.l.b16 %v4604
    %v4673 = vunpack.c.l.b16 %v4605
    %v4674 = vunpack.c.l.b16 %v4606
    %v4675 = vunpack.c.l.b16 %v4607
    %v4676 = vunpack.c.l.b16 %v4608
    %v4677 = vunpack.c.l.b16 %v4609
    %v4678 = vunpack.c.l.b16 %v4610
    %v4679 = vunpack.c.l.b16 %v4611
    %v4680 = vunpack.c.l.b16 %v4612
    %v4681 = vunpack.c.l.b16 %v4613
    %v4682 = vunpack.c.l.b16 %v4614
    %v4683 = vunpack.c.l.b16 %v4615
    %v4684 = vunpack.c.l.b16 %v4616
    %v4685 = vunpack.c.l.b16 %v4617
    %v4686 = vunpack.c.l.b16 %v4618
    %v4687 = vunpack.c.l.b16 %v4619
    %v4688 = vunpack.c.l.b16 %v4620
    %v4689 = vunpack.c.l.b16 %v4621
    %v4690 = vunpack.c.l.b16 %v4622
    %v4691 = vunpack.c.l.b16 %v4623
    %v4692 = vunpack.c.l.b16 %v4624
    %v4693 = vpack.c.b16 %v4662, %v4661
    %v4694 = vpack.c.b16 %v4664, %v4663
    %v4695 = vpack.c.b16 %v4666, %v4665
    %v4696 = vpack.c.b16 %v4668, %v4667
    %v4697 = vpack.c.b16 %v4670, %v4669
    %v4698 = vpack.c.b16 %v4672, %v4671
    %v4699 = vpack.c.b16 %v4674, %v4673
    %v4700 = vpack.c.b16 %v4676, %v4675
    %v4701 = vpack.c.b16 %v4678, %v4677
    %v4702 = vpack.c.b16 %v4680, %v4679
    %v4703 = vpack.c.b16 %v4682, %v4681
    %v4704 = vpack.c.b16 %v4684, %v4683
    %v4705 = vpack.c.b16 %v4686, %v4685
    %v4706 = vpack.c.b16 %v4688, %v4687
    %v4707 = vpack.c.b16 %v4690, %v4689
    %v4708 = vpack.c.b16 %v4692, %v4691
    %4725 = vmatprep.subr.bf16.mxu0 0
    %4726 = vmatpush1.bf16.msra.mxu0 %v4693
    %4727 = vmatprep.subr.bf16.mxu0 0
    %4728 = vmatpush1.bf16.msra.mxu0 %v4694
    %4729 = vmatprep.subr.bf16.mxu0 0
    %4730 = vmatpush1.bf16.msra.mxu0 %v4695
    %4731 = vmatprep.subr.bf16.mxu0 0
    %4732 = vmatpush1.bf16.msra.mxu0 %v4696
    %4733 = vmatprep.subr.bf16.mxu0 0
    %4734 = vmatpush1.bf16.msra.mxu0 %v4697
    %4735 = vmatprep.subr.bf16.mxu0 0
    %4736 = vmatpush1.bf16.msra.mxu0 %v4698
    %4737 = vmatprep.subr.bf16.mxu0 0
    %4738 = vmatpush1.bf16.msra.mxu0 %v4699
    %4739 = vmatprep.subr.bf16.mxu0 0
    %4740 = vmatpush1.bf16.msra.mxu0 %v4700
    %4741 = vmatprep.subr.bf16.mxu0 0
    %4742 = vmatpush1.bf16.msra.mxu0 %v4701
    %4743 = vmatprep.subr.bf16.mxu0 0
    %4744 = vmatpush1.bf16.msra.mxu0 %v4702
    %4745 = vmatprep.subr.bf16.mxu0 0
    %4746 = vmatpush1.bf16.msra.mxu0 %v4703
    %4747 = vmatprep.subr.bf16.mxu0 0
    %4748 = vmatpush1.bf16.msra.mxu0 %v4704
    %4749 = vmatprep.subr.bf16.mxu0 0
    %4750 = vmatpush1.bf16.msra.mxu0 %v4705
    %4751 = vmatprep.subr.bf16.mxu0 0
    %4752 = vmatpush1.bf16.msra.mxu0 %v4706
    %4753 = vmatprep.subr.bf16.mxu0 0
    %4754 = vmatpush1.bf16.msra.mxu0 %v4707
    %4755 = vmatprep.subr.bf16.mxu0 0
    %4756 = vmatpush1.bf16.msra.mxu0 %v4708
    %4757 = vmatprep.mubr.bf16.mxu0 %v4626
    %4758 = vmatmul.mubr.bf16.gmra.mrb[0].mxu0 %v4625
    %v4759 = vpop.f32.mrb[0].mxu0
    %v4760 = vadd.f32 0.0, %v4759
    %v4761 = vpop.f32.mrb[0].mxu0
    %v4762 = vpop.f32.mrb[0].mxu0
    %v4763 = vpop.f32.mrb[0].mxu0
    %4764 = vdwg.mxu0
    %v4765 = vadd.f32 %v4592, %v4760
    %vm4766 = vcmp.gt.f32.partialorder %v4765, 0.0
    %v4767 = vmul.f32 %v4765, 0.01
    %v4768 = vsel %vm4766, %v4765, %v4767
    %4769 = vst.msk [vmem:[#allocation2 + $0x1] sm:$0x1] %vm2703, %v4768
    %v4770 = vld [vmem:[#allocation2] sm:$0x3]
    %v4771 = vld [vmem:[%s3] sm:$0x3]
    %v4772 = vrcp.pop 10.0
    %v4773 = vmul.f32 %v4771, %v4772
    %v4774 = vmul.f32 %v4773, 2.0
    %v4775 = vsub.f32 %v4774, 1.0
    %v4776 = vld [vmem:[#allocation14] sm:$0x1]
    %4778 = vset.pattern.permute.xlu0 0
    %4779 = vperm.xlu0 %4778, %v4775
    %v4780 = vpop.permute.xlu0 %4779
    %v4783 = vlaneseq
    %v4784 = vshrl.u32 %v4783, 7
    %v4785 = vsub.s32 0, %v4784
    %v4786 = vrot.slane %v4776, %v4785
    %v4788 = vmul.f32 %v4780, %v4786
    %v4789 = vld [vmem:[#allocation15] sm:$0x1]
    %v4791 = vlaneseq
    %v4792 = vshrl.u32 %v4791, 7
    %v4793 = vsub.s32 0, %v4792
    %v4794 = vrot.slane %v4789, %v4793
    %v4796 = vadd.f32 %v4788, %v4794
    %vm4797 = vcmp.gt.f32.partialorder %v4796, 0.0
    %v4798 = vmul.f32 %v4796, 0.01
    %v4799 = vsel %vm4797, %v4796, %v4798
    %v4800 = vld [vmem:[#allocation3] sm:$0x3]
    %v4801 = vld [vmem:[#allocation17] sm:$0x1]
    %v4802 = vpack.c.bf16 %v4800, %v4800
    %v4803 = vld [vmem:[#allocation18] sm:$0x1]
    %v4805 = vlaneseq
    %v4806 = vshrl.u32 %v4805, 7
    %v4807 = vsub.s32 0, %v4806
    %v4808 = vrot.slane %v4803, %v4807
    %vm4810 = vcmask 15360
    %v4812 = vsel %vm4810, %v4802, 0
    %vm4814 = vcmask 1040384
    %v4816 = vsel %vm4814, %v4801, 0
    %4818 = vmatprep.subr.bf16.mxu0 0
    %4819 = vmatpush1.bf16.msra.mxu0 %v4816
    %4820 = vmatprep.subr.bf16.mxu0 0
    %4821 = vmatpush1.bf16.msra.mxu0 0
    %4822 = vmatprep.subr.bf16.mxu0 0
    %4823 = vmatpush1.bf16.msra.mxu0 0
    %4824 = vmatprep.subr.bf16.mxu0 0
    %4825 = vmatpush1.bf16.msra.mxu0 0
    %4826 = vmatprep.subr.bf16.mxu0 0
    %4827 = vmatpush1.bf16.msra.mxu0 0
    %4828 = vmatprep.subr.bf16.mxu0 0
    %4829 = vmatpush1.bf16.msra.mxu0 0
    %4830 = vmatprep.subr.bf16.mxu0 0
    %4831 = vmatpush1.bf16.msra.mxu0 0
    %4832 = vmatprep.subr.bf16.mxu0 0
    %4833 = vmatpush1.bf16.msra.mxu0 0
    %4834 = vmatprep.subr.bf16.mxu0 0
    %4835 = vmatpush1.bf16.msra.mxu0 0
    %4836 = vmatprep.subr.bf16.mxu0 0
    %4837 = vmatpush1.bf16.msra.mxu0 0
    %4838 = vmatprep.subr.bf16.mxu0 0
    %4839 = vmatpush1.bf16.msra.mxu0 0
    %4840 = vmatprep.subr.bf16.mxu0 0
    %4841 = vmatpush1.bf16.msra.mxu0 0
    %4842 = vmatprep.subr.bf16.mxu0 0
    %4843 = vmatpush1.bf16.msra.mxu0 0
    %4844 = vmatprep.subr.bf16.mxu0 0
    %4845 = vmatpush1.bf16.msra.mxu0 0
    %4846 = vmatprep.subr.bf16.mxu0 0
    %4847 = vmatpush1.bf16.msra.mxu0 0
    %4848 = vmatprep.subr.bf16.mxu0 0
    %4849 = vmatpush1.bf16.msra.mxu0 0
    %4850 = vmatprep.mubr.bf16.mxu0 0
    %4851 = vmatmul.mubr.bf16.gmra.mrb[0].mxu0 %v4812
    %v4852 = vpop.f32.mrb[0].mxu0
    %v4853 = vadd.f32 %v4808, %v4852
    %v4854 = vpop.f32.mrb[0].mxu0
    %v4855 = vpop.f32.mrb[0].mxu0
    %v4856 = vpop.f32.mrb[0].mxu0
    %4857 = vdwg.mxu0
    %vm4858 = vcmp.gt.f32.partialorder %v4853, 0.0
    %v4859 = vmul.f32 %v4853, 0.01
    %v4860 = vsel %vm4858, %v4853, %v4859
    %v4861 = vld [vmem:[#allocation6] sm:$0x3]
    %v4862 = vld [vmem:[#allocation20] sm:$0x1]
    %v4863 = vpack.c.bf16 %v4861, %v4861
    %v4864 = vld [vmem:[#allocation21] sm:$0x1]
    %v4866 = vlaneseq
    %v4867 = vshrl.u32 %v4866, 7
    %v4868 = vsub.s32 0, %v4867
    %v4869 = vrot.slane %v4864, %v4868
    %v4872 = vsel %vm4810, %v4863, 0
    %v4875 = vsel %vm4814, %v4862, 0
    %4877 = vmatprep.subr.bf16.mxu0 0
    %4878 = vmatpush1.bf16.msra.mxu0 %v4875
    %4879 = vmatprep.subr.bf16.mxu0 0
    %4880 = vmatpush1.bf16.msra.mxu0 0
    %4881 = vmatprep.subr.bf16.mxu0 0
    %4882 = vmatpush1.bf16.msra.mxu0 0
    %4883 = vmatprep.subr.bf16.mxu0 0
    %4884 = vmatpush1.bf16.msra.mxu0 0
    %4885 = vmatprep.subr.bf16.mxu0 0
    %4886 = vmatpush1.bf16.msra.mxu0 0
    %4887 = vmatprep.subr.bf16.mxu0 0
    %4888 = vmatpush1.bf16.msra.mxu0 0
    %4889 = vmatprep.subr.bf16.mxu0 0
    %4890 = vmatpush1.bf16.msra.mxu0 0
    %4891 = vmatprep.subr.bf16.mxu0 0
    %4892 = vmatpush1.bf16.msra.mxu0 0
    %4893 = vmatprep.subr.bf16.mxu0 0
    %4894 = vmatpush1.bf16.msra.mxu0 0
    %4895 = vmatprep.subr.bf16.mxu0 0
    %4896 = vmatpush1.bf16.msra.mxu0 0
    %4897 = vmatprep.subr.bf16.mxu0 0
    %4898 = vmatpush1.bf16.msra.mxu0 0
    %4899 = vmatprep.subr.bf16.mxu0 0
    %4900 = vmatpush1.bf16.msra.mxu0 0
    %4901 = vmatprep.subr.bf16.mxu0 0
    %4902 = vmatpush1.bf16.msra.mxu0 0
    %4903 = vmatprep.subr.bf16.mxu0 0
    %4904 = vmatpush1.bf16.msra.mxu0 0
    %4905 = vmatprep.subr.bf16.mxu0 0
    %4906 = vmatpush1.bf16.msra.mxu0 0
    %4907 = vmatprep.subr.bf16.mxu0 0
    %4908 = vmatpush1.bf16.msra.mxu0 0
    %4909 = vmatprep.mubr.bf16.mxu0 0
    %4910 = vmatmul.mubr.bf16.gmra.mrb[0].mxu0 %v4872
    %v4911 = vpop.f32.mrb[0].mxu0
    %v4912 = vadd.f32 %v4869, %v4911
    %v4913 = vpop.f32.mrb[0].mxu0
    %v4914 = vpop.f32.mrb[0].mxu0
    %v4915 = vpop.f32.mrb[0].mxu0
    %4916 = vdwg.mxu0
    %vm4917 = vcmp.gt.f32.partialorder %v4912, 0.0
    %v4918 = vmul.f32 %v4912, 0.01
    %v4919 = vsel %vm4917, %v4912, %v4918
    %v4920 = vld [vmem:[#allocation23] sm:$0xf]
    %v4921 = vld [vmem:[#allocation23 + $0x4] sm:$0xf]
    %v4922 = vld [vmem:[#allocation23 + $0x8] sm:$0xf]
    %v4923 = vld [vmem:[#allocation23 + $0xc] sm:$0xf]
    %v4924 = vpack.c.bf16 %v4770, %v4770
    %v4925 = vld [vmem:[#allocation24] sm:$0xf]
    %v4926 = vld [vmem:[#allocation24 + $0x4] sm:$0xf]
    %v4927 = vld [vmem:[#allocation24 + $0x8] sm:$0xf]
    %v4928 = vld [vmem:[#allocation24 + $0xc] sm:$0xf]
    %v4929 = vpack.c.bf16 %v4799, %v4799
    %v4934 = vunpack.c.l.b16 %v4925
    %v4935 = vunpack.c.l.b16 %v4926
    %v4936 = vunpack.c.l.b16 %v4927
    %v4937 = vunpack.c.l.b16 %v4928
    %v4938 = vpack.c.b16 %v4935, %v4934
    %v4939 = vpack.c.b16 %v4937, %v4936
    %vm4942 = vcmask 261120
    %v4944 = vsel %vm4942, %v4929, 0
    %4946 = vmatprep.subr.bf16.mxu0 0
    %4947 = vmatpush1.bf16.msra.mxu0 %v4938
    %4948 = vmatprep.subr.bf16.mxu0 0
    %4949 = vmatpush1.bf16.msra.mxu0 %v4939
    %4950 = vmatprep.subr.bf16.mxu0 0
    %4951 = vmatpush1.bf16.msra.mxu0 0
    %4952 = vmatprep.subr.bf16.mxu0 0
    %4953 = vmatpush1.bf16.msra.mxu0 0
    %4954 = vmatprep.subr.bf16.mxu0 0
    %4955 = vmatpush1.bf16.msra.mxu0 0
    %4956 = vmatprep.subr.bf16.mxu0 0
    %4957 = vmatpush1.bf16.msra.mxu0 0
    %4958 = vmatprep.subr.bf16.mxu0 0
    %4959 = vmatpush1.bf16.msra.mxu0 0
    %4960 = vmatprep.subr.bf16.mxu0 0
    %4961 = vmatpush1.bf16.msra.mxu0 0
    %4962 = vmatprep.subr.bf16.mxu0 0
    %4963 = vmatpush1.bf16.msra.mxu0 0
    %4964 = vmatprep.subr.bf16.mxu0 0
    %4965 = vmatpush1.bf16.msra.mxu0 0
    %4966 = vmatprep.subr.bf16.mxu0 0
    %4967 = vmatpush1.bf16.msra.mxu0 0
    %4968 = vmatprep.subr.bf16.mxu0 0
    %4969 = vmatpush1.bf16.msra.mxu0 0
    %4970 = vmatprep.subr.bf16.mxu0 0
    %4971 = vmatpush1.bf16.msra.mxu0 0
    %4972 = vmatprep.subr.bf16.mxu0 0
    %4973 = vmatpush1.bf16.msra.mxu0 0
    %4974 = vmatprep.subr.bf16.mxu0 0
    %4975 = vmatpush1.bf16.msra.mxu0 0
    %4976 = vmatprep.subr.bf16.mxu0 0
    %4977 = vmatpush1.bf16.msra.mxu0 0
    %4978 = vmatprep.mubr.bf16.mxu0 0
    %4979 = vmatmul.mubr.bf16.gmra.mrb[0].mxu0 %v4944
    %v4980 = vpop.f32.mrb[0].mxu0
    %v4981 = vadd.f32 0.0, %v4980
    %v4982 = vpop.f32.mrb[0].mxu0
    %v4983 = vpop.f32.mrb[0].mxu0
    %v4984 = vpop.f32.mrb[0].mxu0
    %4985 = vdwg.mxu0
    %v4990 = vunpack.c.l.b16 %v4920
    %v4991 = vunpack.c.l.b16 %v4921
    %v4992 = vunpack.c.l.b16 %v4922
    %v4993 = vunpack.c.l.b16 %v4923
    %v4994 = vpack.c.b16 %v4991, %v4990
    %v4995 = vpack.c.b16 %v4993, %v4992
    %v4999 = vsel %vm4942, %v4924, 0
    %5001 = vmatprep.subr.bf16.mxu0 0
    %5002 = vmatpush1.bf16.msra.mxu0 %v4994
    %5003 = vmatprep.subr.bf16.mxu0 0
    %5004 = vmatpush1.bf16.msra.mxu0 %v4995
    %5005 = vmatprep.subr.bf16.mxu0 0
    %5006 = vmatpush1.bf16.msra.mxu0 0
    %5007 = vmatprep.subr.bf16.mxu0 0
    %5008 = vmatpush1.bf16.msra.mxu0 0
    %5009 = vmatprep.subr.bf16.mxu0 0
    %5010 = vmatpush1.bf16.msra.mxu0 0
    %5011 = vmatprep.subr.bf16.mxu0 0
    %5012 = vmatpush1.bf16.msra.mxu0 0
    %5013 = vmatprep.subr.bf16.mxu0 0
    %5014 = vmatpush1.bf16.msra.mxu0 0
    %5015 = vmatprep.subr.bf16.mxu0 0
    %5016 = vmatpush1.bf16.msra.mxu0 0
    %5017 = vmatprep.subr.bf16.mxu0 0
    %5018 = vmatpush1.bf16.msra.mxu0 0
    %5019 = vmatprep.subr.bf16.mxu0 0
    %5020 = vmatpush1.bf16.msra.mxu0 0
    %5021 = vmatprep.subr.bf16.mxu0 0
    %5022 = vmatpush1.bf16.msra.mxu0 0
    %5023 = vmatprep.subr.bf16.mxu0 0
    %5024 = vmatpush1.bf16.msra.mxu0 0
    %5025 = vmatprep.subr.bf16.mxu0 0
    %5026 = vmatpush1.bf16.msra.mxu0 0
    %5027 = vmatprep.subr.bf16.mxu0 0
    %5028 = vmatpush1.bf16.msra.mxu0 0
    %5029 = vmatprep.subr.bf16.mxu0 0
    %5030 = vmatpush1.bf16.msra.mxu0 0
    %5031 = vmatprep.subr.bf16.mxu0 0
    %5032 = vmatpush1.bf16.msra.mxu0 0
    %5033 = vmatprep.mubr.bf16.mxu0 0
    %5034 = vmatmul.mubr.bf16.gmra.mrb[0].mxu0 %v4999
    %v5035 = vpop.f32.mrb[0].mxu0
    %v5036 = vadd.f32 %v4981, %v5035
    %v5037 = vpop.f32.mrb[0].mxu0
    %v5038 = vpop.f32.mrb[0].mxu0
    %v5039 = vpop.f32.mrb[0].mxu0
    %5040 = vdwg.mxu0
    %v5041 = vld [vmem:[#allocation26] sm:$0xf]
    %v5042 = vld [vmem:[#allocation26 + $0x4] sm:$0xf]
    %v5043 = vld [vmem:[#allocation26 + $0x8] sm:$0xf]
    %v5044 = vld [vmem:[#allocation26 + $0xc] sm:$0xf]
    %v5045 = vpack.c.bf16 %v4860, %v4860
    %v5050 = vunpack.c.l.b16 %v5041
    %v5051 = vunpack.c.l.b16 %v5042
    %v5052 = vunpack.c.l.b16 %v5043
    %v5053 = vunpack.c.l.b16 %v5044
    %v5054 = vpack.c.b16 %v5051, %v5050
    %v5055 = vpack.c.b16 %v5053, %v5052
    %v5059 = vsel %vm4942, %v5045, 0
    %5061 = vmatprep.subr.bf16.mxu0 0
    %5062 = vmatpush1.bf16.msra.mxu0 %v5054
    %5063 = vmatprep.subr.bf16.mxu0 0
    %5064 = vmatpush1.bf16.msra.mxu0 %v5055
    %5065 = vmatprep.subr.bf16.mxu0 0
    %5066 = vmatpush1.bf16.msra.mxu0 0
    %5067 = vmatprep.subr.bf16.mxu0 0
    %5068 = vmatpush1.bf16.msra.mxu0 0
    %5069 = vmatprep.subr.bf16.mxu0 0
    %5070 = vmatpush1.bf16.msra.mxu0 0
    %5071 = vmatprep.subr.bf16.mxu0 0
    %5072 = vmatpush1.bf16.msra.mxu0 0
    %5073 = vmatprep.subr.bf16.mxu0 0
    %5074 = vmatpush1.bf16.msra.mxu0 0
    %5075 = vmatprep.subr.bf16.mxu0 0
    %5076 = vmatpush1.bf16.msra.mxu0 0
    %5077 = vmatprep.subr.bf16.mxu0 0
    %5078 = vmatpush1.bf16.msra.mxu0 0
    %5079 = vmatprep.subr.bf16.mxu0 0
    %5080 = vmatpush1.bf16.msra.mxu0 0
    %5081 = vmatprep.subr.bf16.mxu0 0
    %5082 = vmatpush1.bf16.msra.mxu0 0
    %5083 = vmatprep.subr.bf16.mxu0 0
    %5084 = vmatpush1.bf16.msra.mxu0 0
    %5085 = vmatprep.subr.bf16.mxu0 0
    %5086 = vmatpush1.bf16.msra.mxu0 0
    %5087 = vmatprep.subr.bf16.mxu0 0
    %5088 = vmatpush1.bf16.msra.mxu0 0
    %5089 = vmatprep.subr.bf16.mxu0 0
    %5090 = vmatpush1.bf16.msra.mxu0 0
    %5091 = vmatprep.subr.bf16.mxu0 0
    %5092 = vmatpush1.bf16.msra.mxu0 0
    %5093 = vmatprep.mubr.bf16.mxu0 0
    %5094 = vmatmul.mubr.bf16.gmra.mrb[0].mxu0 %v5059
    %v5095 = vpop.f32.mrb[0].mxu0
    %v5096 = vadd.f32 0.0, %v5095
    %v5097 = vpop.f32.mrb[0].mxu0
    %v5098 = vpop.f32.mrb[0].mxu0
    %v5099 = vpop.f32.mrb[0].mxu0
    %5100 = vdwg.mxu0
    %v5101 = vadd.f32 %v5036, %v5096
    %v5102 = vld [vmem:[%s9] sm:$0x3]
    %v5103 = vld [vmem:[%s47] sm:$0xf]
    %v5104 = vld [vmem:[%s47 + $0x4] sm:$0xf]
    %v5105 = vld [vmem:[%s47 + $0x8] sm:$0xf]
    %v5106 = vld [vmem:[%s47 + $0xc] sm:$0xf]
    %v5107 = vpack.c.bf16 %v5102, %v5102
    %v5112 = vunpack.c.l.b16 %v5103
    %v5113 = vunpack.c.l.b16 %v5104
    %v5114 = vunpack.c.l.b16 %v5105
    %v5115 = vunpack.c.l.b16 %v5106
    %v5116 = vpack.c.b16 %v5113, %v5112
    %v5117 = vpack.c.b16 %v5115, %v5114
    %v5121 = vsel %vm4942, %v5107, 0
    %5123 = vmatprep.subr.bf16.mxu0 0
    %5124 = vmatpush1.bf16.msra.mxu0 %v5116
    %5125 = vmatprep.subr.bf16.mxu0 0
    %5126 = vmatpush1.bf16.msra.mxu0 %v5117
    %5127 = vmatprep.subr.bf16.mxu0 0
    %5128 = vmatpush1.bf16.msra.mxu0 0
    %5129 = vmatprep.subr.bf16.mxu0 0
    %5130 = vmatpush1.bf16.msra.mxu0 0
    %5131 = vmatprep.subr.bf16.mxu0 0
    %5132 = vmatpush1.bf16.msra.mxu0 0
    %5133 = vmatprep.subr.bf16.mxu0 0
    %5134 = vmatpush1.bf16.msra.mxu0 0
    %5135 = vmatprep.subr.bf16.mxu0 0
    %5136 = vmatpush1.bf16.msra.mxu0 0
    %5137 = vmatprep.subr.bf16.mxu0 0
    %5138 = vmatpush1.bf16.msra.mxu0 0
    %5139 = vmatprep.subr.bf16.mxu0 0
    %5140 = vmatpush1.bf16.msra.mxu0 0
    %5141 = vmatprep.subr.bf16.mxu0 0
    %5142 = vmatpush1.bf16.msra.mxu0 0
    %5143 = vmatprep.subr.bf16.mxu0 0
    %5144 = vmatpush1.bf16.msra.mxu0 0
    %5145 = vmatprep.subr.bf16.mxu0 0
    %5146 = vmatpush1.bf16.msra.mxu0 0
    %5147 = vmatprep.subr.bf16.mxu0 0
    %5148 = vmatpush1.bf16.msra.mxu0 0
    %5149 = vmatprep.subr.bf16.mxu0 0
    %5150 = vmatpush1.bf16.msra.mxu0 0
    %5151 = vmatprep.subr.bf16.mxu0 0
    %5152 = vmatpush1.bf16.msra.mxu0 0
    %5153 = vmatprep.subr.bf16.mxu0 0
    %5154 = vmatpush1.bf16.msra.mxu0 0
    %5155 = vmatprep.mubr.bf16.mxu0 0
    %5156 = vmatmul.mubr.bf16.gmra.mrb[0].mxu0 %v5121
    %v5157 = vpop.f32.mrb[0].mxu0
    %v5158 = vadd.f32 0.0, %v5157
    %v5159 = vpop.f32.mrb[0].mxu0
    %v5160 = vpop.f32.mrb[0].mxu0
    %v5161 = vpop.f32.mrb[0].mxu0
    %5162 = vdwg.mxu0
    %v5163 = vadd.f32 %v5101, %v5158
    %v5164 = vld [vmem:[#allocation27] sm:$0x1]
    %v5166 = vlaneseq
    %v5167 = vshrl.u32 %v5166, 7
    %v5168 = vsub.s32 0, %v5167
    %v5169 = vrot.slane %v5164, %v5168
    %v5171 = vadd.f32 %v5163, %v5169
    %v5172 = vxor.u32 %v5171, 2147483648
    %v5173 = vmul.f32 %v5172, 1.442695
    %v5174 = vpow.pop %v5173
    %v5175 = vadd.f32 %v5174, 1.0
    %v5176 = vrcp.pop %v5175
    %v5177 = vmul.f32 1.0, %v5176
    %v5178 = vtanh.pop %v5171
    %v5179 = vld [vmem:[%s11] sm:$0x3]
    %5181 = vrot.lane.b32.xlu0 %v5179, 32
    %v5182 = vpop.permute.xlu0 %5181
    %v5184 = vmul.f32 %v5177, %v5182
    %5186 = vrot.lane.b32.xlu0 %v5178, 64
    %v5187 = vpop.permute.xlu0 %5186
    %v5189 = vmul.f32 %v5177, %v5187
    %5191 = vrot.lane.b32.xlu0 %v5189, 32
    %v5192 = vpop.permute.xlu0 %5191
    %v5194 = vadd.f32 %v5184, %v5192
    %v5195 = vtanh.pop %v5194
    %5197 = vrot.lane.b32.xlu0 %v5195, 64
    %v5198 = vpop.permute.xlu0 %5197
    %v5200 = vmul.f32 %v5177, %v5198
    %vm5201 = vcmp.gt.f32.partialorder %v5200, 0.0
    %v5202 = vmul.f32 %v5200, 0.01
    %v5203 = vsel %vm5201, %v5200, %v5202
    %v5204 = vld [vmem:[%s51] sm:$0xf]
    %v5205 = vld [vmem:[%s51 + $0x4] sm:$0xf]
    %v5206 = vld [vmem:[%s51 + $0x8] sm:$0xf]
    %v5207 = vld [vmem:[%s51 + $0xc] sm:$0xf]
    %v5208 = vpack.c.bf16 %v5203, %v5203
    %v5209 = vld [vmem:[#allocation29] sm:$0x1]
    %v5211 = vlaneseq
    %v5212 = vshrl.u32 %v5211, 7
    %v5213 = vsub.s32 0, %v5212
    %v5214 = vrot.slane %v5209, %v5213
    %5217 = vrot.lane.b32.xlu0 %v5208, 32
    %v5218 = vpop.permute.xlu0 %5217
    %v5223 = vunpack.c.l.b16 %v5204
    %v5224 = vunpack.c.l.b16 %v5205
    %v5225 = vunpack.c.l.b16 %v5206
    %v5226 = vunpack.c.l.b16 %v5207
    %v5227 = vpack.c.b16 %v5224, %v5223
    %v5228 = vpack.c.b16 %v5226, %v5225
    %v5232 = vsel %vm4942, %v5218, 0
    %5234 = vmatprep.subr.bf16.mxu0 0
    %5235 = vmatpush1.bf16.msra.mxu0 %v5227
    %5236 = vmatprep.subr.bf16.mxu0 0
    %5237 = vmatpush1.bf16.msra.mxu0 %v5228
    %5238 = vmatprep.subr.bf16.mxu0 0
    %5239 = vmatpush1.bf16.msra.mxu0 0
    %5240 = vmatprep.subr.bf16.mxu0 0
    %5241 = vmatpush1.bf16.msra.mxu0 0
    %5242 = vmatprep.subr.bf16.mxu0 0
    %5243 = vmatpush1.bf16.msra.mxu0 0
    %5244 = vmatprep.subr.bf16.mxu0 0
    %5245 = vmatpush1.bf16.msra.mxu0 0
    %5246 = vmatprep.subr.bf16.mxu0 0
    %5247 = vmatpush1.bf16.msra.mxu0 0
    %5248 = vmatprep.subr.bf16.mxu0 0
    %5249 = vmatpush1.bf16.msra.mxu0 0
    %5250 = vmatprep.subr.bf16.mxu0 0
    %5251 = vmatpush1.bf16.msra.mxu0 0
    %5252 = vmatprep.subr.bf16.mxu0 0
    %5253 = vmatpush1.bf16.msra.mxu0 0
    %5254 = vmatprep.subr.bf16.mxu0 0
    %5255 = vmatpush1.bf16.msra.mxu0 0
    %5256 = vmatprep.subr.bf16.mxu0 0
    %5257 = vmatpush1.bf16.msra.mxu0 0
    %5258 = vmatprep.subr.bf16.mxu0 0
    %5259 = vmatpush1.bf16.msra.mxu0 0
    %5260 = vmatprep.subr.bf16.mxu0 0
    %5261 = vmatpush1.bf16.msra.mxu0 0
    %5262 = vmatprep.subr.bf16.mxu0 0
    %5263 = vmatpush1.bf16.msra.mxu0 0
    %5264 = vmatprep.subr.bf16.mxu0 0
    %5265 = vmatpush1.bf16.msra.mxu0 0
    %5266 = vmatprep.mubr.bf16.mxu0 0
    %5267 = vmatmul.mubr.bf16.gmra.mrb[0].mxu0 %v5232
    %v5268 = vpop.f32.mrb[0].mxu0
    %v5269 = vadd.f32 %v5214, %v5268
    %v5270 = vpop.f32.mrb[0].mxu0
    %v5271 = vpop.f32.mrb[0].mxu0
    %v5272 = vpop.f32.mrb[0].mxu0
    %5273 = vdwg.mxu0
    %vm5274 = vcmp.gt.f32.partialorder %v5269, 0.0
    %v5275 = vmul.f32 %v5269, 0.01
    %v5276 = vsel %vm5274, %v5269, %v5275
    %v5277 = vld [vmem:[%s55] sm:$0xf]
    %v5278 = vld [vmem:[%s55 + $0x4] sm:$0xf]
    %v5279 = vld [vmem:[%s55 + $0x8] sm:$0xf]
    %v5280 = vld [vmem:[%s55 + $0xc] sm:$0xf]
    %v5281 = vpack.c.bf16 %v5276, %v5276
    %v5282 = vld [vmem:[#allocation30] sm:$0x1]
    %v5284 = vlaneseq
    %v5285 = vshrl.u32 %v5284, 7
    %v5286 = vsub.s32 0, %v5285
    %v5287 = vrot.slane %v5282, %v5286
    %v5293 = vunpack.c.l.b16 %v5277
    %v5294 = vunpack.c.l.b16 %v5278
    %v5295 = vunpack.c.l.b16 %v5279
    %v5296 = vunpack.c.l.b16 %v5280
    %v5297 = vpack.c.b16 %v5294, %v5293
    %v5298 = vpack.c.b16 %v5296, %v5295
    %v5302 = vsel %vm4942, %v5281, 0
    %5304 = vmatprep.subr.bf16.mxu0 0
    %5305 = vmatpush1.bf16.msra.mxu0 %v5297
    %5306 = vmatprep.subr.bf16.mxu0 0
    %5307 = vmatpush1.bf16.msra.mxu0 %v5298
    %5308 = vmatprep.subr.bf16.mxu0 0
    %5309 = vmatpush1.bf16.msra.mxu0 0
    %5310 = vmatprep.subr.bf16.mxu0 0
    %5311 = vmatpush1.bf16.msra.mxu0 0
    %5312 = vmatprep.subr.bf16.mxu0 0
    %5313 = vmatpush1.bf16.msra.mxu0 0
    %5314 = vmatprep.subr.bf16.mxu0 0
    %5315 = vmatpush1.bf16.msra.mxu0 0
    %5316 = vmatprep.subr.bf16.mxu0 0
    %5317 = vmatpush1.bf16.msra.mxu0 0
    %5318 = vmatprep.subr.bf16.mxu0 0
    %5319 = vmatpush1.bf16.msra.mxu0 0
    %5320 = vmatprep.subr.bf16.mxu0 0
    %5321 = vmatpush1.bf16.msra.mxu0 0
    %5322 = vmatprep.subr.bf16.mxu0 0
    %5323 = vmatpush1.bf16.msra.mxu0 0
    %5324 = vmatprep.subr.bf16.mxu0 0
    %5325 = vmatpush1.bf16.msra.mxu0 0
    %5326 = vmatprep.subr.bf16.mxu0 0
    %5327 = vmatpush1.bf16.msra.mxu0 0
    %5328 = vmatprep.subr.bf16.mxu0 0
    %5329 = vmatpush1.bf16.msra.mxu0 0
    %5330 = vmatprep.subr.bf16.mxu0 0
    %5331 = vmatpush1.bf16.msra.mxu0 0
    %5332 = vmatprep.subr.bf16.mxu0 0
    %5333 = vmatpush1.bf16.msra.mxu0 0
    %5334 = vmatprep.subr.bf16.mxu0 0
    %5335 = vmatpush1.bf16.msra.mxu0 0
    %5336 = vmatprep.mubr.bf16.mxu0 0
    %5337 = vmatmul.mubr.bf16.gmra.mrb[0].mxu0 %v5302
    %v5338 = vpop.f32.mrb[0].mxu0
    %v5339 = vadd.f32 %v5287, %v5338
    %v5340 = vpop.f32.mrb[0].mxu0
    %v5341 = vpop.f32.mrb[0].mxu0
    %v5342 = vpop.f32.mrb[0].mxu0
    %5343 = vdwg.mxu0
    %vm5344 = vcmp.gt.f32.partialorder %v5339, 0.0
    %v5345 = vmul.f32 %v5339, 0.01
    %v5346 = vsel %vm5344, %v5339, %v5345
    %v5347 = vld [vmem:[#allocation32] sm:$0xf]
    %v5348 = vld [vmem:[#allocation32 + $0x4] sm:$0xf]
    %v5349 = vld [vmem:[#allocation32 + $0x8] sm:$0xf]
    %v5350 = vld [vmem:[#allocation32 + $0xc] sm:$0xf]
    %v5351 = vpack.c.bf16 %v5346, %v5346
    %v5352 = vld [vmem:[#allocation33] sm:$0xf]
    %v5353 = vld [vmem:[#allocation33 + $0x4] sm:$0xf]
    %v5354 = vld [vmem:[#allocation33 + $0x8] sm:$0xf]
    %v5355 = vld [vmem:[#allocation33 + $0xc] sm:$0xf]
    %v5356 = vpack.c.bf16 %v4919, %v4919
    %v5361 = vunpack.c.l.b16 %v5352
    %v5362 = vunpack.c.l.b16 %v5353
    %v5363 = vunpack.c.l.b16 %v5354
    %v5364 = vunpack.c.l.b16 %v5355
    %v5365 = vpack.c.b16 %v5362, %v5361
    %v5366 = vpack.c.b16 %v5364, %v5363
    %v5370 = vsel %vm4942, %v5356, 0
    %5372 = vmatprep.subr.bf16.mxu0 0
    %5373 = vmatpush1.bf16.msra.mxu0 %v5365
    %5374 = vmatprep.subr.bf16.mxu0 0
    %5375 = vmatpush1.bf16.msra.mxu0 %v5366
    %5376 = vmatprep.subr.bf16.mxu0 0
    %5377 = vmatpush1.bf16.msra.mxu0 0
    %5378 = vmatprep.subr.bf16.mxu0 0
    %5379 = vmatpush1.bf16.msra.mxu0 0
    %5380 = vmatprep.subr.bf16.mxu0 0
    %5381 = vmatpush1.bf16.msra.mxu0 0
    %5382 = vmatprep.subr.bf16.mxu0 0
    %5383 = vmatpush1.bf16.msra.mxu0 0
    %5384 = vmatprep.subr.bf16.mxu0 0
    %5385 = vmatpush1.bf16.msra.mxu0 0
    %5386 = vmatprep.subr.bf16.mxu0 0
    %5387 = vmatpush1.bf16.msra.mxu0 0
    %5388 = vmatprep.subr.bf16.mxu0 0
    %5389 = vmatpush1.bf16.msra.mxu0 0
    %5390 = vmatprep.subr.bf16.mxu0 0
    %5391 = vmatpush1.bf16.msra.mxu0 0
    %5392 = vmatprep.subr.bf16.mxu0 0
    %5393 = vmatpush1.bf16.msra.mxu0 0
    %5394 = vmatprep.subr.bf16.mxu0 0
    %5395 = vmatpush1.bf16.msra.mxu0 0
    %5396 = vmatprep.subr.bf16.mxu0 0
    %5397 = vmatpush1.bf16.msra.mxu0 0
    %5398 = vmatprep.subr.bf16.mxu0 0
    %5399 = vmatpush1.bf16.msra.mxu0 0
    %5400 = vmatprep.subr.bf16.mxu0 0
    %5401 = vmatpush1.bf16.msra.mxu0 0
    %5402 = vmatprep.subr.bf16.mxu0 0
    %5403 = vmatpush1.bf16.msra.mxu0 0
    %5404 = vmatprep.mubr.bf16.mxu0 0
    %5405 = vmatmul.mubr.bf16.gmra.mrb[0].mxu0 %v5370
    %v5406 = vpop.f32.mrb[0].mxu0
    %v5407 = vadd.f32 0.0, %v5406
    %v5408 = vpop.f32.mrb[0].mxu0
    %v5409 = vpop.f32.mrb[0].mxu0
    %v5410 = vpop.f32.mrb[0].mxu0
    %5411 = vdwg.mxu0
    %v5416 = vunpack.c.l.b16 %v5347
    %v5417 = vunpack.c.l.b16 %v5348
    %v5418 = vunpack.c.l.b16 %v5349
    %v5419 = vunpack.c.l.b16 %v5350
    %v5420 = vpack.c.b16 %v5417, %v5416
    %v5421 = vpack.c.b16 %v5419, %v5418
    %v5425 = vsel %vm4942, %v5351, 0
    %5427 = vmatprep.subr.bf16.mxu0 0
    %5428 = vmatpush1.bf16.msra.mxu0 %v5420
    %5429 = vmatprep.subr.bf16.mxu0 0
    %5430 = vmatpush1.bf16.msra.mxu0 %v5421
    %5431 = vmatprep.subr.bf16.mxu0 0
    %5432 = vmatpush1.bf16.msra.mxu0 0
    %5433 = vmatprep.subr.bf16.mxu0 0
    %5434 = vmatpush1.bf16.msra.mxu0 0
    %5435 = vmatprep.subr.bf16.mxu0 0
    %5436 = vmatpush1.bf16.msra.mxu0 0
    %5437 = vmatprep.subr.bf16.mxu0 0
    %5438 = vmatpush1.bf16.msra.mxu0 0
    %5439 = vmatprep.subr.bf16.mxu0 0
    %5440 = vmatpush1.bf16.msra.mxu0 0
    %5441 = vmatprep.subr.bf16.mxu0 0
    %5442 = vmatpush1.bf16.msra.mxu0 0
    %5443 = vmatprep.subr.bf16.mxu0 0
    %5444 = vmatpush1.bf16.msra.mxu0 0
    %5445 = vmatprep.subr.bf16.mxu0 0
    %5446 = vmatpush1.bf16.msra.mxu0 0
    %5447 = vmatprep.subr.bf16.mxu0 0
    %5448 = vmatpush1.bf16.msra.mxu0 0
    %5449 = vmatprep.subr.bf16.mxu0 0
    %5450 = vmatpush1.bf16.msra.mxu0 0
    %5451 = vmatprep.subr.bf16.mxu0 0
    %5452 = vmatpush1.bf16.msra.mxu0 0
    %5453 = vmatprep.subr.bf16.mxu0 0
    %5454 = vmatpush1.bf16.msra.mxu0 0
    %5455 = vmatprep.subr.bf16.mxu0 0
    %5456 = vmatpush1.bf16.msra.mxu0 0
    %5457 = vmatprep.subr.bf16.mxu0 0
    %5458 = vmatpush1.bf16.msra.mxu0 0
    %5459 = vmatprep.mubr.bf16.mxu0 0
    %5460 = vmatmul.mubr.bf16.gmra.mrb[0].mxu0 %v5425
    %v5461 = vpop.f32.mrb[0].mxu0
    %v5462 = vadd.f32 %v5407, %v5461
    %v5463 = vpop.f32.mrb[0].mxu0
    %v5464 = vpop.f32.mrb[0].mxu0
    %v5465 = vpop.f32.mrb[0].mxu0
    %5466 = vdwg.mxu0
    %v5467 = vld [vmem:[#allocation35] sm:$0x1]
    %v5469 = vlaneseq
    %v5470 = vshrl.u32 %v5469, 7
    %v5471 = vsub.s32 0, %v5470
    %v5472 = vrot.slane %v5467, %v5471
    %v5474 = vadd.f32 %v5462, %v5472
    %v5475 = vld [vmem:[#allocation36] sm:$0xf]
    %v5476 = vld [vmem:[#allocation36 + $0x4] sm:$0xf]
    %v5477 = vld [vmem:[#allocation36 + $0x8] sm:$0xf]
    %v5478 = vld [vmem:[#allocation36 + $0xc] sm:$0xf]
    %v5479 = vpack.c.bf16 %v5474, %v5474
    %v5480 = vld [vmem:[#allocation38] sm:$0x1]
    %v5482 = vlaneseq
    %v5483 = vshrl.u32 %v5482, 7
    %v5484 = vsub.s32 0, %v5483
    %v5485 = vrot.slane %v5480, %v5484
    %v5491 = vunpack.c.l.b16 %v5475
    %v5492 = vunpack.c.l.b16 %v5476
    %v5493 = vunpack.c.l.b16 %v5477
    %v5494 = vunpack.c.l.b16 %v5478
    %v5495 = vpack.c.b16 %v5492, %v5491
    %v5496 = vpack.c.b16 %v5494, %v5493
    %v5500 = vsel %vm4942, %v5479, 0
    %5502 = vmatprep.subr.bf16.mxu0 0
    %5503 = vmatpush1.bf16.msra.mxu0 %v5495
    %5504 = vmatprep.subr.bf16.mxu0 0
    %5505 = vmatpush1.bf16.msra.mxu0 %v5496
    %5506 = vmatprep.subr.bf16.mxu0 0
    %5507 = vmatpush1.bf16.msra.mxu0 0
    %5508 = vmatprep.subr.bf16.mxu0 0
    %5509 = vmatpush1.bf16.msra.mxu0 0
    %5510 = vmatprep.subr.bf16.mxu0 0
    %5511 = vmatpush1.bf16.msra.mxu0 0
    %5512 = vmatprep.subr.bf16.mxu0 0
    %5513 = vmatpush1.bf16.msra.mxu0 0
    %5514 = vmatprep.subr.bf16.mxu0 0
    %5515 = vmatpush1.bf16.msra.mxu0 0
    %5516 = vmatprep.subr.bf16.mxu0 0
    %5517 = vmatpush1.bf16.msra.mxu0 0
    %5518 = vmatprep.subr.bf16.mxu0 0
    %5519 = vmatpush1.bf16.msra.mxu0 0
    %5520 = vmatprep.subr.bf16.mxu0 0
    %5521 = vmatpush1.bf16.msra.mxu0 0
    %5522 = vmatprep.subr.bf16.mxu0 0
    %5523 = vmatpush1.bf16.msra.mxu0 0
    %5524 = vmatprep.subr.bf16.mxu0 0
    %5525 = vmatpush1.bf16.msra.mxu0 0
    %5526 = vmatprep.subr.bf16.mxu0 0
    %5527 = vmatpush1.bf16.msra.mxu0 0
    %5528 = vmatprep.subr.bf16.mxu0 0
    %5529 = vmatpush1.bf16.msra.mxu0 0
    %5530 = vmatprep.subr.bf16.mxu0 0
    %5531 = vmatpush1.bf16.msra.mxu0 0
    %5532 = vmatprep.subr.bf16.mxu0 0
    %5533 = vmatpush1.bf16.msra.mxu0 0
    %5534 = vmatprep.mubr.bf16.mxu0 0
    %5535 = vmatmul.mubr.bf16.gmra.mrb[0].mxu0 %v5500
    %v5536 = vpop.f32.mrb[0].mxu0
    %v5537 = vadd.f32 %v5485, %v5536
    %v5538 = vpop.f32.mrb[0].mxu0
    %v5539 = vpop.f32.mrb[0].mxu0
    %v5540 = vpop.f32.mrb[0].mxu0
    %5541 = vdwg.mxu0
    %vm5542 = vcmp.gt.f32.partialorder %v5537, 0.0
    %v5543 = vmul.f32 %v5537, 0.01
    %v5544 = vsel %vm5542, %v5537, %v5543
    %v5545 = vld [vmem:[%s69] sm:$0xff]
    %v5546 = vld [vmem:[%s69 + $0x8] sm:$0xff]
    %v5547 = vld [vmem:[%s69 + $0x10] sm:$0xff]
    %v5548 = vld [vmem:[%s69 + $0x18] sm:$0xff]
    %v5549 = vld [vmem:[%s69 + $0x20] sm:$0xff]
    %v5550 = vld [vmem:[%s69 + $0x28] sm:$0xff]
    %v5551 = vld [vmem:[%s69 + $0x30] sm:$0xff]
    %v5552 = vld [vmem:[%s69 + $0x38] sm:$0xff]
    %v5553 = vpack.c.bf16 %v5544, %v5544
    %v5554 = vld [vmem:[#allocation39] sm:$0xf]
    %v5556 = vlaneseq
    %v5557 = vshrl.u32 %v5556, 7
    %v5558 = vsub.s32 0, %v5557
    %v5559 = vrot.slane %v5554, %v5558
    %v5560 = vlaneseq
    %v5561 = vshrl.u32 %v5560, 7
    %v5562 = vsub.s32 1, %v5561
    %v5563 = vrot.slane %v5554, %v5562
    %v5564 = vlaneseq
    %v5565 = vshrl.u32 %v5564, 7
    %v5566 = vsub.s32 2, %v5565
    %v5567 = vrot.slane %v5554, %v5566
    %v5568 = vlaneseq
    %v5569 = vshrl.u32 %v5568, 7
    %v5570 = vsub.s32 3, %v5569
    %v5571 = vrot.slane %v5554, %v5570
    %v5584 = vunpack.c.l.b16 %v5545
    %v5585 = vunpack.c.h.b16 %v5545
    %v5586 = vunpack.c.l.b16 %v5546
    %v5587 = vunpack.c.h.b16 %v5546
    %v5588 = vunpack.c.l.b16 %v5547
    %v5589 = vunpack.c.h.b16 %v5547
    %v5590 = vunpack.c.l.b16 %v5548
    %v5591 = vunpack.c.h.b16 %v5548
    %v5592 = vunpack.c.l.b16 %v5549
    %v5593 = vunpack.c.h.b16 %v5549
    %v5594 = vunpack.c.l.b16 %v5550
    %v5595 = vunpack.c.h.b16 %v5550
    %v5596 = vunpack.c.l.b16 %v5551
    %v5597 = vunpack.c.h.b16 %v5551
    %v5598 = vunpack.c.l.b16 %v5552
    %v5599 = vunpack.c.h.b16 %v5552
    %v5600 = vpack.c.b16 %v5588, %v5584
    %v5601 = vpack.c.b16 %v5589, %v5585
    %v5602 = vpack.c.b16 %v5590, %v5586
    %v5603 = vpack.c.b16 %v5591, %v5587
    %v5604 = vpack.c.b16 %v5596, %v5592
    %v5605 = vpack.c.b16 %v5597, %v5593
    %v5606 = vpack.c.b16 %v5598, %v5594
    %v5607 = vpack.c.b16 %v5599, %v5595
    %v5617 = vsel %vm4942, %v5553, 0
    %5619 = vmatprep.subr.bf16.mxu0 %v5601
    %5620 = vmatpush1.bf16.msra.mxu0 %v5600
    %5621 = vmatprep.subr.bf16.mxu0 %v5605
    %5622 = vmatpush1.bf16.msra.mxu0 %v5604
    %5623 = vmatprep.subr.bf16.mxu0 0
    %5624 = vmatpush1.bf16.msra.mxu0 0
    %5625 = vmatprep.subr.bf16.mxu0 0
    %5626 = vmatpush1.bf16.msra.mxu0 0
    %5627 = vmatprep.subr.bf16.mxu0 0
    %5628 = vmatpush1.bf16.msra.mxu0 0
    %5629 = vmatprep.subr.bf16.mxu0 0
    %5630 = vmatpush1.bf16.msra.mxu0 0
    %5631 = vmatprep.subr.bf16.mxu0 0
    %5632 = vmatpush1.bf16.msra.mxu0 0
    %5633 = vmatprep.subr.bf16.mxu0 0
    %5634 = vmatpush1.bf16.msra.mxu0 0
    %5635 = vmatprep.subr.bf16.mxu0 0
    %5636 = vmatpush1.bf16.msra.mxu0 0
    %5637 = vmatprep.subr.bf16.mxu0 0
    %5638 = vmatpush1.bf16.msra.mxu0 0
    %5639 = vmatprep.subr.bf16.mxu0 0
    %5640 = vmatpush1.bf16.msra.mxu0 0
    %5641 = vmatprep.subr.bf16.mxu0 0
    %5642 = vmatpush1.bf16.msra.mxu0 0
    %5643 = vmatprep.subr.bf16.mxu0 0
    %5644 = vmatpush1.bf16.msra.mxu0 0
    %5645 = vmatprep.subr.bf16.mxu0 0
    %5646 = vmatpush1.bf16.msra.mxu0 0
    %5647 = vmatprep.subr.bf16.mxu0 0
    %5648 = vmatpush1.bf16.msra.mxu0 0
    %5649 = vmatprep.subr.bf16.mxu0 0
    %5650 = vmatpush1.bf16.msra.mxu0 0
    %5651 = vmatprep.mubr.bf16.mxu0 0
    %5652 = vmatmul.mubr.bf16.gmra.mrb[0].mxu0 %v5617
    %v5653 = vpop.f32.mrb[0].mxu0
    %v5654 = vadd.f32 %v5559, %v5653
    %v5655 = vpop.f32.mrb[0].mxu0
    %v5656 = vadd.f32 %v5563, %v5655
    %v5657 = vpop.f32.mrb[0].mxu0
    %v5658 = vpop.f32.mrb[0].mxu0
    %5659 = vdwg.mxu0
    %5660 = vmatprep.subr.bf16.mxu0 %v5603
    %5661 = vmatpush1.bf16.msra.mxu0 %v5602
    %5662 = vmatprep.subr.bf16.mxu0 %v5607
    %5663 = vmatpush1.bf16.msra.mxu0 %v5606
    %5664 = vmatprep.subr.bf16.mxu0 0
    %5665 = vmatpush1.bf16.msra.mxu0 0
    %5666 = vmatprep.subr.bf16.mxu0 0
    %5667 = vmatpush1.bf16.msra.mxu0 0
    %5668 = vmatprep.subr.bf16.mxu0 0
    %5669 = vmatpush1.bf16.msra.mxu0 0
    %5670 = vmatprep.subr.bf16.mxu0 0
    %5671 = vmatpush1.bf16.msra.mxu0 0
    %5672 = vmatprep.subr.bf16.mxu0 0
    %5673 = vmatpush1.bf16.msra.mxu0 0
    %5674 = vmatprep.subr.bf16.mxu0 0
    %5675 = vmatpush1.bf16.msra.mxu0 0
    %5676 = vmatprep.subr.bf16.mxu0 0
    %5677 = vmatpush1.bf16.msra.mxu0 0
    %5678 = vmatprep.subr.bf16.mxu0 0
    %5679 = vmatpush1.bf16.msra.mxu0 0
    %5680 = vmatprep.subr.bf16.mxu0 0
    %5681 = vmatpush1.bf16.msra.mxu0 0
    %5682 = vmatprep.subr.bf16.mxu0 0
    %5683 = vmatpush1.bf16.msra.mxu0 0
    %5684 = vmatprep.subr.bf16.mxu0 0
    %5685 = vmatpush1.bf16.msra.mxu0 0
    %5686 = vmatprep.subr.bf16.mxu0 0
    %5687 = vmatpush1.bf16.msra.mxu0 0
    %5688 = vmatprep.subr.bf16.mxu0 0
    %5689 = vmatpush1.bf16.msra.mxu0 0
    %5690 = vmatprep.subr.bf16.mxu0 0
    %5691 = vmatpush1.bf16.msra.mxu0 0
    %5692 = vmatprep.mubr.bf16.mxu0 0
    %5693 = vmatmul.mubr.bf16.gmra.mrb[0].mxu0 %v5617
    %v5694 = vpop.f32.mrb[0].mxu0
    %v5695 = vadd.f32 %v5567, %v5694
    %v5696 = vpop.f32.mrb[0].mxu0
    %v5697 = vadd.f32 %v5571, %v5696
    %v5698 = vpop.f32.mrb[0].mxu0
    %v5699 = vpop.f32.mrb[0].mxu0
    %5700 = vdwg.mxu0
    %vm5701 = vcmp.gt.f32.partialorder %v5654, 0.0
    %vm5702 = vcmp.gt.f32.partialorder %v5656, 0.0
    %vm5703 = vcmp.gt.f32.partialorder %v5695, 0.0
    %vm5704 = vcmp.gt.f32.partialorder %v5697, 0.0
    %v5705 = vmul.f32 %v5654, 0.01
    %v5706 = vmul.f32 %v5656, 0.01
    %v5707 = vmul.f32 %v5695, 0.01
    %v5708 = vmul.f32 %v5697, 0.01
    %v5709 = vsel %vm5701, %v5654, %v5705
    %v5710 = vsel %vm5702, %v5656, %v5706
    %v5711 = vsel %vm5703, %v5695, %v5707
    %v5712 = vsel %vm5704, %v5697, %v5708
    %v5717 = vcombine.low %v5709, %v5710
    %v5718 = vcombine.low %v5711, %v5712
    %v5720 = vunpack.c.l.s4 1983009808
    %v5721 = vunpack.c.0.s8 %v5720
    %v5722 = vlaneseq
    %v5723 = vshrl.u32 %v5722, 7
    %v5724 = vsub.s32 %v5721, %v5723
    %v5725 = vrot.slane %v5717, %v5724
    %v5727 = vunpack.c.l.s4 1983009808
    %v5728 = vunpack.c.0.s8 %v5727
    %v5729 = vlaneseq
    %v5730 = vshrl.u32 %v5729, 7
    %v5731 = vsub.s32 %v5728, %v5730
    %v5732 = vrot.slane %v5718, %v5731
    %v5733 = vcombine.low %v5725, %v5732
    %5735 = vst [vmem:[%s75] sm:$0xff] %v5733
    %5737 = vrot.lane.b32.xlu0 %v5200, 32
    %v5738 = vpop.permute.xlu0 %5737
    %vm5740 = vcmask 254976
    %5741 = vst.msk [vmem:[#allocation42] sm:$0x3] %vm5740, %v5738
    %5743 = vrot.lane.b32.xlu0 %v5194, 96
    %v5744 = vpop.permute.xlu0 %5743
    %5746 = vst.msk [vmem:[#allocation43] sm:$0x3] %vm5740, %v5744
    %v5747 = vld [vmem:[#allocation41] sm:$0xff]
    %v5748 = vld [vmem:[#allocation41 + $0x8] sm:$0xff]
    %v5749 = vld [vmem:[#allocation41 + $0x10] sm:$0xff]
    %v5750 = vld [vmem:[#allocation41 + $0x18] sm:$0xff]
    %v5752 = vsel %vm4942, %v5474, 0
    %5754 = vmatprep.subr.mxu0 0.0
    %5755 = vmatpush1.msra.mxu0 %v5747
    %5756 = vmatprep.subr.mxu0 0.0
    %5757 = vmatpush1.msra.mxu0 %v5748
    %5758 = vmatprep.subr.mxu0 0.0
    %5759 = vmatpush1.msra.mxu0 %v5749
    %5760 = vmatprep.subr.mxu0 0.0
    %5761 = vmatpush1.msra.mxu0 %v5750
    %5762 = vmatprep.subr.mxu0 0.0
    %5763 = vmatpush1.msra.mxu0 0.0
    %5764 = vmatprep.subr.mxu0 0.0
    %5765 = vmatpush1.msra.mxu0 0.0
    %5766 = vmatprep.subr.mxu0 0.0
    %5767 = vmatpush1.msra.mxu0 0.0
    %5768 = vmatprep.subr.mxu0 0.0
    %5769 = vmatpush1.msra.mxu0 0.0
    %5770 = vmatprep.subr.mxu0 0.0
    %5771 = vmatpush1.msra.mxu0 0.0
    %5772 = vmatprep.subr.mxu0 0.0
    %5773 = vmatpush1.msra.mxu0 0.0
    %5774 = vmatprep.subr.mxu0 0.0
    %5775 = vmatpush1.msra.mxu0 0.0
    %5776 = vmatprep.subr.mxu0 0.0
    %5777 = vmatpush1.msra.mxu0 0.0
    %5778 = vmatprep.subr.mxu0 0.0
    %5779 = vmatpush1.msra.mxu0 0.0
    %5780 = vmatprep.subr.mxu0 0.0
    %5781 = vmatpush1.msra.mxu0 0.0
    %5782 = vmatprep.subr.mxu0 0.0
    %5783 = vmatpush1.msra.mxu0 0.0
    %5784 = vmatprep.subr.mxu0 0.0
    %5785 = vmatpush1.msra.mxu0 0.0
    %5786 = vmatprep.subr.mxu0 0.0
    %5787 = vmatpush1.msra.mxu0 0.0
    %5788 = vmatprep.subr.mxu0 0.0
    %5789 = vmatpush1.msra.mxu0 0.0
    %5790 = vmatprep.subr.mxu0 0.0
    %5791 = vmatpush1.msra.mxu0 0.0
    %5792 = vmatprep.subr.mxu0 0.0
    %5793 = vmatpush1.msra.mxu0 0.0
    %5794 = vmatprep.subr.mxu0 0.0
    %5795 = vmatpush1.msra.mxu0 0.0
    %5796 = vmatprep.subr.mxu0 0.0
    %5797 = vmatpush1.msra.mxu0 0.0
    %5798 = vmatprep.subr.mxu0 0.0
    %5799 = vmatpush1.msra.mxu0 0.0
    %5800 = vmatprep.subr.mxu0 0.0
    %5801 = vmatpush1.msra.mxu0 0.0
    %5802 = vmatprep.subr.mxu0 0.0
    %5803 = vmatpush1.msra.mxu0 0.0
    %5804 = vmatprep.subr.mxu0 0.0
    %5805 = vmatpush1.msra.mxu0 0.0
    %5806 = vmatprep.subr.mxu0 0.0
    %5807 = vmatpush1.msra.mxu0 0.0
    %5808 = vmatprep.subr.mxu0 0.0
    %5809 = vmatpush1.msra.mxu0 0.0
    %5810 = vmatprep.subr.mxu0 0.0
    %5811 = vmatpush1.msra.mxu0 0.0
    %5812 = vmatprep.subr.mxu0 0.0
    %5813 = vmatpush1.msra.mxu0 0.0
    %5814 = vmatprep.subr.mxu0 0.0
    %5815 = vmatpush1.msra.mxu0 0.0
    %5816 = vmatprep.subr.mxu0 0.0
    %5817 = vmatpush1.msra.mxu0 0.0
    %5818 = vmatprep.mubr.f32.mxu0 0.0
    %5819 = vmatmul.mubr.f32.gmra.mrb[0].mxu0 %v5752
    %v5820 = vpop.f32.mrb[0].mxu0
    %v5821 = vadd.f32 0.0, %v5820
    %v5822 = vpop.f32.mrb[0].mxu0
    %5823 = vdwg.mxu0
    %vm5824 = vcmask 1024
    %5825 = vst.msk [vmem:[%s81] sm:$0x3] %vm5824, %v5821
    // Predicated region
    $region250: #{transitioner_forward.2} parent=1 // pred_check
      _
    $region251: #{transitioner_forward.2} parent=1 // pred_check_branch
      %5827 = sbr.rel (0) target = $region253
    $region252: #{transitioner_forward.2} parent=1 // pred_region
      _
    $region253: #{transitioner_forward.2} parent=1 // pred_fallthru
      _
    // Predicated region
    $region254: #{transitioner_forward.2} parent=1 // pred_check
      _
    $region255: #{transitioner_forward.2} parent=1 // pred_check_branch
      %5829 = sbr.rel (0) target = $region257
    $region256: #{transitioner_forward.2} parent=1 // pred_region
      %s5831 = ssub.s32 32, 32
      %5832 = vsyncadd [#allocation5], %s5831
      %s5834 = sshll.u32 [#allocation42], 4
      %s5835 = int_to_ptr.vmem [resolvable:$true] %s5834
      %5837 = dma.vmem_to_hbm [thread:$0]  %s5835, 32, %s77, [#allocation5]
    $region257: #{transitioner_forward.2} parent=1 // pred_fallthru
      _
    // Predicated region
    $region258: #{transitioner_forward.2} parent=1 // pred_check
      _
    $region259: #{transitioner_forward.2} parent=1 // pred_check_branch
      %5839 = sbr.rel (0) target = $region261
    $region260: #{transitioner_forward.2} parent=1 // pred_region
      %s5841 = ssub.s32 32, 32
      %5842 = vsyncadd [#allocation44], %s5841
      %s5844 = sshll.u32 [#allocation43], 4
      %s5845 = int_to_ptr.vmem [resolvable:$true] %s5844
      %5847 = dma.vmem_to_hbm [thread:$0]  %s5845, 32, %s79, [#allocation44]
    $region261: #{transitioner_forward.2} parent=1 // pred_fallthru
      _
    // Predicated region
    $region262: #{transitioner_forward.2} parent=1 // pred_check
      _
    $region263: #{transitioner_forward.2} parent=1 // pred_check_branch
      %5849 = sbr.rel (0) target = $region265
    $region264: #{transitioner_forward.2} parent=1 // pred_region
      _
    $region265: #{transitioner_forward.2} parent=1 // pred_fallthru
      _
    // Predicated region
    $region266: #{transitioner_forward.2} parent=1 // pred_check
      _
    $region267: #{transitioner_forward.2} parent=1 // pred_check_branch
      %5851 = sbr.rel (0) target = $region269
    $region268: #{transitioner_forward.2} parent=1 // pred_region
      _
    $region269: #{transitioner_forward.2} parent=1 // pred_fallthru
      _
    // Predicated region
    $region270: #{transitioner_forward.2} parent=1 // pred_check
      _
    $region271: #{transitioner_forward.2} parent=1 // pred_check_branch
      %5853 = sbr.rel (0) target = $region273
    $region272: #{transitioner_forward.2} parent=1 // pred_region
      %5854 = dma.done [#allocation5], 32
    $region273: #{transitioner_forward.2} parent=1 // pred_fallthru
      _
    // Predicated region
    $region274: #{transitioner_forward.2} parent=1 // pred_check
      _
    $region275: #{transitioner_forward.2} parent=1 // pred_check_branch
      %5856 = sbr.rel (0) target = $region277
    $region276: #{transitioner_forward.2} parent=1 // pred_region
      %5857 = dma.done [#allocation44], 32
    $region277: #{transitioner_forward.2} parent=1 // pred_fallthru
      _
    // Predicated region
    $region278: #{transitioner_forward.2} parent=1 // pred_check
      _
    $region279: #{transitioner_forward.2} parent=1 // pred_check_branch
      %5859 = sbr.rel (0) target = $region281
    $region280: #{transitioner_forward.2} parent=1 // pred_region
      _
    $region281: #{transitioner_forward.2} parent=1 // pred_fallthru
      _
    %5860 = vsyncpa [#allocation4], 1
    %5861 = vsyncpa [#allocation7], 1
    %5862 = vsyncpa [#allocation10], 1
    %5863 = vsyncpa [#allocation13], 1
    %5864 = vsyncpa [#allocation16], 1
    %5865 = vsyncpa [#allocation19], 1
    %5866 = vsyncpa [#allocation22], 1
    %5867 = vsyncpa [#allocation25], 1
    %5868 = vsyncpa [#allocation28], 1
    %5869 = vsyncpa [#allocation31], 1
    %5870 = vsyncpa [#allocation34], 1
    %5871 = vsyncpa [#allocation37], 1
    %5872 = vsyncpa [#allocation40], 1
    %5873 = vsyncpa [#allocation5], 1
    %5874 = vsyncpa [#allocation44], 1

</llo_original>
